<compile_context>
chip_gen: v5e
topology: v5e:2x2
jax: 0.10.0
libtpu: 0.0.40
codegen_flags: <defaults>
</compile_context>

<pallas_src>
import functools

import jax
import jax.numpy as jnp
from jax.experimental import pallas as pl
from jax.experimental.pallas import tpu as pltpu


# ---------------------------------------------------------------------------
# Kernels
# ---------------------------------------------------------------------------
def _conv_kernel(w_ref, x_ref, o_ref, *, do_norm, eps, neg_slope):
    """Fused Conv2d(4,2,1,bias=False) [+InstanceNorm2d] +LeakyReLU for one image
    (or one P-tile of one image).

      w_ref: (Cout, K)    bf16   K = 16*Cin, ordered (kh, kw, cin)
      x_ref: (1, K, P)    bf16   transposed im2col patches (K-major)
      o_ref: (1, Cout, P) bf16
    """
    acc = jnp.dot(w_ref[...], x_ref[0],
                  preferred_element_type=jnp.float32)          # (Cout, P) f32

    if do_norm:
        # InstanceNorm2d(affine=False), biased variance, two-pass stats in f32.
        inv_p = 1.0 / acc.shape[1]
        mean = jnp.sum(acc, axis=1, keepdims=True) * inv_p     # (Cout, 1)
        cen = acc - mean
        var = jnp.sum(cen * cen, axis=1, keepdims=True) * inv_p
        acc = cen * jax.lax.rsqrt(var + eps)

    acc = jnp.where(acc >= 0, acc, neg_slope * acc)            # LeakyReLU(0.2)
    o_ref[0] = acc.astype(o_ref.dtype)


def _conv_final_kernel(w_ref, w7_ref, x_ref, o_ref, *, eps, neg_slope):
    """Layer 6 (Conv + InstanceNorm + LeakyReLU) fused with the final
    Conv2d(k=4, stride=1, valid, Cout=1) head.

      w_ref : (128, K)    bf16   layer-6 weight, K = 16*Cin
      w7_ref: (128, 16)   f32    final conv weight, spatial flattened (kh*4+kw)
      x_ref : (1, K, 16)  bf16   layer-6 transposed patches
      o_ref : (1, 1, 1)   f32    critic score for this image
    """
    acc = jnp.dot(w_ref[...], x_ref[0],
                  preferred_element_type=jnp.float32)          # (128, 16) f32
    inv_p = 1.0 / acc.shape[1]
    mean = jnp.sum(acc, axis=1, keepdims=True) * inv_p
    cen = acc - mean
    var = jnp.sum(cen * cen, axis=1, keepdims=True) * inv_p
    act = cen * jax.lax.rsqrt(var + eps)
    act = jnp.where(act >= 0, act, neg_slope * act)
    # Final 4x4 valid conv over a 4x4 map == full contraction with its weight.
    s = jnp.sum(act * w7_ref[...], axis=1, keepdims=True)      # (128, 1)
    s = jnp.sum(s, axis=0, keepdims=True)                      # (1, 1)
    o_ref[0] = s


# ---------------------------------------------------------------------------
# XLA-side layout helpers (tiny tensors: <= ~1.6 MB/image)
# ---------------------------------------------------------------------------
def _im2col_T(x):
    """(N, C, H, W) -> (N, 16*C, (H//2)*(W//2)) bf16 transposed patches.

    K axis ordered (kh, kw, c), matching _prep_weight."""
    N, C, H, W = x.shape
    OH, OW = H // 2, W // 2
    xp = jnp.pad(x.astype(jnp.bfloat16), ((0, 0), (0, 0), (1, 1), (1, 1)))
    taps = []
    for kh in range(4):
        for kw in range(4):
            taps.append(xp[:, :, kh:kh + 2 * OH:2, kw:kw + 2 * OW:2])
    p = jnp.stack(taps, axis=1)                        # (N, 16, C, OH, OW)
    return p.reshape(N, 16 * C, OH * OW), OH, OW


def _prep_weight(w):
    """PyTorch (Cout, Cin, 4, 4) -> (Cout, 16*Cin) bf16, K ordered (kh, kw, c)."""
    cout, cin, kh, kw = w.shape
    return (jnp.transpose(w, (0, 2, 3, 1))
            .reshape(cout, kh * kw * cin).astype(jnp.bfloat16))


# ---------------------------------------------------------------------------
# Layer wrappers
# ---------------------------------------------------------------------------
def conv_layer(x, w, *, do_norm, p_tile=4096, eps=1e-5):
    """Fused Conv2d(k=4, s=2, p=1, bias=False) [+InstanceNorm2d] +LeakyReLU(0.2).

    x: (N, Cin, H, W) -> (N, Cout, H//2, W//2) bf16 (NCHW)."""
    N, Cin, H, W = x.shape
    Cout = w.shape[0]
    patches, OH, OW = _im2col_T(x)
    P = OH * OW
    K = 16 * Cin
    wmat = _prep_weight(w)

    if do_norm or P <= p_tile or P % p_tile != 0:
        # InstanceNorm needs whole-image stats; small layers run un-tiled too.
        pt = P
        grid = (N,)
        w_map = lambda n: (0, 0)
        x_map = lambda n: (n, 0, 0)
        o_map = lambda n: (n, 0, 0)
        dims = ("parallel",)
    else:
        pt = p_tile
        grid = (N, P // pt)
        w_map = lambda n, t: (0, 0)
        x_map = lambda n, t: (n, 0, t)
        o_map = lambda n, t: (n, 0, t)
        dims = ("parallel", "parallel")   # disjoint output tiles -> megacore OK

    out = pl.pallas_call(
        functools.partial(_conv_kernel, do_norm=do_norm, eps=eps, neg_slope=0.2),
        out_shape=jax.ShapeDtypeStruct((N, Cout, P), jnp.bfloat16),
        grid=grid,
        in_specs=[pl.BlockSpec((Cout, K), w_map),
                  pl.BlockSpec((1, K, pt), x_map)],
        out_specs=pl.BlockSpec((1, Cout, pt), o_map),
        compiler_params=pltpu.CompilerParams(dimension_semantics=dims),
    )(wmat, patches)
    return out.reshape(N, Cout, OH, OW)


def final_layers(x, w6, w7, *, eps=1e-5):
    """Layer 6 (Conv+IN+LReLU) fused with the final Conv2d(4, valid) head."""
    N, Cin, H, W = x.shape
    Cout = w6.shape[0]
    patches, OH, OW = _im2col_T(x)
    assert (OH, OW) == (4, 4), "final 4x4 valid conv needs a 4x4 feature map"
    P = OH * OW
    K = 16 * Cin
    wmat = _prep_weight(w6)
    w7r = w7.reshape(Cout, 16).astype(jnp.float32)     # (1,128,4,4) -> (128,16)

    out = pl.pallas_call(
        functools.partial(_conv_final_kernel, eps=eps, neg_slope=0.2),
        out_shape=jax.ShapeDtypeStruct((N, 1, 1), jnp.float32),
        grid=(N,),
        in_specs=[pl.BlockSpec((Cout, K), lambda n: (0, 0)),
                  pl.BlockSpec((Cout, 16), lambda n: (0, 0)),
                  pl.BlockSpec((1, K, P), lambda n: (n, 0, 0))],
        out_specs=pl.BlockSpec((1, 1, 1), lambda n: (n, 0, 0)),
        compiler_params=pltpu.CompilerParams(dimension_semantics=("parallel",)),
    )(wmat, w7r, patches)
    return out.reshape(N)


# ---------------------------------------------------------------------------
# Full Discriminator forward.
# ---------------------------------------------------------------------------
def make_weights(key, ndf, nc):
    """Deterministic synthetic conv weights, PyTorch layout (Cout, Cin, 4, 4)."""
    chans = [
        (ndf // 2, nc),
        (ndf, ndf // 2),
        (ndf * 2, ndf),
        (ndf * 4, ndf * 2),
        (ndf * 8, ndf * 4),
        (ndf * 16, ndf * 8),
        (1, ndf * 16),
    ]
    keys = jax.random.split(key, len(chans))
    return [0.02 * jax.random.normal(k, (co, ci, 4, 4), dtype=jnp.float32)
            for k, (co, ci) in zip(keys, chans)]


def discriminator_forward(x_nchw, weights):
    """x: (N, nc, 256, 256) NCHW f32 -> (N,) f32 (matches main(input).view(-1))."""
    x = conv_layer(x_nchw, weights[0], do_norm=False)    # Conv -> LeakyReLU
    for w in weights[1:5]:
        x = conv_layer(x, w, do_norm=True)               # Conv -> IN -> LeakyReLU
    return final_layers(x, weights[5], weights[6])       # Conv -> IN -> LReLU -> Conv(4, valid)


if __name__ == "__main__":
    ndf, nc = 8, 3
    N, H, W = 2, 256, 256  # the 6x stride-2 downsampling + 4x4 valid head implies 256x256

    key = jax.random.PRNGKey(0)
    kx, kw = jax.random.split(key)
    x = jax.random.normal(kx, (N, nc, H, W), dtype=jnp.float32)
    weights = make_weights(kw, ndf, nc)

    fwd = jax.jit(discriminator_forward)
    out = fwd(x, weights)
    jax.block_until_ready(out)

    assert out.shape == (N,), out.shape
    assert bool(jnp.all(jnp.isfinite(out)))
    print("KERNEL_OK")
</pallas_src>

<mosaic_0001>
module attributes {stable_mosaic.version = 11 : i64} {
  func.func @_conv_kernel(%arg0: i32, %arg1: i32, %arg2: memref<4x48xbf16, #tpu.memory_space<vmem>>, %arg3: memref<1x48x4096xbf16, #tpu.memory_space<vmem>>, %arg4: memref<1x4x4096xbf16, #tpu.memory_space<vmem>>) attributes {dimension_semantics = [#tpu.dimension_semantics<parallel>, #tpu.dimension_semantics<parallel>], iteration_bounds = array<i64: 2, 4>, scalar_prefetch = 0 : i64, scratch_operands = 0 : i64, tpu.core_type = #tpu.core_type<tc>, window_params = [{pipeline_mode = #tpu.pipeline_mode<synchronous>, transform_indices = @transform_0, window_bounds = array<i64: 4, 48>}, {transform_indices = @transform_1, window_bounds = array<i64: 1, 48, 4096>}, {transform_indices = @transform_2, window_bounds = array<i64: 1, 4, 4096>}]} {
    %c0 = arith.constant 0 : index
    %c0_0 = arith.constant 0 : index
    %0 = vector.load %arg2[%c0, %c0_0] : memref<4x48xbf16, #tpu.memory_space<vmem>>, vector<4x48xbf16>
    %c0_1 = arith.constant 0 : index
    %c0_2 = arith.constant 0 : index
    %c0_3 = arith.constant 0 : index
    %1 = vector.load %arg3[%c0_1, %c0_2, %c0_3] : memref<1x48x4096xbf16, #tpu.memory_space<vmem>>, vector<1x48x4096xbf16>
    %2 = vector.shape_cast %1 : vector<1x48x4096xbf16> to vector<48x4096xbf16>
    %cst = arith.constant dense<0.000000e+00> : vector<4x4096xf32>
    %3 = tpu.matmul %0, %2, %cst {dimension_numbers = #tpu.dot_dimension_numbers<[1], [0], [0], [1], [0, 0, 1, 1], [], []>} : vector<4x48xbf16>, vector<48x4096xbf16>, vector<4x4096xf32> -> vector<4x4096xf32>
    %cst_4 = arith.constant 0.000000e+00 : f32
    %4 = vector.broadcast %cst_4 : f32 to vector<4x4096xf32>
    %5 = arith.cmpf oge, %3, %4 : vector<4x4096xf32>
    %cst_5 = arith.constant 2.000000e-01 : f32
    %6 = vector.broadcast %cst_5 : f32 to vector<4x4096xf32>
    %7 = arith.mulf %6, %3 : vector<4x4096xf32>
    %8 = arith.select %5, %3, %7 : vector<4x4096xi1>, vector<4x4096xf32>
    %9 = arith.truncf %8 : vector<4x4096xf32> to vector<4x4096xbf16>
    %c0_6 = arith.constant 0 : index
    %c0_7 = arith.constant 0 : index
    %c0_8 = arith.constant 0 : index
    %10 = vector.load %arg4[%c0_6, %c0_7, %c0_8] : memref<1x4x4096xbf16, #tpu.memory_space<vmem>>, vector<1x4x4096xbf16>
    %11 = vector.shape_cast %10 : vector<1x4x4096xbf16> to vector<4x4096xbf16>
    %12 = vector.shape_cast %9 : vector<4x4096xbf16> to vector<1x4x4096xbf16>
    tpu.vector_store %arg4[%c0_6, %c0_7, %c0_8], %12 {strides = array<i32>} : memref<1x4x4096xbf16, #tpu.memory_space<vmem>>, vector<1x4x4096xbf16>,
    return
  }
  func.func @transform_0(%arg0: i32, %arg1: i32) -> (i32, i32) {
    %c0_i32 = arith.constant 0 : i32
    %c0_i32_0 = arith.constant 0 : i32
    %c0_i32_1 = arith.constant 0 : i32
    return %c0_i32, %c0_i32_0 : i32, i32
  }
  func.func @transform_1(%arg0: i32, %arg1: i32) -> (i32, i32, i32) {
    %c0_i32 = arith.constant 0 : i32
    %c0_i32_0 = arith.constant 0 : i32
    return %arg0, %c0_i32, %arg1 : i32, i32, i32
  }
  func.func @transform_2(%arg0: i32, %arg1: i32) -> (i32, i32, i32) {
    %c0_i32 = arith.constant 0 : i32
    %c0_i32_0 = arith.constant 0 : i32
    return %arg0, %c0_i32, %arg1 : i32, i32, i32
  }
}

module attributes {stable_mosaic.version = 11 : i64} {
  func.func @_conv_kernel(%arg0: i32, %arg1: memref<8x64xbf16, #tpu.memory_space<vmem>>, %arg2: memref<1x64x4096xbf16, #tpu.memory_space<vmem>>, %arg3: memref<1x8x4096xbf16, #tpu.memory_space<vmem>>) attributes {dimension_semantics = [#tpu.dimension_semantics<parallel>], iteration_bounds = array<i64: 2>, scalar_prefetch = 0 : i64, scratch_operands = 0 : i64, tpu.core_type = #tpu.core_type<tc>, window_params = [{pipeline_mode = #tpu.pipeline_mode<synchronous>, transform_indices = @transform_0, window_bounds = array<i64: 8, 64>}, {transform_indices = @transform_1, window_bounds = array<i64: 1, 64, 4096>}, {transform_indices = @transform_2, window_bounds = array<i64: 1, 8, 4096>}]} {
    %c0 = arith.constant 0 : index
    %c0_0 = arith.constant 0 : index
    %0 = vector.load %arg1[%c0, %c0_0] : memref<8x64xbf16, #tpu.memory_space<vmem>>, vector<8x64xbf16>
    %c0_1 = arith.constant 0 : index
    %c0_2 = arith.constant 0 : index
    %c0_3 = arith.constant 0 : index
    %1 = vector.load %arg2[%c0_1, %c0_2, %c0_3] : memref<1x64x4096xbf16, #tpu.memory_space<vmem>>, vector<1x64x4096xbf16>
    %2 = vector.shape_cast %1 : vector<1x64x4096xbf16> to vector<64x4096xbf16>
    %cst = arith.constant dense<0.000000e+00> : vector<8x4096xf32>
    %3 = tpu.matmul %0, %2, %cst {dimension_numbers = #tpu.dot_dimension_numbers<[1], [0], [0], [1], [0, 0, 1, 1], [], []>} : vector<8x64xbf16>, vector<64x4096xbf16>, vector<8x4096xf32> -> vector<8x4096xf32>
    %cst_4 = arith.constant dense<0.000000e+00> : vector<8xf32>
    %4 = vector.multi_reduction <add>, %3, %cst_4 [1] : vector<8x4096xf32> to vector<8xf32>
    %5 = vector.shape_cast %4 : vector<8xf32> to vector<8x1xf32>
    %cst_5 = arith.constant 2.44140625E-4 : f32
    %6 = vector.broadcast %cst_5 : f32 to vector<8x1xf32>
    %7 = arith.mulf %5, %6 : vector<8x1xf32>
    %8 = vector.broadcast %7 : vector<8x1xf32> to vector<8x4096xf32>
    %9 = arith.subf %3, %8 : vector<8x4096xf32>
    %10 = arith.mulf %9, %9 : vector<8x4096xf32>
    %cst_6 = arith.constant dense<0.000000e+00> : vector<8xf32>
    %11 = vector.multi_reduction <add>, %10, %cst_6 [1] : vector<8x4096xf32> to vector<8xf32>
    %12 = vector.shape_cast %11 : vector<8xf32> to vector<8x1xf32>
    %cst_7 = arith.constant 2.44140625E-4 : f32
    %13 = vector.broadcast %cst_7 : f32 to vector<8x1xf32>
    %14 = arith.mulf %12, %13 : vector<8x1xf32>
    %cst_8 = arith.constant 9.99999974E-6 : f32
    %15 = vector.broadcast %cst_8 : f32 to vector<8x1xf32>
    %16 = arith.addf %14, %15 : vector<8x1xf32>
    %17 = math.rsqrt %16 : vector<8x1xf32>
    %18 = vector.broadcast %17 : vector<8x1xf32> to vector<8x4096xf32>
    %19 = arith.mulf %9, %18 : vector<8x4096xf32>
    %cst_9 = arith.constant 0.000000e+00 : f32
    %20 = vector.broadcast %cst_9 : f32 to vector<8x4096xf32>
    %21 = arith.cmpf oge, %19, %20 : vector<8x4096xf32>
    %cst_10 = arith.constant 2.000000e-01 : f32
    %22 = vector.broadcast %cst_10 : f32 to vector<8x4096xf32>
    %23 = arith.mulf %22, %19 : vector<8x4096xf32>
    %24 = arith.select %21, %19, %23 : vector<8x4096xi1>, vector<8x4096xf32>
    %25 = arith.truncf %24 : vector<8x4096xf32> to vector<8x4096xbf16>
    %c0_11 = arith.constant 0 : index
    %c0_12 = arith.constant 0 : index
    %c0_13 = arith.constant 0 : index
    %26 = vector.load %arg3[%c0_11, %c0_12, %c0_13] : memref<1x8x4096xbf16, #tpu.memory_space<vmem>>, vector<1x8x4096xbf16>
    %27 = vector.shape_cast %26 : vector<1x8x4096xbf16> to vector<8x4096xbf16>
    %28 = vector.shape_cast %25 : vector<8x4096xbf16> to vector<1x8x4096xbf16>
    tpu.vector_store %arg3[%c0_11, %c0_12, %c0_13], %28 {strides = array<i32>} : memref<1x8x4096xbf16, #tpu.memory_space<vmem>>, vector<1x8x4096xbf16>,
    return
  }
  func.func @transform_0(%arg0: i32) -> (i32, i32) {
    %c0_i32 = arith.constant 0 : i32
    %c0_i32_0 = arith.constant 0 : i32
    %c0_i32_1 = arith.constant 0 : i32
    return %c0_i32, %c0_i32_0 : i32, i32
  }
  func.func @transform_1(%arg0: i32) -> (i32, i32, i32) {
    %c0_i32 = arith.constant 0 : i32
    %c0_i32_0 = arith.constant 0 : i32
    %c0_i32_1 = arith.constant 0 : i32
    return %arg0, %c0_i32, %c0_i32_0 : i32, i32, i32
  }
  func.func @transform_2(%arg0: i32) -> (i32, i32, i32) {
    %c0_i32 = arith.constant 0 : i32
    %c0_i32_0 = arith.constant 0 : i32
    %c0_i32_1 = arith.constant 0 : i32
    return %arg0, %c0_i32, %c0_i32_0 : i32, i32, i32
  }
}

module attributes {stable_mosaic.version = 11 : i64} {
  func.func @_conv_kernel(%arg0: i32, %arg1: memref<16x128xbf16, #tpu.memory_space<vmem>>, %arg2: memref<1x128x1024xbf16, #tpu.memory_space<vmem>>, %arg3: memref<1x16x1024xbf16, #tpu.memory_space<vmem>>) attributes {dimension_semantics = [#tpu.dimension_semantics<parallel>], iteration_bounds = array<i64: 2>, scalar_prefetch = 0 : i64, scratch_operands = 0 : i64, tpu.core_type = #tpu.core_type<tc>, window_params = [{pipeline_mode = #tpu.pipeline_mode<synchronous>, transform_indices = @transform_0, window_bounds = array<i64: 16, 128>}, {transform_indices = @transform_1, window_bounds = array<i64: 1, 128, 1024>}, {transform_indices = @transform_2, window_bounds = array<i64: 1, 16, 1024>}]} {
    %c0 = arith.constant 0 : index
    %c0_0 = arith.constant 0 : index
    %0 = vector.load %arg1[%c0, %c0_0] : memref<16x128xbf16, #tpu.memory_space<vmem>>, vector<16x128xbf16>
    %c0_1 = arith.constant 0 : index
    %c0_2 = arith.constant 0 : index
    %c0_3 = arith.constant 0 : index
    %1 = vector.load %arg2[%c0_1, %c0_2, %c0_3] : memref<1x128x1024xbf16, #tpu.memory_space<vmem>>, vector<1x128x1024xbf16>
    %2 = vector.shape_cast %1 : vector<1x128x1024xbf16> to vector<128x1024xbf16>
    %cst = arith.constant dense<0.000000e+00> : vector<16x1024xf32>
    %3 = tpu.matmul %0, %2, %cst {dimension_numbers = #tpu.dot_dimension_numbers<[1], [0], [0], [1], [0, 0, 1, 1], [], []>} : vector<16x128xbf16>, vector<128x1024xbf16>, vector<16x1024xf32> -> vector<16x1024xf32>
    %cst_4 = arith.constant dense<0.000000e+00> : vector<16xf32>
    %4 = vector.multi_reduction <add>, %3, %cst_4 [1] : vector<16x1024xf32> to vector<16xf32>
    %5 = vector.shape_cast %4 : vector<16xf32> to vector<16x1xf32>
    %cst_5 = arith.constant 9.765625E-4 : f32
    %6 = vector.broadcast %cst_5 : f32 to vector<16x1xf32>
    %7 = arith.mulf %5, %6 : vector<16x1xf32>
    %8 = vector.broadcast %7 : vector<16x1xf32> to vector<16x1024xf32>
    %9 = arith.subf %3, %8 : vector<16x1024xf32>
    %10 = arith.mulf %9, %9 : vector<16x1024xf32>
    %cst_6 = arith.constant dense<0.000000e+00> : vector<16xf32>
    %11 = vector.multi_reduction <add>, %10, %cst_6 [1] : vector<16x1024xf32> to vector<16xf32>
    %12 = vector.shape_cast %11 : vector<16xf32> to vector<16x1xf32>
    %cst_7 = arith.constant 9.765625E-4 : f32
    %13 = vector.broadcast %cst_7 : f32 to vector<16x1xf32>
    %14 = arith.mulf %12, %13 : vector<16x1xf32>
    %cst_8 = arith.constant 9.99999974E-6 : f32
    %15 = vector.broadcast %cst_8 : f32 to vector<16x1xf32>
    %16 = arith.addf %14, %15 : vector<16x1xf32>
    %17 = math.rsqrt %16 : vector<16x1xf32>
    %18 = vector.broadcast %17 : vector<16x1xf32> to vector<16x1024xf32>
    %19 = arith.mulf %9, %18 : vector<16x1024xf32>
    %cst_9 = arith.constant 0.000000e+00 : f32
    %20 = vector.broadcast %cst_9 : f32 to vector<16x1024xf32>
    %21 = arith.cmpf oge, %19, %20 : vector<16x1024xf32>
    %cst_10 = arith.constant 2.000000e-01 : f32
    %22 = vector.broadcast %cst_10 : f32 to vector<16x1024xf32>
    %23 = arith.mulf %22, %19 : vector<16x1024xf32>
    %24 = arith.select %21, %19, %23 : vector<16x1024xi1>, vector<16x1024xf32>
    %25 = arith.truncf %24 : vector<16x1024xf32> to vector<16x1024xbf16>
    %c0_11 = arith.constant 0 : index
    %c0_12 = arith.constant 0 : index
    %c0_13 = arith.constant 0 : index
    %26 = vector.load %arg3[%c0_11, %c0_12, %c0_13] : memref<1x16x1024xbf16, #tpu.memory_space<vmem>>, vector<1x16x1024xbf16>
    %27 = vector.shape_cast %26 : vector<1x16x1024xbf16> to vector<16x1024xbf16>
    %28 = vector.shape_cast %25 : vector<16x1024xbf16> to vector<1x16x1024xbf16>
    tpu.vector_store %arg3[%c0_11, %c0_12, %c0_13], %28 {strides = array<i32>} : memref<1x16x1024xbf16, #tpu.memory_space<vmem>>, vector<1x16x1024xbf16>,
    return
  }
  func.func @transform_0(%arg0: i32) -> (i32, i32) {
    %c0_i32 = arith.constant 0 : i32
    %c0_i32_0 = arith.constant 0 : i32
    %c0_i32_1 = arith.constant 0 : i32
    return %c0_i32, %c0_i32_0 : i32, i32
  }
  func.func @transform_1(%arg0: i32) -> (i32, i32, i32) {
    %c0_i32 = arith.constant 0 : i32
    %c0_i32_0 = arith.constant 0 : i32
    %c0_i32_1 = arith.constant 0 : i32
    return %arg0, %c0_i32, %c0_i32_0 : i32, i32, i32
  }
  func.func @transform_2(%arg0: i32) -> (i32, i32, i32) {
    %c0_i32 = arith.constant 0 : i32
    %c0_i32_0 = arith.constant 0 : i32
    %c0_i32_1 = arith.constant 0 : i32
    return %arg0, %c0_i32, %c0_i32_0 : i32, i32, i32
  }
}

module attributes {stable_mosaic.version = 11 : i64} {
  func.func @_conv_kernel(%arg0: i32, %arg1: memref<32x256xbf16, #tpu.memory_space<vmem>>, %arg2: memref<1x256x256xbf16, #tpu.memory_space<vmem>>, %arg3: memref<1x32x256xbf16, #tpu.memory_space<vmem>>) attributes {dimension_semantics = [#tpu.dimension_semantics<parallel>], iteration_bounds = array<i64: 2>, scalar_prefetch = 0 : i64, scratch_operands = 0 : i64, tpu.core_type = #tpu.core_type<tc>, window_params = [{pipeline_mode = #tpu.pipeline_mode<synchronous>, transform_indices = @transform_0, window_bounds = array<i64: 32, 256>}, {transform_indices = @transform_1, window_bounds = array<i64: 1, 256, 256>}, {transform_indices = @transform_2, window_bounds = array<i64: 1, 32, 256>}]} {
    %c0 = arith.constant 0 : index
    %c0_0 = arith.constant 0 : index
    %0 = vector.load %arg1[%c0, %c0_0] : memref<32x256xbf16, #tpu.memory_space<vmem>>, vector<32x256xbf16>
    %c0_1 = arith.constant 0 : index
    %c0_2 = arith.constant 0 : index
    %c0_3 = arith.constant 0 : index
    %1 = vector.load %arg2[%c0_1, %c0_2, %c0_3] : memref<1x256x256xbf16, #tpu.memory_space<vmem>>, vector<1x256x256xbf16>
    %2 = vector.shape_cast %1 : vector<1x256x256xbf16> to vector<256x256xbf16>
    %cst = arith.constant dense<0.000000e+00> : vector<32x256xf32>
    %3 = tpu.matmul %0, %2, %cst {dimension_numbers = #tpu.dot_dimension_numbers<[1], [0], [0], [1], [0, 0, 1, 1], [], []>} : vector<32x256xbf16>, vector<256x256xbf16>, vector<32x256xf32> -> vector<32x256xf32>
    %cst_4 = arith.constant dense<0.000000e+00> : vector<32xf32>
    %4 = vector.multi_reduction <add>, %3, %cst_4 [1] : vector<32x256xf32> to vector<32xf32>
    %5 = vector.shape_cast %4 : vector<32xf32> to vector<32x1xf32>
    %cst_5 = arith.constant 3.906250e-03 : f32
    %6 = vector.broadcast %cst_5 : f32 to vector<32x1xf32>
    %7 = arith.mulf %5, %6 : vector<32x1xf32>
    %8 = vector.broadcast %7 : vector<32x1xf32> to vector<32x256xf32>
    %9 = arith.subf %3, %8 : vector<32x256xf32>
    %10 = arith.mulf %9, %9 : vector<32x256xf32>
    %cst_6 = arith.constant dense<0.000000e+00> : vector<32xf32>
    %11 = vector.multi_reduction <add>, %10, %cst_6 [1] : vector<32x256xf32> to vector<32xf32>
    %12 = vector.shape_cast %11 : vector<32xf32> to vector<32x1xf32>
    %cst_7 = arith.constant 3.906250e-03 : f32
    %13 = vector.broadcast %cst_7 : f32 to vector<32x1xf32>
    %14 = arith.mulf %12, %13 : vector<32x1xf32>
    %cst_8 = arith.constant 9.99999974E-6 : f32
    %15 = vector.broadcast %cst_8 : f32 to vector<32x1xf32>
    %16 = arith.addf %14, %15 : vector<32x1xf32>
    %17 = math.rsqrt %16 : vector<32x1xf32>
    %18 = vector.broadcast %17 : vector<32x1xf32> to vector<32x256xf32>
    %19 = arith.mulf %9, %18 : vector<32x256xf32>
    %cst_9 = arith.constant 0.000000e+00 : f32
    %20 = vector.broadcast %cst_9 : f32 to vector<32x256xf32>
    %21 = arith.cmpf oge, %19, %20 : vector<32x256xf32>
    %cst_10 = arith.constant 2.000000e-01 : f32
    %22 = vector.broadcast %cst_10 : f32 to vector<32x256xf32>
    %23 = arith.mulf %22, %19 : vector<32x256xf32>
    %24 = arith.select %21, %19, %23 : vector<32x256xi1>, vector<32x256xf32>
    %25 = arith.truncf %24 : vector<32x256xf32> to vector<32x256xbf16>
    %c0_11 = arith.constant 0 : index
    %c0_12 = arith.constant 0 : index
    %c0_13 = arith.constant 0 : index
    %26 = vector.load %arg3[%c0_11, %c0_12, %c0_13] : memref<1x32x256xbf16, #tpu.memory_space<vmem>>, vector<1x32x256xbf16>
    %27 = vector.shape_cast %26 : vector<1x32x256xbf16> to vector<32x256xbf16>
    %28 = vector.shape_cast %25 : vector<32x256xbf16> to vector<1x32x256xbf16>
    tpu.vector_store %arg3[%c0_11, %c0_12, %c0_13], %28 {strides = array<i32>} : memref<1x32x256xbf16, #tpu.memory_space<vmem>>, vector<1x32x256xbf16>,
    return
  }
  func.func @transform_0(%arg0: i32) -> (i32, i32) {
    %c0_i32 = arith.constant 0 : i32
    %c0_i32_0 = arith.constant 0 : i32
    %c0_i32_1 = arith.constant 0 : i32
    return %c0_i32, %c0_i32_0 : i32, i32
  }
  func.func @transform_1(%arg0: i32) -> (i32, i32, i32) {
    %c0_i32 = arith.constant 0 : i32
    %c0_i32_0 = arith.constant 0 : i32
    %c0_i32_1 = arith.constant 0 : i32
    return %arg0, %c0_i32, %c0_i32_0 : i32, i32, i32
  }
  func.func @transform_2(%arg0: i32) -> (i32, i32, i32) {
    %c0_i32 = arith.constant 0 : i32
    %c0_i32_0 = arith.constant 0 : i32
    %c0_i32_1 = arith.constant 0 : i32
    return %arg0, %c0_i32, %c0_i32_0 : i32, i32, i32
  }
}

module attributes {stable_mosaic.version = 11 : i64} {
  func.func @_conv_kernel(%arg0: i32, %arg1: memref<64x512xbf16, #tpu.memory_space<vmem>>, %arg2: memref<1x512x64xbf16, #tpu.memory_space<vmem>>, %arg3: memref<1x64x64xbf16, #tpu.memory_space<vmem>>) attributes {dimension_semantics = [#tpu.dimension_semantics<parallel>], iteration_bounds = array<i64: 2>, scalar_prefetch = 0 : i64, scratch_operands = 0 : i64, tpu.core_type = #tpu.core_type<tc>, window_params = [{pipeline_mode = #tpu.pipeline_mode<synchronous>, transform_indices = @transform_0, window_bounds = array<i64: 64, 512>}, {transform_indices = @transform_1, window_bounds = array<i64: 1, 512, 64>}, {transform_indices = @transform_2, window_bounds = array<i64: 1, 64, 64>}]} {
    %c0 = arith.constant 0 : index
    %c0_0 = arith.constant 0 : index
    %0 = vector.load %arg1[%c0, %c0_0] : memref<64x512xbf16, #tpu.memory_space<vmem>>, vector<64x512xbf16>
    %c0_1 = arith.constant 0 : index
    %c0_2 = arith.constant 0 : index
    %c0_3 = arith.constant 0 : index
    %1 = vector.load %arg2[%c0_1, %c0_2, %c0_3] : memref<1x512x64xbf16, #tpu.memory_space<vmem>>, vector<1x512x64xbf16>
    %2 = vector.shape_cast %1 : vector<1x512x64xbf16> to vector<512x64xbf16>
    %cst = arith.constant dense<0.000000e+00> : vector<64x64xf32>
    %3 = tpu.matmul %0, %2, %cst {dimension_numbers = #tpu.dot_dimension_numbers<[1], [0], [0], [1], [0, 0, 1, 1], [], []>} : vector<64x512xbf16>, vector<512x64xbf16>, vector<64x64xf32> -> vector<64x64xf32>
    %cst_4 = arith.constant dense<0.000000e+00> : vector<64xf32>
    %4 = vector.multi_reduction <add>, %3, %cst_4 [1] : vector<64x64xf32> to vector<64xf32>
    %5 = vector.shape_cast %4 : vector<64xf32> to vector<64x1xf32>
    %cst_5 = arith.constant 1.562500e-02 : f32
    %6 = vector.broadcast %cst_5 : f32 to vector<64x1xf32>
    %7 = arith.mulf %5, %6 : vector<64x1xf32>
    %8 = vector.broadcast %7 : vector<64x1xf32> to vector<64x64xf32>
    %9 = arith.subf %3, %8 : vector<64x64xf32>
    %10 = arith.mulf %9, %9 : vector<64x64xf32>
    %cst_6 = arith.constant dense<0.000000e+00> : vector<64xf32>
    %11 = vector.multi_reduction <add>, %10, %cst_6 [1] : vector<64x64xf32> to vector<64xf32>
    %12 = vector.shape_cast %11 : vector<64xf32> to vector<64x1xf32>
    %cst_7 = arith.constant 1.562500e-02 : f32
    %13 = vector.broadcast %cst_7 : f32 to vector<64x1xf32>
    %14 = arith.mulf %12, %13 : vector<64x1xf32>
    %cst_8 = arith.constant 9.99999974E-6 : f32
    %15 = vector.broadcast %cst_8 : f32 to vector<64x1xf32>
    %16 = arith.addf %14, %15 : vector<64x1xf32>
    %17 = math.rsqrt %16 : vector<64x1xf32>
    %18 = vector.broadcast %17 : vector<64x1xf32> to vector<64x64xf32>
    %19 = arith.mulf %9, %18 : vector<64x64xf32>
    %cst_9 = arith.constant 0.000000e+00 : f32
    %20 = vector.broadcast %cst_9 : f32 to vector<64x64xf32>
    %21 = arith.cmpf oge, %19, %20 : vector<64x64xf32>
    %cst_10 = arith.constant 2.000000e-01 : f32
    %22 = vector.broadcast %cst_10 : f32 to vector<64x64xf32>
    %23 = arith.mulf %22, %19 : vector<64x64xf32>
    %24 = arith.select %21, %19, %23 : vector<64x64xi1>, vector<64x64xf32>
    %25 = arith.truncf %24 : vector<64x64xf32> to vector<64x64xbf16>
    %c0_11 = arith.constant 0 : index
    %c0_12 = arith.constant 0 : index
    %c0_13 = arith.constant 0 : index
    %26 = vector.load %arg3[%c0_11, %c0_12, %c0_13] : memref<1x64x64xbf16, #tpu.memory_space<vmem>>, vector<1x64x64xbf16>
    %27 = vector.shape_cast %26 : vector<1x64x64xbf16> to vector<64x64xbf16>
    %28 = vector.shape_cast %25 : vector<64x64xbf16> to vector<1x64x64xbf16>
    tpu.vector_store %arg3[%c0_11, %c0_12, %c0_13], %28 {strides = array<i32>} : memref<1x64x64xbf16, #tpu.memory_space<vmem>>, vector<1x64x64xbf16>,
    return
  }
  func.func @transform_0(%arg0: i32) -> (i32, i32) {
    %c0_i32 = arith.constant 0 : i32
    %c0_i32_0 = arith.constant 0 : i32
    %c0_i32_1 = arith.constant 0 : i32
    return %c0_i32, %c0_i32_0 : i32, i32
  }
  func.func @transform_1(%arg0: i32) -> (i32, i32, i32) {
    %c0_i32 = arith.constant 0 : i32
    %c0_i32_0 = arith.constant 0 : i32
    %c0_i32_1 = arith.constant 0 : i32
    return %arg0, %c0_i32, %c0_i32_0 : i32, i32, i32
  }
  func.func @transform_2(%arg0: i32) -> (i32, i32, i32) {
    %c0_i32 = arith.constant 0 : i32
    %c0_i32_0 = arith.constant 0 : i32
    %c0_i32_1 = arith.constant 0 : i32
    return %arg0, %c0_i32, %c0_i32_0 : i32, i32, i32
  }
}

module attributes {stable_mosaic.version = 11 : i64} {
  func.func @_conv_final_kernel(%arg0: i32, %arg1: memref<128x1024xbf16, #tpu.memory_space<vmem>>, %arg2: memref<128x16xf32, #tpu.memory_space<vmem>>, %arg3: memref<1x1024x16xbf16, #tpu.memory_space<vmem>>, %arg4: memref<1x1x1xf32, #tpu.memory_space<vmem>>) attributes {dimension_semantics = [#tpu.dimension_semantics<parallel>], iteration_bounds = array<i64: 2>, scalar_prefetch = 0 : i64, scratch_operands = 0 : i64, tpu.core_type = #tpu.core_type<tc>, window_params = [{pipeline_mode = #tpu.pipeline_mode<synchronous>, transform_indices = @transform_0, window_bounds = array<i64: 128, 1024>}, {pipeline_mode = #tpu.pipeline_mode<synchronous>, transform_indices = @transform_1, window_bounds = array<i64: 128, 16>}, {transform_indices = @transform_2, window_bounds = array<i64: 1, 1024, 16>}, {transform_indices = @transform_3, window_bounds = array<i64: 1, 1, 1>}]} {
    %c0 = arith.constant 0 : index
    %c0_0 = arith.constant 0 : index
    %0 = vector.load %arg1[%c0, %c0_0] : memref<128x1024xbf16, #tpu.memory_space<vmem>>, vector<128x1024xbf16>
    %c0_1 = arith.constant 0 : index
    %c0_2 = arith.constant 0 : index
    %c0_3 = arith.constant 0 : index
    %1 = vector.load %arg3[%c0_1, %c0_2, %c0_3] : memref<1x1024x16xbf16, #tpu.memory_space<vmem>>, vector<1x1024x16xbf16>
    %2 = vector.shape_cast %1 : vector<1x1024x16xbf16> to vector<1024x16xbf16>
    %cst = arith.constant dense<0.000000e+00> : vector<128x16xf32>
    %3 = tpu.matmul %0, %2, %cst {dimension_numbers = #tpu.dot_dimension_numbers<[1], [0], [0], [1], [0, 0, 1, 1], [], []>} : vector<128x1024xbf16>, vector<1024x16xbf16>, vector<128x16xf32> -> vector<128x16xf32>
    %cst_4 = arith.constant dense<0.000000e+00> : vector<128xf32>
    %4 = vector.multi_reduction <add>, %3, %cst_4 [1] : vector<128x16xf32> to vector<128xf32>
    %5 = vector.shape_cast %4 : vector<128xf32> to vector<128x1xf32>
    %cst_5 = arith.constant 6.250000e-02 : f32
    %6 = vector.broadcast %cst_5 : f32 to vector<128x1xf32>
    %7 = arith.mulf %5, %6 : vector<128x1xf32>
    %8 = vector.broadcast %7 : vector<128x1xf32> to vector<128x16xf32>
    %9 = arith.subf %3, %8 : vector<128x16xf32>
    %10 = arith.mulf %9, %9 : vector<128x16xf32>
    %cst_6 = arith.constant dense<0.000000e+00> : vector<128xf32>
    %11 = vector.multi_reduction <add>, %10, %cst_6 [1] : vector<128x16xf32> to vector<128xf32>
    %12 = vector.shape_cast %11 : vector<128xf32> to vector<128x1xf32>
    %cst_7 = arith.constant 6.250000e-02 : f32
    %13 = vector.broadcast %cst_7 : f32 to vector<128x1xf32>
    %14 = arith.mulf %12, %13 : vector<128x1xf32>
    %cst_8 = arith.constant 9.99999974E-6 : f32
    %15 = vector.broadcast %cst_8 : f32 to vector<128x1xf32>
    %16 = arith.addf %14, %15 : vector<128x1xf32>
    %17 = math.rsqrt %16 : vector<128x1xf32>
    %18 = vector.broadcast %17 : vector<128x1xf32> to vector<128x16xf32>
    %19 = arith.mulf %9, %18 : vector<128x16xf32>
    %cst_9 = arith.constant 0.000000e+00 : f32
    %20 = vector.broadcast %cst_9 : f32 to vector<128x16xf32>
    %21 = arith.cmpf oge, %19, %20 : vector<128x16xf32>
    %cst_10 = arith.constant 2.000000e-01 : f32
    %22 = vector.broadcast %cst_10 : f32 to vector<128x16xf32>
    %23 = arith.mulf %22, %19 : vector<128x16xf32>
    %24 = arith.select %21, %19, %23 : vector<128x16xi1>, vector<128x16xf32>
    %c0_11 = arith.constant 0 : index
    %c0_12 = arith.constant 0 : index
    %25 = vector.load %arg2[%c0_11, %c0_12] : memref<128x16xf32, #tpu.memory_space<vmem>>, vector<128x16xf32>
    %26 = arith.mulf %24, %25 : vector<128x16xf32>
    %cst_13 = arith.constant dense<0.000000e+00> : vector<128xf32>
    %27 = vector.multi_reduction <add>, %26, %cst_13 [1] : vector<128x16xf32> to vector<128xf32>
    %28 = vector.shape_cast %27 : vector<128xf32> to vector<128x1xf32>
    %cst_14 = arith.constant dense<0.000000e+00> : vector<1xf32>
    %29 = vector.multi_reduction <add>, %28, %cst_14 [0] : vector<128x1xf32> to vector<1xf32>
    %30 = vector.shape_cast %29 : vector<1xf32> to vector<1x1xf32>
    %c0_15 = arith.constant 0 : index
    %c0_16 = arith.constant 0 : index
    %c0_17 = arith.constant 0 : index
    %31 = vector.load %arg4[%c0_15, %c0_16, %c0_17] : memref<1x1x1xf32, #tpu.memory_space<vmem>>, vector<1x1x1xf32>
    %32 = vector.shape_cast %31 : vector<1x1x1xf32> to vector<1x1xf32>
    %33 = vector.shape_cast %30 : vector<1x1xf32> to vector<1x1x1xf32>
    tpu.vector_store %arg4[%c0_15, %c0_16, %c0_17], %33 {strides = array<i32>} : memref<1x1x1xf32, #tpu.memory_space<vmem>>, vector<1x1x1xf32>,
    return
  }
  func.func @transform_0(%arg0: i32) -> (i32, i32) {
    %c0_i32 = arith.constant 0 : i32
    %c0_i32_0 = arith.constant 0 : i32
    %c0_i32_1 = arith.constant 0 : i32
    return %c0_i32, %c0_i32_0 : i32, i32
  }
  func.func @transform_1(%arg0: i32) -> (i32, i32) {
    %c0_i32 = arith.constant 0 : i32
    %c0_i32_0 = arith.constant 0 : i32
    %c0_i32_1 = arith.constant 0 : i32
    return %c0_i32, %c0_i32_0 : i32, i32
  }
  func.func @transform_2(%arg0: i32) -> (i32, i32, i32) {
    %c0_i32 = arith.constant 0 : i32
    %c0_i32_0 = arith.constant 0 : i32
    %c0_i32_1 = arith.constant 0 : i32
    return %arg0, %c0_i32, %c0_i32_0 : i32, i32, i32
  }
  func.func @transform_3(%arg0: i32) -> (i32, i32, i32) {
    %c0_i32 = arith.constant 0 : i32
    %c0_i32_0 = arith.constant 0 : i32
    %c0_i32_1 = arith.constant 0 : i32
    return %arg0, %c0_i32, %c0_i32_0 : i32, i32, i32
  }
}

</mosaic_0001>

<llo_original>
// kernel: discriminator_forward.6
$region0: #{discriminator_forward.6}
  #allocation0 [shape = 'u32[]', space=smem, size = 0x4, offset = 0x4, fixed_abs, tag = 'smem constant byte address 0x4 - core index']
  #allocation1 [shape = 'u32[72,128]{1,0:T(1,128)}', space=vmem, size = 0x9000, scoped, tag = 'internal scratch']
  %s0 = inlined_call_operand.vmem [shape: bf16[4,48], index: 0, kind: input, shape index: {}]
  %s1 = inlined_call_operand.vmem [shape: bf16[2,48,16384], index: 1, kind: input, shape index: {}]
  %s2 = inlined_call_operand.vmem [shape: bf16[2,4,16384], index: 2, kind: output, shape index: {}]
  %s3 = sld [smem:[#allocation0]]
  $region64: #{discriminator_forward.6} parent=0
    _
  %s5 = ssub.s32 1, %s3
  %s6 = scalar_select 0, %s5, %s3
  $region1: #{discriminator_forward.6} parent=0
    #allocation2 [shape = 'u8[786432]{0}', space=vmem, size = 0xc0000, scoped, tag = 'input window, operand 1']
    loop: start=0, step=1, limit=10
    $region2: #{discriminator_forward.6} parent=1 // loop_pre_header
      _
    $region3: #{discriminator_forward.6} parent=1 // loop_header
      %s8 = sphi 0, %s12
      %p9 = scmp.ge.s32.totalorder %s8, 10
      %s15 = sphi 0, %s27
      %s16 = sphi 0, %s23
      %s17 = sphi 0, %s15
      %s18 = sphi 0, %s16
      %s19 = sphi 0, %s17
      %s20 = sphi 0, %s18
      %s28 = sphi 0, %s28
      %s30 = sphi 0, %s28
      %s31 = sphi 0, %s30
      %s45 = sphi 0, %s31
      %s53 = sphi 0, %s55
      %s56 = sphi 0, %s53
      %s57 = sphi 0, %s56
      %s73 = sphi 0, %s57
      %s81 = sphi 0, %s83
      %s84 = sphi 0, %s81
      %s85 = sphi 0, %s84
      %s101 = sphi 0, %s85
    $region4: #{discriminator_forward.6} parent=1 // loop_header_branch
      %11 = sbr.rel (%p9) target = $region8
    $region5: #{discriminator_forward.6} parent=1 // loop_body
      %s13 = ssub.s32 %s8, 1
      %s14 = ssub.s32 %s8, 2
      %s21 = sadd.s32 1, %s16
      %p22 = scmp.ge.s32.totalorder %s21, 4
      %s23 = scalar_select %p22, 0, %s21
      %s24 = sadd.s32 1, %s15
      %s25 = scalar_select %p22, %s24, %s15
      %p26 = scmp.ge.s32.totalorder %s25, 2
      %s27 = scalar_select %p26, 0, %s25
      %s29 = sadd.s32 %s28, 1
      %p32 = scmp.eq.s32.totalorder %s8, 7
      %p33 = scmp.ne.s32.totalorder %s28, %s30
      %p34 = scmp.eq.s32.totalorder %s8, 0
      %p35 = por %p33, %p34
      %p36 = scmp.ne.s32.totalorder %s28, %s30
      %p37 = scmp.eq.s32.totalorder %s13, 7
      %p38 = por %p36, %p37
      %p39 = scmp.ne.s32.totalorder %s30, %s31
      %p40 = scmp.eq.s32.totalorder %s13, 0
      %p41 = por %p39, %p40
      %p42 = scmp.ne.s32.totalorder %s30, %s31
      %p43 = scmp.eq.s32.totalorder %s14, 7
      %p44 = por %p42, %p43
      %p46 = scmp.ne.s32.totalorder %s31, %s45
      %p47 = scmp.eq.s32.totalorder %s14, 0
      %p48 = por %p46, %p47
      %s49 = ssub.s32 %s15, %s27
      %s50 = ssub.s32 %s16, %s23
      %s51 = sor.u32 %s49, %s50
      %p52 = scmp.eq.s32.totalorder %s51, 0
      %s54 = sadd.s32 %s53, 1
      %s55 = scalar_select %p52, %s53, %s54
      %p58 = pneg %p52
      %p59 = scmp.eq.s32.totalorder %s8, 7
      %p60 = por %p58, %p59
      %p61 = scmp.ne.s32.totalorder %s53, %s56
      %p62 = scmp.eq.s32.totalorder %s8, 0
      %p63 = por %p61, %p62
      %p64 = scmp.ne.s32.totalorder %s53, %s56
      %p65 = scmp.eq.s32.totalorder %s13, 7
      %p66 = por %p64, %p65
      %p67 = scmp.ne.s32.totalorder %s56, %s57
      %p68 = scmp.eq.s32.totalorder %s13, 0
      %p69 = por %p67, %p68
      %p70 = scmp.ne.s32.totalorder %s56, %s57
      %p71 = scmp.eq.s32.totalorder %s14, 7
      %p72 = por %p70, %p71
      %p74 = scmp.ne.s32.totalorder %s57, %s73
      %p75 = scmp.eq.s32.totalorder %s14, 0
      %p76 = por %p74, %p75
      %s77 = ssub.s32 %s15, %s27
      %s78 = ssub.s32 %s16, %s23
      %s79 = sor.u32 %s77, %s78
      %p80 = scmp.eq.s32.totalorder %s79, 0
      %s82 = sadd.s32 %s81, 1
      %s83 = scalar_select %p80, %s81, %s82
      %p86 = pneg %p80
      %p87 = scmp.eq.s32.totalorder %s8, 7
      %p88 = por %p86, %p87
      %p89 = scmp.ne.s32.totalorder %s81, %s84
      %p90 = scmp.eq.s32.totalorder %s8, 0
      %p91 = por %p89, %p90
      %p92 = scmp.ne.s32.totalorder %s81, %s84
      %p93 = scmp.eq.s32.totalorder %s13, 7
      %p94 = por %p92, %p93
      %p95 = scmp.ne.s32.totalorder %s84, %s85
      %p96 = scmp.eq.s32.totalorder %s13, 0
      %p97 = por %p95, %p96
      %p98 = scmp.ne.s32.totalorder %s84, %s85
      %p99 = scmp.eq.s32.totalorder %s14, 7
      %p100 = por %p98, %p99
      %p102 = scmp.ne.s32.totalorder %s85, %s101
      %p103 = scmp.eq.s32.totalorder %s14, 0
      %p104 = por %p102, %p103
      %p105 = scmp.le.s32.totalorder 1, %s8
      %p106 = scmp.lt.s32.totalorder %s8, 9
      %p107 = pnand %p105, %p106
      %p108 = pneg %p107
      // Predicated region
      $region9: #{discriminator_forward.6} parent=5 // pred_check
        _
      $region10: #{discriminator_forward.6} parent=5 // pred_check_branch
        %110 = sbr.rel (%p107) target = $region12
      $region11: #{discriminator_forward.6} parent=5 // pred_region
        %s111 = ssub.s32 %s8, 1
        // Predicated region
        $region13: #{discriminator_forward.6} parent=11 // pred_check
          %p112 = pneg %p41
        $region14: #{discriminator_forward.6} parent=11 // pred_check_branch
          %114 = sbr.rel (%p112) target = $region16
        $region15: #{discriminator_forward.6} parent=11 // pred_region
          _
        $region16: #{discriminator_forward.6} parent=11 // pred_fallthru
          _
      $region12: #{discriminator_forward.6} parent=5 // pred_fallthru
        _
      %p115 = scmp.lt.s32.totalorder %s8, 8
      // Predicated region
      $region17: #{discriminator_forward.6} parent=5 // pred_check
        %p116 = pneg %p115
      $region18: #{discriminator_forward.6} parent=5 // pred_check_branch
        %118 = sbr.rel (%p116) target = $region20
      $region19: #{discriminator_forward.6} parent=5 // pred_region
        // Predicated region
        $region21: #{discriminator_forward.6} parent=19 // pred_check
          %p119 = pneg %p63
        $region22: #{discriminator_forward.6} parent=19 // pred_check_branch
          %121 = sbr.rel (%p119) target = $region24
        $region23: #{discriminator_forward.6} parent=19 // pred_region
          %s122 = sand.u32 %s53, 1
          %s123 = sand.u32 %s53, 1
          %s124 = smul.addr %s123, 768
          %s125 = scalar_lea.vmem [#allocation2], %s124
          %s126 = smul.u32 32, %s16
          %s127 = smul.addr %s15, 768
          %s128 = sadd.s32 %s126, %s127
          %s129 = smul.addr %s128, 4
          %s130 = scalar_lea.vmem %s1, %s129
          // Predicated region
          $region25: #{discriminator_forward.6} parent=23 // pred_check
            _
          $region26: #{discriminator_forward.6} parent=23 // pred_check_branch
            %132 = sbr.rel (0) target = $region28
          $region27: #{discriminator_forward.6} parent=23 // pred_region
            // Predicated region
            $region29: #{discriminator_forward.6} parent=27 // pred_check
              _
            $region30: #{discriminator_forward.6} parent=27 // pred_check_branch
              %134 = sbr.rel (0) target = $region32
            $region31: #{discriminator_forward.6} parent=27 // pred_region
              loop: start=0, step=1, limit=1
              $region33: #{discriminator_forward.6} parent=31 // loop_pre_header
                _
              $region34: #{discriminator_forward.6} parent=31 // loop_header
                %s136 = sphi 0, %s140
                %p137 = scmp.ge.s32.totalorder %s136, 1
                %s141 = sphi %s130, %s130
                %s142 = sphi %s125, %s125
              $region35: #{discriminator_forward.6} parent=31 // loop_header_branch
                %139 = sbr.rel (%p137) target = $region39
              $region36: #{discriminator_forward.6} parent=31 // loop_body
                %v143 = vld [vmem:[%s141] sm:$0xff]
                %144 = vst [vmem:[%s142] sm:$0xff] %v143
                %v145 = vld [vmem:[%s141 + $0x8] sm:$0xff]
                %146 = vst [vmem:[%s142 + $0x8] sm:$0xff] %v145
                %v147 = vld [vmem:[%s141 + $0x10] sm:$0xff]
                %148 = vst [vmem:[%s142 + $0x10] sm:$0xff] %v147
                %v149 = vld [vmem:[%s141 + $0x18] sm:$0xff]
                %150 = vst [vmem:[%s142 + $0x18] sm:$0xff] %v149
                %v151 = vld [vmem:[%s141 + $0x20] sm:$0xff]
                %152 = vst [vmem:[%s142 + $0x20] sm:$0xff] %v151
                %v153 = vld [vmem:[%s141 + $0x28] sm:$0xff]
                %154 = vst [vmem:[%s142 + $0x28] sm:$0xff] %v153
                %v155 = vld [vmem:[%s141 + $0x30] sm:$0xff]
                %156 = vst [vmem:[%s142 + $0x30] sm:$0xff] %v155
                %v157 = vld [vmem:[%s141 + $0x38] sm:$0xff]
                %158 = vst [vmem:[%s142 + $0x38] sm:$0xff] %v157
                %v159 = vld [vmem:[%s141 + $0x40] sm:$0xff]
                %160 = vst [vmem:[%s142 + $0x40] sm:$0xff] %v159
                %v161 = vld [vmem:[%s141 + $0x48] sm:$0xff]
                %162 = vst [vmem:[%s142 + $0x48] sm:$0xff] %v161
                %v163 = vld [vmem:[%s141 + $0x50] sm:$0xff]
                %164 = vst [vmem:[%s142 + $0x50] sm:$0xff] %v163
                %v165 = vld [vmem:[%s141 + $0x58] sm:$0xff]
                %166 = vst [vmem:[%s142 + $0x58] sm:$0xff] %v165
                %v167 = vld [vmem:[%s141 + $0x60] sm:$0xff]
                %168 = vst [vmem:[%s142 + $0x60] sm:$0xff] %v167
                %v169 = vld [vmem:[%s141 + $0x68] sm:$0xff]
                %170 = vst [vmem:[%s142 + $0x68] sm:$0xff] %v169
                %v171 = vld [vmem:[%s141 + $0x70] sm:$0xff]
                %172 = vst [vmem:[%s142 + $0x70] sm:$0xff] %v171
                %v173 = vld [vmem:[%s141 + $0x78] sm:$0xff]
                %174 = vst [vmem:[%s142 + $0x78] sm:$0xff] %v173
                %v175 = vld [vmem:[%s141 + $0x200] sm:$0xff]
                %176 = vst [vmem:[%s142 + $0x80] sm:$0xff] %v175
                %v177 = vld [vmem:[%s141 + $0x208] sm:$0xff]
                %178 = vst [vmem:[%s142 + $0x88] sm:$0xff] %v177
                %v179 = vld [vmem:[%s141 + $0x210] sm:$0xff]
                %180 = vst [vmem:[%s142 + $0x90] sm:$0xff] %v179
                %v181 = vld [vmem:[%s141 + $0x218] sm:$0xff]
                %182 = vst [vmem:[%s142 + $0x98] sm:$0xff] %v181
                %v183 = vld [vmem:[%s141 + $0x220] sm:$0xff]
                %184 = vst [vmem:[%s142 + $0xa0] sm:$0xff] %v183
                %v185 = vld [vmem:[%s141 + $0x228] sm:$0xff]
                %186 = vst [vmem:[%s142 + $0xa8] sm:$0xff] %v185
                %v187 = vld [vmem:[%s141 + $0x230] sm:$0xff]
                %188 = vst [vmem:[%s142 + $0xb0] sm:$0xff] %v187
                %v189 = vld [vmem:[%s141 + $0x238] sm:$0xff]
                %190 = vst [vmem:[%s142 + $0xb8] sm:$0xff] %v189
                %v191 = vld [vmem:[%s141 + $0x240] sm:$0xff]
                %192 = vst [vmem:[%s142 + $0xc0] sm:$0xff] %v191
                %v193 = vld [vmem:[%s141 + $0x248] sm:$0xff]
                %194 = vst [vmem:[%s142 + $0xc8] sm:$0xff] %v193
                %v195 = vld [vmem:[%s141 + $0x250] sm:$0xff]
                %196 = vst [vmem:[%s142 + $0xd0] sm:$0xff] %v195
                %v197 = vld [vmem:[%s141 + $0x258] sm:$0xff]
                %198 = vst [vmem:[%s142 + $0xd8] sm:$0xff] %v197
                %v199 = vld [vmem:[%s141 + $0x260] sm:$0xff]
                %200 = vst [vmem:[%s142 + $0xe0] sm:$0xff] %v199
                %v201 = vld [vmem:[%s141 + $0x268] sm:$0xff]
                %202 = vst [vmem:[%s142 + $0xe8] sm:$0xff] %v201
                %v203 = vld [vmem:[%s141 + $0x270] sm:$0xff]
                %204 = vst [vmem:[%s142 + $0xf0] sm:$0xff] %v203
                %v205 = vld [vmem:[%s141 + $0x278] sm:$0xff]
                %206 = vst [vmem:[%s142 + $0xf8] sm:$0xff] %v205
                %v207 = vld [vmem:[%s141 + $0x400] sm:$0xff]
                %208 = vst [vmem:[%s142 + $0x100] sm:$0xff] %v207
                %v209 = vld [vmem:[%s141 + $0x408] sm:$0xff]
                %210 = vst [vmem:[%s142 + $0x108] sm:$0xff] %v209
                %v211 = vld [vmem:[%s141 + $0x410] sm:$0xff]
                %212 = vst [vmem:[%s142 + $0x110] sm:$0xff] %v211
                %v213 = vld [vmem:[%s141 + $0x418] sm:$0xff]
                %214 = vst [vmem:[%s142 + $0x118] sm:$0xff] %v213
                %v215 = vld [vmem:[%s141 + $0x420] sm:$0xff]
                %216 = vst [vmem:[%s142 + $0x120] sm:$0xff] %v215
                %v217 = vld [vmem:[%s141 + $0x428] sm:$0xff]
                %218 = vst [vmem:[%s142 + $0x128] sm:$0xff] %v217
                %v219 = vld [vmem:[%s141 + $0x430] sm:$0xff]
                %220 = vst [vmem:[%s142 + $0x130] sm:$0xff] %v219
                %v221 = vld [vmem:[%s141 + $0x438] sm:$0xff]
                %222 = vst [vmem:[%s142 + $0x138] sm:$0xff] %v221
                %v223 = vld [vmem:[%s141 + $0x440] sm:$0xff]
                %224 = vst [vmem:[%s142 + $0x140] sm:$0xff] %v223
                %v225 = vld [vmem:[%s141 + $0x448] sm:$0xff]
                %226 = vst [vmem:[%s142 + $0x148] sm:$0xff] %v225
                %v227 = vld [vmem:[%s141 + $0x450] sm:$0xff]
                %228 = vst [vmem:[%s142 + $0x150] sm:$0xff] %v227
                %v229 = vld [vmem:[%s141 + $0x458] sm:$0xff]
                %230 = vst [vmem:[%s142 + $0x158] sm:$0xff] %v229
                %v231 = vld [vmem:[%s141 + $0x460] sm:$0xff]
                %232 = vst [vmem:[%s142 + $0x160] sm:$0xff] %v231
                %v233 = vld [vmem:[%s141 + $0x468] sm:$0xff]
                %234 = vst [vmem:[%s142 + $0x168] sm:$0xff] %v233
                %v235 = vld [vmem:[%s141 + $0x470] sm:$0xff]
                %236 = vst [vmem:[%s142 + $0x170] sm:$0xff] %v235
                %v237 = vld [vmem:[%s141 + $0x478] sm:$0xff]
                %238 = vst [vmem:[%s142 + $0x178] sm:$0xff] %v237
                %v239 = vld [vmem:[%s141 + $0x600] sm:$0xff]
                %240 = vst [vmem:[%s142 + $0x180] sm:$0xff] %v239
                %v241 = vld [vmem:[%s141 + $0x608] sm:$0xff]
                %242 = vst [vmem:[%s142 + $0x188] sm:$0xff] %v241
                %v243 = vld [vmem:[%s141 + $0x610] sm:$0xff]
                %244 = vst [vmem:[%s142 + $0x190] sm:$0xff] %v243
                %v245 = vld [vmem:[%s141 + $0x618] sm:$0xff]
                %246 = vst [vmem:[%s142 + $0x198] sm:$0xff] %v245
                %v247 = vld [vmem:[%s141 + $0x620] sm:$0xff]
                %248 = vst [vmem:[%s142 + $0x1a0] sm:$0xff] %v247
                %v249 = vld [vmem:[%s141 + $0x628] sm:$0xff]
                %250 = vst [vmem:[%s142 + $0x1a8] sm:$0xff] %v249
                %v251 = vld [vmem:[%s141 + $0x630] sm:$0xff]
                %252 = vst [vmem:[%s142 + $0x1b0] sm:$0xff] %v251
                %v253 = vld [vmem:[%s141 + $0x638] sm:$0xff]
                %254 = vst [vmem:[%s142 + $0x1b8] sm:$0xff] %v253
                %v255 = vld [vmem:[%s141 + $0x640] sm:$0xff]
                %256 = vst [vmem:[%s142 + $0x1c0] sm:$0xff] %v255
                %v257 = vld [vmem:[%s141 + $0x648] sm:$0xff]
                %258 = vst [vmem:[%s142 + $0x1c8] sm:$0xff] %v257
                %v259 = vld [vmem:[%s141 + $0x650] sm:$0xff]
                %260 = vst [vmem:[%s142 + $0x1d0] sm:$0xff] %v259
                %v261 = vld [vmem:[%s141 + $0x658] sm:$0xff]
                %262 = vst [vmem:[%s142 + $0x1d8] sm:$0xff] %v261
                %v263 = vld [vmem:[%s141 + $0x660] sm:$0xff]
                %264 = vst [vmem:[%s142 + $0x1e0] sm:$0xff] %v263
                %v265 = vld [vmem:[%s141 + $0x668] sm:$0xff]
                %266 = vst [vmem:[%s142 + $0x1e8] sm:$0xff] %v265
                %v267 = vld [vmem:[%s141 + $0x670] sm:$0xff]
                %268 = vst [vmem:[%s142 + $0x1f0] sm:$0xff] %v267
                %v269 = vld [vmem:[%s141 + $0x678] sm:$0xff]
                %270 = vst [vmem:[%s142 + $0x1f8] sm:$0xff] %v269
                %v271 = vld [vmem:[%s141 + $0x800] sm:$0xff]
                %272 = vst [vmem:[%s142 + $0x200] sm:$0xff] %v271
                %v273 = vld [vmem:[%s141 + $0x808] sm:$0xff]
                %274 = vst [vmem:[%s142 + $0x208] sm:$0xff] %v273
                %v275 = vld [vmem:[%s141 + $0x810] sm:$0xff]
                %276 = vst [vmem:[%s142 + $0x210] sm:$0xff] %v275
                %v277 = vld [vmem:[%s141 + $0x818] sm:$0xff]
                %278 = vst [vmem:[%s142 + $0x218] sm:$0xff] %v277
                %v279 = vld [vmem:[%s141 + $0x820] sm:$0xff]
                %280 = vst [vmem:[%s142 + $0x220] sm:$0xff] %v279
                %v281 = vld [vmem:[%s141 + $0x828] sm:$0xff]
                %282 = vst [vmem:[%s142 + $0x228] sm:$0xff] %v281
                %v283 = vld [vmem:[%s141 + $0x830] sm:$0xff]
                %284 = vst [vmem:[%s142 + $0x230] sm:$0xff] %v283
                %v285 = vld [vmem:[%s141 + $0x838] sm:$0xff]
                %286 = vst [vmem:[%s142 + $0x238] sm:$0xff] %v285
                %v287 = vld [vmem:[%s141 + $0x840] sm:$0xff]
                %288 = vst [vmem:[%s142 + $0x240] sm:$0xff] %v287
                %v289 = vld [vmem:[%s141 + $0x848] sm:$0xff]
                %290 = vst [vmem:[%s142 + $0x248] sm:$0xff] %v289
                %v291 = vld [vmem:[%s141 + $0x850] sm:$0xff]
                %292 = vst [vmem:[%s142 + $0x250] sm:$0xff] %v291
                %v293 = vld [vmem:[%s141 + $0x858] sm:$0xff]
                %294 = vst [vmem:[%s142 + $0x258] sm:$0xff] %v293
                %v295 = vld [vmem:[%s141 + $0x860] sm:$0xff]
                %296 = vst [vmem:[%s142 + $0x260] sm:$0xff] %v295
                %v297 = vld [vmem:[%s141 + $0x868] sm:$0xff]
                %298 = vst [vmem:[%s142 + $0x268] sm:$0xff] %v297
                %v299 = vld [vmem:[%s141 + $0x870] sm:$0xff]
                %300 = vst [vmem:[%s142 + $0x270] sm:$0xff] %v299
                %v301 = vld [vmem:[%s141 + $0x878] sm:$0xff]
                %302 = vst [vmem:[%s142 + $0x278] sm:$0xff] %v301
                %v303 = vld [vmem:[%s141 + $0xa00] sm:$0xff]
                %304 = vst [vmem:[%s142 + $0x280] sm:$0xff] %v303
                %v305 = vld [vmem:[%s141 + $0xa08] sm:$0xff]
                %306 = vst [vmem:[%s142 + $0x288] sm:$0xff] %v305
                %v307 = vld [vmem:[%s141 + $0xa10] sm:$0xff]
                %308 = vst [vmem:[%s142 + $0x290] sm:$0xff] %v307
                %v309 = vld [vmem:[%s141 + $0xa18] sm:$0xff]
                %310 = vst [vmem:[%s142 + $0x298] sm:$0xff] %v309
                %v311 = vld [vmem:[%s141 + $0xa20] sm:$0xff]
                %312 = vst [vmem:[%s142 + $0x2a0] sm:$0xff] %v311
                %v313 = vld [vmem:[%s141 + $0xa28] sm:$0xff]
                %314 = vst [vmem:[%s142 + $0x2a8] sm:$0xff] %v313
                %v315 = vld [vmem:[%s141 + $0xa30] sm:$0xff]
                %316 = vst [vmem:[%s142 + $0x2b0] sm:$0xff] %v315
                %v317 = vld [vmem:[%s141 + $0xa38] sm:$0xff]
                %318 = vst [vmem:[%s142 + $0x2b8] sm:$0xff] %v317
                %v319 = vld [vmem:[%s141 + $0xa40] sm:$0xff]
                %320 = vst [vmem:[%s142 + $0x2c0] sm:$0xff] %v319
                %v321 = vld [vmem:[%s141 + $0xa48] sm:$0xff]
                %322 = vst [vmem:[%s142 + $0x2c8] sm:$0xff] %v321
                %v323 = vld [vmem:[%s141 + $0xa50] sm:$0xff]
                %324 = vst [vmem:[%s142 + $0x2d0] sm:$0xff] %v323
                %v325 = vld [vmem:[%s141 + $0xa58] sm:$0xff]
                %326 = vst [vmem:[%s142 + $0x2d8] sm:$0xff] %v325
                %v327 = vld [vmem:[%s141 + $0xa60] sm:$0xff]
                %328 = vst [vmem:[%s142 + $0x2e0] sm:$0xff] %v327
                %v329 = vld [vmem:[%s141 + $0xa68] sm:$0xff]
                %330 = vst [vmem:[%s142 + $0x2e8] sm:$0xff] %v329
                %v331 = vld [vmem:[%s141 + $0xa70] sm:$0xff]
                %332 = vst [vmem:[%s142 + $0x2f0] sm:$0xff] %v331
                %v333 = vld [vmem:[%s141 + $0xa78] sm:$0xff]
                %334 = vst [vmem:[%s142 + $0x2f8] sm:$0xff] %v333
              $region37: #{discriminator_forward.6} parent=31 // loop_footer
                %s140 = sadd.s32 1, %s136
              $region38: #{discriminator_forward.6} parent=31 // loop_footer_branch
                %135 = sbr.rel target = $region34
              $region39: #{discriminator_forward.6} parent=31 // loop_exit
                _
            $region32: #{discriminator_forward.6} parent=27 // pred_fallthru
              _
            // Predicated region
            $region40: #{discriminator_forward.6} parent=27 // pred_check
              _
            $region41: #{discriminator_forward.6} parent=27 // pred_check_branch
              %336 = sbr.rel target = $region43
            $region42: #{discriminator_forward.6} parent=27 // pred_region
              _
            $region43: #{discriminator_forward.6} parent=27 // pred_fallthru
              _
          $region28: #{discriminator_forward.6} parent=23 // pred_fallthru
            _
          %337 = vnop
        $region24: #{discriminator_forward.6} parent=19 // pred_fallthru
          _
      $region20: #{discriminator_forward.6} parent=5 // pred_fallthru
        _
      %p338 = scmp.le.s32.totalorder 1, %s8
      %p339 = scmp.lt.s32.totalorder %s8, 9
      %p340 = pnand %p338, %p339
      %p341 = pneg %p340
      // Predicated region
      $region44: #{discriminator_forward.6} parent=5 // pred_check
        _
      $region45: #{discriminator_forward.6} parent=5 // pred_check_branch
        %343 = sbr.rel (%p340) target = $region47
      $region46: #{discriminator_forward.6} parent=5 // pred_region
        %s344 = ssub.s32 %s8, 1
        %s345 = sand.u32 %s56, 1
        %s346 = sand.u32 %s56, 1
        %s347 = smul.addr %s346, 768
        %s348 = scalar_lea.vmem [#allocation2], %s347
        // Predicated region
        $region48: #{discriminator_forward.6} parent=46 // pred_check
          %p349 = pneg %p69
        $region49: #{discriminator_forward.6} parent=46 // pred_check_branch
          %351 = sbr.rel (%p349) target = $region51
        $region50: #{discriminator_forward.6} parent=46 // pred_region
          _
        $region51: #{discriminator_forward.6} parent=46 // pred_fallthru
          _
        %p352 = pneg %p41
        %p353 = pneg %p38
        %s354 = sand.u32 %s56, 1
        %s355 = sand.u32 %s56, 1
        %s356 = smul.addr %s355, 768
        %s357 = scalar_lea.vmem [#allocation2], %s356
        %p358 = pneg %p69
        %p359 = pneg %p66
        %p360 = pneg %p97
        %p361 = pneg %p94
        %s362 = smul.u32 32, %s18
        %p363 = scmp.lt.s32.totalorder %s17, 1
        %s364 = scalar_select %p363, %s17, 1
        %p365 = scmp.lt.s32.totalorder %s362, 127
        %s366 = scalar_select %p365, %s362, 127
        %s367 = smul.addr %s364, 128
        %s368 = sadd.s32 %s366, %s367
        %s369 = smul.addr %s368, 2
        %s370 = scalar_lea.vmem %s2, %s369
        %s371 = smul.u32 32, %s18
        %s372 = smul.u32 32, %s18
        %p373 = scmp.lt.s32.totalorder %s17, 1
        %s374 = scalar_select %p373, %s17, 1
        %p375 = scmp.lt.s32.totalorder %s372, 127
        %s376 = scalar_select %p375, %s372, 127
        %s377 = smul.addr %s374, 128
        %s378 = sadd.s32 %s376, %s377
        %s379 = smul.addr %s378, 2
        %s380 = scalar_lea.vmem %s2, %s379
        %s381 = smul.u32 32, %s18
        %v383 = vld [vmem:[%s0] sm:$0x3]
        %v384 = vld [vmem:[%s348] sm:$0xff]
        %v385 = vld [vmem:[%s348 + $0x8] sm:$0xff]
        %v386 = vld [vmem:[%s348 + $0x10] sm:$0xff]
        %v387 = vld [vmem:[%s348 + $0x18] sm:$0xff]
        %v388 = vld [vmem:[%s348 + $0x20] sm:$0xff]
        %v389 = vld [vmem:[%s348 + $0x28] sm:$0xff]
        %v390 = vld [vmem:[%s348 + $0x30] sm:$0xff]
        %v391 = vld [vmem:[%s348 + $0x38] sm:$0xff]
        %v392 = vld [vmem:[%s348 + $0x40] sm:$0xff]
        %v393 = vld [vmem:[%s348 + $0x48] sm:$0xff]
        %v394 = vld [vmem:[%s348 + $0x50] sm:$0xff]
        %v395 = vld [vmem:[%s348 + $0x58] sm:$0xff]
        %v396 = vld [vmem:[%s348 + $0x60] sm:$0xff]
        %v397 = vld [vmem:[%s348 + $0x68] sm:$0xff]
        %v398 = vld [vmem:[%s348 + $0x70] sm:$0xff]
        %v399 = vld [vmem:[%s348 + $0x78] sm:$0xff]
        %v400 = vld [vmem:[%s348 + $0x80] sm:$0xff]
        %v401 = vld [vmem:[%s348 + $0x88] sm:$0xff]
        %v402 = vld [vmem:[%s348 + $0x90] sm:$0xff]
        %v403 = vld [vmem:[%s348 + $0x98] sm:$0xff]
        %v404 = vld [vmem:[%s348 + $0xa0] sm:$0xff]
        %v405 = vld [vmem:[%s348 + $0xa8] sm:$0xff]
        %v406 = vld [vmem:[%s348 + $0xb0] sm:$0xff]
        %v407 = vld [vmem:[%s348 + $0xb8] sm:$0xff]
        %v408 = vld [vmem:[%s348 + $0xc0] sm:$0xff]
        %v409 = vld [vmem:[%s348 + $0xc8] sm:$0xff]
        %v410 = vld [vmem:[%s348 + $0xd0] sm:$0xff]
        %v411 = vld [vmem:[%s348 + $0xd8] sm:$0xff]
        %v412 = vld [vmem:[%s348 + $0xe0] sm:$0xff]
        %v413 = vld [vmem:[%s348 + $0xe8] sm:$0xff]
        %v414 = vld [vmem:[%s348 + $0xf0] sm:$0xff]
        %v415 = vld [vmem:[%s348 + $0xf8] sm:$0xff]
        %v416 = vld [vmem:[%s348 + $0x100] sm:$0xff]
        %v417 = vld [vmem:[%s348 + $0x108] sm:$0xff]
        %v418 = vld [vmem:[%s348 + $0x110] sm:$0xff]
        %v419 = vld [vmem:[%s348 + $0x118] sm:$0xff]
        %v420 = vld [vmem:[%s348 + $0x120] sm:$0xff]
        %v421 = vld [vmem:[%s348 + $0x128] sm:$0xff]
        %v422 = vld [vmem:[%s348 + $0x130] sm:$0xff]
        %v423 = vld [vmem:[%s348 + $0x138] sm:$0xff]
        %v424 = vld [vmem:[%s348 + $0x140] sm:$0xff]
        %v425 = vld [vmem:[%s348 + $0x148] sm:$0xff]
        %v426 = vld [vmem:[%s348 + $0x150] sm:$0xff]
        %v427 = vld [vmem:[%s348 + $0x158] sm:$0xff]
        %v428 = vld [vmem:[%s348 + $0x160] sm:$0xff]
        %v429 = vld [vmem:[%s348 + $0x168] sm:$0xff]
        %v430 = vld [vmem:[%s348 + $0x170] sm:$0xff]
        %v431 = vld [vmem:[%s348 + $0x178] sm:$0xff]
        %v432 = vld [vmem:[%s348 + $0x180] sm:$0xff]
        %v433 = vld [vmem:[%s348 + $0x188] sm:$0xff]
        %v434 = vld [vmem:[%s348 + $0x190] sm:$0xff]
        %v435 = vld [vmem:[%s348 + $0x198] sm:$0xff]
        %v436 = vld [vmem:[%s348 + $0x1a0] sm:$0xff]
        %v437 = vld [vmem:[%s348 + $0x1a8] sm:$0xff]
        %v438 = vld [vmem:[%s348 + $0x1b0] sm:$0xff]
        %v439 = vld [vmem:[%s348 + $0x1b8] sm:$0xff]
        %v440 = vld [vmem:[%s348 + $0x1c0] sm:$0xff]
        %v441 = vld [vmem:[%s348 + $0x1c8] sm:$0xff]
        %v442 = vld [vmem:[%s348 + $0x1d0] sm:$0xff]
        %v443 = vld [vmem:[%s348 + $0x1d8] sm:$0xff]
        %v444 = vld [vmem:[%s348 + $0x1e0] sm:$0xff]
        %v445 = vld [vmem:[%s348 + $0x1e8] sm:$0xff]
        %v446 = vld [vmem:[%s348 + $0x1f0] sm:$0xff]
        %v447 = vld [vmem:[%s348 + $0x1f8] sm:$0xff]
        %v448 = vld [vmem:[%s348 + $0x200] sm:$0xff]
        %v449 = vld [vmem:[%s348 + $0x208] sm:$0xff]
        %v450 = vld [vmem:[%s348 + $0x210] sm:$0xff]
        %v451 = vld [vmem:[%s348 + $0x218] sm:$0xff]
        %v452 = vld [vmem:[%s348 + $0x220] sm:$0xff]
        %v453 = vld [vmem:[%s348 + $0x228] sm:$0xff]
        %v454 = vld [vmem:[%s348 + $0x230] sm:$0xff]
        %v455 = vld [vmem:[%s348 + $0x238] sm:$0xff]
        %v456 = vld [vmem:[%s348 + $0x240] sm:$0xff]
        %v457 = vld [vmem:[%s348 + $0x248] sm:$0xff]
        %v458 = vld [vmem:[%s348 + $0x250] sm:$0xff]
        %v459 = vld [vmem:[%s348 + $0x258] sm:$0xff]
        %v460 = vld [vmem:[%s348 + $0x260] sm:$0xff]
        %v461 = vld [vmem:[%s348 + $0x268] sm:$0xff]
        %v462 = vld [vmem:[%s348 + $0x270] sm:$0xff]
        %v463 = vld [vmem:[%s348 + $0x278] sm:$0xff]
        %v464 = vld [vmem:[%s348 + $0x280] sm:$0xff]
        %v465 = vld [vmem:[%s348 + $0x288] sm:$0xff]
        %v466 = vld [vmem:[%s348 + $0x290] sm:$0xff]
        %v467 = vld [vmem:[%s348 + $0x298] sm:$0xff]
        %v468 = vld [vmem:[%s348 + $0x2a0] sm:$0xff]
        %v469 = vld [vmem:[%s348 + $0x2a8] sm:$0xff]
        %v470 = vld [vmem:[%s348 + $0x2b0] sm:$0xff]
        %v471 = vld [vmem:[%s348 + $0x2b8] sm:$0xff]
        %v472 = vld [vmem:[%s348 + $0x2c0] sm:$0xff]
        %v473 = vld [vmem:[%s348 + $0x2c8] sm:$0xff]
        %v474 = vld [vmem:[%s348 + $0x2d0] sm:$0xff]
        %v475 = vld [vmem:[%s348 + $0x2d8] sm:$0xff]
        %v476 = vld [vmem:[%s348 + $0x2e0] sm:$0xff]
        %v477 = vld [vmem:[%s348 + $0x2e8] sm:$0xff]
        %v478 = vld [vmem:[%s348 + $0x2f0] sm:$0xff]
        %v479 = vld [vmem:[%s348 + $0x2f8] sm:$0xff]
        %v576 = vunpack.c.l.b16 %v384
        %v577 = vunpack.c.h.b16 %v384
        %v578 = vunpack.c.l.b16 %v385
        %v579 = vunpack.c.h.b16 %v385
        %v580 = vunpack.c.l.b16 %v386
        %v581 = vunpack.c.h.b16 %v386
        %v582 = vunpack.c.l.b16 %v387
        %v583 = vunpack.c.h.b16 %v387
        %v584 = vunpack.c.l.b16 %v388
        %v585 = vunpack.c.h.b16 %v388
        %v586 = vunpack.c.l.b16 %v389
        %v587 = vunpack.c.h.b16 %v389
        %v588 = vunpack.c.l.b16 %v390
        %v589 = vunpack.c.h.b16 %v390
        %v590 = vunpack.c.l.b16 %v391
        %v591 = vunpack.c.h.b16 %v391
        %v592 = vunpack.c.l.b16 %v392
        %v593 = vunpack.c.h.b16 %v392
        %v594 = vunpack.c.l.b16 %v393
        %v595 = vunpack.c.h.b16 %v393
        %v596 = vunpack.c.l.b16 %v394
        %v597 = vunpack.c.h.b16 %v394
        %v598 = vunpack.c.l.b16 %v395
        %v599 = vunpack.c.h.b16 %v395
        %v600 = vunpack.c.l.b16 %v396
        %v601 = vunpack.c.h.b16 %v396
        %v602 = vunpack.c.l.b16 %v397
        %v603 = vunpack.c.h.b16 %v397
        %v604 = vunpack.c.l.b16 %v398
        %v605 = vunpack.c.h.b16 %v398
        %v606 = vunpack.c.l.b16 %v399
        %v607 = vunpack.c.h.b16 %v399
        %v608 = vunpack.c.l.b16 %v400
        %v609 = vunpack.c.h.b16 %v400
        %v610 = vunpack.c.l.b16 %v401
        %v611 = vunpack.c.h.b16 %v401
        %v612 = vunpack.c.l.b16 %v402
        %v613 = vunpack.c.h.b16 %v402
        %v614 = vunpack.c.l.b16 %v403
        %v615 = vunpack.c.h.b16 %v403
        %v616 = vunpack.c.l.b16 %v404
        %v617 = vunpack.c.h.b16 %v404
        %v618 = vunpack.c.l.b16 %v405
        %v619 = vunpack.c.h.b16 %v405
        %v620 = vunpack.c.l.b16 %v406
        %v621 = vunpack.c.h.b16 %v406
        %v622 = vunpack.c.l.b16 %v407
        %v623 = vunpack.c.h.b16 %v407
        %v624 = vunpack.c.l.b16 %v408
        %v625 = vunpack.c.h.b16 %v408
        %v626 = vunpack.c.l.b16 %v409
        %v627 = vunpack.c.h.b16 %v409
        %v628 = vunpack.c.l.b16 %v410
        %v629 = vunpack.c.h.b16 %v410
        %v630 = vunpack.c.l.b16 %v411
        %v631 = vunpack.c.h.b16 %v411
        %v632 = vunpack.c.l.b16 %v412
        %v633 = vunpack.c.h.b16 %v412
        %v634 = vunpack.c.l.b16 %v413
        %v635 = vunpack.c.h.b16 %v413
        %v636 = vunpack.c.l.b16 %v414
        %v637 = vunpack.c.h.b16 %v414
        %v638 = vunpack.c.l.b16 %v415
        %v639 = vunpack.c.h.b16 %v415
        %v640 = vunpack.c.l.b16 %v416
        %v641 = vunpack.c.h.b16 %v416
        %v642 = vunpack.c.l.b16 %v417
        %v643 = vunpack.c.h.b16 %v417
        %v644 = vunpack.c.l.b16 %v418
        %v645 = vunpack.c.h.b16 %v418
        %v646 = vunpack.c.l.b16 %v419
        %v647 = vunpack.c.h.b16 %v419
        %v648 = vunpack.c.l.b16 %v420
        %v649 = vunpack.c.h.b16 %v420
        %v650 = vunpack.c.l.b16 %v421
        %v651 = vunpack.c.h.b16 %v421
        %v652 = vunpack.c.l.b16 %v422
        %v653 = vunpack.c.h.b16 %v422
        %v654 = vunpack.c.l.b16 %v423
        %v655 = vunpack.c.h.b16 %v423
        %v656 = vunpack.c.l.b16 %v424
        %v657 = vunpack.c.h.b16 %v424
        %v658 = vunpack.c.l.b16 %v425
        %v659 = vunpack.c.h.b16 %v425
        %v660 = vunpack.c.l.b16 %v426
        %v661 = vunpack.c.h.b16 %v426
        %v662 = vunpack.c.l.b16 %v427
        %v663 = vunpack.c.h.b16 %v427
        %v664 = vunpack.c.l.b16 %v428
        %v665 = vunpack.c.h.b16 %v428
        %v666 = vunpack.c.l.b16 %v429
        %v667 = vunpack.c.h.b16 %v429
        %v668 = vunpack.c.l.b16 %v430
        %v669 = vunpack.c.h.b16 %v430
        %v670 = vunpack.c.l.b16 %v431
        %v671 = vunpack.c.h.b16 %v431
        %v672 = vunpack.c.l.b16 %v432
        %v673 = vunpack.c.h.b16 %v432
        %v674 = vunpack.c.l.b16 %v433
        %v675 = vunpack.c.h.b16 %v433
        %v676 = vunpack.c.l.b16 %v434
        %v677 = vunpack.c.h.b16 %v434
        %v678 = vunpack.c.l.b16 %v435
        %v679 = vunpack.c.h.b16 %v435
        %v680 = vunpack.c.l.b16 %v436
        %v681 = vunpack.c.h.b16 %v436
        %v682 = vunpack.c.l.b16 %v437
        %v683 = vunpack.c.h.b16 %v437
        %v684 = vunpack.c.l.b16 %v438
        %v685 = vunpack.c.h.b16 %v438
        %v686 = vunpack.c.l.b16 %v439
        %v687 = vunpack.c.h.b16 %v439
        %v688 = vunpack.c.l.b16 %v440
        %v689 = vunpack.c.h.b16 %v440
        %v690 = vunpack.c.l.b16 %v441
        %v691 = vunpack.c.h.b16 %v441
        %v692 = vunpack.c.l.b16 %v442
        %v693 = vunpack.c.h.b16 %v442
        %v694 = vunpack.c.l.b16 %v443
        %v695 = vunpack.c.h.b16 %v443
        %v696 = vunpack.c.l.b16 %v444
        %v697 = vunpack.c.h.b16 %v444
        %v698 = vunpack.c.l.b16 %v445
        %v699 = vunpack.c.h.b16 %v445
        %v700 = vunpack.c.l.b16 %v446
        %v701 = vunpack.c.h.b16 %v446
        %v702 = vunpack.c.l.b16 %v447
        %v703 = vunpack.c.h.b16 %v447
        %v704 = vunpack.c.l.b16 %v448
        %v705 = vunpack.c.h.b16 %v448
        %v706 = vunpack.c.l.b16 %v449
        %v707 = vunpack.c.h.b16 %v449
        %v708 = vunpack.c.l.b16 %v450
        %v709 = vunpack.c.h.b16 %v450
        %v710 = vunpack.c.l.b16 %v451
        %v711 = vunpack.c.h.b16 %v451
        %v712 = vunpack.c.l.b16 %v452
        %v713 = vunpack.c.h.b16 %v452
        %v714 = vunpack.c.l.b16 %v453
        %v715 = vunpack.c.h.b16 %v453
        %v716 = vunpack.c.l.b16 %v454
        %v717 = vunpack.c.h.b16 %v454
        %v718 = vunpack.c.l.b16 %v455
        %v719 = vunpack.c.h.b16 %v455
        %v720 = vunpack.c.l.b16 %v456
        %v721 = vunpack.c.h.b16 %v456
        %v722 = vunpack.c.l.b16 %v457
        %v723 = vunpack.c.h.b16 %v457
        %v724 = vunpack.c.l.b16 %v458
        %v725 = vunpack.c.h.b16 %v458
        %v726 = vunpack.c.l.b16 %v459
        %v727 = vunpack.c.h.b16 %v459
        %v728 = vunpack.c.l.b16 %v460
        %v729 = vunpack.c.h.b16 %v460
        %v730 = vunpack.c.l.b16 %v461
        %v731 = vunpack.c.h.b16 %v461
        %v732 = vunpack.c.l.b16 %v462
        %v733 = vunpack.c.h.b16 %v462
        %v734 = vunpack.c.l.b16 %v463
        %v735 = vunpack.c.h.b16 %v463
        %v736 = vunpack.c.l.b16 %v464
        %v737 = vunpack.c.h.b16 %v464
        %v738 = vunpack.c.l.b16 %v465
        %v739 = vunpack.c.h.b16 %v465
        %v740 = vunpack.c.l.b16 %v466
        %v741 = vunpack.c.h.b16 %v466
        %v742 = vunpack.c.l.b16 %v467
        %v743 = vunpack.c.h.b16 %v467
        %v744 = vunpack.c.l.b16 %v468
        %v745 = vunpack.c.h.b16 %v468
        %v746 = vunpack.c.l.b16 %v469
        %v747 = vunpack.c.h.b16 %v469
        %v748 = vunpack.c.l.b16 %v470
        %v749 = vunpack.c.h.b16 %v470
        %v750 = vunpack.c.l.b16 %v471
        %v751 = vunpack.c.h.b16 %v471
        %v752 = vunpack.c.l.b16 %v472
        %v753 = vunpack.c.h.b16 %v472
        %v754 = vunpack.c.l.b16 %v473
        %v755 = vunpack.c.h.b16 %v473
        %v756 = vunpack.c.l.b16 %v474
        %v757 = vunpack.c.h.b16 %v474
        %v758 = vunpack.c.l.b16 %v475
        %v759 = vunpack.c.h.b16 %v475
        %v760 = vunpack.c.l.b16 %v476
        %v761 = vunpack.c.h.b16 %v476
        %v762 = vunpack.c.l.b16 %v477
        %v763 = vunpack.c.h.b16 %v477
        %v764 = vunpack.c.l.b16 %v478
        %v765 = vunpack.c.h.b16 %v478
        %v766 = vunpack.c.l.b16 %v479
        %v767 = vunpack.c.h.b16 %v479
        %v768 = vpack.c.b16 %v608, %v576
        %v769 = vpack.c.b16 %v609, %v577
        %v770 = vpack.c.b16 %v610, %v578
        %v771 = vpack.c.b16 %v611, %v579
        %v772 = vpack.c.b16 %v612, %v580
        %v773 = vpack.c.b16 %v613, %v581
        %v774 = vpack.c.b16 %v614, %v582
        %v775 = vpack.c.b16 %v615, %v583
        %v776 = vpack.c.b16 %v616, %v584
        %v777 = vpack.c.b16 %v617, %v585
        %v778 = vpack.c.b16 %v618, %v586
        %v779 = vpack.c.b16 %v619, %v587
        %v780 = vpack.c.b16 %v620, %v588
        %v781 = vpack.c.b16 %v621, %v589
        %v782 = vpack.c.b16 %v622, %v590
        %v783 = vpack.c.b16 %v623, %v591
        %v784 = vpack.c.b16 %v624, %v592
        %v785 = vpack.c.b16 %v625, %v593
        %v786 = vpack.c.b16 %v626, %v594
        %v787 = vpack.c.b16 %v627, %v595
        %v788 = vpack.c.b16 %v628, %v596
        %v789 = vpack.c.b16 %v629, %v597
        %v790 = vpack.c.b16 %v630, %v598
        %v791 = vpack.c.b16 %v631, %v599
        %v792 = vpack.c.b16 %v632, %v600
        %v793 = vpack.c.b16 %v633, %v601
        %v794 = vpack.c.b16 %v634, %v602
        %v795 = vpack.c.b16 %v635, %v603
        %v796 = vpack.c.b16 %v636, %v604
        %v797 = vpack.c.b16 %v637, %v605
        %v798 = vpack.c.b16 %v638, %v606
        %v799 = vpack.c.b16 %v639, %v607
        %v800 = vpack.c.b16 %v672, %v640
        %v801 = vpack.c.b16 %v673, %v641
        %v802 = vpack.c.b16 %v674, %v642
        %v803 = vpack.c.b16 %v675, %v643
        %v804 = vpack.c.b16 %v676, %v644
        %v805 = vpack.c.b16 %v677, %v645
        %v806 = vpack.c.b16 %v678, %v646
        %v807 = vpack.c.b16 %v679, %v647
        %v808 = vpack.c.b16 %v680, %v648
        %v809 = vpack.c.b16 %v681, %v649
        %v810 = vpack.c.b16 %v682, %v650
        %v811 = vpack.c.b16 %v683, %v651
        %v812 = vpack.c.b16 %v684, %v652
        %v813 = vpack.c.b16 %v685, %v653
        %v814 = vpack.c.b16 %v686, %v654
        %v815 = vpack.c.b16 %v687, %v655
        %v816 = vpack.c.b16 %v688, %v656
        %v817 = vpack.c.b16 %v689, %v657
        %v818 = vpack.c.b16 %v690, %v658
        %v819 = vpack.c.b16 %v691, %v659
        %v820 = vpack.c.b16 %v692, %v660
        %v821 = vpack.c.b16 %v693, %v661
        %v822 = vpack.c.b16 %v694, %v662
        %v823 = vpack.c.b16 %v695, %v663
        %v824 = vpack.c.b16 %v696, %v664
        %v825 = vpack.c.b16 %v697, %v665
        %v826 = vpack.c.b16 %v698, %v666
        %v827 = vpack.c.b16 %v699, %v667
        %v828 = vpack.c.b16 %v700, %v668
        %v829 = vpack.c.b16 %v701, %v669
        %v830 = vpack.c.b16 %v702, %v670
        %v831 = vpack.c.b16 %v703, %v671
        %v832 = vpack.c.b16 %v736, %v704
        %v833 = vpack.c.b16 %v737, %v705
        %v834 = vpack.c.b16 %v738, %v706
        %v835 = vpack.c.b16 %v739, %v707
        %v836 = vpack.c.b16 %v740, %v708
        %v837 = vpack.c.b16 %v741, %v709
        %v838 = vpack.c.b16 %v742, %v710
        %v839 = vpack.c.b16 %v743, %v711
        %v840 = vpack.c.b16 %v744, %v712
        %v841 = vpack.c.b16 %v745, %v713
        %v842 = vpack.c.b16 %v746, %v714
        %v843 = vpack.c.b16 %v747, %v715
        %v844 = vpack.c.b16 %v748, %v716
        %v845 = vpack.c.b16 %v749, %v717
        %v846 = vpack.c.b16 %v750, %v718
        %v847 = vpack.c.b16 %v751, %v719
        %v848 = vpack.c.b16 %v752, %v720
        %v849 = vpack.c.b16 %v753, %v721
        %v850 = vpack.c.b16 %v754, %v722
        %v851 = vpack.c.b16 %v755, %v723
        %v852 = vpack.c.b16 %v756, %v724
        %v853 = vpack.c.b16 %v757, %v725
        %v854 = vpack.c.b16 %v758, %v726
        %v855 = vpack.c.b16 %v759, %v727
        %v856 = vpack.c.b16 %v760, %v728
        %v857 = vpack.c.b16 %v761, %v729
        %v858 = vpack.c.b16 %v762, %v730
        %v859 = vpack.c.b16 %v763, %v731
        %v860 = vpack.c.b16 %v764, %v732
        %v861 = vpack.c.b16 %v765, %v733
        %v862 = vpack.c.b16 %v766, %v734
        %v863 = vpack.c.b16 %v767, %v735
        %vm960 = vcmask 392192
        %v962 = vsel %vm960, %v383, 0
        %964 = vmatpush.bf16.msra.mxu0 0
        %965 = vmatpush.bf16.msra.mxu0 0
        %966 = vmatpush.bf16.msra.mxu0 0
        %967 = vmatpush.bf16.msra.mxu0 0
        %968 = vmatpush.bf16.msra.mxu0 0
        %969 = vmatpush.bf16.msra.mxu0 %v832
        %970 = vmatpush.bf16.msra.mxu0 %v800
        %971 = vmatpush.bf16.msra.mxu0 %v768
        %972 = vmatmul.bf16.gmra.mxu0 %v962
        %v973 = vpop.f32.mrf.mxu0
        %v974 = vadd.f32 0.0, %v973
        %v975 = vpop.f32.mrf.mxu0
        %976 = vdwg.mxu0
        %977 = vmatpush.bf16.msra.mxu0 0
        %978 = vmatpush.bf16.msra.mxu0 0
        %979 = vmatpush.bf16.msra.mxu0 0
        %980 = vmatpush.bf16.msra.mxu0 0
        %981 = vmatpush.bf16.msra.mxu0 0
        %982 = vmatpush.bf16.msra.mxu0 %v833
        %983 = vmatpush.bf16.msra.mxu0 %v801
        %984 = vmatpush.bf16.msra.mxu0 %v769
        %985 = vmatmul.bf16.gmra.mxu0 %v962
        %v986 = vpop.f32.mrf.mxu0
        %v987 = vadd.f32 0.0, %v986
        %v988 = vpop.f32.mrf.mxu0
        %989 = vdwg.mxu0
        %990 = vmatpush.bf16.msra.mxu0 0
        %991 = vmatpush.bf16.msra.mxu0 0
        %992 = vmatpush.bf16.msra.mxu0 0
        %993 = vmatpush.bf16.msra.mxu0 0
        %994 = vmatpush.bf16.msra.mxu0 0
        %995 = vmatpush.bf16.msra.mxu0 %v834
        %996 = vmatpush.bf16.msra.mxu0 %v802
        %997 = vmatpush.bf16.msra.mxu0 %v770
        %998 = vmatmul.bf16.gmra.mxu0 %v962
        %v999 = vpop.f32.mrf.mxu0
        %v1000 = vadd.f32 0.0, %v999
        %v1001 = vpop.f32.mrf.mxu0
        %1002 = vdwg.mxu0
        %1003 = vmatpush.bf16.msra.mxu0 0
        %1004 = vmatpush.bf16.msra.mxu0 0
        %1005 = vmatpush.bf16.msra.mxu0 0
        %1006 = vmatpush.bf16.msra.mxu0 0
        %1007 = vmatpush.bf16.msra.mxu0 0
        %1008 = vmatpush.bf16.msra.mxu0 %v835
        %1009 = vmatpush.bf16.msra.mxu0 %v803
        %1010 = vmatpush.bf16.msra.mxu0 %v771
        %1011 = vmatmul.bf16.gmra.mxu0 %v962
        %v1012 = vpop.f32.mrf.mxu0
        %v1013 = vadd.f32 0.0, %v1012
        %v1014 = vpop.f32.mrf.mxu0
        %1015 = vdwg.mxu0
        %1016 = vmatpush.bf16.msra.mxu0 0
        %1017 = vmatpush.bf16.msra.mxu0 0
        %1018 = vmatpush.bf16.msra.mxu0 0
        %1019 = vmatpush.bf16.msra.mxu0 0
        %1020 = vmatpush.bf16.msra.mxu0 0
        %1021 = vmatpush.bf16.msra.mxu0 %v836
        %1022 = vmatpush.bf16.msra.mxu0 %v804
        %1023 = vmatpush.bf16.msra.mxu0 %v772
        %1024 = vmatmul.bf16.gmra.mxu0 %v962
        %v1025 = vpop.f32.mrf.mxu0
        %v1026 = vadd.f32 0.0, %v1025
        %v1027 = vpop.f32.mrf.mxu0
        %1028 = vdwg.mxu0
        %1029 = vmatpush.bf16.msra.mxu0 0
        %1030 = vmatpush.bf16.msra.mxu0 0
        %1031 = vmatpush.bf16.msra.mxu0 0
        %1032 = vmatpush.bf16.msra.mxu0 0
        %1033 = vmatpush.bf16.msra.mxu0 0
        %1034 = vmatpush.bf16.msra.mxu0 %v837
        %1035 = vmatpush.bf16.msra.mxu0 %v805
        %1036 = vmatpush.bf16.msra.mxu0 %v773
        %1037 = vmatmul.bf16.gmra.mxu0 %v962
        %v1038 = vpop.f32.mrf.mxu0
        %v1039 = vadd.f32 0.0, %v1038
        %v1040 = vpop.f32.mrf.mxu0
        %1041 = vdwg.mxu0
        %1042 = vmatpush.bf16.msra.mxu0 0
        %1043 = vmatpush.bf16.msra.mxu0 0
        %1044 = vmatpush.bf16.msra.mxu0 0
        %1045 = vmatpush.bf16.msra.mxu0 0
        %1046 = vmatpush.bf16.msra.mxu0 0
        %1047 = vmatpush.bf16.msra.mxu0 %v838
        %1048 = vmatpush.bf16.msra.mxu0 %v806
        %1049 = vmatpush.bf16.msra.mxu0 %v774
        %1050 = vmatmul.bf16.gmra.mxu0 %v962
        %v1051 = vpop.f32.mrf.mxu0
        %v1052 = vadd.f32 0.0, %v1051
        %v1053 = vpop.f32.mrf.mxu0
        %1054 = vdwg.mxu0
        %1055 = vmatpush.bf16.msra.mxu0 0
        %1056 = vmatpush.bf16.msra.mxu0 0
        %1057 = vmatpush.bf16.msra.mxu0 0
        %1058 = vmatpush.bf16.msra.mxu0 0
        %1059 = vmatpush.bf16.msra.mxu0 0
        %1060 = vmatpush.bf16.msra.mxu0 %v839
        %1061 = vmatpush.bf16.msra.mxu0 %v807
        %1062 = vmatpush.bf16.msra.mxu0 %v775
        %1063 = vmatmul.bf16.gmra.mxu0 %v962
        %v1064 = vpop.f32.mrf.mxu0
        %v1065 = vadd.f32 0.0, %v1064
        %v1066 = vpop.f32.mrf.mxu0
        %1067 = vdwg.mxu0
        %1068 = vmatpush.bf16.msra.mxu0 0
        %1069 = vmatpush.bf16.msra.mxu0 0
        %1070 = vmatpush.bf16.msra.mxu0 0
        %1071 = vmatpush.bf16.msra.mxu0 0
        %1072 = vmatpush.bf16.msra.mxu0 0
        %1073 = vmatpush.bf16.msra.mxu0 %v840
        %1074 = vmatpush.bf16.msra.mxu0 %v808
        %1075 = vmatpush.bf16.msra.mxu0 %v776
        %1076 = vmatmul.bf16.gmra.mxu0 %v962
        %v1077 = vpop.f32.mrf.mxu0
        %v1078 = vadd.f32 0.0, %v1077
        %v1079 = vpop.f32.mrf.mxu0
        %1080 = vdwg.mxu0
        %1081 = vmatpush.bf16.msra.mxu0 0
        %1082 = vmatpush.bf16.msra.mxu0 0
        %1083 = vmatpush.bf16.msra.mxu0 0
        %1084 = vmatpush.bf16.msra.mxu0 0
        %1085 = vmatpush.bf16.msra.mxu0 0
        %1086 = vmatpush.bf16.msra.mxu0 %v841
        %1087 = vmatpush.bf16.msra.mxu0 %v809
        %1088 = vmatpush.bf16.msra.mxu0 %v777
        %1089 = vmatmul.bf16.gmra.mxu0 %v962
        %v1090 = vpop.f32.mrf.mxu0
        %v1091 = vadd.f32 0.0, %v1090
        %v1092 = vpop.f32.mrf.mxu0
        %1093 = vdwg.mxu0
        %1094 = vmatpush.bf16.msra.mxu0 0
        %1095 = vmatpush.bf16.msra.mxu0 0
        %1096 = vmatpush.bf16.msra.mxu0 0
        %1097 = vmatpush.bf16.msra.mxu0 0
        %1098 = vmatpush.bf16.msra.mxu0 0
        %1099 = vmatpush.bf16.msra.mxu0 %v842
        %1100 = vmatpush.bf16.msra.mxu0 %v810
        %1101 = vmatpush.bf16.msra.mxu0 %v778
        %1102 = vmatmul.bf16.gmra.mxu0 %v962
        %v1103 = vpop.f32.mrf.mxu0
        %v1104 = vadd.f32 0.0, %v1103
        %v1105 = vpop.f32.mrf.mxu0
        %1106 = vdwg.mxu0
        %1107 = vmatpush.bf16.msra.mxu0 0
        %1108 = vmatpush.bf16.msra.mxu0 0
        %1109 = vmatpush.bf16.msra.mxu0 0
        %1110 = vmatpush.bf16.msra.mxu0 0
        %1111 = vmatpush.bf16.msra.mxu0 0
        %1112 = vmatpush.bf16.msra.mxu0 %v843
        %1113 = vmatpush.bf16.msra.mxu0 %v811
        %1114 = vmatpush.bf16.msra.mxu0 %v779
        %1115 = vmatmul.bf16.gmra.mxu0 %v962
        %v1116 = vpop.f32.mrf.mxu0
        %v1117 = vadd.f32 0.0, %v1116
        %v1118 = vpop.f32.mrf.mxu0
        %1119 = vdwg.mxu0
        %1120 = vmatpush.bf16.msra.mxu0 0
        %1121 = vmatpush.bf16.msra.mxu0 0
        %1122 = vmatpush.bf16.msra.mxu0 0
        %1123 = vmatpush.bf16.msra.mxu0 0
        %1124 = vmatpush.bf16.msra.mxu0 0
        %1125 = vmatpush.bf16.msra.mxu0 %v844
        %1126 = vmatpush.bf16.msra.mxu0 %v812
        %1127 = vmatpush.bf16.msra.mxu0 %v780
        %1128 = vmatmul.bf16.gmra.mxu0 %v962
        %v1129 = vpop.f32.mrf.mxu0
        %v1130 = vadd.f32 0.0, %v1129
        %v1131 = vpop.f32.mrf.mxu0
        %1132 = vdwg.mxu0
        %1133 = vmatpush.bf16.msra.mxu0 0
        %1134 = vmatpush.bf16.msra.mxu0 0
        %1135 = vmatpush.bf16.msra.mxu0 0
        %1136 = vmatpush.bf16.msra.mxu0 0
        %1137 = vmatpush.bf16.msra.mxu0 0
        %1138 = vmatpush.bf16.msra.mxu0 %v845
        %1139 = vmatpush.bf16.msra.mxu0 %v813
        %1140 = vmatpush.bf16.msra.mxu0 %v781
        %1141 = vmatmul.bf16.gmra.mxu0 %v962
        %v1142 = vpop.f32.mrf.mxu0
        %v1143 = vadd.f32 0.0, %v1142
        %v1144 = vpop.f32.mrf.mxu0
        %1145 = vdwg.mxu0
        %1146 = vmatpush.bf16.msra.mxu0 0
        %1147 = vmatpush.bf16.msra.mxu0 0
        %1148 = vmatpush.bf16.msra.mxu0 0
        %1149 = vmatpush.bf16.msra.mxu0 0
        %1150 = vmatpush.bf16.msra.mxu0 0
        %1151 = vmatpush.bf16.msra.mxu0 %v846
        %1152 = vmatpush.bf16.msra.mxu0 %v814
        %1153 = vmatpush.bf16.msra.mxu0 %v782
        %1154 = vmatmul.bf16.gmra.mxu0 %v962
        %v1155 = vpop.f32.mrf.mxu0
        %v1156 = vadd.f32 0.0, %v1155
        %v1157 = vpop.f32.mrf.mxu0
        %1158 = vdwg.mxu0
        %1159 = vmatpush.bf16.msra.mxu0 0
        %1160 = vmatpush.bf16.msra.mxu0 0
        %1161 = vmatpush.bf16.msra.mxu0 0
        %1162 = vmatpush.bf16.msra.mxu0 0
        %1163 = vmatpush.bf16.msra.mxu0 0
        %1164 = vmatpush.bf16.msra.mxu0 %v847
        %1165 = vmatpush.bf16.msra.mxu0 %v815
        %1166 = vmatpush.bf16.msra.mxu0 %v783
        %1167 = vmatmul.bf16.gmra.mxu0 %v962
        %v1168 = vpop.f32.mrf.mxu0
        %v1169 = vadd.f32 0.0, %v1168
        %v1170 = vpop.f32.mrf.mxu0
        %1171 = vdwg.mxu0
        %1172 = vmatpush.bf16.msra.mxu0 0
        %1173 = vmatpush.bf16.msra.mxu0 0
        %1174 = vmatpush.bf16.msra.mxu0 0
        %1175 = vmatpush.bf16.msra.mxu0 0
        %1176 = vmatpush.bf16.msra.mxu0 0
        %1177 = vmatpush.bf16.msra.mxu0 %v848
        %1178 = vmatpush.bf16.msra.mxu0 %v816
        %1179 = vmatpush.bf16.msra.mxu0 %v784
        %1180 = vmatmul.bf16.gmra.mxu0 %v962
        %v1181 = vpop.f32.mrf.mxu0
        %v1182 = vadd.f32 0.0, %v1181
        %v1183 = vpop.f32.mrf.mxu0
        %1184 = vdwg.mxu0
        %1185 = vmatpush.bf16.msra.mxu0 0
        %1186 = vmatpush.bf16.msra.mxu0 0
        %1187 = vmatpush.bf16.msra.mxu0 0
        %1188 = vmatpush.bf16.msra.mxu0 0
        %1189 = vmatpush.bf16.msra.mxu0 0
        %1190 = vmatpush.bf16.msra.mxu0 %v849
        %1191 = vmatpush.bf16.msra.mxu0 %v817
        %1192 = vmatpush.bf16.msra.mxu0 %v785
        %1193 = vmatmul.bf16.gmra.mxu0 %v962
        %v1194 = vpop.f32.mrf.mxu0
        %v1195 = vadd.f32 0.0, %v1194
        %v1196 = vpop.f32.mrf.mxu0
        %1197 = vdwg.mxu0
        %1198 = vmatpush.bf16.msra.mxu0 0
        %1199 = vmatpush.bf16.msra.mxu0 0
        %1200 = vmatpush.bf16.msra.mxu0 0
        %1201 = vmatpush.bf16.msra.mxu0 0
        %1202 = vmatpush.bf16.msra.mxu0 0
        %1203 = vmatpush.bf16.msra.mxu0 %v850
        %1204 = vmatpush.bf16.msra.mxu0 %v818
        %1205 = vmatpush.bf16.msra.mxu0 %v786
        %1206 = vmatmul.bf16.gmra.mxu0 %v962
        %v1207 = vpop.f32.mrf.mxu0
        %v1208 = vadd.f32 0.0, %v1207
        %v1209 = vpop.f32.mrf.mxu0
        %1210 = vdwg.mxu0
        %1211 = vmatpush.bf16.msra.mxu0 0
        %1212 = vmatpush.bf16.msra.mxu0 0
        %1213 = vmatpush.bf16.msra.mxu0 0
        %1214 = vmatpush.bf16.msra.mxu0 0
        %1215 = vmatpush.bf16.msra.mxu0 0
        %1216 = vmatpush.bf16.msra.mxu0 %v851
        %1217 = vmatpush.bf16.msra.mxu0 %v819
        %1218 = vmatpush.bf16.msra.mxu0 %v787
        %1219 = vmatmul.bf16.gmra.mxu0 %v962
        %v1220 = vpop.f32.mrf.mxu0
        %v1221 = vadd.f32 0.0, %v1220
        %v1222 = vpop.f32.mrf.mxu0
        %1223 = vdwg.mxu0
        %1224 = vmatpush.bf16.msra.mxu0 0
        %1225 = vmatpush.bf16.msra.mxu0 0
        %1226 = vmatpush.bf16.msra.mxu0 0
        %1227 = vmatpush.bf16.msra.mxu0 0
        %1228 = vmatpush.bf16.msra.mxu0 0
        %1229 = vmatpush.bf16.msra.mxu0 %v852
        %1230 = vmatpush.bf16.msra.mxu0 %v820
        %1231 = vmatpush.bf16.msra.mxu0 %v788
        %1232 = vmatmul.bf16.gmra.mxu0 %v962
        %v1233 = vpop.f32.mrf.mxu0
        %v1234 = vadd.f32 0.0, %v1233
        %v1235 = vpop.f32.mrf.mxu0
        %1236 = vdwg.mxu0
        %1237 = vmatpush.bf16.msra.mxu0 0
        %1238 = vmatpush.bf16.msra.mxu0 0
        %1239 = vmatpush.bf16.msra.mxu0 0
        %1240 = vmatpush.bf16.msra.mxu0 0
        %1241 = vmatpush.bf16.msra.mxu0 0
        %1242 = vmatpush.bf16.msra.mxu0 %v853
        %1243 = vmatpush.bf16.msra.mxu0 %v821
        %1244 = vmatpush.bf16.msra.mxu0 %v789
        %1245 = vmatmul.bf16.gmra.mxu0 %v962
        %v1246 = vpop.f32.mrf.mxu0
        %v1247 = vadd.f32 0.0, %v1246
        %v1248 = vpop.f32.mrf.mxu0
        %1249 = vdwg.mxu0
        %1250 = vmatpush.bf16.msra.mxu0 0
        %1251 = vmatpush.bf16.msra.mxu0 0
        %1252 = vmatpush.bf16.msra.mxu0 0
        %1253 = vmatpush.bf16.msra.mxu0 0
        %1254 = vmatpush.bf16.msra.mxu0 0
        %1255 = vmatpush.bf16.msra.mxu0 %v854
        %1256 = vmatpush.bf16.msra.mxu0 %v822
        %1257 = vmatpush.bf16.msra.mxu0 %v790
        %1258 = vmatmul.bf16.gmra.mxu0 %v962
        %v1259 = vpop.f32.mrf.mxu0
        %v1260 = vadd.f32 0.0, %v1259
        %v1261 = vpop.f32.mrf.mxu0
        %1262 = vdwg.mxu0
        %1263 = vmatpush.bf16.msra.mxu0 0
        %1264 = vmatpush.bf16.msra.mxu0 0
        %1265 = vmatpush.bf16.msra.mxu0 0
        %1266 = vmatpush.bf16.msra.mxu0 0
        %1267 = vmatpush.bf16.msra.mxu0 0
        %1268 = vmatpush.bf16.msra.mxu0 %v855
        %1269 = vmatpush.bf16.msra.mxu0 %v823
        %1270 = vmatpush.bf16.msra.mxu0 %v791
        %1271 = vmatmul.bf16.gmra.mxu0 %v962
        %v1272 = vpop.f32.mrf.mxu0
        %v1273 = vadd.f32 0.0, %v1272
        %v1274 = vpop.f32.mrf.mxu0
        %1275 = vdwg.mxu0
        %1276 = vmatpush.bf16.msra.mxu0 0
        %1277 = vmatpush.bf16.msra.mxu0 0
        %1278 = vmatpush.bf16.msra.mxu0 0
        %1279 = vmatpush.bf16.msra.mxu0 0
        %1280 = vmatpush.bf16.msra.mxu0 0
        %1281 = vmatpush.bf16.msra.mxu0 %v856
        %1282 = vmatpush.bf16.msra.mxu0 %v824
        %1283 = vmatpush.bf16.msra.mxu0 %v792
        %1284 = vmatmul.bf16.gmra.mxu0 %v962
        %v1285 = vpop.f32.mrf.mxu0
        %v1286 = vadd.f32 0.0, %v1285
        %v1287 = vpop.f32.mrf.mxu0
        %1288 = vdwg.mxu0
        %1289 = vmatpush.bf16.msra.mxu0 0
        %1290 = vmatpush.bf16.msra.mxu0 0
        %1291 = vmatpush.bf16.msra.mxu0 0
        %1292 = vmatpush.bf16.msra.mxu0 0
        %1293 = vmatpush.bf16.msra.mxu0 0
        %1294 = vmatpush.bf16.msra.mxu0 %v857
        %1295 = vmatpush.bf16.msra.mxu0 %v825
        %1296 = vmatpush.bf16.msra.mxu0 %v793
        %1297 = vmatmul.bf16.gmra.mxu0 %v962
        %v1298 = vpop.f32.mrf.mxu0
        %v1299 = vadd.f32 0.0, %v1298
        %v1300 = vpop.f32.mrf.mxu0
        %1301 = vdwg.mxu0
        %1302 = vmatpush.bf16.msra.mxu0 0
        %1303 = vmatpush.bf16.msra.mxu0 0
        %1304 = vmatpush.bf16.msra.mxu0 0
        %1305 = vmatpush.bf16.msra.mxu0 0
        %1306 = vmatpush.bf16.msra.mxu0 0
        %1307 = vmatpush.bf16.msra.mxu0 %v858
        %1308 = vmatpush.bf16.msra.mxu0 %v826
        %1309 = vmatpush.bf16.msra.mxu0 %v794
        %1310 = vmatmul.bf16.gmra.mxu0 %v962
        %v1311 = vpop.f32.mrf.mxu0
        %v1312 = vadd.f32 0.0, %v1311
        %v1313 = vpop.f32.mrf.mxu0
        %1314 = vdwg.mxu0
        %1315 = vmatpush.bf16.msra.mxu0 0
        %1316 = vmatpush.bf16.msra.mxu0 0
        %1317 = vmatpush.bf16.msra.mxu0 0
        %1318 = vmatpush.bf16.msra.mxu0 0
        %1319 = vmatpush.bf16.msra.mxu0 0
        %1320 = vmatpush.bf16.msra.mxu0 %v859
        %1321 = vmatpush.bf16.msra.mxu0 %v827
        %1322 = vmatpush.bf16.msra.mxu0 %v795
        %1323 = vmatmul.bf16.gmra.mxu0 %v962
        %v1324 = vpop.f32.mrf.mxu0
        %v1325 = vadd.f32 0.0, %v1324
        %v1326 = vpop.f32.mrf.mxu0
        %1327 = vdwg.mxu0
        %1328 = vmatpush.bf16.msra.mxu0 0
        %1329 = vmatpush.bf16.msra.mxu0 0
        %1330 = vmatpush.bf16.msra.mxu0 0
        %1331 = vmatpush.bf16.msra.mxu0 0
        %1332 = vmatpush.bf16.msra.mxu0 0
        %1333 = vmatpush.bf16.msra.mxu0 %v860
        %1334 = vmatpush.bf16.msra.mxu0 %v828
        %1335 = vmatpush.bf16.msra.mxu0 %v796
        %1336 = vmatmul.bf16.gmra.mxu0 %v962
        %v1337 = vpop.f32.mrf.mxu0
        %v1338 = vadd.f32 0.0, %v1337
        %v1339 = vpop.f32.mrf.mxu0
        %1340 = vdwg.mxu0
        %1341 = vmatpush.bf16.msra.mxu0 0
        %1342 = vmatpush.bf16.msra.mxu0 0
        %1343 = vmatpush.bf16.msra.mxu0 0
        %1344 = vmatpush.bf16.msra.mxu0 0
        %1345 = vmatpush.bf16.msra.mxu0 0
        %1346 = vmatpush.bf16.msra.mxu0 %v861
        %1347 = vmatpush.bf16.msra.mxu0 %v829
        %1348 = vmatpush.bf16.msra.mxu0 %v797
        %1349 = vmatmul.bf16.gmra.mxu0 %v962
        %v1350 = vpop.f32.mrf.mxu0
        %v1351 = vadd.f32 0.0, %v1350
        %v1352 = vpop.f32.mrf.mxu0
        %1353 = vdwg.mxu0
        %1354 = vmatpush.bf16.msra.mxu0 0
        %1355 = vmatpush.bf16.msra.mxu0 0
        %1356 = vmatpush.bf16.msra.mxu0 0
        %1357 = vmatpush.bf16.msra.mxu0 0
        %1358 = vmatpush.bf16.msra.mxu0 0
        %1359 = vmatpush.bf16.msra.mxu0 %v862
        %1360 = vmatpush.bf16.msra.mxu0 %v830
        %1361 = vmatpush.bf16.msra.mxu0 %v798
        %1362 = vmatmul.bf16.gmra.mxu0 %v962
        %v1363 = vpop.f32.mrf.mxu0
        %v1364 = vadd.f32 0.0, %v1363
        %v1365 = vpop.f32.mrf.mxu0
        %1366 = vdwg.mxu0
        %1367 = vmatpush.bf16.msra.mxu0 0
        %1368 = vmatpush.bf16.msra.mxu0 0
        %1369 = vmatpush.bf16.msra.mxu0 0
        %1370 = vmatpush.bf16.msra.mxu0 0
        %1371 = vmatpush.bf16.msra.mxu0 0
        %1372 = vmatpush.bf16.msra.mxu0 %v863
        %1373 = vmatpush.bf16.msra.mxu0 %v831
        %1374 = vmatpush.bf16.msra.mxu0 %v799
        %1375 = vmatmul.bf16.gmra.mxu0 %v962
        %v1376 = vpop.f32.mrf.mxu0
        %v1377 = vadd.f32 0.0, %v1376
        %v1378 = vpop.f32.mrf.mxu0
        %1379 = vdwg.mxu0
        %vm1380 = vcmp.ge.f32.partialorder %v974, 0.0
        %vm1381 = vcmp.ge.f32.partialorder %v987, 0.0
        %vm1382 = vcmp.ge.f32.partialorder %v1000, 0.0
        %vm1383 = vcmp.ge.f32.partialorder %v1013, 0.0
        %vm1384 = vcmp.ge.f32.partialorder %v1026, 0.0
        %vm1385 = vcmp.ge.f32.partialorder %v1039, 0.0
        %vm1386 = vcmp.ge.f32.partialorder %v1052, 0.0
        %vm1387 = vcmp.ge.f32.partialorder %v1065, 0.0
        %vm1388 = vcmp.ge.f32.partialorder %v1078, 0.0
        %vm1389 = vcmp.ge.f32.partialorder %v1091, 0.0
        %vm1390 = vcmp.ge.f32.partialorder %v1104, 0.0
        %vm1391 = vcmp.ge.f32.partialorder %v1117, 0.0
        %vm1392 = vcmp.ge.f32.partialorder %v1130, 0.0
        %vm1393 = vcmp.ge.f32.partialorder %v1143, 0.0
        %vm1394 = vcmp.ge.f32.partialorder %v1156, 0.0
        %vm1395 = vcmp.ge.f32.partialorder %v1169, 0.0
        %vm1396 = vcmp.ge.f32.partialorder %v1182, 0.0
        %vm1397 = vcmp.ge.f32.partialorder %v1195, 0.0
        %vm1398 = vcmp.ge.f32.partialorder %v1208, 0.0
        %vm1399 = vcmp.ge.f32.partialorder %v1221, 0.0
        %vm1400 = vcmp.ge.f32.partialorder %v1234, 0.0
        %vm1401 = vcmp.ge.f32.partialorder %v1247, 0.0
        %vm1402 = vcmp.ge.f32.partialorder %v1260, 0.0
        %vm1403 = vcmp.ge.f32.partialorder %v1273, 0.0
        %vm1404 = vcmp.ge.f32.partialorder %v1286, 0.0
        %vm1405 = vcmp.ge.f32.partialorder %v1299, 0.0
        %vm1406 = vcmp.ge.f32.partialorder %v1312, 0.0
        %vm1407 = vcmp.ge.f32.partialorder %v1325, 0.0
        %vm1408 = vcmp.ge.f32.partialorder %v1338, 0.0
        %vm1409 = vcmp.ge.f32.partialorder %v1351, 0.0
        %vm1410 = vcmp.ge.f32.partialorder %v1364, 0.0
        %vm1411 = vcmp.ge.f32.partialorder %v1377, 0.0
        %v1412 = vmul.f32 %v974, 0.2
        %v1413 = vmul.f32 %v987, 0.2
        %v1414 = vmul.f32 %v1000, 0.2
        %v1415 = vmul.f32 %v1013, 0.2
        %v1416 = vmul.f32 %v1026, 0.2
        %v1417 = vmul.f32 %v1039, 0.2
        %v1418 = vmul.f32 %v1052, 0.2
        %v1419 = vmul.f32 %v1065, 0.2
        %v1420 = vmul.f32 %v1078, 0.2
        %v1421 = vmul.f32 %v1091, 0.2
        %v1422 = vmul.f32 %v1104, 0.2
        %v1423 = vmul.f32 %v1117, 0.2
        %v1424 = vmul.f32 %v1130, 0.2
        %v1425 = vmul.f32 %v1143, 0.2
        %v1426 = vmul.f32 %v1156, 0.2
        %v1427 = vmul.f32 %v1169, 0.2
        %v1428 = vmul.f32 %v1182, 0.2
        %v1429 = vmul.f32 %v1195, 0.2
        %v1430 = vmul.f32 %v1208, 0.2
        %v1431 = vmul.f32 %v1221, 0.2
        %v1432 = vmul.f32 %v1234, 0.2
        %v1433 = vmul.f32 %v1247, 0.2
        %v1434 = vmul.f32 %v1260, 0.2
        %v1435 = vmul.f32 %v1273, 0.2
        %v1436 = vmul.f32 %v1286, 0.2
        %v1437 = vmul.f32 %v1299, 0.2
        %v1438 = vmul.f32 %v1312, 0.2
        %v1439 = vmul.f32 %v1325, 0.2
        %v1440 = vmul.f32 %v1338, 0.2
        %v1441 = vmul.f32 %v1351, 0.2
        %v1442 = vmul.f32 %v1364, 0.2
        %v1443 = vmul.f32 %v1377, 0.2
        %v1444 = vsel %vm1380, %v974, %v1412
        %v1445 = vsel %vm1381, %v987, %v1413
        %v1446 = vsel %vm1382, %v1000, %v1414
        %v1447 = vsel %vm1383, %v1013, %v1415
        %v1448 = vsel %vm1384, %v1026, %v1416
        %v1449 = vsel %vm1385, %v1039, %v1417
        %v1450 = vsel %vm1386, %v1052, %v1418
        %v1451 = vsel %vm1387, %v1065, %v1419
        %v1452 = vsel %vm1388, %v1078, %v1420
        %v1453 = vsel %vm1389, %v1091, %v1421
        %v1454 = vsel %vm1390, %v1104, %v1422
        %v1455 = vsel %vm1391, %v1117, %v1423
        %v1456 = vsel %vm1392, %v1130, %v1424
        %v1457 = vsel %vm1393, %v1143, %v1425
        %v1458 = vsel %vm1394, %v1156, %v1426
        %v1459 = vsel %vm1395, %v1169, %v1427
        %v1460 = vsel %vm1396, %v1182, %v1428
        %v1461 = vsel %vm1397, %v1195, %v1429
        %v1462 = vsel %vm1398, %v1208, %v1430
        %v1463 = vsel %vm1399, %v1221, %v1431
        %v1464 = vsel %vm1400, %v1234, %v1432
        %v1465 = vsel %vm1401, %v1247, %v1433
        %v1466 = vsel %vm1402, %v1260, %v1434
        %v1467 = vsel %vm1403, %v1273, %v1435
        %v1468 = vsel %vm1404, %v1286, %v1436
        %v1469 = vsel %vm1405, %v1299, %v1437
        %v1470 = vsel %vm1406, %v1312, %v1438
        %v1471 = vsel %vm1407, %v1325, %v1439
        %v1472 = vsel %vm1408, %v1338, %v1440
        %v1473 = vsel %vm1409, %v1351, %v1441
        %v1474 = vsel %vm1410, %v1364, %v1442
        %v1475 = vsel %vm1411, %v1377, %v1443
        %v1476 = vpack.c.bf16 %v1445, %v1444
        %v1477 = vpack.c.bf16 %v1447, %v1446
        %v1478 = vpack.c.bf16 %v1449, %v1448
        %v1479 = vpack.c.bf16 %v1451, %v1450
        %v1480 = vpack.c.bf16 %v1453, %v1452
        %v1481 = vpack.c.bf16 %v1455, %v1454
        %v1482 = vpack.c.bf16 %v1457, %v1456
        %v1483 = vpack.c.bf16 %v1459, %v1458
        %v1484 = vpack.c.bf16 %v1461, %v1460
        %v1485 = vpack.c.bf16 %v1463, %v1462
        %v1486 = vpack.c.bf16 %v1465, %v1464
        %v1487 = vpack.c.bf16 %v1467, %v1466
        %v1488 = vpack.c.bf16 %v1469, %v1468
        %v1489 = vpack.c.bf16 %v1471, %v1470
        %v1490 = vpack.c.bf16 %v1473, %v1472
        %v1491 = vpack.c.bf16 %v1475, %v1474
        %v1508 = vrot.slane %v1476, 2
        %v1509 = vrot.slane %v1477, 4
        %v1510 = vrot.slane %v1477, 6
        %v1511 = vrot.slane %v1478, 2
        %v1512 = vrot.slane %v1479, 4
        %v1513 = vrot.slane %v1479, 6
        %v1514 = vrot.slane %v1480, 2
        %v1515 = vrot.slane %v1481, 4
        %v1516 = vrot.slane %v1481, 6
        %v1517 = vrot.slane %v1482, 2
        %v1518 = vrot.slane %v1483, 4
        %v1519 = vrot.slane %v1483, 6
        %v1520 = vrot.slane %v1484, 2
        %v1521 = vrot.slane %v1485, 4
        %v1522 = vrot.slane %v1485, 6
        %v1523 = vrot.slane %v1486, 2
        %v1524 = vrot.slane %v1487, 4
        %v1525 = vrot.slane %v1487, 6
        %v1526 = vrot.slane %v1488, 2
        %v1527 = vrot.slane %v1489, 4
        %v1528 = vrot.slane %v1489, 6
        %v1529 = vrot.slane %v1490, 2
        %v1530 = vrot.slane %v1491, 4
        %v1531 = vrot.slane %v1491, 6
        %vm1532 = vcmask 1041408
        %v1535 = vsel %vm1532, %v1476, %v1508
        %vm1536 = vcmask 1045508
        %v1539 = vsel %vm1536, %v1509, %v1510
        %vm1540 = vcmask 1043456
        %v1541 = vsel %vm1540, %v1535, %v1539
        %v1544 = vsel %vm1532, %v1478, %v1511
        %v1547 = vsel %vm1536, %v1512, %v1513
        %v1548 = vsel %vm1540, %v1544, %v1547
        %v1551 = vsel %vm1532, %v1480, %v1514
        %v1554 = vsel %vm1536, %v1515, %v1516
        %v1555 = vsel %vm1540, %v1551, %v1554
        %v1558 = vsel %vm1532, %v1482, %v1517
        %v1561 = vsel %vm1536, %v1518, %v1519
        %v1562 = vsel %vm1540, %v1558, %v1561
        %v1565 = vsel %vm1532, %v1484, %v1520
        %v1568 = vsel %vm1536, %v1521, %v1522
        %v1569 = vsel %vm1540, %v1565, %v1568
        %v1572 = vsel %vm1532, %v1486, %v1523
        %v1575 = vsel %vm1536, %v1524, %v1525
        %v1576 = vsel %vm1540, %v1572, %v1575
        %v1579 = vsel %vm1532, %v1488, %v1526
        %v1582 = vsel %vm1536, %v1527, %v1528
        %v1583 = vsel %vm1540, %v1579, %v1582
        %v1586 = vsel %vm1532, %v1490, %v1529
        %v1589 = vsel %vm1536, %v1530, %v1531
        %v1590 = vsel %vm1540, %v1586, %v1589
        %1599 = vst [vmem:[%s380] sm:$0xff] %v1541
        %1600 = vst [vmem:[%s380 + $0x8] sm:$0xff] %v1548
        %1601 = vst [vmem:[%s380 + $0x10] sm:$0xff] %v1555
        %1602 = vst [vmem:[%s380 + $0x18] sm:$0xff] %v1562
        %1603 = vst [vmem:[%s380 + $0x20] sm:$0xff] %v1569
        %1604 = vst [vmem:[%s380 + $0x28] sm:$0xff] %v1576
        %1605 = vst [vmem:[%s380 + $0x30] sm:$0xff] %v1583
        %1606 = vst [vmem:[%s380 + $0x38] sm:$0xff] %v1590
        %s1607 = smul.u32 32, %s18
        %p1608 = scmp.lt.s32.totalorder %s17, 1
        %s1609 = scalar_select %p1608, %s17, 1
        %p1610 = scmp.lt.s32.totalorder %s1607, 127
        %s1611 = scalar_select %p1610, %s1607, 127
        %s1612 = smul.addr %s1609, 128
        %s1613 = sadd.s32 %s1611, %s1612
        %s1614 = smul.addr %s1613, 2
        %s1615 = scalar_lea.vmem %s2, %s1614
        // Predicated region
        $region52: #{discriminator_forward.6} parent=46 // pred_check
          %p1616 = pneg %p94
        $region53: #{discriminator_forward.6} parent=46 // pred_check_branch
          %1618 = sbr.rel (%p1616) target = $region55
        $region54: #{discriminator_forward.6} parent=46 // pred_region
          %s1619 = smul.u32 32, %s18
        $region55: #{discriminator_forward.6} parent=46 // pred_fallthru
          _
      $region47: #{discriminator_forward.6} parent=5 // pred_fallthru
        _
      %p1620 = scmp.le.s32.totalorder 2, %s8
      // Predicated region
      $region56: #{discriminator_forward.6} parent=5 // pred_check
        %p1621 = pneg %p1620
      $region57: #{discriminator_forward.6} parent=5 // pred_check_branch
        %1623 = sbr.rel (%p1621) target = $region59
      $region58: #{discriminator_forward.6} parent=5 // pred_region
        %s1624 = ssub.s32 %s8, 2
        // Predicated region
        $region60: #{discriminator_forward.6} parent=58 // pred_check
          %p1625 = pneg %p100
        $region61: #{discriminator_forward.6} parent=58 // pred_check_branch
          %1627 = sbr.rel (%p1625) target = $region63
        $region62: #{discriminator_forward.6} parent=58 // pred_region
          %s1628 = smul.u32 32, %s20
          %p1629 = scmp.lt.s32.totalorder %s19, 1
          %s1630 = scalar_select %p1629, %s19, 1
          %p1631 = scmp.lt.s32.totalorder %s1628, 127
          %s1632 = scalar_select %p1631, %s1628, 127
          %s1633 = smul.addr %s1630, 128
          %s1634 = sadd.s32 %s1632, %s1633
          %s1635 = smul.addr %s1634, 2
          %s1636 = scalar_lea.vmem %s2, %s1635
        $region63: #{discriminator_forward.6} parent=58 // pred_fallthru
          _
      $region59: #{discriminator_forward.6} parent=5 // pred_fallthru
        _
    $region6: #{discriminator_forward.6} parent=1 // loop_footer
      %s12 = sadd.s32 1, %s8
    $region7: #{discriminator_forward.6} parent=1 // loop_footer_branch
      %7 = sbr.rel target = $region3
    $region8: #{discriminator_forward.6} parent=1 // loop_exit
      _

// kernel: discriminator_forward.7
$region0: #{discriminator_forward.7}
  #allocation0 [shape = 'u32[]', space=smem, size = 0x4, offset = 0x4, fixed_abs, tag = 'smem constant byte address 0x4 - core index']
  #allocation1 [shape = 'u32[72,128]{1,0:T(1,128)}', space=vmem, size = 0x9000, scoped, tag = 'internal scratch']
  %s0 = inlined_call_operand.vmem [shape: bf16[8,64], index: 0, kind: input, shape index: {}]
  %s1 = inlined_call_operand.vmem [shape: bf16[2,64,4096], index: 1, kind: input, shape index: {}]
  %s2 = inlined_call_operand.vmem [shape: bf16[2,8,4096], index: 2, kind: output, shape index: {}]
  %s3 = sld [smem:[#allocation0]]
  $region41: #{discriminator_forward.7} parent=0
    _
  %s5 = ssub.s32 1, %s3
  %s6 = scalar_select 0, %s5, %s3
  loop: start=0, step=1, limit=4
  $region2: #{discriminator_forward.7} parent=0 // loop_pre_header
    _
  $region3: #{discriminator_forward.7} parent=0 // loop_header
    %s8 = sphi 0, %s12
    %p9 = scmp.ge.s32.totalorder %s8, 4
    %s16 = sphi 0, %s16
    %s18 = sphi 0, %s16
    %s19 = sphi 0, %s18
    %s33 = sphi 0, %s19
    %s39 = sphi 0, %s41
    %s42 = sphi 0, %s39
    %s43 = sphi 0, %s42
    %s59 = sphi 0, %s43
    %s65 = sphi 0, %s67
    %s68 = sphi 0, %s65
    %s69 = sphi 0, %s68
    %s85 = sphi 0, %s69
  $region4: #{discriminator_forward.7} parent=0 // loop_header_branch
    %11 = sbr.rel (%p9) target = $region8
  $region5: #{discriminator_forward.7} parent=0 // loop_body
    %s13 = ssub.s32 %s8, 1
    %s14 = ssub.s32 %s8, 2
    %s15 = sadd.s32 %s8, 1
    %s17 = sadd.s32 %s16, 1
    %p20 = scmp.eq.s32.totalorder %s8, 1
    %p21 = scmp.ne.s32.totalorder %s16, %s18
    %p22 = scmp.eq.s32.totalorder %s8, 0
    %p23 = por %p21, %p22
    %p24 = scmp.ne.s32.totalorder %s16, %s18
    %p25 = scmp.eq.s32.totalorder %s13, 1
    %p26 = por %p24, %p25
    %p27 = scmp.ne.s32.totalorder %s18, %s19
    %p28 = scmp.eq.s32.totalorder %s13, 0
    %p29 = por %p27, %p28
    %p30 = scmp.ne.s32.totalorder %s18, %s19
    %p31 = scmp.eq.s32.totalorder %s14, 1
    %p32 = por %p30, %p31
    %p34 = scmp.ne.s32.totalorder %s19, %s33
    %p35 = scmp.eq.s32.totalorder %s14, 0
    %p36 = por %p34, %p35
    %s37 = ssub.s32 %s8, %s15
    %p38 = scmp.eq.s32.totalorder %s37, 0
    %s40 = sadd.s32 %s39, 1
    %s41 = scalar_select %p38, %s39, %s40
    %p44 = pneg %p38
    %p45 = scmp.eq.s32.totalorder %s8, 1
    %p46 = por %p44, %p45
    %p47 = scmp.ne.s32.totalorder %s39, %s42
    %p48 = scmp.eq.s32.totalorder %s8, 0
    %p49 = por %p47, %p48
    %p50 = scmp.ne.s32.totalorder %s39, %s42
    %p51 = scmp.eq.s32.totalorder %s13, 1
    %p52 = por %p50, %p51
    %p53 = scmp.ne.s32.totalorder %s42, %s43
    %p54 = scmp.eq.s32.totalorder %s13, 0
    %p55 = por %p53, %p54
    %p56 = scmp.ne.s32.totalorder %s42, %s43
    %p57 = scmp.eq.s32.totalorder %s14, 1
    %p58 = por %p56, %p57
    %p60 = scmp.ne.s32.totalorder %s43, %s59
    %p61 = scmp.eq.s32.totalorder %s14, 0
    %p62 = por %p60, %p61
    %s63 = ssub.s32 %s8, %s15
    %p64 = scmp.eq.s32.totalorder %s63, 0
    %s66 = sadd.s32 %s65, 1
    %s67 = scalar_select %p64, %s65, %s66
    %p70 = pneg %p64
    %p71 = scmp.eq.s32.totalorder %s8, 1
    %p72 = por %p70, %p71
    %p73 = scmp.ne.s32.totalorder %s65, %s68
    %p74 = scmp.eq.s32.totalorder %s8, 0
    %p75 = por %p73, %p74
    %p76 = scmp.ne.s32.totalorder %s65, %s68
    %p77 = scmp.eq.s32.totalorder %s13, 1
    %p78 = por %p76, %p77
    %p79 = scmp.ne.s32.totalorder %s68, %s69
    %p80 = scmp.eq.s32.totalorder %s13, 0
    %p81 = por %p79, %p80
    %p82 = scmp.ne.s32.totalorder %s68, %s69
    %p83 = scmp.eq.s32.totalorder %s14, 1
    %p84 = por %p82, %p83
    %p86 = scmp.ne.s32.totalorder %s69, %s85
    %p87 = scmp.eq.s32.totalorder %s14, 0
    %p88 = por %p86, %p87
    %p89 = scmp.le.s32.totalorder 1, %s8
    %p90 = scmp.lt.s32.totalorder %s8, 3
    %p91 = pnand %p89, %p90
    %p92 = pneg %p91
    // Predicated region
    $region9: #{discriminator_forward.7} parent=5 // pred_check
      _
    $region10: #{discriminator_forward.7} parent=5 // pred_check_branch
      %94 = sbr.rel (%p91) target = $region12
    $region11: #{discriminator_forward.7} parent=5 // pred_region
      %s95 = ssub.s32 %s8, 1
      // Predicated region
      $region13: #{discriminator_forward.7} parent=11 // pred_check
        %p96 = pneg %p29
      $region14: #{discriminator_forward.7} parent=11 // pred_check_branch
        %98 = sbr.rel (%p96) target = $region16
      $region15: #{discriminator_forward.7} parent=11 // pred_region
        _
      $region16: #{discriminator_forward.7} parent=11 // pred_fallthru
        _
    $region12: #{discriminator_forward.7} parent=5 // pred_fallthru
      _
    %p99 = scmp.lt.s32.totalorder %s8, 2
    // Predicated region
    $region17: #{discriminator_forward.7} parent=5 // pred_check
      %p100 = pneg %p99
    $region18: #{discriminator_forward.7} parent=5 // pred_check_branch
      %102 = sbr.rel (%p100) target = $region20
    $region19: #{discriminator_forward.7} parent=5 // pred_region
      // Predicated region
      $region21: #{discriminator_forward.7} parent=19 // pred_check
        %p103 = pneg %p49
      $region22: #{discriminator_forward.7} parent=19 // pred_check_branch
        %105 = sbr.rel (%p103) target = $region24
      $region23: #{discriminator_forward.7} parent=19 // pred_region
        %p106 = scmp.lt.s32.totalorder %s8, 1
        %s107 = scalar_select %p106, %s8, 1
        %s108 = smul.addr %s107, 256
        %s109 = smul.addr %s108, 4
        %s110 = scalar_lea.vmem %s1, %s109
      $region24: #{discriminator_forward.7} parent=19 // pred_fallthru
        _
    $region20: #{discriminator_forward.7} parent=5 // pred_fallthru
      _
    %p111 = scmp.le.s32.totalorder 1, %s8
    %p112 = scmp.lt.s32.totalorder %s8, 3
    %p113 = pnand %p111, %p112
    %p114 = pneg %p113
    // Predicated region
    $region25: #{discriminator_forward.7} parent=5 // pred_check
      _
    $region26: #{discriminator_forward.7} parent=5 // pred_check_branch
      %116 = sbr.rel (%p113) target = $region28
    $region27: #{discriminator_forward.7} parent=5 // pred_region
      %s117 = ssub.s32 %s8, 1
      %p118 = pneg %p29
      %p119 = pneg %p26
      %p120 = scmp.lt.s32.totalorder %s13, 1
      %s121 = scalar_select %p120, %s13, 1
      %s122 = smul.addr %s121, 256
      %s123 = smul.addr %s122, 4
      %s124 = scalar_lea.vmem %s1, %s123
      %p125 = pneg %p55
      %p126 = pneg %p52
      %p127 = pneg %p81
      %p128 = pneg %p78
      %p129 = scmp.lt.s32.totalorder %s13, 1
      %s130 = scalar_select %p129, %s13, 1
      %s131 = smul.addr %s130, 32
      %s132 = smul.addr %s131, 4
      %s133 = scalar_lea.vmem %s2, %s132
      %p134 = scmp.lt.s32.totalorder %s13, 1
      %s135 = scalar_select %p134, %s13, 1
      %s136 = smul.addr %s135, 256
      %s137 = smul.addr %s136, 4
      %s138 = scalar_lea.vmem %s1, %s137
      %p139 = scmp.lt.s32.totalorder %s13, 1
      %s140 = scalar_select %p139, %s13, 1
      %s141 = smul.addr %s140, 32
      %s142 = smul.addr %s141, 4
      %s143 = scalar_lea.vmem %s2, %s142
      %v145 = vld [vmem:[%s0] sm:$0xf]
      %v146 = vld [vmem:[%s138] sm:$0xff]
      %v147 = vld [vmem:[%s138 + $0x8] sm:$0xff]
      %v148 = vld [vmem:[%s138 + $0x10] sm:$0xff]
      %v149 = vld [vmem:[%s138 + $0x18] sm:$0xff]
      %v150 = vld [vmem:[%s138 + $0x20] sm:$0xff]
      %v151 = vld [vmem:[%s138 + $0x28] sm:$0xff]
      %v152 = vld [vmem:[%s138 + $0x30] sm:$0xff]
      %v153 = vld [vmem:[%s138 + $0x38] sm:$0xff]
      %v154 = vld [vmem:[%s138 + $0x40] sm:$0xff]
      %v155 = vld [vmem:[%s138 + $0x48] sm:$0xff]
      %v156 = vld [vmem:[%s138 + $0x50] sm:$0xff]
      %v157 = vld [vmem:[%s138 + $0x58] sm:$0xff]
      %v158 = vld [vmem:[%s138 + $0x60] sm:$0xff]
      %v159 = vld [vmem:[%s138 + $0x68] sm:$0xff]
      %v160 = vld [vmem:[%s138 + $0x70] sm:$0xff]
      %v161 = vld [vmem:[%s138 + $0x78] sm:$0xff]
      %v162 = vld [vmem:[%s138 + $0x80] sm:$0xff]
      %v163 = vld [vmem:[%s138 + $0x88] sm:$0xff]
      %v164 = vld [vmem:[%s138 + $0x90] sm:$0xff]
      %v165 = vld [vmem:[%s138 + $0x98] sm:$0xff]
      %v166 = vld [vmem:[%s138 + $0xa0] sm:$0xff]
      %v167 = vld [vmem:[%s138 + $0xa8] sm:$0xff]
      %v168 = vld [vmem:[%s138 + $0xb0] sm:$0xff]
      %v169 = vld [vmem:[%s138 + $0xb8] sm:$0xff]
      %v170 = vld [vmem:[%s138 + $0xc0] sm:$0xff]
      %v171 = vld [vmem:[%s138 + $0xc8] sm:$0xff]
      %v172 = vld [vmem:[%s138 + $0xd0] sm:$0xff]
      %v173 = vld [vmem:[%s138 + $0xd8] sm:$0xff]
      %v174 = vld [vmem:[%s138 + $0xe0] sm:$0xff]
      %v175 = vld [vmem:[%s138 + $0xe8] sm:$0xff]
      %v176 = vld [vmem:[%s138 + $0xf0] sm:$0xff]
      %v177 = vld [vmem:[%s138 + $0xf8] sm:$0xff]
      %v178 = vld [vmem:[%s138 + $0x100] sm:$0xff]
      %v179 = vld [vmem:[%s138 + $0x108] sm:$0xff]
      %v180 = vld [vmem:[%s138 + $0x110] sm:$0xff]
      %v181 = vld [vmem:[%s138 + $0x118] sm:$0xff]
      %v182 = vld [vmem:[%s138 + $0x120] sm:$0xff]
      %v183 = vld [vmem:[%s138 + $0x128] sm:$0xff]
      %v184 = vld [vmem:[%s138 + $0x130] sm:$0xff]
      %v185 = vld [vmem:[%s138 + $0x138] sm:$0xff]
      %v186 = vld [vmem:[%s138 + $0x140] sm:$0xff]
      %v187 = vld [vmem:[%s138 + $0x148] sm:$0xff]
      %v188 = vld [vmem:[%s138 + $0x150] sm:$0xff]
      %v189 = vld [vmem:[%s138 + $0x158] sm:$0xff]
      %v190 = vld [vmem:[%s138 + $0x160] sm:$0xff]
      %v191 = vld [vmem:[%s138 + $0x168] sm:$0xff]
      %v192 = vld [vmem:[%s138 + $0x170] sm:$0xff]
      %v193 = vld [vmem:[%s138 + $0x178] sm:$0xff]
      %v194 = vld [vmem:[%s138 + $0x180] sm:$0xff]
      %v195 = vld [vmem:[%s138 + $0x188] sm:$0xff]
      %v196 = vld [vmem:[%s138 + $0x190] sm:$0xff]
      %v197 = vld [vmem:[%s138 + $0x198] sm:$0xff]
      %v198 = vld [vmem:[%s138 + $0x1a0] sm:$0xff]
      %v199 = vld [vmem:[%s138 + $0x1a8] sm:$0xff]
      %v200 = vld [vmem:[%s138 + $0x1b0] sm:$0xff]
      %v201 = vld [vmem:[%s138 + $0x1b8] sm:$0xff]
      %v202 = vld [vmem:[%s138 + $0x1c0] sm:$0xff]
      %v203 = vld [vmem:[%s138 + $0x1c8] sm:$0xff]
      %v204 = vld [vmem:[%s138 + $0x1d0] sm:$0xff]
      %v205 = vld [vmem:[%s138 + $0x1d8] sm:$0xff]
      %v206 = vld [vmem:[%s138 + $0x1e0] sm:$0xff]
      %v207 = vld [vmem:[%s138 + $0x1e8] sm:$0xff]
      %v208 = vld [vmem:[%s138 + $0x1f0] sm:$0xff]
      %v209 = vld [vmem:[%s138 + $0x1f8] sm:$0xff]
      %v210 = vld [vmem:[%s138 + $0x200] sm:$0xff]
      %v211 = vld [vmem:[%s138 + $0x208] sm:$0xff]
      %v212 = vld [vmem:[%s138 + $0x210] sm:$0xff]
      %v213 = vld [vmem:[%s138 + $0x218] sm:$0xff]
      %v214 = vld [vmem:[%s138 + $0x220] sm:$0xff]
      %v215 = vld [vmem:[%s138 + $0x228] sm:$0xff]
      %v216 = vld [vmem:[%s138 + $0x230] sm:$0xff]
      %v217 = vld [vmem:[%s138 + $0x238] sm:$0xff]
      %v218 = vld [vmem:[%s138 + $0x240] sm:$0xff]
      %v219 = vld [vmem:[%s138 + $0x248] sm:$0xff]
      %v220 = vld [vmem:[%s138 + $0x250] sm:$0xff]
      %v221 = vld [vmem:[%s138 + $0x258] sm:$0xff]
      %v222 = vld [vmem:[%s138 + $0x260] sm:$0xff]
      %v223 = vld [vmem:[%s138 + $0x268] sm:$0xff]
      %v224 = vld [vmem:[%s138 + $0x270] sm:$0xff]
      %v225 = vld [vmem:[%s138 + $0x278] sm:$0xff]
      %v226 = vld [vmem:[%s138 + $0x280] sm:$0xff]
      %v227 = vld [vmem:[%s138 + $0x288] sm:$0xff]
      %v228 = vld [vmem:[%s138 + $0x290] sm:$0xff]
      %v229 = vld [vmem:[%s138 + $0x298] sm:$0xff]
      %v230 = vld [vmem:[%s138 + $0x2a0] sm:$0xff]
      %v231 = vld [vmem:[%s138 + $0x2a8] sm:$0xff]
      %v232 = vld [vmem:[%s138 + $0x2b0] sm:$0xff]
      %v233 = vld [vmem:[%s138 + $0x2b8] sm:$0xff]
      %v234 = vld [vmem:[%s138 + $0x2c0] sm:$0xff]
      %v235 = vld [vmem:[%s138 + $0x2c8] sm:$0xff]
      %v236 = vld [vmem:[%s138 + $0x2d0] sm:$0xff]
      %v237 = vld [vmem:[%s138 + $0x2d8] sm:$0xff]
      %v238 = vld [vmem:[%s138 + $0x2e0] sm:$0xff]
      %v239 = vld [vmem:[%s138 + $0x2e8] sm:$0xff]
      %v240 = vld [vmem:[%s138 + $0x2f0] sm:$0xff]
      %v241 = vld [vmem:[%s138 + $0x2f8] sm:$0xff]
      %v242 = vld [vmem:[%s138 + $0x300] sm:$0xff]
      %v243 = vld [vmem:[%s138 + $0x308] sm:$0xff]
      %v244 = vld [vmem:[%s138 + $0x310] sm:$0xff]
      %v245 = vld [vmem:[%s138 + $0x318] sm:$0xff]
      %v246 = vld [vmem:[%s138 + $0x320] sm:$0xff]
      %v247 = vld [vmem:[%s138 + $0x328] sm:$0xff]
      %v248 = vld [vmem:[%s138 + $0x330] sm:$0xff]
      %v249 = vld [vmem:[%s138 + $0x338] sm:$0xff]
      %v250 = vld [vmem:[%s138 + $0x340] sm:$0xff]
      %v251 = vld [vmem:[%s138 + $0x348] sm:$0xff]
      %v252 = vld [vmem:[%s138 + $0x350] sm:$0xff]
      %v253 = vld [vmem:[%s138 + $0x358] sm:$0xff]
      %v254 = vld [vmem:[%s138 + $0x360] sm:$0xff]
      %v255 = vld [vmem:[%s138 + $0x368] sm:$0xff]
      %v256 = vld [vmem:[%s138 + $0x370] sm:$0xff]
      %v257 = vld [vmem:[%s138 + $0x378] sm:$0xff]
      %v258 = vld [vmem:[%s138 + $0x380] sm:$0xff]
      %v259 = vld [vmem:[%s138 + $0x388] sm:$0xff]
      %v260 = vld [vmem:[%s138 + $0x390] sm:$0xff]
      %v261 = vld [vmem:[%s138 + $0x398] sm:$0xff]
      %v262 = vld [vmem:[%s138 + $0x3a0] sm:$0xff]
      %v263 = vld [vmem:[%s138 + $0x3a8] sm:$0xff]
      %v264 = vld [vmem:[%s138 + $0x3b0] sm:$0xff]
      %v265 = vld [vmem:[%s138 + $0x3b8] sm:$0xff]
      %v266 = vld [vmem:[%s138 + $0x3c0] sm:$0xff]
      %v267 = vld [vmem:[%s138 + $0x3c8] sm:$0xff]
      %v268 = vld [vmem:[%s138 + $0x3d0] sm:$0xff]
      %v269 = vld [vmem:[%s138 + $0x3d8] sm:$0xff]
      %v270 = vld [vmem:[%s138 + $0x3e0] sm:$0xff]
      %v271 = vld [vmem:[%s138 + $0x3e8] sm:$0xff]
      %v272 = vld [vmem:[%s138 + $0x3f0] sm:$0xff]
      %v273 = vld [vmem:[%s138 + $0x3f8] sm:$0xff]
      %v402 = vunpack.c.l.b16 %v146
      %v403 = vunpack.c.h.b16 %v146
      %v404 = vunpack.c.l.b16 %v147
      %v405 = vunpack.c.h.b16 %v147
      %v406 = vunpack.c.l.b16 %v148
      %v407 = vunpack.c.h.b16 %v148
      %v408 = vunpack.c.l.b16 %v149
      %v409 = vunpack.c.h.b16 %v149
      %v410 = vunpack.c.l.b16 %v150
      %v411 = vunpack.c.h.b16 %v150
      %v412 = vunpack.c.l.b16 %v151
      %v413 = vunpack.c.h.b16 %v151
      %v414 = vunpack.c.l.b16 %v152
      %v415 = vunpack.c.h.b16 %v152
      %v416 = vunpack.c.l.b16 %v153
      %v417 = vunpack.c.h.b16 %v153
      %v418 = vunpack.c.l.b16 %v154
      %v419 = vunpack.c.h.b16 %v154
      %v420 = vunpack.c.l.b16 %v155
      %v421 = vunpack.c.h.b16 %v155
      %v422 = vunpack.c.l.b16 %v156
      %v423 = vunpack.c.h.b16 %v156
      %v424 = vunpack.c.l.b16 %v157
      %v425 = vunpack.c.h.b16 %v157
      %v426 = vunpack.c.l.b16 %v158
      %v427 = vunpack.c.h.b16 %v158
      %v428 = vunpack.c.l.b16 %v159
      %v429 = vunpack.c.h.b16 %v159
      %v430 = vunpack.c.l.b16 %v160
      %v431 = vunpack.c.h.b16 %v160
      %v432 = vunpack.c.l.b16 %v161
      %v433 = vunpack.c.h.b16 %v161
      %v434 = vunpack.c.l.b16 %v162
      %v435 = vunpack.c.h.b16 %v162
      %v436 = vunpack.c.l.b16 %v163
      %v437 = vunpack.c.h.b16 %v163
      %v438 = vunpack.c.l.b16 %v164
      %v439 = vunpack.c.h.b16 %v164
      %v440 = vunpack.c.l.b16 %v165
      %v441 = vunpack.c.h.b16 %v165
      %v442 = vunpack.c.l.b16 %v166
      %v443 = vunpack.c.h.b16 %v166
      %v444 = vunpack.c.l.b16 %v167
      %v445 = vunpack.c.h.b16 %v167
      %v446 = vunpack.c.l.b16 %v168
      %v447 = vunpack.c.h.b16 %v168
      %v448 = vunpack.c.l.b16 %v169
      %v449 = vunpack.c.h.b16 %v169
      %v450 = vunpack.c.l.b16 %v170
      %v451 = vunpack.c.h.b16 %v170
      %v452 = vunpack.c.l.b16 %v171
      %v453 = vunpack.c.h.b16 %v171
      %v454 = vunpack.c.l.b16 %v172
      %v455 = vunpack.c.h.b16 %v172
      %v456 = vunpack.c.l.b16 %v173
      %v457 = vunpack.c.h.b16 %v173
      %v458 = vunpack.c.l.b16 %v174
      %v459 = vunpack.c.h.b16 %v174
      %v460 = vunpack.c.l.b16 %v175
      %v461 = vunpack.c.h.b16 %v175
      %v462 = vunpack.c.l.b16 %v176
      %v463 = vunpack.c.h.b16 %v176
      %v464 = vunpack.c.l.b16 %v177
      %v465 = vunpack.c.h.b16 %v177
      %v466 = vunpack.c.l.b16 %v178
      %v467 = vunpack.c.h.b16 %v178
      %v468 = vunpack.c.l.b16 %v179
      %v469 = vunpack.c.h.b16 %v179
      %v470 = vunpack.c.l.b16 %v180
      %v471 = vunpack.c.h.b16 %v180
      %v472 = vunpack.c.l.b16 %v181
      %v473 = vunpack.c.h.b16 %v181
      %v474 = vunpack.c.l.b16 %v182
      %v475 = vunpack.c.h.b16 %v182
      %v476 = vunpack.c.l.b16 %v183
      %v477 = vunpack.c.h.b16 %v183
      %v478 = vunpack.c.l.b16 %v184
      %v479 = vunpack.c.h.b16 %v184
      %v480 = vunpack.c.l.b16 %v185
      %v481 = vunpack.c.h.b16 %v185
      %v482 = vunpack.c.l.b16 %v186
      %v483 = vunpack.c.h.b16 %v186
      %v484 = vunpack.c.l.b16 %v187
      %v485 = vunpack.c.h.b16 %v187
      %v486 = vunpack.c.l.b16 %v188
      %v487 = vunpack.c.h.b16 %v188
      %v488 = vunpack.c.l.b16 %v189
      %v489 = vunpack.c.h.b16 %v189
      %v490 = vunpack.c.l.b16 %v190
      %v491 = vunpack.c.h.b16 %v190
      %v492 = vunpack.c.l.b16 %v191
      %v493 = vunpack.c.h.b16 %v191
      %v494 = vunpack.c.l.b16 %v192
      %v495 = vunpack.c.h.b16 %v192
      %v496 = vunpack.c.l.b16 %v193
      %v497 = vunpack.c.h.b16 %v193
      %v498 = vunpack.c.l.b16 %v194
      %v499 = vunpack.c.h.b16 %v194
      %v500 = vunpack.c.l.b16 %v195
      %v501 = vunpack.c.h.b16 %v195
      %v502 = vunpack.c.l.b16 %v196
      %v503 = vunpack.c.h.b16 %v196
      %v504 = vunpack.c.l.b16 %v197
      %v505 = vunpack.c.h.b16 %v197
      %v506 = vunpack.c.l.b16 %v198
      %v507 = vunpack.c.h.b16 %v198
      %v508 = vunpack.c.l.b16 %v199
      %v509 = vunpack.c.h.b16 %v199
      %v510 = vunpack.c.l.b16 %v200
      %v511 = vunpack.c.h.b16 %v200
      %v512 = vunpack.c.l.b16 %v201
      %v513 = vunpack.c.h.b16 %v201
      %v514 = vunpack.c.l.b16 %v202
      %v515 = vunpack.c.h.b16 %v202
      %v516 = vunpack.c.l.b16 %v203
      %v517 = vunpack.c.h.b16 %v203
      %v518 = vunpack.c.l.b16 %v204
      %v519 = vunpack.c.h.b16 %v204
      %v520 = vunpack.c.l.b16 %v205
      %v521 = vunpack.c.h.b16 %v205
      %v522 = vunpack.c.l.b16 %v206
      %v523 = vunpack.c.h.b16 %v206
      %v524 = vunpack.c.l.b16 %v207
      %v525 = vunpack.c.h.b16 %v207
      %v526 = vunpack.c.l.b16 %v208
      %v527 = vunpack.c.h.b16 %v208
      %v528 = vunpack.c.l.b16 %v209
      %v529 = vunpack.c.h.b16 %v209
      %v530 = vunpack.c.l.b16 %v210
      %v531 = vunpack.c.h.b16 %v210
      %v532 = vunpack.c.l.b16 %v211
      %v533 = vunpack.c.h.b16 %v211
      %v534 = vunpack.c.l.b16 %v212
      %v535 = vunpack.c.h.b16 %v212
      %v536 = vunpack.c.l.b16 %v213
      %v537 = vunpack.c.h.b16 %v213
      %v538 = vunpack.c.l.b16 %v214
      %v539 = vunpack.c.h.b16 %v214
      %v540 = vunpack.c.l.b16 %v215
      %v541 = vunpack.c.h.b16 %v215
      %v542 = vunpack.c.l.b16 %v216
      %v543 = vunpack.c.h.b16 %v216
      %v544 = vunpack.c.l.b16 %v217
      %v545 = vunpack.c.h.b16 %v217
      %v546 = vunpack.c.l.b16 %v218
      %v547 = vunpack.c.h.b16 %v218
      %v548 = vunpack.c.l.b16 %v219
      %v549 = vunpack.c.h.b16 %v219
      %v550 = vunpack.c.l.b16 %v220
      %v551 = vunpack.c.h.b16 %v220
      %v552 = vunpack.c.l.b16 %v221
      %v553 = vunpack.c.h.b16 %v221
      %v554 = vunpack.c.l.b16 %v222
      %v555 = vunpack.c.h.b16 %v222
      %v556 = vunpack.c.l.b16 %v223
      %v557 = vunpack.c.h.b16 %v223
      %v558 = vunpack.c.l.b16 %v224
      %v559 = vunpack.c.h.b16 %v224
      %v560 = vunpack.c.l.b16 %v225
      %v561 = vunpack.c.h.b16 %v225
      %v562 = vunpack.c.l.b16 %v226
      %v563 = vunpack.c.h.b16 %v226
      %v564 = vunpack.c.l.b16 %v227
      %v565 = vunpack.c.h.b16 %v227
      %v566 = vunpack.c.l.b16 %v228
      %v567 = vunpack.c.h.b16 %v228
      %v568 = vunpack.c.l.b16 %v229
      %v569 = vunpack.c.h.b16 %v229
      %v570 = vunpack.c.l.b16 %v230
      %v571 = vunpack.c.h.b16 %v230
      %v572 = vunpack.c.l.b16 %v231
      %v573 = vunpack.c.h.b16 %v231
      %v574 = vunpack.c.l.b16 %v232
      %v575 = vunpack.c.h.b16 %v232
      %v576 = vunpack.c.l.b16 %v233
      %v577 = vunpack.c.h.b16 %v233
      %v578 = vunpack.c.l.b16 %v234
      %v579 = vunpack.c.h.b16 %v234
      %v580 = vunpack.c.l.b16 %v235
      %v581 = vunpack.c.h.b16 %v235
      %v582 = vunpack.c.l.b16 %v236
      %v583 = vunpack.c.h.b16 %v236
      %v584 = vunpack.c.l.b16 %v237
      %v585 = vunpack.c.h.b16 %v237
      %v586 = vunpack.c.l.b16 %v238
      %v587 = vunpack.c.h.b16 %v238
      %v588 = vunpack.c.l.b16 %v239
      %v589 = vunpack.c.h.b16 %v239
      %v590 = vunpack.c.l.b16 %v240
      %v591 = vunpack.c.h.b16 %v240
      %v592 = vunpack.c.l.b16 %v241
      %v593 = vunpack.c.h.b16 %v241
      %v594 = vunpack.c.l.b16 %v242
      %v595 = vunpack.c.h.b16 %v242
      %v596 = vunpack.c.l.b16 %v243
      %v597 = vunpack.c.h.b16 %v243
      %v598 = vunpack.c.l.b16 %v244
      %v599 = vunpack.c.h.b16 %v244
      %v600 = vunpack.c.l.b16 %v245
      %v601 = vunpack.c.h.b16 %v245
      %v602 = vunpack.c.l.b16 %v246
      %v603 = vunpack.c.h.b16 %v246
      %v604 = vunpack.c.l.b16 %v247
      %v605 = vunpack.c.h.b16 %v247
      %v606 = vunpack.c.l.b16 %v248
      %v607 = vunpack.c.h.b16 %v248
      %v608 = vunpack.c.l.b16 %v249
      %v609 = vunpack.c.h.b16 %v249
      %v610 = vunpack.c.l.b16 %v250
      %v611 = vunpack.c.h.b16 %v250
      %v612 = vunpack.c.l.b16 %v251
      %v613 = vunpack.c.h.b16 %v251
      %v614 = vunpack.c.l.b16 %v252
      %v615 = vunpack.c.h.b16 %v252
      %v616 = vunpack.c.l.b16 %v253
      %v617 = vunpack.c.h.b16 %v253
      %v618 = vunpack.c.l.b16 %v254
      %v619 = vunpack.c.h.b16 %v254
      %v620 = vunpack.c.l.b16 %v255
      %v621 = vunpack.c.h.b16 %v255
      %v622 = vunpack.c.l.b16 %v256
      %v623 = vunpack.c.h.b16 %v256
      %v624 = vunpack.c.l.b16 %v257
      %v625 = vunpack.c.h.b16 %v257
      %v626 = vunpack.c.l.b16 %v258
      %v627 = vunpack.c.h.b16 %v258
      %v628 = vunpack.c.l.b16 %v259
      %v629 = vunpack.c.h.b16 %v259
      %v630 = vunpack.c.l.b16 %v260
      %v631 = vunpack.c.h.b16 %v260
      %v632 = vunpack.c.l.b16 %v261
      %v633 = vunpack.c.h.b16 %v261
      %v634 = vunpack.c.l.b16 %v262
      %v635 = vunpack.c.h.b16 %v262
      %v636 = vunpack.c.l.b16 %v263
      %v637 = vunpack.c.h.b16 %v263
      %v638 = vunpack.c.l.b16 %v264
      %v639 = vunpack.c.h.b16 %v264
      %v640 = vunpack.c.l.b16 %v265
      %v641 = vunpack.c.h.b16 %v265
      %v642 = vunpack.c.l.b16 %v266
      %v643 = vunpack.c.h.b16 %v266
      %v644 = vunpack.c.l.b16 %v267
      %v645 = vunpack.c.h.b16 %v267
      %v646 = vunpack.c.l.b16 %v268
      %v647 = vunpack.c.h.b16 %v268
      %v648 = vunpack.c.l.b16 %v269
      %v649 = vunpack.c.h.b16 %v269
      %v650 = vunpack.c.l.b16 %v270
      %v651 = vunpack.c.h.b16 %v270
      %v652 = vunpack.c.l.b16 %v271
      %v653 = vunpack.c.h.b16 %v271
      %v654 = vunpack.c.l.b16 %v272
      %v655 = vunpack.c.h.b16 %v272
      %v656 = vunpack.c.l.b16 %v273
      %v657 = vunpack.c.h.b16 %v273
      %v658 = vpack.c.b16 %v434, %v402
      %v659 = vpack.c.b16 %v435, %v403
      %v660 = vpack.c.b16 %v436, %v404
      %v661 = vpack.c.b16 %v437, %v405
      %v662 = vpack.c.b16 %v438, %v406
      %v663 = vpack.c.b16 %v439, %v407
      %v664 = vpack.c.b16 %v440, %v408
      %v665 = vpack.c.b16 %v441, %v409
      %v666 = vpack.c.b16 %v442, %v410
      %v667 = vpack.c.b16 %v443, %v411
      %v668 = vpack.c.b16 %v444, %v412
      %v669 = vpack.c.b16 %v445, %v413
      %v670 = vpack.c.b16 %v446, %v414
      %v671 = vpack.c.b16 %v447, %v415
      %v672 = vpack.c.b16 %v448, %v416
      %v673 = vpack.c.b16 %v449, %v417
      %v674 = vpack.c.b16 %v450, %v418
      %v675 = vpack.c.b16 %v451, %v419
      %v676 = vpack.c.b16 %v452, %v420
      %v677 = vpack.c.b16 %v453, %v421
      %v678 = vpack.c.b16 %v454, %v422
      %v679 = vpack.c.b16 %v455, %v423
      %v680 = vpack.c.b16 %v456, %v424
      %v681 = vpack.c.b16 %v457, %v425
      %v682 = vpack.c.b16 %v458, %v426
      %v683 = vpack.c.b16 %v459, %v427
      %v684 = vpack.c.b16 %v460, %v428
      %v685 = vpack.c.b16 %v461, %v429
      %v686 = vpack.c.b16 %v462, %v430
      %v687 = vpack.c.b16 %v463, %v431
      %v688 = vpack.c.b16 %v464, %v432
      %v689 = vpack.c.b16 %v465, %v433
      %v690 = vpack.c.b16 %v498, %v466
      %v691 = vpack.c.b16 %v499, %v467
      %v692 = vpack.c.b16 %v500, %v468
      %v693 = vpack.c.b16 %v501, %v469
      %v694 = vpack.c.b16 %v502, %v470
      %v695 = vpack.c.b16 %v503, %v471
      %v696 = vpack.c.b16 %v504, %v472
      %v697 = vpack.c.b16 %v505, %v473
      %v698 = vpack.c.b16 %v506, %v474
      %v699 = vpack.c.b16 %v507, %v475
      %v700 = vpack.c.b16 %v508, %v476
      %v701 = vpack.c.b16 %v509, %v477
      %v702 = vpack.c.b16 %v510, %v478
      %v703 = vpack.c.b16 %v511, %v479
      %v704 = vpack.c.b16 %v512, %v480
      %v705 = vpack.c.b16 %v513, %v481
      %v706 = vpack.c.b16 %v514, %v482
      %v707 = vpack.c.b16 %v515, %v483
      %v708 = vpack.c.b16 %v516, %v484
      %v709 = vpack.c.b16 %v517, %v485
      %v710 = vpack.c.b16 %v518, %v486
      %v711 = vpack.c.b16 %v519, %v487
      %v712 = vpack.c.b16 %v520, %v488
      %v713 = vpack.c.b16 %v521, %v489
      %v714 = vpack.c.b16 %v522, %v490
      %v715 = vpack.c.b16 %v523, %v491
      %v716 = vpack.c.b16 %v524, %v492
      %v717 = vpack.c.b16 %v525, %v493
      %v718 = vpack.c.b16 %v526, %v494
      %v719 = vpack.c.b16 %v527, %v495
      %v720 = vpack.c.b16 %v528, %v496
      %v721 = vpack.c.b16 %v529, %v497
      %v722 = vpack.c.b16 %v562, %v530
      %v723 = vpack.c.b16 %v563, %v531
      %v724 = vpack.c.b16 %v564, %v532
      %v725 = vpack.c.b16 %v565, %v533
      %v726 = vpack.c.b16 %v566, %v534
      %v727 = vpack.c.b16 %v567, %v535
      %v728 = vpack.c.b16 %v568, %v536
      %v729 = vpack.c.b16 %v569, %v537
      %v730 = vpack.c.b16 %v570, %v538
      %v731 = vpack.c.b16 %v571, %v539
      %v732 = vpack.c.b16 %v572, %v540
      %v733 = vpack.c.b16 %v573, %v541
      %v734 = vpack.c.b16 %v574, %v542
      %v735 = vpack.c.b16 %v575, %v543
      %v736 = vpack.c.b16 %v576, %v544
      %v737 = vpack.c.b16 %v577, %v545
      %v738 = vpack.c.b16 %v578, %v546
      %v739 = vpack.c.b16 %v579, %v547
      %v740 = vpack.c.b16 %v580, %v548
      %v741 = vpack.c.b16 %v581, %v549
      %v742 = vpack.c.b16 %v582, %v550
      %v743 = vpack.c.b16 %v583, %v551
      %v744 = vpack.c.b16 %v584, %v552
      %v745 = vpack.c.b16 %v585, %v553
      %v746 = vpack.c.b16 %v586, %v554
      %v747 = vpack.c.b16 %v587, %v555
      %v748 = vpack.c.b16 %v588, %v556
      %v749 = vpack.c.b16 %v589, %v557
      %v750 = vpack.c.b16 %v590, %v558
      %v751 = vpack.c.b16 %v591, %v559
      %v752 = vpack.c.b16 %v592, %v560
      %v753 = vpack.c.b16 %v593, %v561
      %v754 = vpack.c.b16 %v626, %v594
      %v755 = vpack.c.b16 %v627, %v595
      %v756 = vpack.c.b16 %v628, %v596
      %v757 = vpack.c.b16 %v629, %v597
      %v758 = vpack.c.b16 %v630, %v598
      %v759 = vpack.c.b16 %v631, %v599
      %v760 = vpack.c.b16 %v632, %v600
      %v761 = vpack.c.b16 %v633, %v601
      %v762 = vpack.c.b16 %v634, %v602
      %v763 = vpack.c.b16 %v635, %v603
      %v764 = vpack.c.b16 %v636, %v604
      %v765 = vpack.c.b16 %v637, %v605
      %v766 = vpack.c.b16 %v638, %v606
      %v767 = vpack.c.b16 %v639, %v607
      %v768 = vpack.c.b16 %v640, %v608
      %v769 = vpack.c.b16 %v641, %v609
      %v770 = vpack.c.b16 %v642, %v610
      %v771 = vpack.c.b16 %v643, %v611
      %v772 = vpack.c.b16 %v644, %v612
      %v773 = vpack.c.b16 %v645, %v613
      %v774 = vpack.c.b16 %v646, %v614
      %v775 = vpack.c.b16 %v647, %v615
      %v776 = vpack.c.b16 %v648, %v616
      %v777 = vpack.c.b16 %v649, %v617
      %v778 = vpack.c.b16 %v650, %v618
      %v779 = vpack.c.b16 %v651, %v619
      %v780 = vpack.c.b16 %v652, %v620
      %v781 = vpack.c.b16 %v653, %v621
      %v782 = vpack.c.b16 %v654, %v622
      %v783 = vpack.c.b16 %v655, %v623
      %v784 = vpack.c.b16 %v656, %v624
      %v785 = vpack.c.b16 %v657, %v625
      %vm914 = vcmask 523264
      %v916 = vsel %vm914, %v145, 0
      %918 = vmatpush.bf16.msra.mxu0 0
      %919 = vmatpush.bf16.msra.mxu0 0
      %920 = vmatpush.bf16.msra.mxu0 0
      %921 = vmatpush.bf16.msra.mxu0 0
      %922 = vmatpush.bf16.msra.mxu0 %v754
      %923 = vmatpush.bf16.msra.mxu0 %v722
      %924 = vmatpush.bf16.msra.mxu0 %v690
      %925 = vmatpush.bf16.msra.mxu0 %v658
      %926 = vmatmul.bf16.gmra.mxu0 %v916
      %v927 = vpop.f32.mrf.mxu0
      %v928 = vadd.f32 0.0, %v927
      %v929 = vpop.f32.mrf.mxu0
      %930 = vdwg.mxu0
      %931 = vmatpush.bf16.msra.mxu0 0
      %932 = vmatpush.bf16.msra.mxu0 0
      %933 = vmatpush.bf16.msra.mxu0 0
      %934 = vmatpush.bf16.msra.mxu0 0
      %935 = vmatpush.bf16.msra.mxu0 %v755
      %936 = vmatpush.bf16.msra.mxu0 %v723
      %937 = vmatpush.bf16.msra.mxu0 %v691
      %938 = vmatpush.bf16.msra.mxu0 %v659
      %939 = vmatmul.bf16.gmra.mxu0 %v916
      %v940 = vpop.f32.mrf.mxu0
      %v941 = vadd.f32 0.0, %v940
      %v942 = vpop.f32.mrf.mxu0
      %943 = vdwg.mxu0
      %944 = vmatpush.bf16.msra.mxu0 0
      %945 = vmatpush.bf16.msra.mxu0 0
      %946 = vmatpush.bf16.msra.mxu0 0
      %947 = vmatpush.bf16.msra.mxu0 0
      %948 = vmatpush.bf16.msra.mxu0 %v756
      %949 = vmatpush.bf16.msra.mxu0 %v724
      %950 = vmatpush.bf16.msra.mxu0 %v692
      %951 = vmatpush.bf16.msra.mxu0 %v660
      %952 = vmatmul.bf16.gmra.mxu0 %v916
      %v953 = vpop.f32.mrf.mxu0
      %v954 = vadd.f32 0.0, %v953
      %v955 = vpop.f32.mrf.mxu0
      %956 = vdwg.mxu0
      %957 = vmatpush.bf16.msra.mxu0 0
      %958 = vmatpush.bf16.msra.mxu0 0
      %959 = vmatpush.bf16.msra.mxu0 0
      %960 = vmatpush.bf16.msra.mxu0 0
      %961 = vmatpush.bf16.msra.mxu0 %v757
      %962 = vmatpush.bf16.msra.mxu0 %v725
      %963 = vmatpush.bf16.msra.mxu0 %v693
      %964 = vmatpush.bf16.msra.mxu0 %v661
      %965 = vmatmul.bf16.gmra.mxu0 %v916
      %v966 = vpop.f32.mrf.mxu0
      %v967 = vadd.f32 0.0, %v966
      %v968 = vpop.f32.mrf.mxu0
      %969 = vdwg.mxu0
      %970 = vmatpush.bf16.msra.mxu0 0
      %971 = vmatpush.bf16.msra.mxu0 0
      %972 = vmatpush.bf16.msra.mxu0 0
      %973 = vmatpush.bf16.msra.mxu0 0
      %974 = vmatpush.bf16.msra.mxu0 %v758
      %975 = vmatpush.bf16.msra.mxu0 %v726
      %976 = vmatpush.bf16.msra.mxu0 %v694
      %977 = vmatpush.bf16.msra.mxu0 %v662
      %978 = vmatmul.bf16.gmra.mxu0 %v916
      %v979 = vpop.f32.mrf.mxu0
      %v980 = vadd.f32 0.0, %v979
      %v981 = vpop.f32.mrf.mxu0
      %982 = vdwg.mxu0
      %983 = vmatpush.bf16.msra.mxu0 0
      %984 = vmatpush.bf16.msra.mxu0 0
      %985 = vmatpush.bf16.msra.mxu0 0
      %986 = vmatpush.bf16.msra.mxu0 0
      %987 = vmatpush.bf16.msra.mxu0 %v759
      %988 = vmatpush.bf16.msra.mxu0 %v727
      %989 = vmatpush.bf16.msra.mxu0 %v695
      %990 = vmatpush.bf16.msra.mxu0 %v663
      %991 = vmatmul.bf16.gmra.mxu0 %v916
      %v992 = vpop.f32.mrf.mxu0
      %v993 = vadd.f32 0.0, %v992
      %v994 = vpop.f32.mrf.mxu0
      %995 = vdwg.mxu0
      %996 = vmatpush.bf16.msra.mxu0 0
      %997 = vmatpush.bf16.msra.mxu0 0
      %998 = vmatpush.bf16.msra.mxu0 0
      %999 = vmatpush.bf16.msra.mxu0 0
      %1000 = vmatpush.bf16.msra.mxu0 %v760
      %1001 = vmatpush.bf16.msra.mxu0 %v728
      %1002 = vmatpush.bf16.msra.mxu0 %v696
      %1003 = vmatpush.bf16.msra.mxu0 %v664
      %1004 = vmatmul.bf16.gmra.mxu0 %v916
      %v1005 = vpop.f32.mrf.mxu0
      %v1006 = vadd.f32 0.0, %v1005
      %v1007 = vpop.f32.mrf.mxu0
      %1008 = vdwg.mxu0
      %1009 = vmatpush.bf16.msra.mxu0 0
      %1010 = vmatpush.bf16.msra.mxu0 0
      %1011 = vmatpush.bf16.msra.mxu0 0
      %1012 = vmatpush.bf16.msra.mxu0 0
      %1013 = vmatpush.bf16.msra.mxu0 %v761
      %1014 = vmatpush.bf16.msra.mxu0 %v729
      %1015 = vmatpush.bf16.msra.mxu0 %v697
      %1016 = vmatpush.bf16.msra.mxu0 %v665
      %1017 = vmatmul.bf16.gmra.mxu0 %v916
      %v1018 = vpop.f32.mrf.mxu0
      %v1019 = vadd.f32 0.0, %v1018
      %v1020 = vpop.f32.mrf.mxu0
      %1021 = vdwg.mxu0
      %1022 = vmatpush.bf16.msra.mxu0 0
      %1023 = vmatpush.bf16.msra.mxu0 0
      %1024 = vmatpush.bf16.msra.mxu0 0
      %1025 = vmatpush.bf16.msra.mxu0 0
      %1026 = vmatpush.bf16.msra.mxu0 %v762
      %1027 = vmatpush.bf16.msra.mxu0 %v730
      %1028 = vmatpush.bf16.msra.mxu0 %v698
      %1029 = vmatpush.bf16.msra.mxu0 %v666
      %1030 = vmatmul.bf16.gmra.mxu0 %v916
      %v1031 = vpop.f32.mrf.mxu0
      %v1032 = vadd.f32 0.0, %v1031
      %v1033 = vpop.f32.mrf.mxu0
      %1034 = vdwg.mxu0
      %1035 = vmatpush.bf16.msra.mxu0 0
      %1036 = vmatpush.bf16.msra.mxu0 0
      %1037 = vmatpush.bf16.msra.mxu0 0
      %1038 = vmatpush.bf16.msra.mxu0 0
      %1039 = vmatpush.bf16.msra.mxu0 %v763
      %1040 = vmatpush.bf16.msra.mxu0 %v731
      %1041 = vmatpush.bf16.msra.mxu0 %v699
      %1042 = vmatpush.bf16.msra.mxu0 %v667
      %1043 = vmatmul.bf16.gmra.mxu0 %v916
      %v1044 = vpop.f32.mrf.mxu0
      %v1045 = vadd.f32 0.0, %v1044
      %v1046 = vpop.f32.mrf.mxu0
      %1047 = vdwg.mxu0
      %1048 = vmatpush.bf16.msra.mxu0 0
      %1049 = vmatpush.bf16.msra.mxu0 0
      %1050 = vmatpush.bf16.msra.mxu0 0
      %1051 = vmatpush.bf16.msra.mxu0 0
      %1052 = vmatpush.bf16.msra.mxu0 %v764
      %1053 = vmatpush.bf16.msra.mxu0 %v732
      %1054 = vmatpush.bf16.msra.mxu0 %v700
      %1055 = vmatpush.bf16.msra.mxu0 %v668
      %1056 = vmatmul.bf16.gmra.mxu0 %v916
      %v1057 = vpop.f32.mrf.mxu0
      %v1058 = vadd.f32 0.0, %v1057
      %v1059 = vpop.f32.mrf.mxu0
      %1060 = vdwg.mxu0
      %1061 = vmatpush.bf16.msra.mxu0 0
      %1062 = vmatpush.bf16.msra.mxu0 0
      %1063 = vmatpush.bf16.msra.mxu0 0
      %1064 = vmatpush.bf16.msra.mxu0 0
      %1065 = vmatpush.bf16.msra.mxu0 %v765
      %1066 = vmatpush.bf16.msra.mxu0 %v733
      %1067 = vmatpush.bf16.msra.mxu0 %v701
      %1068 = vmatpush.bf16.msra.mxu0 %v669
      %1069 = vmatmul.bf16.gmra.mxu0 %v916
      %v1070 = vpop.f32.mrf.mxu0
      %v1071 = vadd.f32 0.0, %v1070
      %v1072 = vpop.f32.mrf.mxu0
      %1073 = vdwg.mxu0
      %1074 = vmatpush.bf16.msra.mxu0 0
      %1075 = vmatpush.bf16.msra.mxu0 0
      %1076 = vmatpush.bf16.msra.mxu0 0
      %1077 = vmatpush.bf16.msra.mxu0 0
      %1078 = vmatpush.bf16.msra.mxu0 %v766
      %1079 = vmatpush.bf16.msra.mxu0 %v734
      %1080 = vmatpush.bf16.msra.mxu0 %v702
      %1081 = vmatpush.bf16.msra.mxu0 %v670
      %1082 = vmatmul.bf16.gmra.mxu0 %v916
      %v1083 = vpop.f32.mrf.mxu0
      %v1084 = vadd.f32 0.0, %v1083
      %v1085 = vpop.f32.mrf.mxu0
      %1086 = vdwg.mxu0
      %1087 = vmatpush.bf16.msra.mxu0 0
      %1088 = vmatpush.bf16.msra.mxu0 0
      %1089 = vmatpush.bf16.msra.mxu0 0
      %1090 = vmatpush.bf16.msra.mxu0 0
      %1091 = vmatpush.bf16.msra.mxu0 %v767
      %1092 = vmatpush.bf16.msra.mxu0 %v735
      %1093 = vmatpush.bf16.msra.mxu0 %v703
      %1094 = vmatpush.bf16.msra.mxu0 %v671
      %1095 = vmatmul.bf16.gmra.mxu0 %v916
      %v1096 = vpop.f32.mrf.mxu0
      %v1097 = vadd.f32 0.0, %v1096
      %v1098 = vpop.f32.mrf.mxu0
      %1099 = vdwg.mxu0
      %1100 = vmatpush.bf16.msra.mxu0 0
      %1101 = vmatpush.bf16.msra.mxu0 0
      %1102 = vmatpush.bf16.msra.mxu0 0
      %1103 = vmatpush.bf16.msra.mxu0 0
      %1104 = vmatpush.bf16.msra.mxu0 %v768
      %1105 = vmatpush.bf16.msra.mxu0 %v736
      %1106 = vmatpush.bf16.msra.mxu0 %v704
      %1107 = vmatpush.bf16.msra.mxu0 %v672
      %1108 = vmatmul.bf16.gmra.mxu0 %v916
      %v1109 = vpop.f32.mrf.mxu0
      %v1110 = vadd.f32 0.0, %v1109
      %v1111 = vpop.f32.mrf.mxu0
      %1112 = vdwg.mxu0
      %1113 = vmatpush.bf16.msra.mxu0 0
      %1114 = vmatpush.bf16.msra.mxu0 0
      %1115 = vmatpush.bf16.msra.mxu0 0
      %1116 = vmatpush.bf16.msra.mxu0 0
      %1117 = vmatpush.bf16.msra.mxu0 %v769
      %1118 = vmatpush.bf16.msra.mxu0 %v737
      %1119 = vmatpush.bf16.msra.mxu0 %v705
      %1120 = vmatpush.bf16.msra.mxu0 %v673
      %1121 = vmatmul.bf16.gmra.mxu0 %v916
      %v1122 = vpop.f32.mrf.mxu0
      %v1123 = vadd.f32 0.0, %v1122
      %v1124 = vpop.f32.mrf.mxu0
      %1125 = vdwg.mxu0
      %1126 = vmatpush.bf16.msra.mxu0 0
      %1127 = vmatpush.bf16.msra.mxu0 0
      %1128 = vmatpush.bf16.msra.mxu0 0
      %1129 = vmatpush.bf16.msra.mxu0 0
      %1130 = vmatpush.bf16.msra.mxu0 %v770
      %1131 = vmatpush.bf16.msra.mxu0 %v738
      %1132 = vmatpush.bf16.msra.mxu0 %v706
      %1133 = vmatpush.bf16.msra.mxu0 %v674
      %1134 = vmatmul.bf16.gmra.mxu0 %v916
      %v1135 = vpop.f32.mrf.mxu0
      %v1136 = vadd.f32 0.0, %v1135
      %v1137 = vpop.f32.mrf.mxu0
      %1138 = vdwg.mxu0
      %1139 = vmatpush.bf16.msra.mxu0 0
      %1140 = vmatpush.bf16.msra.mxu0 0
      %1141 = vmatpush.bf16.msra.mxu0 0
      %1142 = vmatpush.bf16.msra.mxu0 0
      %1143 = vmatpush.bf16.msra.mxu0 %v771
      %1144 = vmatpush.bf16.msra.mxu0 %v739
      %1145 = vmatpush.bf16.msra.mxu0 %v707
      %1146 = vmatpush.bf16.msra.mxu0 %v675
      %1147 = vmatmul.bf16.gmra.mxu0 %v916
      %v1148 = vpop.f32.mrf.mxu0
      %v1149 = vadd.f32 0.0, %v1148
      %v1150 = vpop.f32.mrf.mxu0
      %1151 = vdwg.mxu0
      %1152 = vmatpush.bf16.msra.mxu0 0
      %1153 = vmatpush.bf16.msra.mxu0 0
      %1154 = vmatpush.bf16.msra.mxu0 0
      %1155 = vmatpush.bf16.msra.mxu0 0
      %1156 = vmatpush.bf16.msra.mxu0 %v772
      %1157 = vmatpush.bf16.msra.mxu0 %v740
      %1158 = vmatpush.bf16.msra.mxu0 %v708
      %1159 = vmatpush.bf16.msra.mxu0 %v676
      %1160 = vmatmul.bf16.gmra.mxu0 %v916
      %v1161 = vpop.f32.mrf.mxu0
      %v1162 = vadd.f32 0.0, %v1161
      %v1163 = vpop.f32.mrf.mxu0
      %1164 = vdwg.mxu0
      %1165 = vmatpush.bf16.msra.mxu0 0
      %1166 = vmatpush.bf16.msra.mxu0 0
      %1167 = vmatpush.bf16.msra.mxu0 0
      %1168 = vmatpush.bf16.msra.mxu0 0
      %1169 = vmatpush.bf16.msra.mxu0 %v773
      %1170 = vmatpush.bf16.msra.mxu0 %v741
      %1171 = vmatpush.bf16.msra.mxu0 %v709
      %1172 = vmatpush.bf16.msra.mxu0 %v677
      %1173 = vmatmul.bf16.gmra.mxu0 %v916
      %v1174 = vpop.f32.mrf.mxu0
      %v1175 = vadd.f32 0.0, %v1174
      %v1176 = vpop.f32.mrf.mxu0
      %1177 = vdwg.mxu0
      %1178 = vmatpush.bf16.msra.mxu0 0
      %1179 = vmatpush.bf16.msra.mxu0 0
      %1180 = vmatpush.bf16.msra.mxu0 0
      %1181 = vmatpush.bf16.msra.mxu0 0
      %1182 = vmatpush.bf16.msra.mxu0 %v774
      %1183 = vmatpush.bf16.msra.mxu0 %v742
      %1184 = vmatpush.bf16.msra.mxu0 %v710
      %1185 = vmatpush.bf16.msra.mxu0 %v678
      %1186 = vmatmul.bf16.gmra.mxu0 %v916
      %v1187 = vpop.f32.mrf.mxu0
      %v1188 = vadd.f32 0.0, %v1187
      %v1189 = vpop.f32.mrf.mxu0
      %1190 = vdwg.mxu0
      %1191 = vmatpush.bf16.msra.mxu0 0
      %1192 = vmatpush.bf16.msra.mxu0 0
      %1193 = vmatpush.bf16.msra.mxu0 0
      %1194 = vmatpush.bf16.msra.mxu0 0
      %1195 = vmatpush.bf16.msra.mxu0 %v775
      %1196 = vmatpush.bf16.msra.mxu0 %v743
      %1197 = vmatpush.bf16.msra.mxu0 %v711
      %1198 = vmatpush.bf16.msra.mxu0 %v679
      %1199 = vmatmul.bf16.gmra.mxu0 %v916
      %v1200 = vpop.f32.mrf.mxu0
      %v1201 = vadd.f32 0.0, %v1200
      %v1202 = vpop.f32.mrf.mxu0
      %1203 = vdwg.mxu0
      %1204 = vmatpush.bf16.msra.mxu0 0
      %1205 = vmatpush.bf16.msra.mxu0 0
      %1206 = vmatpush.bf16.msra.mxu0 0
      %1207 = vmatpush.bf16.msra.mxu0 0
      %1208 = vmatpush.bf16.msra.mxu0 %v776
      %1209 = vmatpush.bf16.msra.mxu0 %v744
      %1210 = vmatpush.bf16.msra.mxu0 %v712
      %1211 = vmatpush.bf16.msra.mxu0 %v680
      %1212 = vmatmul.bf16.gmra.mxu0 %v916
      %v1213 = vpop.f32.mrf.mxu0
      %v1214 = vadd.f32 0.0, %v1213
      %v1215 = vpop.f32.mrf.mxu0
      %1216 = vdwg.mxu0
      %1217 = vmatpush.bf16.msra.mxu0 0
      %1218 = vmatpush.bf16.msra.mxu0 0
      %1219 = vmatpush.bf16.msra.mxu0 0
      %1220 = vmatpush.bf16.msra.mxu0 0
      %1221 = vmatpush.bf16.msra.mxu0 %v777
      %1222 = vmatpush.bf16.msra.mxu0 %v745
      %1223 = vmatpush.bf16.msra.mxu0 %v713
      %1224 = vmatpush.bf16.msra.mxu0 %v681
      %1225 = vmatmul.bf16.gmra.mxu0 %v916
      %v1226 = vpop.f32.mrf.mxu0
      %v1227 = vadd.f32 0.0, %v1226
      %v1228 = vpop.f32.mrf.mxu0
      %1229 = vdwg.mxu0
      %1230 = vmatpush.bf16.msra.mxu0 0
      %1231 = vmatpush.bf16.msra.mxu0 0
      %1232 = vmatpush.bf16.msra.mxu0 0
      %1233 = vmatpush.bf16.msra.mxu0 0
      %1234 = vmatpush.bf16.msra.mxu0 %v778
      %1235 = vmatpush.bf16.msra.mxu0 %v746
      %1236 = vmatpush.bf16.msra.mxu0 %v714
      %1237 = vmatpush.bf16.msra.mxu0 %v682
      %1238 = vmatmul.bf16.gmra.mxu0 %v916
      %v1239 = vpop.f32.mrf.mxu0
      %v1240 = vadd.f32 0.0, %v1239
      %v1241 = vpop.f32.mrf.mxu0
      %1242 = vdwg.mxu0
      %1243 = vmatpush.bf16.msra.mxu0 0
      %1244 = vmatpush.bf16.msra.mxu0 0
      %1245 = vmatpush.bf16.msra.mxu0 0
      %1246 = vmatpush.bf16.msra.mxu0 0
      %1247 = vmatpush.bf16.msra.mxu0 %v779
      %1248 = vmatpush.bf16.msra.mxu0 %v747
      %1249 = vmatpush.bf16.msra.mxu0 %v715
      %1250 = vmatpush.bf16.msra.mxu0 %v683
      %1251 = vmatmul.bf16.gmra.mxu0 %v916
      %v1252 = vpop.f32.mrf.mxu0
      %v1253 = vadd.f32 0.0, %v1252
      %v1254 = vpop.f32.mrf.mxu0
      %1255 = vdwg.mxu0
      %1256 = vmatpush.bf16.msra.mxu0 0
      %1257 = vmatpush.bf16.msra.mxu0 0
      %1258 = vmatpush.bf16.msra.mxu0 0
      %1259 = vmatpush.bf16.msra.mxu0 0
      %1260 = vmatpush.bf16.msra.mxu0 %v780
      %1261 = vmatpush.bf16.msra.mxu0 %v748
      %1262 = vmatpush.bf16.msra.mxu0 %v716
      %1263 = vmatpush.bf16.msra.mxu0 %v684
      %1264 = vmatmul.bf16.gmra.mxu0 %v916
      %v1265 = vpop.f32.mrf.mxu0
      %v1266 = vadd.f32 0.0, %v1265
      %v1267 = vpop.f32.mrf.mxu0
      %1268 = vdwg.mxu0
      %1269 = vmatpush.bf16.msra.mxu0 0
      %1270 = vmatpush.bf16.msra.mxu0 0
      %1271 = vmatpush.bf16.msra.mxu0 0
      %1272 = vmatpush.bf16.msra.mxu0 0
      %1273 = vmatpush.bf16.msra.mxu0 %v781
      %1274 = vmatpush.bf16.msra.mxu0 %v749
      %1275 = vmatpush.bf16.msra.mxu0 %v717
      %1276 = vmatpush.bf16.msra.mxu0 %v685
      %1277 = vmatmul.bf16.gmra.mxu0 %v916
      %v1278 = vpop.f32.mrf.mxu0
      %v1279 = vadd.f32 0.0, %v1278
      %v1280 = vpop.f32.mrf.mxu0
      %1281 = vdwg.mxu0
      %1282 = vmatpush.bf16.msra.mxu0 0
      %1283 = vmatpush.bf16.msra.mxu0 0
      %1284 = vmatpush.bf16.msra.mxu0 0
      %1285 = vmatpush.bf16.msra.mxu0 0
      %1286 = vmatpush.bf16.msra.mxu0 %v782
      %1287 = vmatpush.bf16.msra.mxu0 %v750
      %1288 = vmatpush.bf16.msra.mxu0 %v718
      %1289 = vmatpush.bf16.msra.mxu0 %v686
      %1290 = vmatmul.bf16.gmra.mxu0 %v916
      %v1291 = vpop.f32.mrf.mxu0
      %v1292 = vadd.f32 0.0, %v1291
      %v1293 = vpop.f32.mrf.mxu0
      %1294 = vdwg.mxu0
      %1295 = vmatpush.bf16.msra.mxu0 0
      %1296 = vmatpush.bf16.msra.mxu0 0
      %1297 = vmatpush.bf16.msra.mxu0 0
      %1298 = vmatpush.bf16.msra.mxu0 0
      %1299 = vmatpush.bf16.msra.mxu0 %v783
      %1300 = vmatpush.bf16.msra.mxu0 %v751
      %1301 = vmatpush.bf16.msra.mxu0 %v719
      %1302 = vmatpush.bf16.msra.mxu0 %v687
      %1303 = vmatmul.bf16.gmra.mxu0 %v916
      %v1304 = vpop.f32.mrf.mxu0
      %v1305 = vadd.f32 0.0, %v1304
      %v1306 = vpop.f32.mrf.mxu0
      %1307 = vdwg.mxu0
      %1308 = vmatpush.bf16.msra.mxu0 0
      %1309 = vmatpush.bf16.msra.mxu0 0
      %1310 = vmatpush.bf16.msra.mxu0 0
      %1311 = vmatpush.bf16.msra.mxu0 0
      %1312 = vmatpush.bf16.msra.mxu0 %v784
      %1313 = vmatpush.bf16.msra.mxu0 %v752
      %1314 = vmatpush.bf16.msra.mxu0 %v720
      %1315 = vmatpush.bf16.msra.mxu0 %v688
      %1316 = vmatmul.bf16.gmra.mxu0 %v916
      %v1317 = vpop.f32.mrf.mxu0
      %v1318 = vadd.f32 0.0, %v1317
      %v1319 = vpop.f32.mrf.mxu0
      %1320 = vdwg.mxu0
      %1321 = vmatpush.bf16.msra.mxu0 0
      %1322 = vmatpush.bf16.msra.mxu0 0
      %1323 = vmatpush.bf16.msra.mxu0 0
      %1324 = vmatpush.bf16.msra.mxu0 0
      %1325 = vmatpush.bf16.msra.mxu0 %v785
      %1326 = vmatpush.bf16.msra.mxu0 %v753
      %1327 = vmatpush.bf16.msra.mxu0 %v721
      %1328 = vmatpush.bf16.msra.mxu0 %v689
      %1329 = vmatmul.bf16.gmra.mxu0 %v916
      %v1330 = vpop.f32.mrf.mxu0
      %v1331 = vadd.f32 0.0, %v1330
      %v1332 = vpop.f32.mrf.mxu0
      %1333 = vdwg.mxu0
      %v1334 = vadd.f32 %v928, %v941
      %v1335 = vadd.f32 %v1334, %v954
      %v1336 = vadd.f32 %v1335, %v967
      %v1337 = vadd.f32 %v1336, %v980
      %v1338 = vadd.f32 %v1337, %v993
      %v1339 = vadd.f32 %v1338, %v1006
      %v1340 = vadd.f32 %v1339, %v1019
      %v1341 = vadd.f32 %v1340, %v1032
      %v1342 = vadd.f32 %v1341, %v1045
      %v1343 = vadd.f32 %v1342, %v1058
      %v1344 = vadd.f32 %v1343, %v1071
      %v1345 = vadd.f32 %v1344, %v1084
      %v1346 = vadd.f32 %v1345, %v1097
      %v1347 = vadd.f32 %v1346, %v1110
      %v1348 = vadd.f32 %v1347, %v1123
      %v1349 = vadd.f32 %v1348, %v1136
      %v1350 = vadd.f32 %v1349, %v1149
      %v1351 = vadd.f32 %v1350, %v1162
      %v1352 = vadd.f32 %v1351, %v1175
      %v1353 = vadd.f32 %v1352, %v1188
      %v1354 = vadd.f32 %v1353, %v1201
      %v1355 = vadd.f32 %v1354, %v1214
      %v1356 = vadd.f32 %v1355, %v1227
      %v1357 = vadd.f32 %v1356, %v1240
      %v1358 = vadd.f32 %v1357, %v1253
      %v1359 = vadd.f32 %v1358, %v1266
      %v1360 = vadd.f32 %v1359, %v1279
      %v1361 = vadd.f32 %v1360, %v1292
      %v1362 = vadd.f32 %v1361, %v1305
      %v1363 = vadd.f32 %v1362, %v1318
      %v1364 = vadd.f32 %v1363, %v1331
      %1365 = vadd.xlane.f32.xlu0 %v1364
      %v1366 = vpop.xlane.xlu0 %1365
      %v1367 = vmul.f32 %v1366, 0.00024414063
      %v1368 = vsub.f32 %v928, %v1367
      %v1369 = vsub.f32 %v941, %v1367
      %v1370 = vsub.f32 %v954, %v1367
      %v1371 = vsub.f32 %v967, %v1367
      %v1372 = vsub.f32 %v980, %v1367
      %v1373 = vsub.f32 %v993, %v1367
      %v1374 = vsub.f32 %v1006, %v1367
      %v1375 = vsub.f32 %v1019, %v1367
      %v1376 = vsub.f32 %v1032, %v1367
      %v1377 = vsub.f32 %v1045, %v1367
      %v1378 = vsub.f32 %v1058, %v1367
      %v1379 = vsub.f32 %v1071, %v1367
      %v1380 = vsub.f32 %v1084, %v1367
      %v1381 = vsub.f32 %v1097, %v1367
      %v1382 = vsub.f32 %v1110, %v1367
      %v1383 = vsub.f32 %v1123, %v1367
      %v1384 = vsub.f32 %v1136, %v1367
      %v1385 = vsub.f32 %v1149, %v1367
      %v1386 = vsub.f32 %v1162, %v1367
      %v1387 = vsub.f32 %v1175, %v1367
      %v1388 = vsub.f32 %v1188, %v1367
      %v1389 = vsub.f32 %v1201, %v1367
      %v1390 = vsub.f32 %v1214, %v1367
      %v1391 = vsub.f32 %v1227, %v1367
      %v1392 = vsub.f32 %v1240, %v1367
      %v1393 = vsub.f32 %v1253, %v1367
      %v1394 = vsub.f32 %v1266, %v1367
      %v1395 = vsub.f32 %v1279, %v1367
      %v1396 = vsub.f32 %v1292, %v1367
      %v1397 = vsub.f32 %v1305, %v1367
      %v1398 = vsub.f32 %v1318, %v1367
      %v1399 = vsub.f32 %v1331, %v1367
      %v1400 = vmul.f32 %v1368, %v1368
      %v1401 = vmul.f32 %v1369, %v1369
      %v1402 = vmul.f32 %v1370, %v1370
      %v1403 = vmul.f32 %v1371, %v1371
      %v1404 = vmul.f32 %v1372, %v1372
      %v1405 = vmul.f32 %v1373, %v1373
      %v1406 = vmul.f32 %v1374, %v1374
      %v1407 = vmul.f32 %v1375, %v1375
      %v1408 = vmul.f32 %v1376, %v1376
      %v1409 = vmul.f32 %v1377, %v1377
      %v1410 = vmul.f32 %v1378, %v1378
      %v1411 = vmul.f32 %v1379, %v1379
      %v1412 = vmul.f32 %v1380, %v1380
      %v1413 = vmul.f32 %v1381, %v1381
      %v1414 = vmul.f32 %v1382, %v1382
      %v1415 = vmul.f32 %v1383, %v1383
      %v1416 = vmul.f32 %v1384, %v1384
      %v1417 = vmul.f32 %v1385, %v1385
      %v1418 = vmul.f32 %v1386, %v1386
      %v1419 = vmul.f32 %v1387, %v1387
      %v1420 = vmul.f32 %v1388, %v1388
      %v1421 = vmul.f32 %v1389, %v1389
      %v1422 = vmul.f32 %v1390, %v1390
      %v1423 = vmul.f32 %v1391, %v1391
      %v1424 = vmul.f32 %v1392, %v1392
      %v1425 = vmul.f32 %v1393, %v1393
      %v1426 = vmul.f32 %v1394, %v1394
      %v1427 = vmul.f32 %v1395, %v1395
      %v1428 = vmul.f32 %v1396, %v1396
      %v1429 = vmul.f32 %v1397, %v1397
      %v1430 = vmul.f32 %v1398, %v1398
      %v1431 = vmul.f32 %v1399, %v1399
      %v1432 = vadd.f32 %v1400, %v1401
      %v1433 = vadd.f32 %v1432, %v1402
      %v1434 = vadd.f32 %v1433, %v1403
      %v1435 = vadd.f32 %v1434, %v1404
      %v1436 = vadd.f32 %v1435, %v1405
      %v1437 = vadd.f32 %v1436, %v1406
      %v1438 = vadd.f32 %v1437, %v1407
      %v1439 = vadd.f32 %v1438, %v1408
      %v1440 = vadd.f32 %v1439, %v1409
      %v1441 = vadd.f32 %v1440, %v1410
      %v1442 = vadd.f32 %v1441, %v1411
      %v1443 = vadd.f32 %v1442, %v1412
      %v1444 = vadd.f32 %v1443, %v1413
      %v1445 = vadd.f32 %v1444, %v1414
      %v1446 = vadd.f32 %v1445, %v1415
      %v1447 = vadd.f32 %v1446, %v1416
      %v1448 = vadd.f32 %v1447, %v1417
      %v1449 = vadd.f32 %v1448, %v1418
      %v1450 = vadd.f32 %v1449, %v1419
      %v1451 = vadd.f32 %v1450, %v1420
      %v1452 = vadd.f32 %v1451, %v1421
      %v1453 = vadd.f32 %v1452, %v1422
      %v1454 = vadd.f32 %v1453, %v1423
      %v1455 = vadd.f32 %v1454, %v1424
      %v1456 = vadd.f32 %v1455, %v1425
      %v1457 = vadd.f32 %v1456, %v1426
      %v1458 = vadd.f32 %v1457, %v1427
      %v1459 = vadd.f32 %v1458, %v1428
      %v1460 = vadd.f32 %v1459, %v1429
      %v1461 = vadd.f32 %v1460, %v1430
      %v1462 = vadd.f32 %v1461, %v1431
      %1463 = vadd.xlane.f32.xlu0 %v1462
      %v1464 = vpop.xlane.xlu0 %1463
      %v1465 = vmul.f32 %v1464, 0.00024414063
      %v1466 = vadd.f32 %v1465, 1e-05
      %v1467 = vrsqrt.pop %v1466
      %v1468 = vmul.f32 %v1467, %v1466
      %v1469 = vmul.f32 %v1468, %v1467
      %v1470 = vmul.f32 0.5, %v1469
      %v1471 = vsub.f32 1.5, %v1470
      %v1472 = vmul.f32 %v1467, %v1471
      %vm1473 = vweird.f32 %v1466
      %vm1474 = vweird.f32 %v1467
      %vm1475 = vmor %vm1473, %vm1474
      %v1476 = vsel %vm1475, %v1467, %v1472
      %v1477 = vmul.f32 %v1368, %v1476
      %v1478 = vmul.f32 %v1369, %v1476
      %v1479 = vmul.f32 %v1370, %v1476
      %v1480 = vmul.f32 %v1371, %v1476
      %v1481 = vmul.f32 %v1372, %v1476
      %v1482 = vmul.f32 %v1373, %v1476
      %v1483 = vmul.f32 %v1374, %v1476
      %v1484 = vmul.f32 %v1375, %v1476
      %v1485 = vmul.f32 %v1376, %v1476
      %v1486 = vmul.f32 %v1377, %v1476
      %v1487 = vmul.f32 %v1378, %v1476
      %v1488 = vmul.f32 %v1379, %v1476
      %v1489 = vmul.f32 %v1380, %v1476
      %v1490 = vmul.f32 %v1381, %v1476
      %v1491 = vmul.f32 %v1382, %v1476
      %v1492 = vmul.f32 %v1383, %v1476
      %v1493 = vmul.f32 %v1384, %v1476
      %v1494 = vmul.f32 %v1385, %v1476
      %v1495 = vmul.f32 %v1386, %v1476
      %v1496 = vmul.f32 %v1387, %v1476
      %v1497 = vmul.f32 %v1388, %v1476
      %v1498 = vmul.f32 %v1389, %v1476
      %v1499 = vmul.f32 %v1390, %v1476
      %v1500 = vmul.f32 %v1391, %v1476
      %v1501 = vmul.f32 %v1392, %v1476
      %v1502 = vmul.f32 %v1393, %v1476
      %v1503 = vmul.f32 %v1394, %v1476
      %v1504 = vmul.f32 %v1395, %v1476
      %v1505 = vmul.f32 %v1396, %v1476
      %v1506 = vmul.f32 %v1397, %v1476
      %v1507 = vmul.f32 %v1398, %v1476
      %v1508 = vmul.f32 %v1399, %v1476
      %vm1509 = vcmp.ge.f32.partialorder %v1477, 0.0
      %vm1510 = vcmp.ge.f32.partialorder %v1478, 0.0
      %vm1511 = vcmp.ge.f32.partialorder %v1479, 0.0
      %vm1512 = vcmp.ge.f32.partialorder %v1480, 0.0
      %vm1513 = vcmp.ge.f32.partialorder %v1481, 0.0
      %vm1514 = vcmp.ge.f32.partialorder %v1482, 0.0
      %vm1515 = vcmp.ge.f32.partialorder %v1483, 0.0
      %vm1516 = vcmp.ge.f32.partialorder %v1484, 0.0
      %vm1517 = vcmp.ge.f32.partialorder %v1485, 0.0
      %vm1518 = vcmp.ge.f32.partialorder %v1486, 0.0
      %vm1519 = vcmp.ge.f32.partialorder %v1487, 0.0
      %vm1520 = vcmp.ge.f32.partialorder %v1488, 0.0
      %vm1521 = vcmp.ge.f32.partialorder %v1489, 0.0
      %vm1522 = vcmp.ge.f32.partialorder %v1490, 0.0
      %vm1523 = vcmp.ge.f32.partialorder %v1491, 0.0
      %vm1524 = vcmp.ge.f32.partialorder %v1492, 0.0
      %vm1525 = vcmp.ge.f32.partialorder %v1493, 0.0
      %vm1526 = vcmp.ge.f32.partialorder %v1494, 0.0
      %vm1527 = vcmp.ge.f32.partialorder %v1495, 0.0
      %vm1528 = vcmp.ge.f32.partialorder %v1496, 0.0
      %vm1529 = vcmp.ge.f32.partialorder %v1497, 0.0
      %vm1530 = vcmp.ge.f32.partialorder %v1498, 0.0
      %vm1531 = vcmp.ge.f32.partialorder %v1499, 0.0
      %vm1532 = vcmp.ge.f32.partialorder %v1500, 0.0
      %vm1533 = vcmp.ge.f32.partialorder %v1501, 0.0
      %vm1534 = vcmp.ge.f32.partialorder %v1502, 0.0
      %vm1535 = vcmp.ge.f32.partialorder %v1503, 0.0
      %vm1536 = vcmp.ge.f32.partialorder %v1504, 0.0
      %vm1537 = vcmp.ge.f32.partialorder %v1505, 0.0
      %vm1538 = vcmp.ge.f32.partialorder %v1506, 0.0
      %vm1539 = vcmp.ge.f32.partialorder %v1507, 0.0
      %vm1540 = vcmp.ge.f32.partialorder %v1508, 0.0
      %v1541 = vmul.f32 %v1477, 0.2
      %v1542 = vmul.f32 %v1478, 0.2
      %v1543 = vmul.f32 %v1479, 0.2
      %v1544 = vmul.f32 %v1480, 0.2
      %v1545 = vmul.f32 %v1481, 0.2
      %v1546 = vmul.f32 %v1482, 0.2
      %v1547 = vmul.f32 %v1483, 0.2
      %v1548 = vmul.f32 %v1484, 0.2
      %v1549 = vmul.f32 %v1485, 0.2
      %v1550 = vmul.f32 %v1486, 0.2
      %v1551 = vmul.f32 %v1487, 0.2
      %v1552 = vmul.f32 %v1488, 0.2
      %v1553 = vmul.f32 %v1489, 0.2
      %v1554 = vmul.f32 %v1490, 0.2
      %v1555 = vmul.f32 %v1491, 0.2
      %v1556 = vmul.f32 %v1492, 0.2
      %v1557 = vmul.f32 %v1493, 0.2
      %v1558 = vmul.f32 %v1494, 0.2
      %v1559 = vmul.f32 %v1495, 0.2
      %v1560 = vmul.f32 %v1496, 0.2
      %v1561 = vmul.f32 %v1497, 0.2
      %v1562 = vmul.f32 %v1498, 0.2
      %v1563 = vmul.f32 %v1499, 0.2
      %v1564 = vmul.f32 %v1500, 0.2
      %v1565 = vmul.f32 %v1501, 0.2
      %v1566 = vmul.f32 %v1502, 0.2
      %v1567 = vmul.f32 %v1503, 0.2
      %v1568 = vmul.f32 %v1504, 0.2
      %v1569 = vmul.f32 %v1505, 0.2
      %v1570 = vmul.f32 %v1506, 0.2
      %v1571 = vmul.f32 %v1507, 0.2
      %v1572 = vmul.f32 %v1508, 0.2
      %v1573 = vsel %vm1509, %v1477, %v1541
      %v1574 = vsel %vm1510, %v1478, %v1542
      %v1575 = vsel %vm1511, %v1479, %v1543
      %v1576 = vsel %vm1512, %v1480, %v1544
      %v1577 = vsel %vm1513, %v1481, %v1545
      %v1578 = vsel %vm1514, %v1482, %v1546
      %v1579 = vsel %vm1515, %v1483, %v1547
      %v1580 = vsel %vm1516, %v1484, %v1548
      %v1581 = vsel %vm1517, %v1485, %v1549
      %v1582 = vsel %vm1518, %v1486, %v1550
      %v1583 = vsel %vm1519, %v1487, %v1551
      %v1584 = vsel %vm1520, %v1488, %v1552
      %v1585 = vsel %vm1521, %v1489, %v1553
      %v1586 = vsel %vm1522, %v1490, %v1554
      %v1587 = vsel %vm1523, %v1491, %v1555
      %v1588 = vsel %vm1524, %v1492, %v1556
      %v1589 = vsel %vm1525, %v1493, %v1557
      %v1590 = vsel %vm1526, %v1494, %v1558
      %v1591 = vsel %vm1527, %v1495, %v1559
      %v1592 = vsel %vm1528, %v1496, %v1560
      %v1593 = vsel %vm1529, %v1497, %v1561
      %v1594 = vsel %vm1530, %v1498, %v1562
      %v1595 = vsel %vm1531, %v1499, %v1563
      %v1596 = vsel %vm1532, %v1500, %v1564
      %v1597 = vsel %vm1533, %v1501, %v1565
      %v1598 = vsel %vm1534, %v1502, %v1566
      %v1599 = vsel %vm1535, %v1503, %v1567
      %v1600 = vsel %vm1536, %v1504, %v1568
      %v1601 = vsel %vm1537, %v1505, %v1569
      %v1602 = vsel %vm1538, %v1506, %v1570
      %v1603 = vsel %vm1539, %v1507, %v1571
      %v1604 = vsel %vm1540, %v1508, %v1572
      %v1605 = vpack.c.bf16 %v1574, %v1573
      %v1606 = vpack.c.bf16 %v1576, %v1575
      %v1607 = vpack.c.bf16 %v1578, %v1577
      %v1608 = vpack.c.bf16 %v1580, %v1579
      %v1609 = vpack.c.bf16 %v1582, %v1581
      %v1610 = vpack.c.bf16 %v1584, %v1583
      %v1611 = vpack.c.bf16 %v1586, %v1585
      %v1612 = vpack.c.bf16 %v1588, %v1587
      %v1613 = vpack.c.bf16 %v1590, %v1589
      %v1614 = vpack.c.bf16 %v1592, %v1591
      %v1615 = vpack.c.bf16 %v1594, %v1593
      %v1616 = vpack.c.bf16 %v1596, %v1595
      %v1617 = vpack.c.bf16 %v1598, %v1597
      %v1618 = vpack.c.bf16 %v1600, %v1599
      %v1619 = vpack.c.bf16 %v1602, %v1601
      %v1620 = vpack.c.bf16 %v1604, %v1603
      %1621 = vst [vmem:[%s143] sm:$0xff] %v1605
      %1622 = vst [vmem:[%s143 + $0x8] sm:$0xff] %v1606
      %1623 = vst [vmem:[%s143 + $0x10] sm:$0xff] %v1607
      %1624 = vst [vmem:[%s143 + $0x18] sm:$0xff] %v1608
      %1625 = vst [vmem:[%s143 + $0x20] sm:$0xff] %v1609
      %1626 = vst [vmem:[%s143 + $0x28] sm:$0xff] %v1610
      %1627 = vst [vmem:[%s143 + $0x30] sm:$0xff] %v1611
      %1628 = vst [vmem:[%s143 + $0x38] sm:$0xff] %v1612
      %1629 = vst [vmem:[%s143 + $0x40] sm:$0xff] %v1613
      %1630 = vst [vmem:[%s143 + $0x48] sm:$0xff] %v1614
      %1631 = vst [vmem:[%s143 + $0x50] sm:$0xff] %v1615
      %1632 = vst [vmem:[%s143 + $0x58] sm:$0xff] %v1616
      %1633 = vst [vmem:[%s143 + $0x60] sm:$0xff] %v1617
      %1634 = vst [vmem:[%s143 + $0x68] sm:$0xff] %v1618
      %1635 = vst [vmem:[%s143 + $0x70] sm:$0xff] %v1619
      %1636 = vst [vmem:[%s143 + $0x78] sm:$0xff] %v1620
      %p1637 = scmp.lt.s32.totalorder %s13, 1
      %s1638 = scalar_select %p1637, %s13, 1
      %s1639 = smul.addr %s1638, 32
      %s1640 = smul.addr %s1639, 4
      %s1641 = scalar_lea.vmem %s2, %s1640
      // Predicated region
      $region29: #{discriminator_forward.7} parent=27 // pred_check
        %p1642 = pneg %p78
      $region30: #{discriminator_forward.7} parent=27 // pred_check_branch
        %1644 = sbr.rel (%p1642) target = $region32
      $region31: #{discriminator_forward.7} parent=27 // pred_region
        _
      $region32: #{discriminator_forward.7} parent=27 // pred_fallthru
        _
    $region28: #{discriminator_forward.7} parent=5 // pred_fallthru
      _
    %p1645 = scmp.le.s32.totalorder 2, %s8
    // Predicated region
    $region33: #{discriminator_forward.7} parent=5 // pred_check
      %p1646 = pneg %p1645
    $region34: #{discriminator_forward.7} parent=5 // pred_check_branch
      %1648 = sbr.rel (%p1646) target = $region36
    $region35: #{discriminator_forward.7} parent=5 // pred_region
      %s1649 = ssub.s32 %s8, 2
      // Predicated region
      $region37: #{discriminator_forward.7} parent=35 // pred_check
        %p1650 = pneg %p84
      $region38: #{discriminator_forward.7} parent=35 // pred_check_branch
        %1652 = sbr.rel (%p1650) target = $region40
      $region39: #{discriminator_forward.7} parent=35 // pred_region
        %p1653 = scmp.lt.s32.totalorder %s14, 1
        %s1654 = scalar_select %p1653, %s14, 1
        %s1655 = smul.addr %s1654, 32
        %s1656 = smul.addr %s1655, 4
        %s1657 = scalar_lea.vmem %s2, %s1656
      $region40: #{discriminator_forward.7} parent=35 // pred_fallthru
        _
    $region36: #{discriminator_forward.7} parent=5 // pred_fallthru
      _
  $region6: #{discriminator_forward.7} parent=0 // loop_footer
    %s12 = sadd.s32 1, %s8
  $region7: #{discriminator_forward.7} parent=0 // loop_footer_branch
    %7 = sbr.rel target = $region3
  $region8: #{discriminator_forward.7} parent=0 // loop_exit
    _

// kernel: discriminator_forward.8
$region0: #{discriminator_forward.8}
  #allocation0 [shape = 'u32[]', space=smem, size = 0x4, offset = 0x4, fixed_abs, tag = 'smem constant byte address 0x4 - core index']
  #allocation1 [shape = 'u32[72,128]{1,0:T(1,128)}', space=vmem, size = 0x9000, scoped, tag = 'internal scratch']
  %s0 = inlined_call_operand.vmem [shape: bf16[16,128], index: 0, kind: input, shape index: {}]
  %s1 = inlined_call_operand.vmem [shape: bf16[2,128,1024], index: 1, kind: input, shape index: {}]
  %s2 = inlined_call_operand.vmem [shape: bf16[2,16,1024], index: 2, kind: output, shape index: {}]
  %s3 = sld [smem:[#allocation0]]
  $region41: #{discriminator_forward.8} parent=0
    _
  %s5 = ssub.s32 1, %s3
  %s6 = scalar_select 0, %s5, %s3
  loop: start=0, step=1, limit=4
  $region2: #{discriminator_forward.8} parent=0 // loop_pre_header
    _
  $region3: #{discriminator_forward.8} parent=0 // loop_header
    %s8 = sphi 0, %s12
    %p9 = scmp.ge.s32.totalorder %s8, 4
    %s16 = sphi 0, %s16
    %s18 = sphi 0, %s16
    %s19 = sphi 0, %s18
    %s33 = sphi 0, %s19
    %s39 = sphi 0, %s41
    %s42 = sphi 0, %s39
    %s43 = sphi 0, %s42
    %s59 = sphi 0, %s43
    %s65 = sphi 0, %s67
    %s68 = sphi 0, %s65
    %s69 = sphi 0, %s68
    %s85 = sphi 0, %s69
  $region4: #{discriminator_forward.8} parent=0 // loop_header_branch
    %11 = sbr.rel (%p9) target = $region8
  $region5: #{discriminator_forward.8} parent=0 // loop_body
    %s13 = ssub.s32 %s8, 1
    %s14 = ssub.s32 %s8, 2
    %s15 = sadd.s32 %s8, 1
    %s17 = sadd.s32 %s16, 1
    %p20 = scmp.eq.s32.totalorder %s8, 1
    %p21 = scmp.ne.s32.totalorder %s16, %s18
    %p22 = scmp.eq.s32.totalorder %s8, 0
    %p23 = por %p21, %p22
    %p24 = scmp.ne.s32.totalorder %s16, %s18
    %p25 = scmp.eq.s32.totalorder %s13, 1
    %p26 = por %p24, %p25
    %p27 = scmp.ne.s32.totalorder %s18, %s19
    %p28 = scmp.eq.s32.totalorder %s13, 0
    %p29 = por %p27, %p28
    %p30 = scmp.ne.s32.totalorder %s18, %s19
    %p31 = scmp.eq.s32.totalorder %s14, 1
    %p32 = por %p30, %p31
    %p34 = scmp.ne.s32.totalorder %s19, %s33
    %p35 = scmp.eq.s32.totalorder %s14, 0
    %p36 = por %p34, %p35
    %s37 = ssub.s32 %s8, %s15
    %p38 = scmp.eq.s32.totalorder %s37, 0
    %s40 = sadd.s32 %s39, 1
    %s41 = scalar_select %p38, %s39, %s40
    %p44 = pneg %p38
    %p45 = scmp.eq.s32.totalorder %s8, 1
    %p46 = por %p44, %p45
    %p47 = scmp.ne.s32.totalorder %s39, %s42
    %p48 = scmp.eq.s32.totalorder %s8, 0
    %p49 = por %p47, %p48
    %p50 = scmp.ne.s32.totalorder %s39, %s42
    %p51 = scmp.eq.s32.totalorder %s13, 1
    %p52 = por %p50, %p51
    %p53 = scmp.ne.s32.totalorder %s42, %s43
    %p54 = scmp.eq.s32.totalorder %s13, 0
    %p55 = por %p53, %p54
    %p56 = scmp.ne.s32.totalorder %s42, %s43
    %p57 = scmp.eq.s32.totalorder %s14, 1
    %p58 = por %p56, %p57
    %p60 = scmp.ne.s32.totalorder %s43, %s59
    %p61 = scmp.eq.s32.totalorder %s14, 0
    %p62 = por %p60, %p61
    %s63 = ssub.s32 %s8, %s15
    %p64 = scmp.eq.s32.totalorder %s63, 0
    %s66 = sadd.s32 %s65, 1
    %s67 = scalar_select %p64, %s65, %s66
    %p70 = pneg %p64
    %p71 = scmp.eq.s32.totalorder %s8, 1
    %p72 = por %p70, %p71
    %p73 = scmp.ne.s32.totalorder %s65, %s68
    %p74 = scmp.eq.s32.totalorder %s8, 0
    %p75 = por %p73, %p74
    %p76 = scmp.ne.s32.totalorder %s65, %s68
    %p77 = scmp.eq.s32.totalorder %s13, 1
    %p78 = por %p76, %p77
    %p79 = scmp.ne.s32.totalorder %s68, %s69
    %p80 = scmp.eq.s32.totalorder %s13, 0
    %p81 = por %p79, %p80
    %p82 = scmp.ne.s32.totalorder %s68, %s69
    %p83 = scmp.eq.s32.totalorder %s14, 1
    %p84 = por %p82, %p83
    %p86 = scmp.ne.s32.totalorder %s69, %s85
    %p87 = scmp.eq.s32.totalorder %s14, 0
    %p88 = por %p86, %p87
    %p89 = scmp.le.s32.totalorder 1, %s8
    %p90 = scmp.lt.s32.totalorder %s8, 3
    %p91 = pnand %p89, %p90
    %p92 = pneg %p91
    // Predicated region
    $region9: #{discriminator_forward.8} parent=5 // pred_check
      _
    $region10: #{discriminator_forward.8} parent=5 // pred_check_branch
      %94 = sbr.rel (%p91) target = $region12
    $region11: #{discriminator_forward.8} parent=5 // pred_region
      %s95 = ssub.s32 %s8, 1
      // Predicated region
      $region13: #{discriminator_forward.8} parent=11 // pred_check
        %p96 = pneg %p29
      $region14: #{discriminator_forward.8} parent=11 // pred_check_branch
        %98 = sbr.rel (%p96) target = $region16
      $region15: #{discriminator_forward.8} parent=11 // pred_region
        _
      $region16: #{discriminator_forward.8} parent=11 // pred_fallthru
        _
    $region12: #{discriminator_forward.8} parent=5 // pred_fallthru
      _
    %p99 = scmp.lt.s32.totalorder %s8, 2
    // Predicated region
    $region17: #{discriminator_forward.8} parent=5 // pred_check
      %p100 = pneg %p99
    $region18: #{discriminator_forward.8} parent=5 // pred_check_branch
      %102 = sbr.rel (%p100) target = $region20
    $region19: #{discriminator_forward.8} parent=5 // pred_region
      // Predicated region
      $region21: #{discriminator_forward.8} parent=19 // pred_check
        %p103 = pneg %p49
      $region22: #{discriminator_forward.8} parent=19 // pred_check_branch
        %105 = sbr.rel (%p103) target = $region24
      $region23: #{discriminator_forward.8} parent=19 // pred_region
        %p106 = scmp.lt.s32.totalorder %s8, 1
        %s107 = scalar_select %p106, %s8, 1
        %s108 = smul.addr %s107, 128
        %s109 = smul.addr %s108, 4
        %s110 = scalar_lea.vmem %s1, %s109
      $region24: #{discriminator_forward.8} parent=19 // pred_fallthru
        _
    $region20: #{discriminator_forward.8} parent=5 // pred_fallthru
      _
    %p111 = scmp.le.s32.totalorder 1, %s8
    %p112 = scmp.lt.s32.totalorder %s8, 3
    %p113 = pnand %p111, %p112
    %p114 = pneg %p113
    // Predicated region
    $region25: #{discriminator_forward.8} parent=5 // pred_check
      _
    $region26: #{discriminator_forward.8} parent=5 // pred_check_branch
      %116 = sbr.rel (%p113) target = $region28
    $region27: #{discriminator_forward.8} parent=5 // pred_region
      %s117 = ssub.s32 %s8, 1
      %p118 = pneg %p29
      %p119 = pneg %p26
      %p120 = scmp.lt.s32.totalorder %s13, 1
      %s121 = scalar_select %p120, %s13, 1
      %s122 = smul.addr %s121, 128
      %s123 = smul.addr %s122, 4
      %s124 = scalar_lea.vmem %s1, %s123
      %p125 = pneg %p55
      %p126 = pneg %p52
      %p127 = pneg %p81
      %p128 = pneg %p78
      %p129 = scmp.lt.s32.totalorder %s13, 1
      %s130 = scalar_select %p129, %s13, 1
      %s131 = smul.addr %s130, 16
      %s132 = smul.addr %s131, 4
      %s133 = scalar_lea.vmem %s2, %s132
      %p134 = scmp.lt.s32.totalorder %s13, 1
      %s135 = scalar_select %p134, %s13, 1
      %s136 = smul.addr %s135, 128
      %s137 = smul.addr %s136, 4
      %s138 = scalar_lea.vmem %s1, %s137
      %p139 = scmp.lt.s32.totalorder %s13, 1
      %s140 = scalar_select %p139, %s13, 1
      %s141 = smul.addr %s140, 16
      %s142 = smul.addr %s141, 4
      %s143 = scalar_lea.vmem %s2, %s142
      %v144 = vld [vmem:[%s0] sm:$0xf]
      %v145 = vld [vmem:[%s0 + $0x4] sm:$0xf]
      %v146 = vld [vmem:[%s138] sm:$0xff]
      %v147 = vld [vmem:[%s138 + $0x8] sm:$0xff]
      %v148 = vld [vmem:[%s138 + $0x10] sm:$0xff]
      %v149 = vld [vmem:[%s138 + $0x18] sm:$0xff]
      %v150 = vld [vmem:[%s138 + $0x20] sm:$0xff]
      %v151 = vld [vmem:[%s138 + $0x28] sm:$0xff]
      %v152 = vld [vmem:[%s138 + $0x30] sm:$0xff]
      %v153 = vld [vmem:[%s138 + $0x38] sm:$0xff]
      %v154 = vld [vmem:[%s138 + $0x40] sm:$0xff]
      %v155 = vld [vmem:[%s138 + $0x48] sm:$0xff]
      %v156 = vld [vmem:[%s138 + $0x50] sm:$0xff]
      %v157 = vld [vmem:[%s138 + $0x58] sm:$0xff]
      %v158 = vld [vmem:[%s138 + $0x60] sm:$0xff]
      %v159 = vld [vmem:[%s138 + $0x68] sm:$0xff]
      %v160 = vld [vmem:[%s138 + $0x70] sm:$0xff]
      %v161 = vld [vmem:[%s138 + $0x78] sm:$0xff]
      %v162 = vld [vmem:[%s138 + $0x80] sm:$0xff]
      %v163 = vld [vmem:[%s138 + $0x88] sm:$0xff]
      %v164 = vld [vmem:[%s138 + $0x90] sm:$0xff]
      %v165 = vld [vmem:[%s138 + $0x98] sm:$0xff]
      %v166 = vld [vmem:[%s138 + $0xa0] sm:$0xff]
      %v167 = vld [vmem:[%s138 + $0xa8] sm:$0xff]
      %v168 = vld [vmem:[%s138 + $0xb0] sm:$0xff]
      %v169 = vld [vmem:[%s138 + $0xb8] sm:$0xff]
      %v170 = vld [vmem:[%s138 + $0xc0] sm:$0xff]
      %v171 = vld [vmem:[%s138 + $0xc8] sm:$0xff]
      %v172 = vld [vmem:[%s138 + $0xd0] sm:$0xff]
      %v173 = vld [vmem:[%s138 + $0xd8] sm:$0xff]
      %v174 = vld [vmem:[%s138 + $0xe0] sm:$0xff]
      %v175 = vld [vmem:[%s138 + $0xe8] sm:$0xff]
      %v176 = vld [vmem:[%s138 + $0xf0] sm:$0xff]
      %v177 = vld [vmem:[%s138 + $0xf8] sm:$0xff]
      %v178 = vld [vmem:[%s138 + $0x100] sm:$0xff]
      %v179 = vld [vmem:[%s138 + $0x108] sm:$0xff]
      %v180 = vld [vmem:[%s138 + $0x110] sm:$0xff]
      %v181 = vld [vmem:[%s138 + $0x118] sm:$0xff]
      %v182 = vld [vmem:[%s138 + $0x120] sm:$0xff]
      %v183 = vld [vmem:[%s138 + $0x128] sm:$0xff]
      %v184 = vld [vmem:[%s138 + $0x130] sm:$0xff]
      %v185 = vld [vmem:[%s138 + $0x138] sm:$0xff]
      %v186 = vld [vmem:[%s138 + $0x140] sm:$0xff]
      %v187 = vld [vmem:[%s138 + $0x148] sm:$0xff]
      %v188 = vld [vmem:[%s138 + $0x150] sm:$0xff]
      %v189 = vld [vmem:[%s138 + $0x158] sm:$0xff]
      %v190 = vld [vmem:[%s138 + $0x160] sm:$0xff]
      %v191 = vld [vmem:[%s138 + $0x168] sm:$0xff]
      %v192 = vld [vmem:[%s138 + $0x170] sm:$0xff]
      %v193 = vld [vmem:[%s138 + $0x178] sm:$0xff]
      %v194 = vld [vmem:[%s138 + $0x180] sm:$0xff]
      %v195 = vld [vmem:[%s138 + $0x188] sm:$0xff]
      %v196 = vld [vmem:[%s138 + $0x190] sm:$0xff]
      %v197 = vld [vmem:[%s138 + $0x198] sm:$0xff]
      %v198 = vld [vmem:[%s138 + $0x1a0] sm:$0xff]
      %v199 = vld [vmem:[%s138 + $0x1a8] sm:$0xff]
      %v200 = vld [vmem:[%s138 + $0x1b0] sm:$0xff]
      %v201 = vld [vmem:[%s138 + $0x1b8] sm:$0xff]
      %v202 = vld [vmem:[%s138 + $0x1c0] sm:$0xff]
      %v203 = vld [vmem:[%s138 + $0x1c8] sm:$0xff]
      %v204 = vld [vmem:[%s138 + $0x1d0] sm:$0xff]
      %v205 = vld [vmem:[%s138 + $0x1d8] sm:$0xff]
      %v206 = vld [vmem:[%s138 + $0x1e0] sm:$0xff]
      %v207 = vld [vmem:[%s138 + $0x1e8] sm:$0xff]
      %v208 = vld [vmem:[%s138 + $0x1f0] sm:$0xff]
      %v209 = vld [vmem:[%s138 + $0x1f8] sm:$0xff]
      %v212 = vunpack.c.l.b16 %v144
      %v213 = vunpack.c.l.b16 %v145
      %v214 = vpack.c.b16 %v213, %v212
      %v280 = vunpack.c.l.b16 %v146
      %v281 = vunpack.c.h.b16 %v146
      %v282 = vunpack.c.l.b16 %v147
      %v283 = vunpack.c.h.b16 %v147
      %v284 = vunpack.c.l.b16 %v148
      %v285 = vunpack.c.h.b16 %v148
      %v286 = vunpack.c.l.b16 %v149
      %v287 = vunpack.c.h.b16 %v149
      %v288 = vunpack.c.l.b16 %v150
      %v289 = vunpack.c.h.b16 %v150
      %v290 = vunpack.c.l.b16 %v151
      %v291 = vunpack.c.h.b16 %v151
      %v292 = vunpack.c.l.b16 %v152
      %v293 = vunpack.c.h.b16 %v152
      %v294 = vunpack.c.l.b16 %v153
      %v295 = vunpack.c.h.b16 %v153
      %v296 = vunpack.c.l.b16 %v154
      %v297 = vunpack.c.h.b16 %v154
      %v298 = vunpack.c.l.b16 %v155
      %v299 = vunpack.c.h.b16 %v155
      %v300 = vunpack.c.l.b16 %v156
      %v301 = vunpack.c.h.b16 %v156
      %v302 = vunpack.c.l.b16 %v157
      %v303 = vunpack.c.h.b16 %v157
      %v304 = vunpack.c.l.b16 %v158
      %v305 = vunpack.c.h.b16 %v158
      %v306 = vunpack.c.l.b16 %v159
      %v307 = vunpack.c.h.b16 %v159
      %v308 = vunpack.c.l.b16 %v160
      %v309 = vunpack.c.h.b16 %v160
      %v310 = vunpack.c.l.b16 %v161
      %v311 = vunpack.c.h.b16 %v161
      %v312 = vunpack.c.l.b16 %v162
      %v313 = vunpack.c.h.b16 %v162
      %v314 = vunpack.c.l.b16 %v163
      %v315 = vunpack.c.h.b16 %v163
      %v316 = vunpack.c.l.b16 %v164
      %v317 = vunpack.c.h.b16 %v164
      %v318 = vunpack.c.l.b16 %v165
      %v319 = vunpack.c.h.b16 %v165
      %v320 = vunpack.c.l.b16 %v166
      %v321 = vunpack.c.h.b16 %v166
      %v322 = vunpack.c.l.b16 %v167
      %v323 = vunpack.c.h.b16 %v167
      %v324 = vunpack.c.l.b16 %v168
      %v325 = vunpack.c.h.b16 %v168
      %v326 = vunpack.c.l.b16 %v169
      %v327 = vunpack.c.h.b16 %v169
      %v328 = vunpack.c.l.b16 %v170
      %v329 = vunpack.c.h.b16 %v170
      %v330 = vunpack.c.l.b16 %v171
      %v331 = vunpack.c.h.b16 %v171
      %v332 = vunpack.c.l.b16 %v172
      %v333 = vunpack.c.h.b16 %v172
      %v334 = vunpack.c.l.b16 %v173
      %v335 = vunpack.c.h.b16 %v173
      %v336 = vunpack.c.l.b16 %v174
      %v337 = vunpack.c.h.b16 %v174
      %v338 = vunpack.c.l.b16 %v175
      %v339 = vunpack.c.h.b16 %v175
      %v340 = vunpack.c.l.b16 %v176
      %v341 = vunpack.c.h.b16 %v176
      %v342 = vunpack.c.l.b16 %v177
      %v343 = vunpack.c.h.b16 %v177
      %v344 = vunpack.c.l.b16 %v178
      %v345 = vunpack.c.h.b16 %v178
      %v346 = vunpack.c.l.b16 %v179
      %v347 = vunpack.c.h.b16 %v179
      %v348 = vunpack.c.l.b16 %v180
      %v349 = vunpack.c.h.b16 %v180
      %v350 = vunpack.c.l.b16 %v181
      %v351 = vunpack.c.h.b16 %v181
      %v352 = vunpack.c.l.b16 %v182
      %v353 = vunpack.c.h.b16 %v182
      %v354 = vunpack.c.l.b16 %v183
      %v355 = vunpack.c.h.b16 %v183
      %v356 = vunpack.c.l.b16 %v184
      %v357 = vunpack.c.h.b16 %v184
      %v358 = vunpack.c.l.b16 %v185
      %v359 = vunpack.c.h.b16 %v185
      %v360 = vunpack.c.l.b16 %v186
      %v361 = vunpack.c.h.b16 %v186
      %v362 = vunpack.c.l.b16 %v187
      %v363 = vunpack.c.h.b16 %v187
      %v364 = vunpack.c.l.b16 %v188
      %v365 = vunpack.c.h.b16 %v188
      %v366 = vunpack.c.l.b16 %v189
      %v367 = vunpack.c.h.b16 %v189
      %v368 = vunpack.c.l.b16 %v190
      %v369 = vunpack.c.h.b16 %v190
      %v370 = vunpack.c.l.b16 %v191
      %v371 = vunpack.c.h.b16 %v191
      %v372 = vunpack.c.l.b16 %v192
      %v373 = vunpack.c.h.b16 %v192
      %v374 = vunpack.c.l.b16 %v193
      %v375 = vunpack.c.h.b16 %v193
      %v376 = vunpack.c.l.b16 %v194
      %v377 = vunpack.c.h.b16 %v194
      %v378 = vunpack.c.l.b16 %v195
      %v379 = vunpack.c.h.b16 %v195
      %v380 = vunpack.c.l.b16 %v196
      %v381 = vunpack.c.h.b16 %v196
      %v382 = vunpack.c.l.b16 %v197
      %v383 = vunpack.c.h.b16 %v197
      %v384 = vunpack.c.l.b16 %v198
      %v385 = vunpack.c.h.b16 %v198
      %v386 = vunpack.c.l.b16 %v199
      %v387 = vunpack.c.h.b16 %v199
      %v388 = vunpack.c.l.b16 %v200
      %v389 = vunpack.c.h.b16 %v200
      %v390 = vunpack.c.l.b16 %v201
      %v391 = vunpack.c.h.b16 %v201
      %v392 = vunpack.c.l.b16 %v202
      %v393 = vunpack.c.h.b16 %v202
      %v394 = vunpack.c.l.b16 %v203
      %v395 = vunpack.c.h.b16 %v203
      %v396 = vunpack.c.l.b16 %v204
      %v397 = vunpack.c.h.b16 %v204
      %v398 = vunpack.c.l.b16 %v205
      %v399 = vunpack.c.h.b16 %v205
      %v400 = vunpack.c.l.b16 %v206
      %v401 = vunpack.c.h.b16 %v206
      %v402 = vunpack.c.l.b16 %v207
      %v403 = vunpack.c.h.b16 %v207
      %v404 = vunpack.c.l.b16 %v208
      %v405 = vunpack.c.h.b16 %v208
      %v406 = vunpack.c.l.b16 %v209
      %v407 = vunpack.c.h.b16 %v209
      %v408 = vpack.c.b16 %v288, %v280
      %v409 = vpack.c.b16 %v289, %v281
      %v410 = vpack.c.b16 %v290, %v282
      %v411 = vpack.c.b16 %v291, %v283
      %v412 = vpack.c.b16 %v292, %v284
      %v413 = vpack.c.b16 %v293, %v285
      %v414 = vpack.c.b16 %v294, %v286
      %v415 = vpack.c.b16 %v295, %v287
      %v416 = vpack.c.b16 %v304, %v296
      %v417 = vpack.c.b16 %v305, %v297
      %v418 = vpack.c.b16 %v306, %v298
      %v419 = vpack.c.b16 %v307, %v299
      %v420 = vpack.c.b16 %v308, %v300
      %v421 = vpack.c.b16 %v309, %v301
      %v422 = vpack.c.b16 %v310, %v302
      %v423 = vpack.c.b16 %v311, %v303
      %v424 = vpack.c.b16 %v320, %v312
      %v425 = vpack.c.b16 %v321, %v313
      %v426 = vpack.c.b16 %v322, %v314
      %v427 = vpack.c.b16 %v323, %v315
      %v428 = vpack.c.b16 %v324, %v316
      %v429 = vpack.c.b16 %v325, %v317
      %v430 = vpack.c.b16 %v326, %v318
      %v431 = vpack.c.b16 %v327, %v319
      %v432 = vpack.c.b16 %v336, %v328
      %v433 = vpack.c.b16 %v337, %v329
      %v434 = vpack.c.b16 %v338, %v330
      %v435 = vpack.c.b16 %v339, %v331
      %v436 = vpack.c.b16 %v340, %v332
      %v437 = vpack.c.b16 %v341, %v333
      %v438 = vpack.c.b16 %v342, %v334
      %v439 = vpack.c.b16 %v343, %v335
      %v440 = vpack.c.b16 %v352, %v344
      %v441 = vpack.c.b16 %v353, %v345
      %v442 = vpack.c.b16 %v354, %v346
      %v443 = vpack.c.b16 %v355, %v347
      %v444 = vpack.c.b16 %v356, %v348
      %v445 = vpack.c.b16 %v357, %v349
      %v446 = vpack.c.b16 %v358, %v350
      %v447 = vpack.c.b16 %v359, %v351
      %v448 = vpack.c.b16 %v368, %v360
      %v449 = vpack.c.b16 %v369, %v361
      %v450 = vpack.c.b16 %v370, %v362
      %v451 = vpack.c.b16 %v371, %v363
      %v452 = vpack.c.b16 %v372, %v364
      %v453 = vpack.c.b16 %v373, %v365
      %v454 = vpack.c.b16 %v374, %v366
      %v455 = vpack.c.b16 %v375, %v367
      %v456 = vpack.c.b16 %v384, %v376
      %v457 = vpack.c.b16 %v385, %v377
      %v458 = vpack.c.b16 %v386, %v378
      %v459 = vpack.c.b16 %v387, %v379
      %v460 = vpack.c.b16 %v388, %v380
      %v461 = vpack.c.b16 %v389, %v381
      %v462 = vpack.c.b16 %v390, %v382
      %v463 = vpack.c.b16 %v391, %v383
      %v464 = vpack.c.b16 %v400, %v392
      %v465 = vpack.c.b16 %v401, %v393
      %v466 = vpack.c.b16 %v402, %v394
      %v467 = vpack.c.b16 %v403, %v395
      %v468 = vpack.c.b16 %v404, %v396
      %v469 = vpack.c.b16 %v405, %v397
      %v470 = vpack.c.b16 %v406, %v398
      %v471 = vpack.c.b16 %v407, %v399
      %536 = vmatpush.bf16.msra.mxu0 %v464
      %537 = vmatpush.bf16.msra.mxu0 %v456
      %538 = vmatpush.bf16.msra.mxu0 %v448
      %539 = vmatpush.bf16.msra.mxu0 %v440
      %540 = vmatpush.bf16.msra.mxu0 %v432
      %541 = vmatpush.bf16.msra.mxu0 %v424
      %542 = vmatpush.bf16.msra.mxu0 %v416
      %543 = vmatpush.bf16.msra.mxu0 %v408
      %544 = vmatmul.bf16.gmra.mxu0 %v214
      %v545 = vpop.f32.mrf.mxu0
      %v546 = vadd.f32 0.0, %v545
      %v547 = vpop.f32.mrf.mxu0
      %v548 = vadd.f32 0.0, %v547
      %549 = vdwg.mxu0
      %550 = vmatpush.bf16.msra.mxu0 %v465
      %551 = vmatpush.bf16.msra.mxu0 %v457
      %552 = vmatpush.bf16.msra.mxu0 %v449
      %553 = vmatpush.bf16.msra.mxu0 %v441
      %554 = vmatpush.bf16.msra.mxu0 %v433
      %555 = vmatpush.bf16.msra.mxu0 %v425
      %556 = vmatpush.bf16.msra.mxu0 %v417
      %557 = vmatpush.bf16.msra.mxu0 %v409
      %558 = vmatmul.bf16.gmra.mxu0 %v214
      %v559 = vpop.f32.mrf.mxu0
      %v560 = vadd.f32 0.0, %v559
      %v561 = vpop.f32.mrf.mxu0
      %v562 = vadd.f32 0.0, %v561
      %563 = vdwg.mxu0
      %564 = vmatpush.bf16.msra.mxu0 %v466
      %565 = vmatpush.bf16.msra.mxu0 %v458
      %566 = vmatpush.bf16.msra.mxu0 %v450
      %567 = vmatpush.bf16.msra.mxu0 %v442
      %568 = vmatpush.bf16.msra.mxu0 %v434
      %569 = vmatpush.bf16.msra.mxu0 %v426
      %570 = vmatpush.bf16.msra.mxu0 %v418
      %571 = vmatpush.bf16.msra.mxu0 %v410
      %572 = vmatmul.bf16.gmra.mxu0 %v214
      %v573 = vpop.f32.mrf.mxu0
      %v574 = vadd.f32 0.0, %v573
      %v575 = vpop.f32.mrf.mxu0
      %v576 = vadd.f32 0.0, %v575
      %577 = vdwg.mxu0
      %578 = vmatpush.bf16.msra.mxu0 %v467
      %579 = vmatpush.bf16.msra.mxu0 %v459
      %580 = vmatpush.bf16.msra.mxu0 %v451
      %581 = vmatpush.bf16.msra.mxu0 %v443
      %582 = vmatpush.bf16.msra.mxu0 %v435
      %583 = vmatpush.bf16.msra.mxu0 %v427
      %584 = vmatpush.bf16.msra.mxu0 %v419
      %585 = vmatpush.bf16.msra.mxu0 %v411
      %586 = vmatmul.bf16.gmra.mxu0 %v214
      %v587 = vpop.f32.mrf.mxu0
      %v588 = vadd.f32 0.0, %v587
      %v589 = vpop.f32.mrf.mxu0
      %v590 = vadd.f32 0.0, %v589
      %591 = vdwg.mxu0
      %592 = vmatpush.bf16.msra.mxu0 %v468
      %593 = vmatpush.bf16.msra.mxu0 %v460
      %594 = vmatpush.bf16.msra.mxu0 %v452
      %595 = vmatpush.bf16.msra.mxu0 %v444
      %596 = vmatpush.bf16.msra.mxu0 %v436
      %597 = vmatpush.bf16.msra.mxu0 %v428
      %598 = vmatpush.bf16.msra.mxu0 %v420
      %599 = vmatpush.bf16.msra.mxu0 %v412
      %600 = vmatmul.bf16.gmra.mxu0 %v214
      %v601 = vpop.f32.mrf.mxu0
      %v602 = vadd.f32 0.0, %v601
      %v603 = vpop.f32.mrf.mxu0
      %v604 = vadd.f32 0.0, %v603
      %605 = vdwg.mxu0
      %606 = vmatpush.bf16.msra.mxu0 %v469
      %607 = vmatpush.bf16.msra.mxu0 %v461
      %608 = vmatpush.bf16.msra.mxu0 %v453
      %609 = vmatpush.bf16.msra.mxu0 %v445
      %610 = vmatpush.bf16.msra.mxu0 %v437
      %611 = vmatpush.bf16.msra.mxu0 %v429
      %612 = vmatpush.bf16.msra.mxu0 %v421
      %613 = vmatpush.bf16.msra.mxu0 %v413
      %614 = vmatmul.bf16.gmra.mxu0 %v214
      %v615 = vpop.f32.mrf.mxu0
      %v616 = vadd.f32 0.0, %v615
      %v617 = vpop.f32.mrf.mxu0
      %v618 = vadd.f32 0.0, %v617
      %619 = vdwg.mxu0
      %620 = vmatpush.bf16.msra.mxu0 %v470
      %621 = vmatpush.bf16.msra.mxu0 %v462
      %622 = vmatpush.bf16.msra.mxu0 %v454
      %623 = vmatpush.bf16.msra.mxu0 %v446
      %624 = vmatpush.bf16.msra.mxu0 %v438
      %625 = vmatpush.bf16.msra.mxu0 %v430
      %626 = vmatpush.bf16.msra.mxu0 %v422
      %627 = vmatpush.bf16.msra.mxu0 %v414
      %628 = vmatmul.bf16.gmra.mxu0 %v214
      %v629 = vpop.f32.mrf.mxu0
      %v630 = vadd.f32 0.0, %v629
      %v631 = vpop.f32.mrf.mxu0
      %v632 = vadd.f32 0.0, %v631
      %633 = vdwg.mxu0
      %634 = vmatpush.bf16.msra.mxu0 %v471
      %635 = vmatpush.bf16.msra.mxu0 %v463
      %636 = vmatpush.bf16.msra.mxu0 %v455
      %637 = vmatpush.bf16.msra.mxu0 %v447
      %638 = vmatpush.bf16.msra.mxu0 %v439
      %639 = vmatpush.bf16.msra.mxu0 %v431
      %640 = vmatpush.bf16.msra.mxu0 %v423
      %641 = vmatpush.bf16.msra.mxu0 %v415
      %642 = vmatmul.bf16.gmra.mxu0 %v214
      %v643 = vpop.f32.mrf.mxu0
      %v644 = vadd.f32 0.0, %v643
      %v645 = vpop.f32.mrf.mxu0
      %v646 = vadd.f32 0.0, %v645
      %647 = vdwg.mxu0
      %v648 = vadd.f32 %v546, %v560
      %v649 = vadd.f32 %v648, %v574
      %v650 = vadd.f32 %v649, %v588
      %v651 = vadd.f32 %v650, %v602
      %v652 = vadd.f32 %v651, %v616
      %v653 = vadd.f32 %v652, %v630
      %v654 = vadd.f32 %v653, %v644
      %655 = vadd.xlane.f32.xlu0 %v654
      %v656 = vpop.xlane.xlu0 %655
      %v657 = vadd.f32 %v548, %v562
      %v658 = vadd.f32 %v657, %v576
      %v659 = vadd.f32 %v658, %v590
      %v660 = vadd.f32 %v659, %v604
      %v661 = vadd.f32 %v660, %v618
      %v662 = vadd.f32 %v661, %v632
      %v663 = vadd.f32 %v662, %v646
      %664 = vadd.xlane.f32.xlu0 %v663
      %v665 = vpop.xlane.xlu0 %664
      %v666 = vmul.f32 %v656, 0.0009765625
      %v667 = vmul.f32 %v665, 0.0009765625
      %v668 = vsub.f32 %v546, %v666
      %v669 = vsub.f32 %v560, %v666
      %v670 = vsub.f32 %v574, %v666
      %v671 = vsub.f32 %v588, %v666
      %v672 = vsub.f32 %v602, %v666
      %v673 = vsub.f32 %v616, %v666
      %v674 = vsub.f32 %v630, %v666
      %v675 = vsub.f32 %v644, %v666
      %v676 = vsub.f32 %v548, %v667
      %v677 = vsub.f32 %v562, %v667
      %v678 = vsub.f32 %v576, %v667
      %v679 = vsub.f32 %v590, %v667
      %v680 = vsub.f32 %v604, %v667
      %v681 = vsub.f32 %v618, %v667
      %v682 = vsub.f32 %v632, %v667
      %v683 = vsub.f32 %v646, %v667
      %v684 = vmul.f32 %v668, %v668
      %v685 = vmul.f32 %v669, %v669
      %v686 = vmul.f32 %v670, %v670
      %v687 = vmul.f32 %v671, %v671
      %v688 = vmul.f32 %v672, %v672
      %v689 = vmul.f32 %v673, %v673
      %v690 = vmul.f32 %v674, %v674
      %v691 = vmul.f32 %v675, %v675
      %v692 = vmul.f32 %v676, %v676
      %v693 = vmul.f32 %v677, %v677
      %v694 = vmul.f32 %v678, %v678
      %v695 = vmul.f32 %v679, %v679
      %v696 = vmul.f32 %v680, %v680
      %v697 = vmul.f32 %v681, %v681
      %v698 = vmul.f32 %v682, %v682
      %v699 = vmul.f32 %v683, %v683
      %v700 = vadd.f32 %v684, %v685
      %v701 = vadd.f32 %v700, %v686
      %v702 = vadd.f32 %v701, %v687
      %v703 = vadd.f32 %v702, %v688
      %v704 = vadd.f32 %v703, %v689
      %v705 = vadd.f32 %v704, %v690
      %v706 = vadd.f32 %v705, %v691
      %707 = vadd.xlane.f32.xlu0 %v706
      %v708 = vpop.xlane.xlu0 %707
      %v709 = vadd.f32 %v692, %v693
      %v710 = vadd.f32 %v709, %v694
      %v711 = vadd.f32 %v710, %v695
      %v712 = vadd.f32 %v711, %v696
      %v713 = vadd.f32 %v712, %v697
      %v714 = vadd.f32 %v713, %v698
      %v715 = vadd.f32 %v714, %v699
      %716 = vadd.xlane.f32.xlu0 %v715
      %v717 = vpop.xlane.xlu0 %716
      %v718 = vmul.f32 %v708, 0.0009765625
      %v719 = vmul.f32 %v717, 0.0009765625
      %v720 = vadd.f32 %v718, 1e-05
      %v721 = vadd.f32 %v719, 1e-05
      %v722 = vrsqrt.pop %v720
      %v723 = vmul.f32 %v722, %v720
      %v724 = vmul.f32 %v723, %v722
      %v725 = vmul.f32 0.5, %v724
      %v726 = vsub.f32 1.5, %v725
      %v727 = vmul.f32 %v722, %v726
      %vm728 = vweird.f32 %v720
      %vm729 = vweird.f32 %v722
      %vm730 = vmor %vm728, %vm729
      %v731 = vsel %vm730, %v722, %v727
      %v732 = vrsqrt.pop %v721
      %v733 = vmul.f32 %v732, %v721
      %v734 = vmul.f32 %v733, %v732
      %v735 = vmul.f32 0.5, %v734
      %v736 = vsub.f32 1.5, %v735
      %v737 = vmul.f32 %v732, %v736
      %vm738 = vweird.f32 %v721
      %vm739 = vweird.f32 %v732
      %vm740 = vmor %vm738, %vm739
      %v741 = vsel %vm740, %v732, %v737
      %v742 = vmul.f32 %v668, %v731
      %v743 = vmul.f32 %v669, %v731
      %v744 = vmul.f32 %v670, %v731
      %v745 = vmul.f32 %v671, %v731
      %v746 = vmul.f32 %v672, %v731
      %v747 = vmul.f32 %v673, %v731
      %v748 = vmul.f32 %v674, %v731
      %v749 = vmul.f32 %v675, %v731
      %v750 = vmul.f32 %v676, %v741
      %v751 = vmul.f32 %v677, %v741
      %v752 = vmul.f32 %v678, %v741
      %v753 = vmul.f32 %v679, %v741
      %v754 = vmul.f32 %v680, %v741
      %v755 = vmul.f32 %v681, %v741
      %v756 = vmul.f32 %v682, %v741
      %v757 = vmul.f32 %v683, %v741
      %vm758 = vcmp.ge.f32.partialorder %v742, 0.0
      %vm759 = vcmp.ge.f32.partialorder %v743, 0.0
      %vm760 = vcmp.ge.f32.partialorder %v744, 0.0
      %vm761 = vcmp.ge.f32.partialorder %v745, 0.0
      %vm762 = vcmp.ge.f32.partialorder %v746, 0.0
      %vm763 = vcmp.ge.f32.partialorder %v747, 0.0
      %vm764 = vcmp.ge.f32.partialorder %v748, 0.0
      %vm765 = vcmp.ge.f32.partialorder %v749, 0.0
      %vm766 = vcmp.ge.f32.partialorder %v750, 0.0
      %vm767 = vcmp.ge.f32.partialorder %v751, 0.0
      %vm768 = vcmp.ge.f32.partialorder %v752, 0.0
      %vm769 = vcmp.ge.f32.partialorder %v753, 0.0
      %vm770 = vcmp.ge.f32.partialorder %v754, 0.0
      %vm771 = vcmp.ge.f32.partialorder %v755, 0.0
      %vm772 = vcmp.ge.f32.partialorder %v756, 0.0
      %vm773 = vcmp.ge.f32.partialorder %v757, 0.0
      %v774 = vmul.f32 %v742, 0.2
      %v775 = vmul.f32 %v743, 0.2
      %v776 = vmul.f32 %v744, 0.2
      %v777 = vmul.f32 %v745, 0.2
      %v778 = vmul.f32 %v746, 0.2
      %v779 = vmul.f32 %v747, 0.2
      %v780 = vmul.f32 %v748, 0.2
      %v781 = vmul.f32 %v749, 0.2
      %v782 = vmul.f32 %v750, 0.2
      %v783 = vmul.f32 %v751, 0.2
      %v784 = vmul.f32 %v752, 0.2
      %v785 = vmul.f32 %v753, 0.2
      %v786 = vmul.f32 %v754, 0.2
      %v787 = vmul.f32 %v755, 0.2
      %v788 = vmul.f32 %v756, 0.2
      %v789 = vmul.f32 %v757, 0.2
      %v790 = vsel %vm758, %v742, %v774
      %v791 = vsel %vm759, %v743, %v775
      %v792 = vsel %vm760, %v744, %v776
      %v793 = vsel %vm761, %v745, %v777
      %v794 = vsel %vm762, %v746, %v778
      %v795 = vsel %vm763, %v747, %v779
      %v796 = vsel %vm764, %v748, %v780
      %v797 = vsel %vm765, %v749, %v781
      %v798 = vsel %vm766, %v750, %v782
      %v799 = vsel %vm767, %v751, %v783
      %v800 = vsel %vm768, %v752, %v784
      %v801 = vsel %vm769, %v753, %v785
      %v802 = vsel %vm770, %v754, %v786
      %v803 = vsel %vm771, %v755, %v787
      %v804 = vsel %vm772, %v756, %v788
      %v805 = vsel %vm773, %v757, %v789
      %v806 = vpack.c.bf16 %v791, %v790
      %v807 = vpack.c.bf16 %v793, %v792
      %v808 = vpack.c.bf16 %v795, %v794
      %v809 = vpack.c.bf16 %v797, %v796
      %v810 = vpack.c.bf16 %v799, %v798
      %v811 = vpack.c.bf16 %v801, %v800
      %v812 = vpack.c.bf16 %v803, %v802
      %v813 = vpack.c.bf16 %v805, %v804
      %814 = vst [vmem:[%s143] sm:$0xff] %v806
      %815 = vst [vmem:[%s143 + $0x8] sm:$0xff] %v807
      %816 = vst [vmem:[%s143 + $0x10] sm:$0xff] %v808
      %817 = vst [vmem:[%s143 + $0x18] sm:$0xff] %v809
      %818 = vst [vmem:[%s143 + $0x20] sm:$0xff] %v810
      %819 = vst [vmem:[%s143 + $0x28] sm:$0xff] %v811
      %820 = vst [vmem:[%s143 + $0x30] sm:$0xff] %v812
      %821 = vst [vmem:[%s143 + $0x38] sm:$0xff] %v813
      %p822 = scmp.lt.s32.totalorder %s13, 1
      %s823 = scalar_select %p822, %s13, 1
      %s824 = smul.addr %s823, 16
      %s825 = smul.addr %s824, 4
      %s826 = scalar_lea.vmem %s2, %s825
      // Predicated region
      $region29: #{discriminator_forward.8} parent=27 // pred_check
        %p827 = pneg %p78
      $region30: #{discriminator_forward.8} parent=27 // pred_check_branch
        %829 = sbr.rel (%p827) target = $region32
      $region31: #{discriminator_forward.8} parent=27 // pred_region
        _
      $region32: #{discriminator_forward.8} parent=27 // pred_fallthru
        _
    $region28: #{discriminator_forward.8} parent=5 // pred_fallthru
      _
    %p830 = scmp.le.s32.totalorder 2, %s8
    // Predicated region
    $region33: #{discriminator_forward.8} parent=5 // pred_check
      %p831 = pneg %p830
    $region34: #{discriminator_forward.8} parent=5 // pred_check_branch
      %833 = sbr.rel (%p831) target = $region36
    $region35: #{discriminator_forward.8} parent=5 // pred_region
      %s834 = ssub.s32 %s8, 2
      // Predicated region
      $region37: #{discriminator_forward.8} parent=35 // pred_check
        %p835 = pneg %p84
      $region38: #{discriminator_forward.8} parent=35 // pred_check_branch
        %837 = sbr.rel (%p835) target = $region40
      $region39: #{discriminator_forward.8} parent=35 // pred_region
        %p838 = scmp.lt.s32.totalorder %s14, 1
        %s839 = scalar_select %p838, %s14, 1
        %s840 = smul.addr %s839, 16
        %s841 = smul.addr %s840, 4
        %s842 = scalar_lea.vmem %s2, %s841
      $region40: #{discriminator_forward.8} parent=35 // pred_fallthru
        _
    $region36: #{discriminator_forward.8} parent=5 // pred_fallthru
      _
  $region6: #{discriminator_forward.8} parent=0 // loop_footer
    %s12 = sadd.s32 1, %s8
  $region7: #{discriminator_forward.8} parent=0 // loop_footer_branch
    %7 = sbr.rel target = $region3
  $region8: #{discriminator_forward.8} parent=0 // loop_exit
    _

// kernel: discriminator_forward.9
$region0: #{discriminator_forward.9}
  #allocation0 [shape = 'u32[]', space=smem, size = 0x4, offset = 0x4, fixed_abs, tag = 'smem constant byte address 0x4 - core index']
  #allocation1 [shape = 'u32[72,128]{1,0:T(1,128)}', space=vmem, size = 0x9000, scoped, tag = 'internal scratch']
  %s0 = inlined_call_operand.vmem [shape: bf16[32,256], index: 0, kind: input, shape index: {}]
  %s1 = inlined_call_operand.vmem [shape: bf16[2,256,256], index: 1, kind: input, shape index: {}]
  %s2 = inlined_call_operand.vmem [shape: bf16[2,32,256], index: 2, kind: output, shape index: {}]
  %s3 = sld [smem:[#allocation0]]
  $region41: #{discriminator_forward.9} parent=0
    _
  %s5 = ssub.s32 1, %s3
  %s6 = scalar_select 0, %s5, %s3
  loop: start=0, step=1, limit=4
  $region2: #{discriminator_forward.9} parent=0 // loop_pre_header
    _
  $region3: #{discriminator_forward.9} parent=0 // loop_header
    %s8 = sphi 0, %s12
    %p9 = scmp.ge.s32.totalorder %s8, 4
    %s16 = sphi 0, %s16
    %s18 = sphi 0, %s16
    %s19 = sphi 0, %s18
    %s33 = sphi 0, %s19
    %s39 = sphi 0, %s41
    %s42 = sphi 0, %s39
    %s43 = sphi 0, %s42
    %s59 = sphi 0, %s43
    %s65 = sphi 0, %s67
    %s68 = sphi 0, %s65
    %s69 = sphi 0, %s68
    %s85 = sphi 0, %s69
  $region4: #{discriminator_forward.9} parent=0 // loop_header_branch
    %11 = sbr.rel (%p9) target = $region8
  $region5: #{discriminator_forward.9} parent=0 // loop_body
    %s13 = ssub.s32 %s8, 1
    %s14 = ssub.s32 %s8, 2
    %s15 = sadd.s32 %s8, 1
    %s17 = sadd.s32 %s16, 1
    %p20 = scmp.eq.s32.totalorder %s8, 1
    %p21 = scmp.ne.s32.totalorder %s16, %s18
    %p22 = scmp.eq.s32.totalorder %s8, 0
    %p23 = por %p21, %p22
    %p24 = scmp.ne.s32.totalorder %s16, %s18
    %p25 = scmp.eq.s32.totalorder %s13, 1
    %p26 = por %p24, %p25
    %p27 = scmp.ne.s32.totalorder %s18, %s19
    %p28 = scmp.eq.s32.totalorder %s13, 0
    %p29 = por %p27, %p28
    %p30 = scmp.ne.s32.totalorder %s18, %s19
    %p31 = scmp.eq.s32.totalorder %s14, 1
    %p32 = por %p30, %p31
    %p34 = scmp.ne.s32.totalorder %s19, %s33
    %p35 = scmp.eq.s32.totalorder %s14, 0
    %p36 = por %p34, %p35
    %s37 = ssub.s32 %s8, %s15
    %p38 = scmp.eq.s32.totalorder %s37, 0
    %s40 = sadd.s32 %s39, 1
    %s41 = scalar_select %p38, %s39, %s40
    %p44 = pneg %p38
    %p45 = scmp.eq.s32.totalorder %s8, 1
    %p46 = por %p44, %p45
    %p47 = scmp.ne.s32.totalorder %s39, %s42
    %p48 = scmp.eq.s32.totalorder %s8, 0
    %p49 = por %p47, %p48
    %p50 = scmp.ne.s32.totalorder %s39, %s42
    %p51 = scmp.eq.s32.totalorder %s13, 1
    %p52 = por %p50, %p51
    %p53 = scmp.ne.s32.totalorder %s42, %s43
    %p54 = scmp.eq.s32.totalorder %s13, 0
    %p55 = por %p53, %p54
    %p56 = scmp.ne.s32.totalorder %s42, %s43
    %p57 = scmp.eq.s32.totalorder %s14, 1
    %p58 = por %p56, %p57
    %p60 = scmp.ne.s32.totalorder %s43, %s59
    %p61 = scmp.eq.s32.totalorder %s14, 0
    %p62 = por %p60, %p61
    %s63 = ssub.s32 %s8, %s15
    %p64 = scmp.eq.s32.totalorder %s63, 0
    %s66 = sadd.s32 %s65, 1
    %s67 = scalar_select %p64, %s65, %s66
    %p70 = pneg %p64
    %p71 = scmp.eq.s32.totalorder %s8, 1
    %p72 = por %p70, %p71
    %p73 = scmp.ne.s32.totalorder %s65, %s68
    %p74 = scmp.eq.s32.totalorder %s8, 0
    %p75 = por %p73, %p74
    %p76 = scmp.ne.s32.totalorder %s65, %s68
    %p77 = scmp.eq.s32.totalorder %s13, 1
    %p78 = por %p76, %p77
    %p79 = scmp.ne.s32.totalorder %s68, %s69
    %p80 = scmp.eq.s32.totalorder %s13, 0
    %p81 = por %p79, %p80
    %p82 = scmp.ne.s32.totalorder %s68, %s69
    %p83 = scmp.eq.s32.totalorder %s14, 1
    %p84 = por %p82, %p83
    %p86 = scmp.ne.s32.totalorder %s69, %s85
    %p87 = scmp.eq.s32.totalorder %s14, 0
    %p88 = por %p86, %p87
    %p89 = scmp.le.s32.totalorder 1, %s8
    %p90 = scmp.lt.s32.totalorder %s8, 3
    %p91 = pnand %p89, %p90
    %p92 = pneg %p91
    // Predicated region
    $region9: #{discriminator_forward.9} parent=5 // pred_check
      _
    $region10: #{discriminator_forward.9} parent=5 // pred_check_branch
      %94 = sbr.rel (%p91) target = $region12
    $region11: #{discriminator_forward.9} parent=5 // pred_region
      %s95 = ssub.s32 %s8, 1
      // Predicated region
      $region13: #{discriminator_forward.9} parent=11 // pred_check
        %p96 = pneg %p29
      $region14: #{discriminator_forward.9} parent=11 // pred_check_branch
        %98 = sbr.rel (%p96) target = $region16
      $region15: #{discriminator_forward.9} parent=11 // pred_region
        _
      $region16: #{discriminator_forward.9} parent=11 // pred_fallthru
        _
    $region12: #{discriminator_forward.9} parent=5 // pred_fallthru
      _
    %p99 = scmp.lt.s32.totalorder %s8, 2
    // Predicated region
    $region17: #{discriminator_forward.9} parent=5 // pred_check
      %p100 = pneg %p99
    $region18: #{discriminator_forward.9} parent=5 // pred_check_branch
      %102 = sbr.rel (%p100) target = $region20
    $region19: #{discriminator_forward.9} parent=5 // pred_region
      // Predicated region
      $region21: #{discriminator_forward.9} parent=19 // pred_check
        %p103 = pneg %p49
      $region22: #{discriminator_forward.9} parent=19 // pred_check_branch
        %105 = sbr.rel (%p103) target = $region24
      $region23: #{discriminator_forward.9} parent=19 // pred_region
        %p106 = scmp.lt.s32.totalorder %s8, 1
        %s107 = scalar_select %p106, %s8, 1
        %s108 = smul.addr %s107, 64
        %s109 = smul.addr %s108, 4
        %s110 = scalar_lea.vmem %s1, %s109
      $region24: #{discriminator_forward.9} parent=19 // pred_fallthru
        _
    $region20: #{discriminator_forward.9} parent=5 // pred_fallthru
      _
    %p111 = scmp.le.s32.totalorder 1, %s8
    %p112 = scmp.lt.s32.totalorder %s8, 3
    %p113 = pnand %p111, %p112
    %p114 = pneg %p113
    // Predicated region
    $region25: #{discriminator_forward.9} parent=5 // pred_check
      _
    $region26: #{discriminator_forward.9} parent=5 // pred_check_branch
      %116 = sbr.rel (%p113) target = $region28
    $region27: #{discriminator_forward.9} parent=5 // pred_region
      %s117 = ssub.s32 %s8, 1
      %p118 = pneg %p29
      %p119 = pneg %p26
      %p120 = scmp.lt.s32.totalorder %s13, 1
      %s121 = scalar_select %p120, %s13, 1
      %s122 = smul.addr %s121, 64
      %s123 = smul.addr %s122, 4
      %s124 = scalar_lea.vmem %s1, %s123
      %p125 = pneg %p55
      %p126 = pneg %p52
      %p127 = pneg %p81
      %p128 = pneg %p78
      %p129 = scmp.lt.s32.totalorder %s13, 1
      %s130 = scalar_select %p129, %s13, 1
      %s131 = smul.addr %s130, 8
      %s132 = smul.addr %s131, 4
      %s133 = scalar_lea.vmem %s2, %s132
      %p134 = scmp.lt.s32.totalorder %s13, 1
      %s135 = scalar_select %p134, %s13, 1
      %s136 = smul.addr %s135, 64
      %s137 = smul.addr %s136, 4
      %s138 = scalar_lea.vmem %s1, %s137
      %p139 = scmp.lt.s32.totalorder %s13, 1
      %s140 = scalar_select %p139, %s13, 1
      %s141 = smul.addr %s140, 8
      %s142 = smul.addr %s141, 4
      %s143 = scalar_lea.vmem %s2, %s142
      %v144 = vld [vmem:[%s0] sm:$0xff]
      %v145 = vld [vmem:[%s0 + $0x8] sm:$0xff]
      %v146 = vld [vmem:[%s0 + $0x10] sm:$0xff]
      %v147 = vld [vmem:[%s0 + $0x18] sm:$0xff]
      %v148 = vld [vmem:[%s138] sm:$0xff]
      %v149 = vld [vmem:[%s138 + $0x8] sm:$0xff]
      %v150 = vld [vmem:[%s138 + $0x10] sm:$0xff]
      %v151 = vld [vmem:[%s138 + $0x18] sm:$0xff]
      %v152 = vld [vmem:[%s138 + $0x20] sm:$0xff]
      %v153 = vld [vmem:[%s138 + $0x28] sm:$0xff]
      %v154 = vld [vmem:[%s138 + $0x30] sm:$0xff]
      %v155 = vld [vmem:[%s138 + $0x38] sm:$0xff]
      %v156 = vld [vmem:[%s138 + $0x40] sm:$0xff]
      %v157 = vld [vmem:[%s138 + $0x48] sm:$0xff]
      %v158 = vld [vmem:[%s138 + $0x50] sm:$0xff]
      %v159 = vld [vmem:[%s138 + $0x58] sm:$0xff]
      %v160 = vld [vmem:[%s138 + $0x60] sm:$0xff]
      %v161 = vld [vmem:[%s138 + $0x68] sm:$0xff]
      %v162 = vld [vmem:[%s138 + $0x70] sm:$0xff]
      %v163 = vld [vmem:[%s138 + $0x78] sm:$0xff]
      %v164 = vld [vmem:[%s138 + $0x80] sm:$0xff]
      %v165 = vld [vmem:[%s138 + $0x88] sm:$0xff]
      %v166 = vld [vmem:[%s138 + $0x90] sm:$0xff]
      %v167 = vld [vmem:[%s138 + $0x98] sm:$0xff]
      %v168 = vld [vmem:[%s138 + $0xa0] sm:$0xff]
      %v169 = vld [vmem:[%s138 + $0xa8] sm:$0xff]
      %v170 = vld [vmem:[%s138 + $0xb0] sm:$0xff]
      %v171 = vld [vmem:[%s138 + $0xb8] sm:$0xff]
      %v172 = vld [vmem:[%s138 + $0xc0] sm:$0xff]
      %v173 = vld [vmem:[%s138 + $0xc8] sm:$0xff]
      %v174 = vld [vmem:[%s138 + $0xd0] sm:$0xff]
      %v175 = vld [vmem:[%s138 + $0xd8] sm:$0xff]
      %v176 = vld [vmem:[%s138 + $0xe0] sm:$0xff]
      %v177 = vld [vmem:[%s138 + $0xe8] sm:$0xff]
      %v178 = vld [vmem:[%s138 + $0xf0] sm:$0xff]
      %v179 = vld [vmem:[%s138 + $0xf8] sm:$0xff]
      %v184 = vunpack.c.l.b16 %v144
      %v185 = vunpack.c.h.b16 %v144
      %v186 = vunpack.c.l.b16 %v145
      %v187 = vunpack.c.h.b16 %v145
      %v188 = vunpack.c.l.b16 %v146
      %v189 = vunpack.c.h.b16 %v146
      %v190 = vunpack.c.l.b16 %v147
      %v191 = vunpack.c.h.b16 %v147
      %v192 = vpack.c.b16 %v186, %v184
      %v193 = vpack.c.b16 %v187, %v185
      %v194 = vpack.c.b16 %v190, %v188
      %v195 = vpack.c.b16 %v191, %v189
      %v232 = vunpack.c.l.b16 %v148
      %v233 = vunpack.c.h.b16 %v148
      %v234 = vunpack.c.l.b16 %v149
      %v235 = vunpack.c.h.b16 %v149
      %v236 = vunpack.c.l.b16 %v150
      %v237 = vunpack.c.h.b16 %v150
      %v238 = vunpack.c.l.b16 %v151
      %v239 = vunpack.c.h.b16 %v151
      %v240 = vunpack.c.l.b16 %v152
      %v241 = vunpack.c.h.b16 %v152
      %v242 = vunpack.c.l.b16 %v153
      %v243 = vunpack.c.h.b16 %v153
      %v244 = vunpack.c.l.b16 %v154
      %v245 = vunpack.c.h.b16 %v154
      %v246 = vunpack.c.l.b16 %v155
      %v247 = vunpack.c.h.b16 %v155
      %v248 = vunpack.c.l.b16 %v156
      %v249 = vunpack.c.h.b16 %v156
      %v250 = vunpack.c.l.b16 %v157
      %v251 = vunpack.c.h.b16 %v157
      %v252 = vunpack.c.l.b16 %v158
      %v253 = vunpack.c.h.b16 %v158
      %v254 = vunpack.c.l.b16 %v159
      %v255 = vunpack.c.h.b16 %v159
      %v256 = vunpack.c.l.b16 %v160
      %v257 = vunpack.c.h.b16 %v160
      %v258 = vunpack.c.l.b16 %v161
      %v259 = vunpack.c.h.b16 %v161
      %v260 = vunpack.c.l.b16 %v162
      %v261 = vunpack.c.h.b16 %v162
      %v262 = vunpack.c.l.b16 %v163
      %v263 = vunpack.c.h.b16 %v163
      %v264 = vunpack.c.l.b16 %v164
      %v265 = vunpack.c.h.b16 %v164
      %v266 = vunpack.c.l.b16 %v165
      %v267 = vunpack.c.h.b16 %v165
      %v268 = vunpack.c.l.b16 %v166
      %v269 = vunpack.c.h.b16 %v166
      %v270 = vunpack.c.l.b16 %v167
      %v271 = vunpack.c.h.b16 %v167
      %v272 = vunpack.c.l.b16 %v168
      %v273 = vunpack.c.h.b16 %v168
      %v274 = vunpack.c.l.b16 %v169
      %v275 = vunpack.c.h.b16 %v169
      %v276 = vunpack.c.l.b16 %v170
      %v277 = vunpack.c.h.b16 %v170
      %v278 = vunpack.c.l.b16 %v171
      %v279 = vunpack.c.h.b16 %v171
      %v280 = vunpack.c.l.b16 %v172
      %v281 = vunpack.c.h.b16 %v172
      %v282 = vunpack.c.l.b16 %v173
      %v283 = vunpack.c.h.b16 %v173
      %v284 = vunpack.c.l.b16 %v174
      %v285 = vunpack.c.h.b16 %v174
      %v286 = vunpack.c.l.b16 %v175
      %v287 = vunpack.c.h.b16 %v175
      %v288 = vunpack.c.l.b16 %v176
      %v289 = vunpack.c.h.b16 %v176
      %v290 = vunpack.c.l.b16 %v177
      %v291 = vunpack.c.h.b16 %v177
      %v292 = vunpack.c.l.b16 %v178
      %v293 = vunpack.c.h.b16 %v178
      %v294 = vunpack.c.l.b16 %v179
      %v295 = vunpack.c.h.b16 %v179
      %v296 = vpack.c.b16 %v234, %v232
      %v297 = vpack.c.b16 %v235, %v233
      %v298 = vpack.c.b16 %v238, %v236
      %v299 = vpack.c.b16 %v239, %v237
      %v300 = vpack.c.b16 %v242, %v240
      %v301 = vpack.c.b16 %v243, %v241
      %v302 = vpack.c.b16 %v246, %v244
      %v303 = vpack.c.b16 %v247, %v245
      %v304 = vpack.c.b16 %v250, %v248
      %v305 = vpack.c.b16 %v251, %v249
      %v306 = vpack.c.b16 %v254, %v252
      %v307 = vpack.c.b16 %v255, %v253
      %v308 = vpack.c.b16 %v258, %v256
      %v309 = vpack.c.b16 %v259, %v257
      %v310 = vpack.c.b16 %v262, %v260
      %v311 = vpack.c.b16 %v263, %v261
      %v312 = vpack.c.b16 %v266, %v264
      %v313 = vpack.c.b16 %v267, %v265
      %v314 = vpack.c.b16 %v270, %v268
      %v315 = vpack.c.b16 %v271, %v269
      %v316 = vpack.c.b16 %v274, %v272
      %v317 = vpack.c.b16 %v275, %v273
      %v318 = vpack.c.b16 %v278, %v276
      %v319 = vpack.c.b16 %v279, %v277
      %v320 = vpack.c.b16 %v282, %v280
      %v321 = vpack.c.b16 %v283, %v281
      %v322 = vpack.c.b16 %v286, %v284
      %v323 = vpack.c.b16 %v287, %v285
      %v324 = vpack.c.b16 %v290, %v288
      %v325 = vpack.c.b16 %v291, %v289
      %v326 = vpack.c.b16 %v294, %v292
      %v327 = vpack.c.b16 %v295, %v293
      %360 = vmatpush.bf16.msra.mxu0 %v310
      %361 = vmatpush.bf16.msra.mxu0 %v308
      %362 = vmatpush.bf16.msra.mxu0 %v306
      %363 = vmatpush.bf16.msra.mxu0 %v304
      %364 = vmatpush.bf16.msra.mxu0 %v302
      %365 = vmatpush.bf16.msra.mxu0 %v300
      %366 = vmatpush.bf16.msra.mxu0 %v298
      %367 = vmatpush.bf16.msra.mxu0 %v296
      %368 = vmatmul.bf16.gmra.mxu0 %v192
      %v369 = vpop.f32.mrf.mxu0
      %v370 = vadd.f32 0.0, %v369
      %v371 = vpop.f32.mrf.mxu0
      %v372 = vadd.f32 0.0, %v371
      %373 = vmatmul.bf16.gmra.mxu0 %v194
      %v374 = vpop.f32.mrf.mxu0
      %v375 = vadd.f32 0.0, %v374
      %v376 = vpop.f32.mrf.mxu0
      %v377 = vadd.f32 0.0, %v376
      %378 = vdwg.mxu0
      %379 = vmatpush.bf16.msra.mxu0 %v326
      %380 = vmatpush.bf16.msra.mxu0 %v324
      %381 = vmatpush.bf16.msra.mxu0 %v322
      %382 = vmatpush.bf16.msra.mxu0 %v320
      %383 = vmatpush.bf16.msra.mxu0 %v318
      %384 = vmatpush.bf16.msra.mxu0 %v316
      %385 = vmatpush.bf16.msra.mxu0 %v314
      %386 = vmatpush.bf16.msra.mxu0 %v312
      %387 = vmatmul.bf16.gmra.mxu0 %v193
      %v388 = vpop.f32.mrf.mxu0
      %v389 = vadd.f32 %v370, %v388
      %v390 = vpop.f32.mrf.mxu0
      %v391 = vadd.f32 %v372, %v390
      %392 = vmatmul.bf16.gmra.mxu0 %v195
      %v393 = vpop.f32.mrf.mxu0
      %v394 = vadd.f32 %v375, %v393
      %v395 = vpop.f32.mrf.mxu0
      %v396 = vadd.f32 %v377, %v395
      %397 = vdwg.mxu0
      %398 = vmatpush.bf16.msra.mxu0 %v311
      %399 = vmatpush.bf16.msra.mxu0 %v309
      %400 = vmatpush.bf16.msra.mxu0 %v307
      %401 = vmatpush.bf16.msra.mxu0 %v305
      %402 = vmatpush.bf16.msra.mxu0 %v303
      %403 = vmatpush.bf16.msra.mxu0 %v301
      %404 = vmatpush.bf16.msra.mxu0 %v299
      %405 = vmatpush.bf16.msra.mxu0 %v297
      %406 = vmatmul.bf16.gmra.mxu0 %v192
      %v407 = vpop.f32.mrf.mxu0
      %v408 = vadd.f32 0.0, %v407
      %v409 = vpop.f32.mrf.mxu0
      %v410 = vadd.f32 0.0, %v409
      %411 = vmatmul.bf16.gmra.mxu0 %v194
      %v412 = vpop.f32.mrf.mxu0
      %v413 = vadd.f32 0.0, %v412
      %v414 = vpop.f32.mrf.mxu0
      %v415 = vadd.f32 0.0, %v414
      %416 = vdwg.mxu0
      %417 = vmatpush.bf16.msra.mxu0 %v327
      %418 = vmatpush.bf16.msra.mxu0 %v325
      %419 = vmatpush.bf16.msra.mxu0 %v323
      %420 = vmatpush.bf16.msra.mxu0 %v321
      %421 = vmatpush.bf16.msra.mxu0 %v319
      %422 = vmatpush.bf16.msra.mxu0 %v317
      %423 = vmatpush.bf16.msra.mxu0 %v315
      %424 = vmatpush.bf16.msra.mxu0 %v313
      %425 = vmatmul.bf16.gmra.mxu0 %v193
      %v426 = vpop.f32.mrf.mxu0
      %v427 = vadd.f32 %v408, %v426
      %v428 = vpop.f32.mrf.mxu0
      %v429 = vadd.f32 %v410, %v428
      %430 = vmatmul.bf16.gmra.mxu0 %v195
      %v431 = vpop.f32.mrf.mxu0
      %v432 = vadd.f32 %v413, %v431
      %v433 = vpop.f32.mrf.mxu0
      %v434 = vadd.f32 %v415, %v433
      %435 = vdwg.mxu0
      %v436 = vadd.f32 %v389, %v427
      %437 = vadd.xlane.f32.xlu0 %v436
      %v438 = vpop.xlane.xlu0 %437
      %v439 = vadd.f32 %v391, %v429
      %440 = vadd.xlane.f32.xlu0 %v439
      %v441 = vpop.xlane.xlu0 %440
      %v442 = vadd.f32 %v394, %v432
      %443 = vadd.xlane.f32.xlu0 %v442
      %v444 = vpop.xlane.xlu0 %443
      %v445 = vadd.f32 %v396, %v434
      %446 = vadd.xlane.f32.xlu0 %v445
      %v447 = vpop.xlane.xlu0 %446
      %v448 = vmul.f32 %v438, 0.00390625
      %v449 = vmul.f32 %v441, 0.00390625
      %v450 = vmul.f32 %v444, 0.00390625
      %v451 = vmul.f32 %v447, 0.00390625
      %v452 = vsub.f32 %v389, %v448
      %v453 = vsub.f32 %v427, %v448
      %v454 = vsub.f32 %v391, %v449
      %v455 = vsub.f32 %v429, %v449
      %v456 = vsub.f32 %v394, %v450
      %v457 = vsub.f32 %v432, %v450
      %v458 = vsub.f32 %v396, %v451
      %v459 = vsub.f32 %v434, %v451
      %v460 = vmul.f32 %v452, %v452
      %v461 = vmul.f32 %v453, %v453
      %v462 = vmul.f32 %v454, %v454
      %v463 = vmul.f32 %v455, %v455
      %v464 = vmul.f32 %v456, %v456
      %v465 = vmul.f32 %v457, %v457
      %v466 = vmul.f32 %v458, %v458
      %v467 = vmul.f32 %v459, %v459
      %v468 = vadd.f32 %v460, %v461
      %469 = vadd.xlane.f32.xlu0 %v468
      %v470 = vpop.xlane.xlu0 %469
      %v471 = vadd.f32 %v462, %v463
      %472 = vadd.xlane.f32.xlu0 %v471
      %v473 = vpop.xlane.xlu0 %472
      %v474 = vadd.f32 %v464, %v465
      %475 = vadd.xlane.f32.xlu0 %v474
      %v476 = vpop.xlane.xlu0 %475
      %v477 = vadd.f32 %v466, %v467
      %478 = vadd.xlane.f32.xlu0 %v477
      %v479 = vpop.xlane.xlu0 %478
      %v480 = vmul.f32 %v470, 0.00390625
      %v481 = vmul.f32 %v473, 0.00390625
      %v482 = vmul.f32 %v476, 0.00390625
      %v483 = vmul.f32 %v479, 0.00390625
      %v484 = vadd.f32 %v480, 1e-05
      %v485 = vadd.f32 %v481, 1e-05
      %v486 = vadd.f32 %v482, 1e-05
      %v487 = vadd.f32 %v483, 1e-05
      %v488 = vrsqrt.pop %v484
      %v489 = vmul.f32 %v488, %v484
      %v490 = vmul.f32 %v489, %v488
      %v491 = vmul.f32 0.5, %v490
      %v492 = vsub.f32 1.5, %v491
      %v493 = vmul.f32 %v488, %v492
      %vm494 = vweird.f32 %v484
      %vm495 = vweird.f32 %v488
      %vm496 = vmor %vm494, %vm495
      %v497 = vsel %vm496, %v488, %v493
      %v498 = vrsqrt.pop %v485
      %v499 = vmul.f32 %v498, %v485
      %v500 = vmul.f32 %v499, %v498
      %v501 = vmul.f32 0.5, %v500
      %v502 = vsub.f32 1.5, %v501
      %v503 = vmul.f32 %v498, %v502
      %vm504 = vweird.f32 %v485
      %vm505 = vweird.f32 %v498
      %vm506 = vmor %vm504, %vm505
      %v507 = vsel %vm506, %v498, %v503
      %v508 = vrsqrt.pop %v486
      %v509 = vmul.f32 %v508, %v486
      %v510 = vmul.f32 %v509, %v508
      %v511 = vmul.f32 0.5, %v510
      %v512 = vsub.f32 1.5, %v511
      %v513 = vmul.f32 %v508, %v512
      %vm514 = vweird.f32 %v486
      %vm515 = vweird.f32 %v508
      %vm516 = vmor %vm514, %vm515
      %v517 = vsel %vm516, %v508, %v513
      %v518 = vrsqrt.pop %v487
      %v519 = vmul.f32 %v518, %v487
      %v520 = vmul.f32 %v519, %v518
      %v521 = vmul.f32 0.5, %v520
      %v522 = vsub.f32 1.5, %v521
      %v523 = vmul.f32 %v518, %v522
      %vm524 = vweird.f32 %v487
      %vm525 = vweird.f32 %v518
      %vm526 = vmor %vm524, %vm525
      %v527 = vsel %vm526, %v518, %v523
      %v528 = vmul.f32 %v452, %v497
      %v529 = vmul.f32 %v453, %v497
      %v530 = vmul.f32 %v454, %v507
      %v531 = vmul.f32 %v455, %v507
      %v532 = vmul.f32 %v456, %v517
      %v533 = vmul.f32 %v457, %v517
      %v534 = vmul.f32 %v458, %v527
      %v535 = vmul.f32 %v459, %v527
      %vm536 = vcmp.ge.f32.partialorder %v528, 0.0
      %vm537 = vcmp.ge.f32.partialorder %v529, 0.0
      %vm538 = vcmp.ge.f32.partialorder %v530, 0.0
      %vm539 = vcmp.ge.f32.partialorder %v531, 0.0
      %vm540 = vcmp.ge.f32.partialorder %v532, 0.0
      %vm541 = vcmp.ge.f32.partialorder %v533, 0.0
      %vm542 = vcmp.ge.f32.partialorder %v534, 0.0
      %vm543 = vcmp.ge.f32.partialorder %v535, 0.0
      %v544 = vmul.f32 %v528, 0.2
      %v545 = vmul.f32 %v529, 0.2
      %v546 = vmul.f32 %v530, 0.2
      %v547 = vmul.f32 %v531, 0.2
      %v548 = vmul.f32 %v532, 0.2
      %v549 = vmul.f32 %v533, 0.2
      %v550 = vmul.f32 %v534, 0.2
      %v551 = vmul.f32 %v535, 0.2
      %v552 = vsel %vm536, %v528, %v544
      %v553 = vsel %vm537, %v529, %v545
      %v554 = vsel %vm538, %v530, %v546
      %v555 = vsel %vm539, %v531, %v547
      %v556 = vsel %vm540, %v532, %v548
      %v557 = vsel %vm541, %v533, %v549
      %v558 = vsel %vm542, %v534, %v550
      %v559 = vsel %vm543, %v535, %v551
      %v560 = vpack.c.bf16 %v553, %v552
      %v561 = vpack.c.bf16 %v555, %v554
      %v562 = vpack.c.bf16 %v557, %v556
      %v563 = vpack.c.bf16 %v559, %v558
      %564 = vst [vmem:[%s143] sm:$0xff] %v560
      %565 = vst [vmem:[%s143 + $0x8] sm:$0xff] %v561
      %566 = vst [vmem:[%s143 + $0x10] sm:$0xff] %v562
      %567 = vst [vmem:[%s143 + $0x18] sm:$0xff] %v563
      %p568 = scmp.lt.s32.totalorder %s13, 1
      %s569 = scalar_select %p568, %s13, 1
      %s570 = smul.addr %s569, 8
      %s571 = smul.addr %s570, 4
      %s572 = scalar_lea.vmem %s2, %s571
      // Predicated region
      $region29: #{discriminator_forward.9} parent=27 // pred_check
        %p573 = pneg %p78
      $region30: #{discriminator_forward.9} parent=27 // pred_check_branch
        %575 = sbr.rel (%p573) target = $region32
      $region31: #{discriminator_forward.9} parent=27 // pred_region
        _
      $region32: #{discriminator_forward.9} parent=27 // pred_fallthru
        _
    $region28: #{discriminator_forward.9} parent=5 // pred_fallthru
      _
    %p576 = scmp.le.s32.totalorder 2, %s8
    // Predicated region
    $region33: #{discriminator_forward.9} parent=5 // pred_check
      %p577 = pneg %p576
    $region34: #{discriminator_forward.9} parent=5 // pred_check_branch
      %579 = sbr.rel (%p577) target = $region36
    $region35: #{discriminator_forward.9} parent=5 // pred_region
      %s580 = ssub.s32 %s8, 2
      // Predicated region
      $region37: #{discriminator_forward.9} parent=35 // pred_check
        %p581 = pneg %p84
      $region38: #{discriminator_forward.9} parent=35 // pred_check_branch
        %583 = sbr.rel (%p581) target = $region40
      $region39: #{discriminator_forward.9} parent=35 // pred_region
        %p584 = scmp.lt.s32.totalorder %s14, 1
        %s585 = scalar_select %p584, %s14, 1
        %s586 = smul.addr %s585, 8
        %s587 = smul.addr %s586, 4
        %s588 = scalar_lea.vmem %s2, %s587
      $region40: #{discriminator_forward.9} parent=35 // pred_fallthru
        _
    $region36: #{discriminator_forward.9} parent=5 // pred_fallthru
      _
  $region6: #{discriminator_forward.9} parent=0 // loop_footer
    %s12 = sadd.s32 1, %s8
  $region7: #{discriminator_forward.9} parent=0 // loop_footer_branch
    %7 = sbr.rel target = $region3
  $region8: #{discriminator_forward.9} parent=0 // loop_exit
    _

// kernel: discriminator_forward.10
$region0: #{discriminator_forward.10}
  #allocation0 [shape = 'u32[]', space=smem, size = 0x4, offset = 0x4, fixed_abs, tag = 'smem constant byte address 0x4 - core index']
  #allocation1 [shape = 'u32[72,128]{1,0:T(1,128)}', space=vmem, size = 0x9000, scoped, tag = 'internal scratch']
  %s0 = inlined_call_operand.vmem [shape: bf16[64,512], index: 0, kind: input, shape index: {}]
  %s1 = inlined_call_operand.vmem [shape: bf16[2,512,64], index: 1, kind: input, shape index: {}]
  %s2 = inlined_call_operand.vmem [shape: bf16[2,64,64], index: 2, kind: output, shape index: {}]
  %s3 = sld [smem:[#allocation0]]
  $region41: #{discriminator_forward.10} parent=0
    _
  %s5 = ssub.s32 1, %s3
  %s6 = scalar_select 0, %s5, %s3
  loop: start=0, step=1, limit=4
  $region2: #{discriminator_forward.10} parent=0 // loop_pre_header
    _
  $region3: #{discriminator_forward.10} parent=0 // loop_header
    %s8 = sphi 0, %s12
    %p9 = scmp.ge.s32.totalorder %s8, 4
    %s16 = sphi 0, %s16
    %s18 = sphi 0, %s16
    %s19 = sphi 0, %s18
    %s33 = sphi 0, %s19
    %s39 = sphi 0, %s41
    %s42 = sphi 0, %s39
    %s43 = sphi 0, %s42
    %s59 = sphi 0, %s43
    %s65 = sphi 0, %s67
    %s68 = sphi 0, %s65
    %s69 = sphi 0, %s68
    %s85 = sphi 0, %s69
  $region4: #{discriminator_forward.10} parent=0 // loop_header_branch
    %11 = sbr.rel (%p9) target = $region8
  $region5: #{discriminator_forward.10} parent=0 // loop_body
    %s13 = ssub.s32 %s8, 1
    %s14 = ssub.s32 %s8, 2
    %s15 = sadd.s32 %s8, 1
    %s17 = sadd.s32 %s16, 1
    %p20 = scmp.eq.s32.totalorder %s8, 1
    %p21 = scmp.ne.s32.totalorder %s16, %s18
    %p22 = scmp.eq.s32.totalorder %s8, 0
    %p23 = por %p21, %p22
    %p24 = scmp.ne.s32.totalorder %s16, %s18
    %p25 = scmp.eq.s32.totalorder %s13, 1
    %p26 = por %p24, %p25
    %p27 = scmp.ne.s32.totalorder %s18, %s19
    %p28 = scmp.eq.s32.totalorder %s13, 0
    %p29 = por %p27, %p28
    %p30 = scmp.ne.s32.totalorder %s18, %s19
    %p31 = scmp.eq.s32.totalorder %s14, 1
    %p32 = por %p30, %p31
    %p34 = scmp.ne.s32.totalorder %s19, %s33
    %p35 = scmp.eq.s32.totalorder %s14, 0
    %p36 = por %p34, %p35
    %s37 = ssub.s32 %s8, %s15
    %p38 = scmp.eq.s32.totalorder %s37, 0
    %s40 = sadd.s32 %s39, 1
    %s41 = scalar_select %p38, %s39, %s40
    %p44 = pneg %p38
    %p45 = scmp.eq.s32.totalorder %s8, 1
    %p46 = por %p44, %p45
    %p47 = scmp.ne.s32.totalorder %s39, %s42
    %p48 = scmp.eq.s32.totalorder %s8, 0
    %p49 = por %p47, %p48
    %p50 = scmp.ne.s32.totalorder %s39, %s42
    %p51 = scmp.eq.s32.totalorder %s13, 1
    %p52 = por %p50, %p51
    %p53 = scmp.ne.s32.totalorder %s42, %s43
    %p54 = scmp.eq.s32.totalorder %s13, 0
    %p55 = por %p53, %p54
    %p56 = scmp.ne.s32.totalorder %s42, %s43
    %p57 = scmp.eq.s32.totalorder %s14, 1
    %p58 = por %p56, %p57
    %p60 = scmp.ne.s32.totalorder %s43, %s59
    %p61 = scmp.eq.s32.totalorder %s14, 0
    %p62 = por %p60, %p61
    %s63 = ssub.s32 %s8, %s15
    %p64 = scmp.eq.s32.totalorder %s63, 0
    %s66 = sadd.s32 %s65, 1
    %s67 = scalar_select %p64, %s65, %s66
    %p70 = pneg %p64
    %p71 = scmp.eq.s32.totalorder %s8, 1
    %p72 = por %p70, %p71
    %p73 = scmp.ne.s32.totalorder %s65, %s68
    %p74 = scmp.eq.s32.totalorder %s8, 0
    %p75 = por %p73, %p74
    %p76 = scmp.ne.s32.totalorder %s65, %s68
    %p77 = scmp.eq.s32.totalorder %s13, 1
    %p78 = por %p76, %p77
    %p79 = scmp.ne.s32.totalorder %s68, %s69
    %p80 = scmp.eq.s32.totalorder %s13, 0
    %p81 = por %p79, %p80
    %p82 = scmp.ne.s32.totalorder %s68, %s69
    %p83 = scmp.eq.s32.totalorder %s14, 1
    %p84 = por %p82, %p83
    %p86 = scmp.ne.s32.totalorder %s69, %s85
    %p87 = scmp.eq.s32.totalorder %s14, 0
    %p88 = por %p86, %p87
    %p89 = scmp.le.s32.totalorder 1, %s8
    %p90 = scmp.lt.s32.totalorder %s8, 3
    %p91 = pnand %p89, %p90
    %p92 = pneg %p91
    // Predicated region
    $region9: #{discriminator_forward.10} parent=5 // pred_check
      _
    $region10: #{discriminator_forward.10} parent=5 // pred_check_branch
      %94 = sbr.rel (%p91) target = $region12
    $region11: #{discriminator_forward.10} parent=5 // pred_region
      %s95 = ssub.s32 %s8, 1
      // Predicated region
      $region13: #{discriminator_forward.10} parent=11 // pred_check
        %p96 = pneg %p29
      $region14: #{discriminator_forward.10} parent=11 // pred_check_branch
        %98 = sbr.rel (%p96) target = $region16
      $region15: #{discriminator_forward.10} parent=11 // pred_region
        _
      $region16: #{discriminator_forward.10} parent=11 // pred_fallthru
        _
    $region12: #{discriminator_forward.10} parent=5 // pred_fallthru
      _
    %p99 = scmp.lt.s32.totalorder %s8, 2
    // Predicated region
    $region17: #{discriminator_forward.10} parent=5 // pred_check
      %p100 = pneg %p99
    $region18: #{discriminator_forward.10} parent=5 // pred_check_branch
      %102 = sbr.rel (%p100) target = $region20
    $region19: #{discriminator_forward.10} parent=5 // pred_region
      // Predicated region
      $region21: #{discriminator_forward.10} parent=19 // pred_check
        %p103 = pneg %p49
      $region22: #{discriminator_forward.10} parent=19 // pred_check_branch
        %105 = sbr.rel (%p103) target = $region24
      $region23: #{discriminator_forward.10} parent=19 // pred_region
        %p106 = scmp.lt.s32.totalorder %s8, 1
        %s107 = scalar_select %p106, %s8, 1
        %s108 = smul.addr %s107, 64
        %s109 = smul.addr %s108, 4
        %s110 = scalar_lea.vmem %s1, %s109
      $region24: #{discriminator_forward.10} parent=19 // pred_fallthru
        _
    $region20: #{discriminator_forward.10} parent=5 // pred_fallthru
      _
    %p111 = scmp.le.s32.totalorder 1, %s8
    %p112 = scmp.lt.s32.totalorder %s8, 3
    %p113 = pnand %p111, %p112
    %p114 = pneg %p113
    // Predicated region
    $region25: #{discriminator_forward.10} parent=5 // pred_check
      _
    $region26: #{discriminator_forward.10} parent=5 // pred_check_branch
      %116 = sbr.rel (%p113) target = $region28
    $region27: #{discriminator_forward.10} parent=5 // pred_region
      %s117 = ssub.s32 %s8, 1
      %p118 = pneg %p29
      %p119 = pneg %p26
      %p120 = scmp.lt.s32.totalorder %s13, 1
      %s121 = scalar_select %p120, %s13, 1
      %s122 = smul.addr %s121, 64
      %s123 = smul.addr %s122, 4
      %s124 = scalar_lea.vmem %s1, %s123
      %p125 = pneg %p55
      %p126 = pneg %p52
      %p127 = pneg %p81
      %p128 = pneg %p78
      %p129 = scmp.lt.s32.totalorder %s13, 1
      %s130 = scalar_select %p129, %s13, 1
      %s131 = smul.addr %s130, 8
      %s132 = smul.addr %s131, 4
      %s133 = scalar_lea.vmem %s2, %s132
      %p134 = scmp.lt.s32.totalorder %s13, 1
      %s135 = scalar_select %p134, %s13, 1
      %s136 = smul.addr %s135, 64
      %s137 = smul.addr %s136, 4
      %s138 = scalar_lea.vmem %s1, %s137
      %p139 = scmp.lt.s32.totalorder %s13, 1
      %s140 = scalar_select %p139, %s13, 1
      %s141 = smul.addr %s140, 8
      %s142 = smul.addr %s141, 4
      %s143 = scalar_lea.vmem %s2, %s142
      %v144 = vld [vmem:[%s0] sm:$0xff]
      %v145 = vld [vmem:[%s0 + $0x8] sm:$0xff]
      %v146 = vld [vmem:[%s0 + $0x10] sm:$0xff]
      %v147 = vld [vmem:[%s0 + $0x18] sm:$0xff]
      %v148 = vld [vmem:[%s0 + $0x20] sm:$0xff]
      %v149 = vld [vmem:[%s0 + $0x28] sm:$0xff]
      %v150 = vld [vmem:[%s0 + $0x30] sm:$0xff]
      %v151 = vld [vmem:[%s0 + $0x38] sm:$0xff]
      %v152 = vld [vmem:[%s0 + $0x40] sm:$0xff]
      %v153 = vld [vmem:[%s0 + $0x48] sm:$0xff]
      %v154 = vld [vmem:[%s0 + $0x50] sm:$0xff]
      %v155 = vld [vmem:[%s0 + $0x58] sm:$0xff]
      %v156 = vld [vmem:[%s0 + $0x60] sm:$0xff]
      %v157 = vld [vmem:[%s0 + $0x68] sm:$0xff]
      %v158 = vld [vmem:[%s0 + $0x70] sm:$0xff]
      %v159 = vld [vmem:[%s0 + $0x78] sm:$0xff]
      %v160 = vld [vmem:[%s138] sm:$0xf]
      %v161 = vld [vmem:[%s138 + $0x4] sm:$0xf]
      %v162 = vld [vmem:[%s138 + $0x8] sm:$0xf]
      %v163 = vld [vmem:[%s138 + $0xc] sm:$0xf]
      %v164 = vld [vmem:[%s138 + $0x10] sm:$0xf]
      %v165 = vld [vmem:[%s138 + $0x14] sm:$0xf]
      %v166 = vld [vmem:[%s138 + $0x18] sm:$0xf]
      %v167 = vld [vmem:[%s138 + $0x1c] sm:$0xf]
      %v168 = vld [vmem:[%s138 + $0x20] sm:$0xf]
      %v169 = vld [vmem:[%s138 + $0x24] sm:$0xf]
      %v170 = vld [vmem:[%s138 + $0x28] sm:$0xf]
      %v171 = vld [vmem:[%s138 + $0x2c] sm:$0xf]
      %v172 = vld [vmem:[%s138 + $0x30] sm:$0xf]
      %v173 = vld [vmem:[%s138 + $0x34] sm:$0xf]
      %v174 = vld [vmem:[%s138 + $0x38] sm:$0xf]
      %v175 = vld [vmem:[%s138 + $0x3c] sm:$0xf]
      %v176 = vld [vmem:[%s138 + $0x40] sm:$0xf]
      %v177 = vld [vmem:[%s138 + $0x44] sm:$0xf]
      %v178 = vld [vmem:[%s138 + $0x48] sm:$0xf]
      %v179 = vld [vmem:[%s138 + $0x4c] sm:$0xf]
      %v180 = vld [vmem:[%s138 + $0x50] sm:$0xf]
      %v181 = vld [vmem:[%s138 + $0x54] sm:$0xf]
      %v182 = vld [vmem:[%s138 + $0x58] sm:$0xf]
      %v183 = vld [vmem:[%s138 + $0x5c] sm:$0xf]
      %v184 = vld [vmem:[%s138 + $0x60] sm:$0xf]
      %v185 = vld [vmem:[%s138 + $0x64] sm:$0xf]
      %v186 = vld [vmem:[%s138 + $0x68] sm:$0xf]
      %v187 = vld [vmem:[%s138 + $0x6c] sm:$0xf]
      %v188 = vld [vmem:[%s138 + $0x70] sm:$0xf]
      %v189 = vld [vmem:[%s138 + $0x74] sm:$0xf]
      %v190 = vld [vmem:[%s138 + $0x78] sm:$0xf]
      %v191 = vld [vmem:[%s138 + $0x7c] sm:$0xf]
      %v192 = vld [vmem:[%s138 + $0x80] sm:$0xf]
      %v193 = vld [vmem:[%s138 + $0x84] sm:$0xf]
      %v194 = vld [vmem:[%s138 + $0x88] sm:$0xf]
      %v195 = vld [vmem:[%s138 + $0x8c] sm:$0xf]
      %v196 = vld [vmem:[%s138 + $0x90] sm:$0xf]
      %v197 = vld [vmem:[%s138 + $0x94] sm:$0xf]
      %v198 = vld [vmem:[%s138 + $0x98] sm:$0xf]
      %v199 = vld [vmem:[%s138 + $0x9c] sm:$0xf]
      %v200 = vld [vmem:[%s138 + $0xa0] sm:$0xf]
      %v201 = vld [vmem:[%s138 + $0xa4] sm:$0xf]
      %v202 = vld [vmem:[%s138 + $0xa8] sm:$0xf]
      %v203 = vld [vmem:[%s138 + $0xac] sm:$0xf]
      %v204 = vld [vmem:[%s138 + $0xb0] sm:$0xf]
      %v205 = vld [vmem:[%s138 + $0xb4] sm:$0xf]
      %v206 = vld [vmem:[%s138 + $0xb8] sm:$0xf]
      %v207 = vld [vmem:[%s138 + $0xbc] sm:$0xf]
      %v208 = vld [vmem:[%s138 + $0xc0] sm:$0xf]
      %v209 = vld [vmem:[%s138 + $0xc4] sm:$0xf]
      %v210 = vld [vmem:[%s138 + $0xc8] sm:$0xf]
      %v211 = vld [vmem:[%s138 + $0xcc] sm:$0xf]
      %v212 = vld [vmem:[%s138 + $0xd0] sm:$0xf]
      %v213 = vld [vmem:[%s138 + $0xd4] sm:$0xf]
      %v214 = vld [vmem:[%s138 + $0xd8] sm:$0xf]
      %v215 = vld [vmem:[%s138 + $0xdc] sm:$0xf]
      %v216 = vld [vmem:[%s138 + $0xe0] sm:$0xf]
      %v217 = vld [vmem:[%s138 + $0xe4] sm:$0xf]
      %v218 = vld [vmem:[%s138 + $0xe8] sm:$0xf]
      %v219 = vld [vmem:[%s138 + $0xec] sm:$0xf]
      %v220 = vld [vmem:[%s138 + $0xf0] sm:$0xf]
      %v221 = vld [vmem:[%s138 + $0xf4] sm:$0xf]
      %v222 = vld [vmem:[%s138 + $0xf8] sm:$0xf]
      %v223 = vld [vmem:[%s138 + $0xfc] sm:$0xf]
      %v240 = vunpack.c.l.b16 %v144
      %v241 = vunpack.c.h.b16 %v144
      %v242 = vunpack.c.l.b16 %v145
      %v243 = vunpack.c.h.b16 %v145
      %v244 = vunpack.c.l.b16 %v146
      %v245 = vunpack.c.h.b16 %v146
      %v246 = vunpack.c.l.b16 %v147
      %v247 = vunpack.c.h.b16 %v147
      %v248 = vunpack.c.l.b16 %v148
      %v249 = vunpack.c.h.b16 %v148
      %v250 = vunpack.c.l.b16 %v149
      %v251 = vunpack.c.h.b16 %v149
      %v252 = vunpack.c.l.b16 %v150
      %v253 = vunpack.c.h.b16 %v150
      %v254 = vunpack.c.l.b16 %v151
      %v255 = vunpack.c.h.b16 %v151
      %v256 = vunpack.c.l.b16 %v152
      %v257 = vunpack.c.h.b16 %v152
      %v258 = vunpack.c.l.b16 %v153
      %v259 = vunpack.c.h.b16 %v153
      %v260 = vunpack.c.l.b16 %v154
      %v261 = vunpack.c.h.b16 %v154
      %v262 = vunpack.c.l.b16 %v155
      %v263 = vunpack.c.h.b16 %v155
      %v264 = vunpack.c.l.b16 %v156
      %v265 = vunpack.c.h.b16 %v156
      %v266 = vunpack.c.l.b16 %v157
      %v267 = vunpack.c.h.b16 %v157
      %v268 = vunpack.c.l.b16 %v158
      %v269 = vunpack.c.h.b16 %v158
      %v270 = vunpack.c.l.b16 %v159
      %v271 = vunpack.c.h.b16 %v159
      %v272 = vpack.c.b16 %v244, %v240
      %v273 = vpack.c.b16 %v245, %v241
      %v274 = vpack.c.b16 %v246, %v242
      %v275 = vpack.c.b16 %v247, %v243
      %v276 = vpack.c.b16 %v252, %v248
      %v277 = vpack.c.b16 %v253, %v249
      %v278 = vpack.c.b16 %v254, %v250
      %v279 = vpack.c.b16 %v255, %v251
      %v280 = vpack.c.b16 %v260, %v256
      %v281 = vpack.c.b16 %v261, %v257
      %v282 = vpack.c.b16 %v262, %v258
      %v283 = vpack.c.b16 %v263, %v259
      %v284 = vpack.c.b16 %v268, %v264
      %v285 = vpack.c.b16 %v269, %v265
      %v286 = vpack.c.b16 %v270, %v266
      %v287 = vpack.c.b16 %v271, %v267
      %v368 = vunpack.c.l.b16 %v160
      %v369 = vunpack.c.l.b16 %v161
      %v370 = vunpack.c.l.b16 %v162
      %v371 = vunpack.c.l.b16 %v163
      %v372 = vunpack.c.l.b16 %v164
      %v373 = vunpack.c.l.b16 %v165
      %v374 = vunpack.c.l.b16 %v166
      %v375 = vunpack.c.l.b16 %v167
      %v376 = vunpack.c.l.b16 %v168
      %v377 = vunpack.c.l.b16 %v169
      %v378 = vunpack.c.l.b16 %v170
      %v379 = vunpack.c.l.b16 %v171
      %v380 = vunpack.c.l.b16 %v172
      %v381 = vunpack.c.l.b16 %v173
      %v382 = vunpack.c.l.b16 %v174
      %v383 = vunpack.c.l.b16 %v175
      %v384 = vunpack.c.l.b16 %v176
      %v385 = vunpack.c.l.b16 %v177
      %v386 = vunpack.c.l.b16 %v178
      %v387 = vunpack.c.l.b16 %v179
      %v388 = vunpack.c.l.b16 %v180
      %v389 = vunpack.c.l.b16 %v181
      %v390 = vunpack.c.l.b16 %v182
      %v391 = vunpack.c.l.b16 %v183
      %v392 = vunpack.c.l.b16 %v184
      %v393 = vunpack.c.l.b16 %v185
      %v394 = vunpack.c.l.b16 %v186
      %v395 = vunpack.c.l.b16 %v187
      %v396 = vunpack.c.l.b16 %v188
      %v397 = vunpack.c.l.b16 %v189
      %v398 = vunpack.c.l.b16 %v190
      %v399 = vunpack.c.l.b16 %v191
      %v400 = vunpack.c.l.b16 %v192
      %v401 = vunpack.c.l.b16 %v193
      %v402 = vunpack.c.l.b16 %v194
      %v403 = vunpack.c.l.b16 %v195
      %v404 = vunpack.c.l.b16 %v196
      %v405 = vunpack.c.l.b16 %v197
      %v406 = vunpack.c.l.b16 %v198
      %v407 = vunpack.c.l.b16 %v199
      %v408 = vunpack.c.l.b16 %v200
      %v409 = vunpack.c.l.b16 %v201
      %v410 = vunpack.c.l.b16 %v202
      %v411 = vunpack.c.l.b16 %v203
      %v412 = vunpack.c.l.b16 %v204
      %v413 = vunpack.c.l.b16 %v205
      %v414 = vunpack.c.l.b16 %v206
      %v415 = vunpack.c.l.b16 %v207
      %v416 = vunpack.c.l.b16 %v208
      %v417 = vunpack.c.l.b16 %v209
      %v418 = vunpack.c.l.b16 %v210
      %v419 = vunpack.c.l.b16 %v211
      %v420 = vunpack.c.l.b16 %v212
      %v421 = vunpack.c.l.b16 %v213
      %v422 = vunpack.c.l.b16 %v214
      %v423 = vunpack.c.l.b16 %v215
      %v424 = vunpack.c.l.b16 %v216
      %v425 = vunpack.c.l.b16 %v217
      %v426 = vunpack.c.l.b16 %v218
      %v427 = vunpack.c.l.b16 %v219
      %v428 = vunpack.c.l.b16 %v220
      %v429 = vunpack.c.l.b16 %v221
      %v430 = vunpack.c.l.b16 %v222
      %v431 = vunpack.c.l.b16 %v223
      %v432 = vpack.c.b16 %v369, %v368
      %v433 = vpack.c.b16 %v371, %v370
      %v434 = vpack.c.b16 %v373, %v372
      %v435 = vpack.c.b16 %v375, %v374
      %v436 = vpack.c.b16 %v377, %v376
      %v437 = vpack.c.b16 %v379, %v378
      %v438 = vpack.c.b16 %v381, %v380
      %v439 = vpack.c.b16 %v383, %v382
      %v440 = vpack.c.b16 %v385, %v384
      %v441 = vpack.c.b16 %v387, %v386
      %v442 = vpack.c.b16 %v389, %v388
      %v443 = vpack.c.b16 %v391, %v390
      %v444 = vpack.c.b16 %v393, %v392
      %v445 = vpack.c.b16 %v395, %v394
      %v446 = vpack.c.b16 %v397, %v396
      %v447 = vpack.c.b16 %v399, %v398
      %v448 = vpack.c.b16 %v401, %v400
      %v449 = vpack.c.b16 %v403, %v402
      %v450 = vpack.c.b16 %v405, %v404
      %v451 = vpack.c.b16 %v407, %v406
      %v452 = vpack.c.b16 %v409, %v408
      %v453 = vpack.c.b16 %v411, %v410
      %v454 = vpack.c.b16 %v413, %v412
      %v455 = vpack.c.b16 %v415, %v414
      %v456 = vpack.c.b16 %v417, %v416
      %v457 = vpack.c.b16 %v419, %v418
      %v458 = vpack.c.b16 %v421, %v420
      %v459 = vpack.c.b16 %v423, %v422
      %v460 = vpack.c.b16 %v425, %v424
      %v461 = vpack.c.b16 %v427, %v426
      %v462 = vpack.c.b16 %v429, %v428
      %v463 = vpack.c.b16 %v431, %v430
      %496 = vmatpush.bf16.msra.mxu0 %v439
      %497 = vmatpush.bf16.msra.mxu0 %v438
      %498 = vmatpush.bf16.msra.mxu0 %v437
      %499 = vmatpush.bf16.msra.mxu0 %v436
      %500 = vmatpush.bf16.msra.mxu0 %v435
      %501 = vmatpush.bf16.msra.mxu0 %v434
      %502 = vmatpush.bf16.msra.mxu0 %v433
      %503 = vmatpush.bf16.msra.mxu0 %v432
      %504 = vmatmul.bf16.gmra.mxu0 %v272
      %v505 = vpop.f32.mrf.mxu0
      %v506 = vadd.f32 0.0, %v505
      %v507 = vpop.f32.mrf.mxu0
      %v508 = vadd.f32 0.0, %v507
      %509 = vmatmul.bf16.gmra.mxu0 %v276
      %v510 = vpop.f32.mrf.mxu0
      %v511 = vadd.f32 0.0, %v510
      %v512 = vpop.f32.mrf.mxu0
      %v513 = vadd.f32 0.0, %v512
      %514 = vmatmul.bf16.gmra.mxu0 %v280
      %v515 = vpop.f32.mrf.mxu0
      %v516 = vadd.f32 0.0, %v515
      %v517 = vpop.f32.mrf.mxu0
      %v518 = vadd.f32 0.0, %v517
      %519 = vmatmul.bf16.gmra.mxu0 %v284
      %v520 = vpop.f32.mrf.mxu0
      %v521 = vadd.f32 0.0, %v520
      %v522 = vpop.f32.mrf.mxu0
      %v523 = vadd.f32 0.0, %v522
      %524 = vdwg.mxu0
      %525 = vmatpush.bf16.msra.mxu0 %v447
      %526 = vmatpush.bf16.msra.mxu0 %v446
      %527 = vmatpush.bf16.msra.mxu0 %v445
      %528 = vmatpush.bf16.msra.mxu0 %v444
      %529 = vmatpush.bf16.msra.mxu0 %v443
      %530 = vmatpush.bf16.msra.mxu0 %v442
      %531 = vmatpush.bf16.msra.mxu0 %v441
      %532 = vmatpush.bf16.msra.mxu0 %v440
      %533 = vmatmul.bf16.gmra.mxu0 %v273
      %v534 = vpop.f32.mrf.mxu0
      %v535 = vadd.f32 %v506, %v534
      %v536 = vpop.f32.mrf.mxu0
      %v537 = vadd.f32 %v508, %v536
      %538 = vmatmul.bf16.gmra.mxu0 %v277
      %v539 = vpop.f32.mrf.mxu0
      %v540 = vadd.f32 %v511, %v539
      %v541 = vpop.f32.mrf.mxu0
      %v542 = vadd.f32 %v513, %v541
      %543 = vmatmul.bf16.gmra.mxu0 %v281
      %v544 = vpop.f32.mrf.mxu0
      %v545 = vadd.f32 %v516, %v544
      %v546 = vpop.f32.mrf.mxu0
      %v547 = vadd.f32 %v518, %v546
      %548 = vmatmul.bf16.gmra.mxu0 %v285
      %v549 = vpop.f32.mrf.mxu0
      %v550 = vadd.f32 %v521, %v549
      %v551 = vpop.f32.mrf.mxu0
      %v552 = vadd.f32 %v523, %v551
      %553 = vdwg.mxu0
      %554 = vmatpush.bf16.msra.mxu0 %v455
      %555 = vmatpush.bf16.msra.mxu0 %v454
      %556 = vmatpush.bf16.msra.mxu0 %v453
      %557 = vmatpush.bf16.msra.mxu0 %v452
      %558 = vmatpush.bf16.msra.mxu0 %v451
      %559 = vmatpush.bf16.msra.mxu0 %v450
      %560 = vmatpush.bf16.msra.mxu0 %v449
      %561 = vmatpush.bf16.msra.mxu0 %v448
      %562 = vmatmul.bf16.gmra.mxu0 %v274
      %v563 = vpop.f32.mrf.mxu0
      %v564 = vadd.f32 %v535, %v563
      %v565 = vpop.f32.mrf.mxu0
      %v566 = vadd.f32 %v537, %v565
      %567 = vmatmul.bf16.gmra.mxu0 %v278
      %v568 = vpop.f32.mrf.mxu0
      %v569 = vadd.f32 %v540, %v568
      %v570 = vpop.f32.mrf.mxu0
      %v571 = vadd.f32 %v542, %v570
      %572 = vmatmul.bf16.gmra.mxu0 %v282
      %v573 = vpop.f32.mrf.mxu0
      %v574 = vadd.f32 %v545, %v573
      %v575 = vpop.f32.mrf.mxu0
      %v576 = vadd.f32 %v547, %v575
      %577 = vmatmul.bf16.gmra.mxu0 %v286
      %v578 = vpop.f32.mrf.mxu0
      %v579 = vadd.f32 %v550, %v578
      %v580 = vpop.f32.mrf.mxu0
      %v581 = vadd.f32 %v552, %v580
      %582 = vdwg.mxu0
      %583 = vmatpush.bf16.msra.mxu0 %v463
      %584 = vmatpush.bf16.msra.mxu0 %v462
      %585 = vmatpush.bf16.msra.mxu0 %v461
      %586 = vmatpush.bf16.msra.mxu0 %v460
      %587 = vmatpush.bf16.msra.mxu0 %v459
      %588 = vmatpush.bf16.msra.mxu0 %v458
      %589 = vmatpush.bf16.msra.mxu0 %v457
      %590 = vmatpush.bf16.msra.mxu0 %v456
      %591 = vmatmul.bf16.gmra.mxu0 %v275
      %v592 = vpop.f32.mrf.mxu0
      %v593 = vadd.f32 %v564, %v592
      %v594 = vpop.f32.mrf.mxu0
      %v595 = vadd.f32 %v566, %v594
      %596 = vmatmul.bf16.gmra.mxu0 %v279
      %v597 = vpop.f32.mrf.mxu0
      %v598 = vadd.f32 %v569, %v597
      %v599 = vpop.f32.mrf.mxu0
      %v600 = vadd.f32 %v571, %v599
      %601 = vmatmul.bf16.gmra.mxu0 %v283
      %v602 = vpop.f32.mrf.mxu0
      %v603 = vadd.f32 %v574, %v602
      %v604 = vpop.f32.mrf.mxu0
      %v605 = vadd.f32 %v576, %v604
      %606 = vmatmul.bf16.gmra.mxu0 %v287
      %v607 = vpop.f32.mrf.mxu0
      %v608 = vadd.f32 %v579, %v607
      %v609 = vpop.f32.mrf.mxu0
      %v610 = vadd.f32 %v581, %v609
      %611 = vdwg.mxu0
      %vm612 = vcmask 523264
      %v613 = vsel %vm612, %v593, 0.0
      %614 = vadd.xlane.f32.xlu0 %v613
      %v615 = vpop.xlane.xlu0 %614
      %v616 = vsel %vm612, %v595, 0.0
      %617 = vadd.xlane.f32.xlu0 %v616
      %v618 = vpop.xlane.xlu0 %617
      %v619 = vsel %vm612, %v598, 0.0
      %620 = vadd.xlane.f32.xlu0 %v619
      %v621 = vpop.xlane.xlu0 %620
      %v622 = vsel %vm612, %v600, 0.0
      %623 = vadd.xlane.f32.xlu0 %v622
      %v624 = vpop.xlane.xlu0 %623
      %v625 = vsel %vm612, %v603, 0.0
      %626 = vadd.xlane.f32.xlu0 %v625
      %v627 = vpop.xlane.xlu0 %626
      %v628 = vsel %vm612, %v605, 0.0
      %629 = vadd.xlane.f32.xlu0 %v628
      %v630 = vpop.xlane.xlu0 %629
      %v631 = vsel %vm612, %v608, 0.0
      %632 = vadd.xlane.f32.xlu0 %v631
      %v633 = vpop.xlane.xlu0 %632
      %v634 = vsel %vm612, %v610, 0.0
      %635 = vadd.xlane.f32.xlu0 %v634
      %v636 = vpop.xlane.xlu0 %635
      %v637 = vmul.f32 %v615, 0.015625
      %v638 = vmul.f32 %v618, 0.015625
      %v639 = vmul.f32 %v621, 0.015625
      %v640 = vmul.f32 %v624, 0.015625
      %v641 = vmul.f32 %v627, 0.015625
      %v642 = vmul.f32 %v630, 0.015625
      %v643 = vmul.f32 %v633, 0.015625
      %v644 = vmul.f32 %v636, 0.015625
      %v645 = vsub.f32 %v593, %v637
      %v646 = vsub.f32 %v595, %v638
      %v647 = vsub.f32 %v598, %v639
      %v648 = vsub.f32 %v600, %v640
      %v649 = vsub.f32 %v603, %v641
      %v650 = vsub.f32 %v605, %v642
      %v651 = vsub.f32 %v608, %v643
      %v652 = vsub.f32 %v610, %v644
      %v653 = vmul.f32 %v645, %v645
      %v654 = vmul.f32 %v646, %v646
      %v655 = vmul.f32 %v647, %v647
      %v656 = vmul.f32 %v648, %v648
      %v657 = vmul.f32 %v649, %v649
      %v658 = vmul.f32 %v650, %v650
      %v659 = vmul.f32 %v651, %v651
      %v660 = vmul.f32 %v652, %v652
      %v661 = vsel %vm612, %v653, 0.0
      %662 = vadd.xlane.f32.xlu0 %v661
      %v663 = vpop.xlane.xlu0 %662
      %v664 = vsel %vm612, %v654, 0.0
      %665 = vadd.xlane.f32.xlu0 %v664
      %v666 = vpop.xlane.xlu0 %665
      %v667 = vsel %vm612, %v655, 0.0
      %668 = vadd.xlane.f32.xlu0 %v667
      %v669 = vpop.xlane.xlu0 %668
      %v670 = vsel %vm612, %v656, 0.0
      %671 = vadd.xlane.f32.xlu0 %v670
      %v672 = vpop.xlane.xlu0 %671
      %v673 = vsel %vm612, %v657, 0.0
      %674 = vadd.xlane.f32.xlu0 %v673
      %v675 = vpop.xlane.xlu0 %674
      %v676 = vsel %vm612, %v658, 0.0
      %677 = vadd.xlane.f32.xlu0 %v676
      %v678 = vpop.xlane.xlu0 %677
      %v679 = vsel %vm612, %v659, 0.0
      %680 = vadd.xlane.f32.xlu0 %v679
      %v681 = vpop.xlane.xlu0 %680
      %v682 = vsel %vm612, %v660, 0.0
      %683 = vadd.xlane.f32.xlu0 %v682
      %v684 = vpop.xlane.xlu0 %683
      %v685 = vmul.f32 %v663, 0.015625
      %v686 = vmul.f32 %v666, 0.015625
      %v687 = vmul.f32 %v669, 0.015625
      %v688 = vmul.f32 %v672, 0.015625
      %v689 = vmul.f32 %v675, 0.015625
      %v690 = vmul.f32 %v678, 0.015625
      %v691 = vmul.f32 %v681, 0.015625
      %v692 = vmul.f32 %v684, 0.015625
      %v693 = vadd.f32 %v685, 1e-05
      %v694 = vadd.f32 %v686, 1e-05
      %v695 = vadd.f32 %v687, 1e-05
      %v696 = vadd.f32 %v688, 1e-05
      %v697 = vadd.f32 %v689, 1e-05
      %v698 = vadd.f32 %v690, 1e-05
      %v699 = vadd.f32 %v691, 1e-05
      %v700 = vadd.f32 %v692, 1e-05
      %v701 = vrsqrt.pop %v693
      %v702 = vmul.f32 %v701, %v693
      %v703 = vmul.f32 %v702, %v701
      %v704 = vmul.f32 0.5, %v703
      %v705 = vsub.f32 1.5, %v704
      %v706 = vmul.f32 %v701, %v705
      %vm707 = vweird.f32 %v693
      %vm708 = vweird.f32 %v701
      %vm709 = vmor %vm707, %vm708
      %v710 = vsel %vm709, %v701, %v706
      %v711 = vrsqrt.pop %v694
      %v712 = vmul.f32 %v711, %v694
      %v713 = vmul.f32 %v712, %v711
      %v714 = vmul.f32 0.5, %v713
      %v715 = vsub.f32 1.5, %v714
      %v716 = vmul.f32 %v711, %v715
      %vm717 = vweird.f32 %v694
      %vm718 = vweird.f32 %v711
      %vm719 = vmor %vm717, %vm718
      %v720 = vsel %vm719, %v711, %v716
      %v721 = vrsqrt.pop %v695
      %v722 = vmul.f32 %v721, %v695
      %v723 = vmul.f32 %v722, %v721
      %v724 = vmul.f32 0.5, %v723
      %v725 = vsub.f32 1.5, %v724
      %v726 = vmul.f32 %v721, %v725
      %vm727 = vweird.f32 %v695
      %vm728 = vweird.f32 %v721
      %vm729 = vmor %vm727, %vm728
      %v730 = vsel %vm729, %v721, %v726
      %v731 = vrsqrt.pop %v696
      %v732 = vmul.f32 %v731, %v696
      %v733 = vmul.f32 %v732, %v731
      %v734 = vmul.f32 0.5, %v733
      %v735 = vsub.f32 1.5, %v734
      %v736 = vmul.f32 %v731, %v735
      %vm737 = vweird.f32 %v696
      %vm738 = vweird.f32 %v731
      %vm739 = vmor %vm737, %vm738
      %v740 = vsel %vm739, %v731, %v736
      %v741 = vrsqrt.pop %v697
      %v742 = vmul.f32 %v741, %v697
      %v743 = vmul.f32 %v742, %v741
      %v744 = vmul.f32 0.5, %v743
      %v745 = vsub.f32 1.5, %v744
      %v746 = vmul.f32 %v741, %v745
      %vm747 = vweird.f32 %v697
      %vm748 = vweird.f32 %v741
      %vm749 = vmor %vm747, %vm748
      %v750 = vsel %vm749, %v741, %v746
      %v751 = vrsqrt.pop %v698
      %v752 = vmul.f32 %v751, %v698
      %v753 = vmul.f32 %v752, %v751
      %v754 = vmul.f32 0.5, %v753
      %v755 = vsub.f32 1.5, %v754
      %v756 = vmul.f32 %v751, %v755
      %vm757 = vweird.f32 %v698
      %vm758 = vweird.f32 %v751
      %vm759 = vmor %vm757, %vm758
      %v760 = vsel %vm759, %v751, %v756
      %v761 = vrsqrt.pop %v699
      %v762 = vmul.f32 %v761, %v699
      %v763 = vmul.f32 %v762, %v761
      %v764 = vmul.f32 0.5, %v763
      %v765 = vsub.f32 1.5, %v764
      %v766 = vmul.f32 %v761, %v765
      %vm767 = vweird.f32 %v699
      %vm768 = vweird.f32 %v761
      %vm769 = vmor %vm767, %vm768
      %v770 = vsel %vm769, %v761, %v766
      %v771 = vrsqrt.pop %v700
      %v772 = vmul.f32 %v771, %v700
      %v773 = vmul.f32 %v772, %v771
      %v774 = vmul.f32 0.5, %v773
      %v775 = vsub.f32 1.5, %v774
      %v776 = vmul.f32 %v771, %v775
      %vm777 = vweird.f32 %v700
      %vm778 = vweird.f32 %v771
      %vm779 = vmor %vm777, %vm778
      %v780 = vsel %vm779, %v771, %v776
      %v781 = vmul.f32 %v645, %v710
      %v782 = vmul.f32 %v646, %v720
      %v783 = vmul.f32 %v647, %v730
      %v784 = vmul.f32 %v648, %v740
      %v785 = vmul.f32 %v649, %v750
      %v786 = vmul.f32 %v650, %v760
      %v787 = vmul.f32 %v651, %v770
      %v788 = vmul.f32 %v652, %v780
      %vm789 = vcmp.ge.f32.partialorder %v781, 0.0
      %vm790 = vcmp.ge.f32.partialorder %v782, 0.0
      %vm791 = vcmp.ge.f32.partialorder %v783, 0.0
      %vm792 = vcmp.ge.f32.partialorder %v784, 0.0
      %vm793 = vcmp.ge.f32.partialorder %v785, 0.0
      %vm794 = vcmp.ge.f32.partialorder %v786, 0.0
      %vm795 = vcmp.ge.f32.partialorder %v787, 0.0
      %vm796 = vcmp.ge.f32.partialorder %v788, 0.0
      %v797 = vmul.f32 %v781, 0.2
      %v798 = vmul.f32 %v782, 0.2
      %v799 = vmul.f32 %v783, 0.2
      %v800 = vmul.f32 %v784, 0.2
      %v801 = vmul.f32 %v785, 0.2
      %v802 = vmul.f32 %v786, 0.2
      %v803 = vmul.f32 %v787, 0.2
      %v804 = vmul.f32 %v788, 0.2
      %v805 = vsel %vm789, %v781, %v797
      %v806 = vsel %vm790, %v782, %v798
      %v807 = vsel %vm791, %v783, %v799
      %v808 = vsel %vm792, %v784, %v800
      %v809 = vsel %vm793, %v785, %v801
      %v810 = vsel %vm794, %v786, %v802
      %v811 = vsel %vm795, %v787, %v803
      %v812 = vsel %vm796, %v788, %v804
      %v813 = vpack.c.bf16 %v805, %v805
      %v814 = vpack.c.bf16 %v806, %v806
      %v815 = vpack.c.bf16 %v807, %v807
      %v816 = vpack.c.bf16 %v808, %v808
      %v817 = vpack.c.bf16 %v809, %v809
      %v818 = vpack.c.bf16 %v810, %v810
      %v819 = vpack.c.bf16 %v811, %v811
      %v820 = vpack.c.bf16 %v812, %v812
      %vm821 = vcmask 519168
      %822 = vst.msk [vmem:[%s143] sm:$0xf] %vm821, %v813
      %823 = vst.msk [vmem:[%s143 + $0x4] sm:$0xf] %vm821, %v814
      %824 = vst.msk [vmem:[%s143 + $0x8] sm:$0xf] %vm821, %v815
      %825 = vst.msk [vmem:[%s143 + $0xc] sm:$0xf] %vm821, %v816
      %826 = vst.msk [vmem:[%s143 + $0x10] sm:$0xf] %vm821, %v817
      %827 = vst.msk [vmem:[%s143 + $0x14] sm:$0xf] %vm821, %v818
      %828 = vst.msk [vmem:[%s143 + $0x18] sm:$0xf] %vm821, %v819
      %829 = vst.msk [vmem:[%s143 + $0x1c] sm:$0xf] %vm821, %v820
      %p830 = scmp.lt.s32.totalorder %s13, 1
      %s831 = scalar_select %p830, %s13, 1
      %s832 = smul.addr %s831, 8
      %s833 = smul.addr %s832, 4
      %s834 = scalar_lea.vmem %s2, %s833
      // Predicated region
      $region29: #{discriminator_forward.10} parent=27 // pred_check
        %p835 = pneg %p78
      $region30: #{discriminator_forward.10} parent=27 // pred_check_branch
        %837 = sbr.rel (%p835) target = $region32
      $region31: #{discriminator_forward.10} parent=27 // pred_region
        _
      $region32: #{discriminator_forward.10} parent=27 // pred_fallthru
        _
    $region28: #{discriminator_forward.10} parent=5 // pred_fallthru
      _
    %p838 = scmp.le.s32.totalorder 2, %s8
    // Predicated region
    $region33: #{discriminator_forward.10} parent=5 // pred_check
      %p839 = pneg %p838
    $region34: #{discriminator_forward.10} parent=5 // pred_check_branch
      %841 = sbr.rel (%p839) target = $region36
    $region35: #{discriminator_forward.10} parent=5 // pred_region
      %s842 = ssub.s32 %s8, 2
      // Predicated region
      $region37: #{discriminator_forward.10} parent=35 // pred_check
        %p843 = pneg %p84
      $region38: #{discriminator_forward.10} parent=35 // pred_check_branch
        %845 = sbr.rel (%p843) target = $region40
      $region39: #{discriminator_forward.10} parent=35 // pred_region
        %p846 = scmp.lt.s32.totalorder %s14, 1
        %s847 = scalar_select %p846, %s14, 1
        %s848 = smul.addr %s847, 8
        %s849 = smul.addr %s848, 4
        %s850 = scalar_lea.vmem %s2, %s849
      $region40: #{discriminator_forward.10} parent=35 // pred_fallthru
        _
    $region36: #{discriminator_forward.10} parent=5 // pred_fallthru
      _
  $region6: #{discriminator_forward.10} parent=0 // loop_footer
    %s12 = sadd.s32 1, %s8
  $region7: #{discriminator_forward.10} parent=0 // loop_footer_branch
    %7 = sbr.rel target = $region3
  $region8: #{discriminator_forward.10} parent=0 // loop_exit
    _

// kernel: discriminator_forward.11
$region0: #{discriminator_forward.11}
  #allocation0 [shape = 'u32[]', space=smem, size = 0x4, offset = 0x4, fixed_abs, tag = 'smem constant byte address 0x4 - core index']
  #allocation1 [shape = 'u32[72,128]{1,0:T(1,128)}', space=vmem, size = 0x9000, scoped, tag = 'internal scratch']
  %s0 = inlined_call_operand.vmem [shape: bf16[128,1024], index: 0, kind: input, shape index: {}]
  %s1 = inlined_call_operand.vmem [shape: f32[128,16], index: 1, kind: input, shape index: {}]
  %s2 = inlined_call_operand.vmem [shape: bf16[2,1024,16], index: 2, kind: input, shape index: {}]
  %s3 = inlined_call_operand.vmem [shape: f32[2,1,1], index: 3, kind: output, shape index: {}]
  %s4 = sld [smem:[#allocation0]]
  $region45: #{discriminator_forward.11} parent=0
    _
  %s6 = ssub.s32 1, %s4
  %s7 = scalar_select 0, %s6, %s4
  loop: start=0, step=1, limit=4
  $region2: #{discriminator_forward.11} parent=0 // loop_pre_header
    _
  $region3: #{discriminator_forward.11} parent=0 // loop_header
    %s9 = sphi 0, %s13
    %p10 = scmp.ge.s32.totalorder %s9, 4
    %s17 = sphi 0, %s17
    %s19 = sphi 0, %s17
    %s20 = sphi 0, %s19
    %s34 = sphi 0, %s20
    %s38 = sphi 0, %s38
    %s40 = sphi 0, %s38
    %s41 = sphi 0, %s40
    %s55 = sphi 0, %s41
    %s61 = sphi 0, %s63
    %s64 = sphi 0, %s61
    %s65 = sphi 0, %s64
    %s81 = sphi 0, %s65
    %s87 = sphi 0, %s89
    %s90 = sphi 0, %s87
    %s91 = sphi 0, %s90
    %s107 = sphi 0, %s91
  $region4: #{discriminator_forward.11} parent=0 // loop_header_branch
    %12 = sbr.rel (%p10) target = $region8
  $region5: #{discriminator_forward.11} parent=0 // loop_body
    %s14 = ssub.s32 %s9, 1
    %s15 = ssub.s32 %s9, 2
    %s16 = sadd.s32 %s9, 1
    %s18 = sadd.s32 %s17, 1
    %p21 = scmp.eq.s32.totalorder %s9, 1
    %p22 = scmp.ne.s32.totalorder %s17, %s19
    %p23 = scmp.eq.s32.totalorder %s9, 0
    %p24 = por %p22, %p23
    %p25 = scmp.ne.s32.totalorder %s17, %s19
    %p26 = scmp.eq.s32.totalorder %s14, 1
    %p27 = por %p25, %p26
    %p28 = scmp.ne.s32.totalorder %s19, %s20
    %p29 = scmp.eq.s32.totalorder %s14, 0
    %p30 = por %p28, %p29
    %p31 = scmp.ne.s32.totalorder %s19, %s20
    %p32 = scmp.eq.s32.totalorder %s15, 1
    %p33 = por %p31, %p32
    %p35 = scmp.ne.s32.totalorder %s20, %s34
    %p36 = scmp.eq.s32.totalorder %s15, 0
    %p37 = por %p35, %p36
    %s39 = sadd.s32 %s38, 1
    %p42 = scmp.eq.s32.totalorder %s9, 1
    %p43 = scmp.ne.s32.totalorder %s38, %s40
    %p44 = scmp.eq.s32.totalorder %s9, 0
    %p45 = por %p43, %p44
    %p46 = scmp.ne.s32.totalorder %s38, %s40
    %p47 = scmp.eq.s32.totalorder %s14, 1
    %p48 = por %p46, %p47
    %p49 = scmp.ne.s32.totalorder %s40, %s41
    %p50 = scmp.eq.s32.totalorder %s14, 0
    %p51 = por %p49, %p50
    %p52 = scmp.ne.s32.totalorder %s40, %s41
    %p53 = scmp.eq.s32.totalorder %s15, 1
    %p54 = por %p52, %p53
    %p56 = scmp.ne.s32.totalorder %s41, %s55
    %p57 = scmp.eq.s32.totalorder %s15, 0
    %p58 = por %p56, %p57
    %s59 = ssub.s32 %s9, %s16
    %p60 = scmp.eq.s32.totalorder %s59, 0
    %s62 = sadd.s32 %s61, 1
    %s63 = scalar_select %p60, %s61, %s62
    %p66 = pneg %p60
    %p67 = scmp.eq.s32.totalorder %s9, 1
    %p68 = por %p66, %p67
    %p69 = scmp.ne.s32.totalorder %s61, %s64
    %p70 = scmp.eq.s32.totalorder %s9, 0
    %p71 = por %p69, %p70
    %p72 = scmp.ne.s32.totalorder %s61, %s64
    %p73 = scmp.eq.s32.totalorder %s14, 1
    %p74 = por %p72, %p73
    %p75 = scmp.ne.s32.totalorder %s64, %s65
    %p76 = scmp.eq.s32.totalorder %s14, 0
    %p77 = por %p75, %p76
    %p78 = scmp.ne.s32.totalorder %s64, %s65
    %p79 = scmp.eq.s32.totalorder %s15, 1
    %p80 = por %p78, %p79
    %p82 = scmp.ne.s32.totalorder %s65, %s81
    %p83 = scmp.eq.s32.totalorder %s15, 0
    %p84 = por %p82, %p83
    %s85 = ssub.s32 %s9, %s16
    %p86 = scmp.eq.s32.totalorder %s85, 0
    %s88 = sadd.s32 %s87, 1
    %s89 = scalar_select %p86, %s87, %s88
    %p92 = pneg %p86
    %p93 = scmp.eq.s32.totalorder %s9, 1
    %p94 = por %p92, %p93
    %p95 = scmp.ne.s32.totalorder %s87, %s90
    %p96 = scmp.eq.s32.totalorder %s9, 0
    %p97 = por %p95, %p96
    %p98 = scmp.ne.s32.totalorder %s87, %s90
    %p99 = scmp.eq.s32.totalorder %s14, 1
    %p100 = por %p98, %p99
    %p101 = scmp.ne.s32.totalorder %s90, %s91
    %p102 = scmp.eq.s32.totalorder %s14, 0
    %p103 = por %p101, %p102
    %p104 = scmp.ne.s32.totalorder %s90, %s91
    %p105 = scmp.eq.s32.totalorder %s15, 1
    %p106 = por %p104, %p105
    %p108 = scmp.ne.s32.totalorder %s91, %s107
    %p109 = scmp.eq.s32.totalorder %s15, 0
    %p110 = por %p108, %p109
    %p111 = scmp.le.s32.totalorder 1, %s9
    %p112 = scmp.lt.s32.totalorder %s9, 3
    %p113 = pnand %p111, %p112
    %p114 = pneg %p113
    // Predicated region
    $region9: #{discriminator_forward.11} parent=5 // pred_check
      _
    $region10: #{discriminator_forward.11} parent=5 // pred_check_branch
      %116 = sbr.rel (%p113) target = $region12
    $region11: #{discriminator_forward.11} parent=5 // pred_region
      %s117 = ssub.s32 %s9, 1
      // Predicated region
      $region13: #{discriminator_forward.11} parent=11 // pred_check
        %p118 = pneg %p30
      $region14: #{discriminator_forward.11} parent=11 // pred_check_branch
        %120 = sbr.rel (%p118) target = $region16
      $region15: #{discriminator_forward.11} parent=11 // pred_region
        _
      $region16: #{discriminator_forward.11} parent=11 // pred_fallthru
        _
      // Predicated region
      $region17: #{discriminator_forward.11} parent=11 // pred_check
        %p121 = pneg %p51
      $region18: #{discriminator_forward.11} parent=11 // pred_check_branch
        %123 = sbr.rel (%p121) target = $region20
      $region19: #{discriminator_forward.11} parent=11 // pred_region
        _
      $region20: #{discriminator_forward.11} parent=11 // pred_fallthru
        _
    $region12: #{discriminator_forward.11} parent=5 // pred_fallthru
      _
    %p124 = scmp.lt.s32.totalorder %s9, 2
    // Predicated region
    $region21: #{discriminator_forward.11} parent=5 // pred_check
      %p125 = pneg %p124
    $region22: #{discriminator_forward.11} parent=5 // pred_check_branch
      %127 = sbr.rel (%p125) target = $region24
    $region23: #{discriminator_forward.11} parent=5 // pred_region
      // Predicated region
      $region25: #{discriminator_forward.11} parent=23 // pred_check
        %p128 = pneg %p71
      $region26: #{discriminator_forward.11} parent=23 // pred_check_branch
        %130 = sbr.rel (%p128) target = $region28
      $region27: #{discriminator_forward.11} parent=23 // pred_region
        %p131 = scmp.lt.s32.totalorder %s9, 1
        %s132 = scalar_select %p131, %s9, 1
        %s133 = smul.addr %s132, 128
        %s134 = smul.addr %s133, 4
        %s135 = scalar_lea.vmem %s2, %s134
      $region28: #{discriminator_forward.11} parent=23 // pred_fallthru
        _
    $region24: #{discriminator_forward.11} parent=5 // pred_fallthru
      _
    %p136 = scmp.le.s32.totalorder 1, %s9
    %p137 = scmp.lt.s32.totalorder %s9, 3
    %p138 = pnand %p136, %p137
    %p139 = pneg %p138
    // Predicated region
    $region29: #{discriminator_forward.11} parent=5 // pred_check
      _
    $region30: #{discriminator_forward.11} parent=5 // pred_check_branch
      %141 = sbr.rel (%p138) target = $region32
    $region31: #{discriminator_forward.11} parent=5 // pred_region
      %s142 = ssub.s32 %s9, 1
      %p143 = pneg %p30
      %p144 = pneg %p27
      %p145 = pneg %p51
      %p146 = pneg %p48
      %p147 = scmp.lt.s32.totalorder %s14, 1
      %s148 = scalar_select %p147, %s14, 1
      %s149 = smul.addr %s148, 128
      %s150 = smul.addr %s149, 4
      %s151 = scalar_lea.vmem %s2, %s150
      %p152 = pneg %p77
      %p153 = pneg %p74
      %p154 = pneg %p103
      %p155 = pneg %p100
      %p156 = scmp.lt.s32.totalorder %s14, 1
      %s157 = scalar_select %p156, %s14, 1
      %s158 = scalar_lea.vmem %s3, %s157
      %p159 = scmp.lt.s32.totalorder %s14, 1
      %s160 = scalar_select %p159, %s14, 1
      %s161 = smul.addr %s160, 128
      %s162 = smul.addr %s161, 4
      %s163 = scalar_lea.vmem %s2, %s162
      %p164 = scmp.lt.s32.totalorder %s14, 1
      %s165 = scalar_select %p164, %s14, 1
      %s166 = scalar_lea.vmem %s3, %s165
      %v167 = vld [vmem:[%s0] sm:$0xff]
      %v168 = vld [vmem:[%s0 + $0x8] sm:$0xff]
      %v169 = vld [vmem:[%s0 + $0x10] sm:$0xff]
      %v170 = vld [vmem:[%s0 + $0x18] sm:$0xff]
      %v171 = vld [vmem:[%s0 + $0x20] sm:$0xff]
      %v172 = vld [vmem:[%s0 + $0x28] sm:$0xff]
      %v173 = vld [vmem:[%s0 + $0x30] sm:$0xff]
      %v174 = vld [vmem:[%s0 + $0x38] sm:$0xff]
      %v175 = vld [vmem:[%s0 + $0x40] sm:$0xff]
      %v176 = vld [vmem:[%s0 + $0x48] sm:$0xff]
      %v177 = vld [vmem:[%s0 + $0x50] sm:$0xff]
      %v178 = vld [vmem:[%s0 + $0x58] sm:$0xff]
      %v179 = vld [vmem:[%s0 + $0x60] sm:$0xff]
      %v180 = vld [vmem:[%s0 + $0x68] sm:$0xff]
      %v181 = vld [vmem:[%s0 + $0x70] sm:$0xff]
      %v182 = vld [vmem:[%s0 + $0x78] sm:$0xff]
      %v183 = vld [vmem:[%s0 + $0x80] sm:$0xff]
      %v184 = vld [vmem:[%s0 + $0x88] sm:$0xff]
      %v185 = vld [vmem:[%s0 + $0x90] sm:$0xff]
      %v186 = vld [vmem:[%s0 + $0x98] sm:$0xff]
      %v187 = vld [vmem:[%s0 + $0xa0] sm:$0xff]
      %v188 = vld [vmem:[%s0 + $0xa8] sm:$0xff]
      %v189 = vld [vmem:[%s0 + $0xb0] sm:$0xff]
      %v190 = vld [vmem:[%s0 + $0xb8] sm:$0xff]
      %v191 = vld [vmem:[%s0 + $0xc0] sm:$0xff]
      %v192 = vld [vmem:[%s0 + $0xc8] sm:$0xff]
      %v193 = vld [vmem:[%s0 + $0xd0] sm:$0xff]
      %v194 = vld [vmem:[%s0 + $0xd8] sm:$0xff]
      %v195 = vld [vmem:[%s0 + $0xe0] sm:$0xff]
      %v196 = vld [vmem:[%s0 + $0xe8] sm:$0xff]
      %v197 = vld [vmem:[%s0 + $0xf0] sm:$0xff]
      %v198 = vld [vmem:[%s0 + $0xf8] sm:$0xff]
      %v199 = vld [vmem:[%s0 + $0x100] sm:$0xff]
      %v200 = vld [vmem:[%s0 + $0x108] sm:$0xff]
      %v201 = vld [vmem:[%s0 + $0x110] sm:$0xff]
      %v202 = vld [vmem:[%s0 + $0x118] sm:$0xff]
      %v203 = vld [vmem:[%s0 + $0x120] sm:$0xff]
      %v204 = vld [vmem:[%s0 + $0x128] sm:$0xff]
      %v205 = vld [vmem:[%s0 + $0x130] sm:$0xff]
      %v206 = vld [vmem:[%s0 + $0x138] sm:$0xff]
      %v207 = vld [vmem:[%s0 + $0x140] sm:$0xff]
      %v208 = vld [vmem:[%s0 + $0x148] sm:$0xff]
      %v209 = vld [vmem:[%s0 + $0x150] sm:$0xff]
      %v210 = vld [vmem:[%s0 + $0x158] sm:$0xff]
      %v211 = vld [vmem:[%s0 + $0x160] sm:$0xff]
      %v212 = vld [vmem:[%s0 + $0x168] sm:$0xff]
      %v213 = vld [vmem:[%s0 + $0x170] sm:$0xff]
      %v214 = vld [vmem:[%s0 + $0x178] sm:$0xff]
      %v215 = vld [vmem:[%s0 + $0x180] sm:$0xff]
      %v216 = vld [vmem:[%s0 + $0x188] sm:$0xff]
      %v217 = vld [vmem:[%s0 + $0x190] sm:$0xff]
      %v218 = vld [vmem:[%s0 + $0x198] sm:$0xff]
      %v219 = vld [vmem:[%s0 + $0x1a0] sm:$0xff]
      %v220 = vld [vmem:[%s0 + $0x1a8] sm:$0xff]
      %v221 = vld [vmem:[%s0 + $0x1b0] sm:$0xff]
      %v222 = vld [vmem:[%s0 + $0x1b8] sm:$0xff]
      %v223 = vld [vmem:[%s0 + $0x1c0] sm:$0xff]
      %v224 = vld [vmem:[%s0 + $0x1c8] sm:$0xff]
      %v225 = vld [vmem:[%s0 + $0x1d0] sm:$0xff]
      %v226 = vld [vmem:[%s0 + $0x1d8] sm:$0xff]
      %v227 = vld [vmem:[%s0 + $0x1e0] sm:$0xff]
      %v228 = vld [vmem:[%s0 + $0x1e8] sm:$0xff]
      %v229 = vld [vmem:[%s0 + $0x1f0] sm:$0xff]
      %v230 = vld [vmem:[%s0 + $0x1f8] sm:$0xff]
      %v231 = vld [vmem:[%s163] sm:$0xf]
      %v232 = vld [vmem:[%s163 + $0x4] sm:$0xf]
      %v233 = vld [vmem:[%s163 + $0x8] sm:$0xf]
      %v234 = vld [vmem:[%s163 + $0xc] sm:$0xf]
      %v235 = vld [vmem:[%s163 + $0x10] sm:$0xf]
      %v236 = vld [vmem:[%s163 + $0x14] sm:$0xf]
      %v237 = vld [vmem:[%s163 + $0x18] sm:$0xf]
      %v238 = vld [vmem:[%s163 + $0x1c] sm:$0xf]
      %v239 = vld [vmem:[%s163 + $0x20] sm:$0xf]
      %v240 = vld [vmem:[%s163 + $0x24] sm:$0xf]
      %v241 = vld [vmem:[%s163 + $0x28] sm:$0xf]
      %v242 = vld [vmem:[%s163 + $0x2c] sm:$0xf]
      %v243 = vld [vmem:[%s163 + $0x30] sm:$0xf]
      %v244 = vld [vmem:[%s163 + $0x34] sm:$0xf]
      %v245 = vld [vmem:[%s163 + $0x38] sm:$0xf]
      %v246 = vld [vmem:[%s163 + $0x3c] sm:$0xf]
      %v247 = vld [vmem:[%s163 + $0x40] sm:$0xf]
      %v248 = vld [vmem:[%s163 + $0x44] sm:$0xf]
      %v249 = vld [vmem:[%s163 + $0x48] sm:$0xf]
      %v250 = vld [vmem:[%s163 + $0x4c] sm:$0xf]
      %v251 = vld [vmem:[%s163 + $0x50] sm:$0xf]
      %v252 = vld [vmem:[%s163 + $0x54] sm:$0xf]
      %v253 = vld [vmem:[%s163 + $0x58] sm:$0xf]
      %v254 = vld [vmem:[%s163 + $0x5c] sm:$0xf]
      %v255 = vld [vmem:[%s163 + $0x60] sm:$0xf]
      %v256 = vld [vmem:[%s163 + $0x64] sm:$0xf]
      %v257 = vld [vmem:[%s163 + $0x68] sm:$0xf]
      %v258 = vld [vmem:[%s163 + $0x6c] sm:$0xf]
      %v259 = vld [vmem:[%s163 + $0x70] sm:$0xf]
      %v260 = vld [vmem:[%s163 + $0x74] sm:$0xf]
      %v261 = vld [vmem:[%s163 + $0x78] sm:$0xf]
      %v262 = vld [vmem:[%s163 + $0x7c] sm:$0xf]
      %v263 = vld [vmem:[%s163 + $0x80] sm:$0xf]
      %v264 = vld [vmem:[%s163 + $0x84] sm:$0xf]
      %v265 = vld [vmem:[%s163 + $0x88] sm:$0xf]
      %v266 = vld [vmem:[%s163 + $0x8c] sm:$0xf]
      %v267 = vld [vmem:[%s163 + $0x90] sm:$0xf]
      %v268 = vld [vmem:[%s163 + $0x94] sm:$0xf]
      %v269 = vld [vmem:[%s163 + $0x98] sm:$0xf]
      %v270 = vld [vmem:[%s163 + $0x9c] sm:$0xf]
      %v271 = vld [vmem:[%s163 + $0xa0] sm:$0xf]
      %v272 = vld [vmem:[%s163 + $0xa4] sm:$0xf]
      %v273 = vld [vmem:[%s163 + $0xa8] sm:$0xf]
      %v274 = vld [vmem:[%s163 + $0xac] sm:$0xf]
      %v275 = vld [vmem:[%s163 + $0xb0] sm:$0xf]
      %v276 = vld [vmem:[%s163 + $0xb4] sm:$0xf]
      %v277 = vld [vmem:[%s163 + $0xb8] sm:$0xf]
      %v278 = vld [vmem:[%s163 + $0xbc] sm:$0xf]
      %v279 = vld [vmem:[%s163 + $0xc0] sm:$0xf]
      %v280 = vld [vmem:[%s163 + $0xc4] sm:$0xf]
      %v281 = vld [vmem:[%s163 + $0xc8] sm:$0xf]
      %v282 = vld [vmem:[%s163 + $0xcc] sm:$0xf]
      %v283 = vld [vmem:[%s163 + $0xd0] sm:$0xf]
      %v284 = vld [vmem:[%s163 + $0xd4] sm:$0xf]
      %v285 = vld [vmem:[%s163 + $0xd8] sm:$0xf]
      %v286 = vld [vmem:[%s163 + $0xdc] sm:$0xf]
      %v287 = vld [vmem:[%s163 + $0xe0] sm:$0xf]
      %v288 = vld [vmem:[%s163 + $0xe4] sm:$0xf]
      %v289 = vld [vmem:[%s163 + $0xe8] sm:$0xf]
      %v290 = vld [vmem:[%s163 + $0xec] sm:$0xf]
      %v291 = vld [vmem:[%s163 + $0xf0] sm:$0xf]
      %v292 = vld [vmem:[%s163 + $0xf4] sm:$0xf]
      %v293 = vld [vmem:[%s163 + $0xf8] sm:$0xf]
      %v294 = vld [vmem:[%s163 + $0xfc] sm:$0xf]
      %v295 = vld [vmem:[%s163 + $0x100] sm:$0xf]
      %v296 = vld [vmem:[%s163 + $0x104] sm:$0xf]
      %v297 = vld [vmem:[%s163 + $0x108] sm:$0xf]
      %v298 = vld [vmem:[%s163 + $0x10c] sm:$0xf]
      %v299 = vld [vmem:[%s163 + $0x110] sm:$0xf]
      %v300 = vld [vmem:[%s163 + $0x114] sm:$0xf]
      %v301 = vld [vmem:[%s163 + $0x118] sm:$0xf]
      %v302 = vld [vmem:[%s163 + $0x11c] sm:$0xf]
      %v303 = vld [vmem:[%s163 + $0x120] sm:$0xf]
      %v304 = vld [vmem:[%s163 + $0x124] sm:$0xf]
      %v305 = vld [vmem:[%s163 + $0x128] sm:$0xf]
      %v306 = vld [vmem:[%s163 + $0x12c] sm:$0xf]
      %v307 = vld [vmem:[%s163 + $0x130] sm:$0xf]
      %v308 = vld [vmem:[%s163 + $0x134] sm:$0xf]
      %v309 = vld [vmem:[%s163 + $0x138] sm:$0xf]
      %v310 = vld [vmem:[%s163 + $0x13c] sm:$0xf]
      %v311 = vld [vmem:[%s163 + $0x140] sm:$0xf]
      %v312 = vld [vmem:[%s163 + $0x144] sm:$0xf]
      %v313 = vld [vmem:[%s163 + $0x148] sm:$0xf]
      %v314 = vld [vmem:[%s163 + $0x14c] sm:$0xf]
      %v315 = vld [vmem:[%s163 + $0x150] sm:$0xf]
      %v316 = vld [vmem:[%s163 + $0x154] sm:$0xf]
      %v317 = vld [vmem:[%s163 + $0x158] sm:$0xf]
      %v318 = vld [vmem:[%s163 + $0x15c] sm:$0xf]
      %v319 = vld [vmem:[%s163 + $0x160] sm:$0xf]
      %v320 = vld [vmem:[%s163 + $0x164] sm:$0xf]
      %v321 = vld [vmem:[%s163 + $0x168] sm:$0xf]
      %v322 = vld [vmem:[%s163 + $0x16c] sm:$0xf]
      %v323 = vld [vmem:[%s163 + $0x170] sm:$0xf]
      %v324 = vld [vmem:[%s163 + $0x174] sm:$0xf]
      %v325 = vld [vmem:[%s163 + $0x178] sm:$0xf]
      %v326 = vld [vmem:[%s163 + $0x17c] sm:$0xf]
      %v327 = vld [vmem:[%s163 + $0x180] sm:$0xf]
      %v328 = vld [vmem:[%s163 + $0x184] sm:$0xf]
      %v329 = vld [vmem:[%s163 + $0x188] sm:$0xf]
      %v330 = vld [vmem:[%s163 + $0x18c] sm:$0xf]
      %v331 = vld [vmem:[%s163 + $0x190] sm:$0xf]
      %v332 = vld [vmem:[%s163 + $0x194] sm:$0xf]
      %v333 = vld [vmem:[%s163 + $0x198] sm:$0xf]
      %v334 = vld [vmem:[%s163 + $0x19c] sm:$0xf]
      %v335 = vld [vmem:[%s163 + $0x1a0] sm:$0xf]
      %v336 = vld [vmem:[%s163 + $0x1a4] sm:$0xf]
      %v337 = vld [vmem:[%s163 + $0x1a8] sm:$0xf]
      %v338 = vld [vmem:[%s163 + $0x1ac] sm:$0xf]
      %v339 = vld [vmem:[%s163 + $0x1b0] sm:$0xf]
      %v340 = vld [vmem:[%s163 + $0x1b4] sm:$0xf]
      %v341 = vld [vmem:[%s163 + $0x1b8] sm:$0xf]
      %v342 = vld [vmem:[%s163 + $0x1bc] sm:$0xf]
      %v343 = vld [vmem:[%s163 + $0x1c0] sm:$0xf]
      %v344 = vld [vmem:[%s163 + $0x1c4] sm:$0xf]
      %v345 = vld [vmem:[%s163 + $0x1c8] sm:$0xf]
      %v346 = vld [vmem:[%s163 + $0x1cc] sm:$0xf]
      %v347 = vld [vmem:[%s163 + $0x1d0] sm:$0xf]
      %v348 = vld [vmem:[%s163 + $0x1d4] sm:$0xf]
      %v349 = vld [vmem:[%s163 + $0x1d8] sm:$0xf]
      %v350 = vld [vmem:[%s163 + $0x1dc] sm:$0xf]
      %v351 = vld [vmem:[%s163 + $0x1e0] sm:$0xf]
      %v352 = vld [vmem:[%s163 + $0x1e4] sm:$0xf]
      %v353 = vld [vmem:[%s163 + $0x1e8] sm:$0xf]
      %v354 = vld [vmem:[%s163 + $0x1ec] sm:$0xf]
      %v355 = vld [vmem:[%s163 + $0x1f0] sm:$0xf]
      %v356 = vld [vmem:[%s163 + $0x1f4] sm:$0xf]
      %v357 = vld [vmem:[%s163 + $0x1f8] sm:$0xf]
      %v358 = vld [vmem:[%s163 + $0x1fc] sm:$0xf]
      %v423 = vunpack.c.l.b16 %v167
      %v424 = vunpack.c.h.b16 %v167
      %v425 = vunpack.c.l.b16 %v168
      %v426 = vunpack.c.h.b16 %v168
      %v427 = vunpack.c.l.b16 %v169
      %v428 = vunpack.c.h.b16 %v169
      %v429 = vunpack.c.l.b16 %v170
      %v430 = vunpack.c.h.b16 %v170
      %v431 = vunpack.c.l.b16 %v171
      %v432 = vunpack.c.h.b16 %v171
      %v433 = vunpack.c.l.b16 %v172
      %v434 = vunpack.c.h.b16 %v172
      %v435 = vunpack.c.l.b16 %v173
      %v436 = vunpack.c.h.b16 %v173
      %v437 = vunpack.c.l.b16 %v174
      %v438 = vunpack.c.h.b16 %v174
      %v439 = vunpack.c.l.b16 %v175
      %v440 = vunpack.c.h.b16 %v175
      %v441 = vunpack.c.l.b16 %v176
      %v442 = vunpack.c.h.b16 %v176
      %v443 = vunpack.c.l.b16 %v177
      %v444 = vunpack.c.h.b16 %v177
      %v445 = vunpack.c.l.b16 %v178
      %v446 = vunpack.c.h.b16 %v178
      %v447 = vunpack.c.l.b16 %v179
      %v448 = vunpack.c.h.b16 %v179
      %v449 = vunpack.c.l.b16 %v180
      %v450 = vunpack.c.h.b16 %v180
      %v451 = vunpack.c.l.b16 %v181
      %v452 = vunpack.c.h.b16 %v181
      %v453 = vunpack.c.l.b16 %v182
      %v454 = vunpack.c.h.b16 %v182
      %v455 = vunpack.c.l.b16 %v183
      %v456 = vunpack.c.h.b16 %v183
      %v457 = vunpack.c.l.b16 %v184
      %v458 = vunpack.c.h.b16 %v184
      %v459 = vunpack.c.l.b16 %v185
      %v460 = vunpack.c.h.b16 %v185
      %v461 = vunpack.c.l.b16 %v186
      %v462 = vunpack.c.h.b16 %v186
      %v463 = vunpack.c.l.b16 %v187
      %v464 = vunpack.c.h.b16 %v187
      %v465 = vunpack.c.l.b16 %v188
      %v466 = vunpack.c.h.b16 %v188
      %v467 = vunpack.c.l.b16 %v189
      %v468 = vunpack.c.h.b16 %v189
      %v469 = vunpack.c.l.b16 %v190
      %v470 = vunpack.c.h.b16 %v190
      %v471 = vunpack.c.l.b16 %v191
      %v472 = vunpack.c.h.b16 %v191
      %v473 = vunpack.c.l.b16 %v192
      %v474 = vunpack.c.h.b16 %v192
      %v475 = vunpack.c.l.b16 %v193
      %v476 = vunpack.c.h.b16 %v193
      %v477 = vunpack.c.l.b16 %v194
      %v478 = vunpack.c.h.b16 %v194
      %v479 = vunpack.c.l.b16 %v195
      %v480 = vunpack.c.h.b16 %v195
      %v481 = vunpack.c.l.b16 %v196
      %v482 = vunpack.c.h.b16 %v196
      %v483 = vunpack.c.l.b16 %v197
      %v484 = vunpack.c.h.b16 %v197
      %v485 = vunpack.c.l.b16 %v198
      %v486 = vunpack.c.h.b16 %v198
      %v487 = vunpack.c.l.b16 %v199
      %v488 = vunpack.c.h.b16 %v199
      %v489 = vunpack.c.l.b16 %v200
      %v490 = vunpack.c.h.b16 %v200
      %v491 = vunpack.c.l.b16 %v201
      %v492 = vunpack.c.h.b16 %v201
      %v493 = vunpack.c.l.b16 %v202
      %v494 = vunpack.c.h.b16 %v202
      %v495 = vunpack.c.l.b16 %v203
      %v496 = vunpack.c.h.b16 %v203
      %v497 = vunpack.c.l.b16 %v204
      %v498 = vunpack.c.h.b16 %v204
      %v499 = vunpack.c.l.b16 %v205
      %v500 = vunpack.c.h.b16 %v205
      %v501 = vunpack.c.l.b16 %v206
      %v502 = vunpack.c.h.b16 %v206
      %v503 = vunpack.c.l.b16 %v207
      %v504 = vunpack.c.h.b16 %v207
      %v505 = vunpack.c.l.b16 %v208
      %v506 = vunpack.c.h.b16 %v208
      %v507 = vunpack.c.l.b16 %v209
      %v508 = vunpack.c.h.b16 %v209
      %v509 = vunpack.c.l.b16 %v210
      %v510 = vunpack.c.h.b16 %v210
      %v511 = vunpack.c.l.b16 %v211
      %v512 = vunpack.c.h.b16 %v211
      %v513 = vunpack.c.l.b16 %v212
      %v514 = vunpack.c.h.b16 %v212
      %v515 = vunpack.c.l.b16 %v213
      %v516 = vunpack.c.h.b16 %v213
      %v517 = vunpack.c.l.b16 %v214
      %v518 = vunpack.c.h.b16 %v214
      %v519 = vunpack.c.l.b16 %v215
      %v520 = vunpack.c.h.b16 %v215
      %v521 = vunpack.c.l.b16 %v216
      %v522 = vunpack.c.h.b16 %v216
      %v523 = vunpack.c.l.b16 %v217
      %v524 = vunpack.c.h.b16 %v217
      %v525 = vunpack.c.l.b16 %v218
      %v526 = vunpack.c.h.b16 %v218
      %v527 = vunpack.c.l.b16 %v219
      %v528 = vunpack.c.h.b16 %v219
      %v529 = vunpack.c.l.b16 %v220
      %v530 = vunpack.c.h.b16 %v220
      %v531 = vunpack.c.l.b16 %v221
      %v532 = vunpack.c.h.b16 %v221
      %v533 = vunpack.c.l.b16 %v222
      %v534 = vunpack.c.h.b16 %v222
      %v535 = vunpack.c.l.b16 %v223
      %v536 = vunpack.c.h.b16 %v223
      %v537 = vunpack.c.l.b16 %v224
      %v538 = vunpack.c.h.b16 %v224
      %v539 = vunpack.c.l.b16 %v225
      %v540 = vunpack.c.h.b16 %v225
      %v541 = vunpack.c.l.b16 %v226
      %v542 = vunpack.c.h.b16 %v226
      %v543 = vunpack.c.l.b16 %v227
      %v544 = vunpack.c.h.b16 %v227
      %v545 = vunpack.c.l.b16 %v228
      %v546 = vunpack.c.h.b16 %v228
      %v547 = vunpack.c.l.b16 %v229
      %v548 = vunpack.c.h.b16 %v229
      %v549 = vunpack.c.l.b16 %v230
      %v550 = vunpack.c.h.b16 %v230
      %v551 = vpack.c.b16 %v431, %v423
      %v552 = vpack.c.b16 %v432, %v424
      %v553 = vpack.c.b16 %v433, %v425
      %v554 = vpack.c.b16 %v434, %v426
      %v555 = vpack.c.b16 %v435, %v427
      %v556 = vpack.c.b16 %v436, %v428
      %v557 = vpack.c.b16 %v437, %v429
      %v558 = vpack.c.b16 %v438, %v430
      %v559 = vpack.c.b16 %v447, %v439
      %v560 = vpack.c.b16 %v448, %v440
      %v561 = vpack.c.b16 %v449, %v441
      %v562 = vpack.c.b16 %v450, %v442
      %v563 = vpack.c.b16 %v451, %v443
      %v564 = vpack.c.b16 %v452, %v444
      %v565 = vpack.c.b16 %v453, %v445
      %v566 = vpack.c.b16 %v454, %v446
      %v567 = vpack.c.b16 %v463, %v455
      %v568 = vpack.c.b16 %v464, %v456
      %v569 = vpack.c.b16 %v465, %v457
      %v570 = vpack.c.b16 %v466, %v458
      %v571 = vpack.c.b16 %v467, %v459
      %v572 = vpack.c.b16 %v468, %v460
      %v573 = vpack.c.b16 %v469, %v461
      %v574 = vpack.c.b16 %v470, %v462
      %v575 = vpack.c.b16 %v479, %v471
      %v576 = vpack.c.b16 %v480, %v472
      %v577 = vpack.c.b16 %v481, %v473
      %v578 = vpack.c.b16 %v482, %v474
      %v579 = vpack.c.b16 %v483, %v475
      %v580 = vpack.c.b16 %v484, %v476
      %v581 = vpack.c.b16 %v485, %v477
      %v582 = vpack.c.b16 %v486, %v478
      %v583 = vpack.c.b16 %v495, %v487
      %v584 = vpack.c.b16 %v496, %v488
      %v585 = vpack.c.b16 %v497, %v489
      %v586 = vpack.c.b16 %v498, %v490
      %v587 = vpack.c.b16 %v499, %v491
      %v588 = vpack.c.b16 %v500, %v492
      %v589 = vpack.c.b16 %v501, %v493
      %v590 = vpack.c.b16 %v502, %v494
      %v591 = vpack.c.b16 %v511, %v503
      %v592 = vpack.c.b16 %v512, %v504
      %v593 = vpack.c.b16 %v513, %v505
      %v594 = vpack.c.b16 %v514, %v506
      %v595 = vpack.c.b16 %v515, %v507
      %v596 = vpack.c.b16 %v516, %v508
      %v597 = vpack.c.b16 %v517, %v509
      %v598 = vpack.c.b16 %v518, %v510
      %v599 = vpack.c.b16 %v527, %v519
      %v600 = vpack.c.b16 %v528, %v520
      %v601 = vpack.c.b16 %v529, %v521
      %v602 = vpack.c.b16 %v530, %v522
      %v603 = vpack.c.b16 %v531, %v523
      %v604 = vpack.c.b16 %v532, %v524
      %v605 = vpack.c.b16 %v533, %v525
      %v606 = vpack.c.b16 %v534, %v526
      %v607 = vpack.c.b16 %v543, %v535
      %v608 = vpack.c.b16 %v544, %v536
      %v609 = vpack.c.b16 %v545, %v537
      %v610 = vpack.c.b16 %v546, %v538
      %v611 = vpack.c.b16 %v547, %v539
      %v612 = vpack.c.b16 %v548, %v540
      %v613 = vpack.c.b16 %v549, %v541
      %v614 = vpack.c.b16 %v550, %v542
      %v807 = vunpack.c.l.b16 %v231
      %v808 = vunpack.c.l.b16 %v232
      %v809 = vunpack.c.l.b16 %v233
      %v810 = vunpack.c.l.b16 %v234
      %v811 = vunpack.c.l.b16 %v235
      %v812 = vunpack.c.l.b16 %v236
      %v813 = vunpack.c.l.b16 %v237
      %v814 = vunpack.c.l.b16 %v238
      %v815 = vunpack.c.l.b16 %v239
      %v816 = vunpack.c.l.b16 %v240
      %v817 = vunpack.c.l.b16 %v241
      %v818 = vunpack.c.l.b16 %v242
      %v819 = vunpack.c.l.b16 %v243
      %v820 = vunpack.c.l.b16 %v244
      %v821 = vunpack.c.l.b16 %v245
      %v822 = vunpack.c.l.b16 %v246
      %v823 = vunpack.c.l.b16 %v247
      %v824 = vunpack.c.l.b16 %v248
      %v825 = vunpack.c.l.b16 %v249
      %v826 = vunpack.c.l.b16 %v250
      %v827 = vunpack.c.l.b16 %v251
      %v828 = vunpack.c.l.b16 %v252
      %v829 = vunpack.c.l.b16 %v253
      %v830 = vunpack.c.l.b16 %v254
      %v831 = vunpack.c.l.b16 %v255
      %v832 = vunpack.c.l.b16 %v256
      %v833 = vunpack.c.l.b16 %v257
      %v834 = vunpack.c.l.b16 %v258
      %v835 = vunpack.c.l.b16 %v259
      %v836 = vunpack.c.l.b16 %v260
      %v837 = vunpack.c.l.b16 %v261
      %v838 = vunpack.c.l.b16 %v262
      %v839 = vunpack.c.l.b16 %v263
      %v840 = vunpack.c.l.b16 %v264
      %v841 = vunpack.c.l.b16 %v265
      %v842 = vunpack.c.l.b16 %v266
      %v843 = vunpack.c.l.b16 %v267
      %v844 = vunpack.c.l.b16 %v268
      %v845 = vunpack.c.l.b16 %v269
      %v846 = vunpack.c.l.b16 %v270
      %v847 = vunpack.c.l.b16 %v271
      %v848 = vunpack.c.l.b16 %v272
      %v849 = vunpack.c.l.b16 %v273
      %v850 = vunpack.c.l.b16 %v274
      %v851 = vunpack.c.l.b16 %v275
      %v852 = vunpack.c.l.b16 %v276
      %v853 = vunpack.c.l.b16 %v277
      %v854 = vunpack.c.l.b16 %v278
      %v855 = vunpack.c.l.b16 %v279
      %v856 = vunpack.c.l.b16 %v280
      %v857 = vunpack.c.l.b16 %v281
      %v858 = vunpack.c.l.b16 %v282
      %v859 = vunpack.c.l.b16 %v283
      %v860 = vunpack.c.l.b16 %v284
      %v861 = vunpack.c.l.b16 %v285
      %v862 = vunpack.c.l.b16 %v286
      %v863 = vunpack.c.l.b16 %v287
      %v864 = vunpack.c.l.b16 %v288
      %v865 = vunpack.c.l.b16 %v289
      %v866 = vunpack.c.l.b16 %v290
      %v867 = vunpack.c.l.b16 %v291
      %v868 = vunpack.c.l.b16 %v292
      %v869 = vunpack.c.l.b16 %v293
      %v870 = vunpack.c.l.b16 %v294
      %v871 = vunpack.c.l.b16 %v295
      %v872 = vunpack.c.l.b16 %v296
      %v873 = vunpack.c.l.b16 %v297
      %v874 = vunpack.c.l.b16 %v298
      %v875 = vunpack.c.l.b16 %v299
      %v876 = vunpack.c.l.b16 %v300
      %v877 = vunpack.c.l.b16 %v301
      %v878 = vunpack.c.l.b16 %v302
      %v879 = vunpack.c.l.b16 %v303
      %v880 = vunpack.c.l.b16 %v304
      %v881 = vunpack.c.l.b16 %v305
      %v882 = vunpack.c.l.b16 %v306
      %v883 = vunpack.c.l.b16 %v307
      %v884 = vunpack.c.l.b16 %v308
      %v885 = vunpack.c.l.b16 %v309
      %v886 = vunpack.c.l.b16 %v310
      %v887 = vunpack.c.l.b16 %v311
      %v888 = vunpack.c.l.b16 %v312
      %v889 = vunpack.c.l.b16 %v313
      %v890 = vunpack.c.l.b16 %v314
      %v891 = vunpack.c.l.b16 %v315
      %v892 = vunpack.c.l.b16 %v316
      %v893 = vunpack.c.l.b16 %v317
      %v894 = vunpack.c.l.b16 %v318
      %v895 = vunpack.c.l.b16 %v319
      %v896 = vunpack.c.l.b16 %v320
      %v897 = vunpack.c.l.b16 %v321
      %v898 = vunpack.c.l.b16 %v322
      %v899 = vunpack.c.l.b16 %v323
      %v900 = vunpack.c.l.b16 %v324
      %v901 = vunpack.c.l.b16 %v325
      %v902 = vunpack.c.l.b16 %v326
      %v903 = vunpack.c.l.b16 %v327
      %v904 = vunpack.c.l.b16 %v328
      %v905 = vunpack.c.l.b16 %v329
      %v906 = vunpack.c.l.b16 %v330
      %v907 = vunpack.c.l.b16 %v331
      %v908 = vunpack.c.l.b16 %v332
      %v909 = vunpack.c.l.b16 %v333
      %v910 = vunpack.c.l.b16 %v334
      %v911 = vunpack.c.l.b16 %v335
      %v912 = vunpack.c.l.b16 %v336
      %v913 = vunpack.c.l.b16 %v337
      %v914 = vunpack.c.l.b16 %v338
      %v915 = vunpack.c.l.b16 %v339
      %v916 = vunpack.c.l.b16 %v340
      %v917 = vunpack.c.l.b16 %v341
      %v918 = vunpack.c.l.b16 %v342
      %v919 = vunpack.c.l.b16 %v343
      %v920 = vunpack.c.l.b16 %v344
      %v921 = vunpack.c.l.b16 %v345
      %v922 = vunpack.c.l.b16 %v346
      %v923 = vunpack.c.l.b16 %v347
      %v924 = vunpack.c.l.b16 %v348
      %v925 = vunpack.c.l.b16 %v349
      %v926 = vunpack.c.l.b16 %v350
      %v927 = vunpack.c.l.b16 %v351
      %v928 = vunpack.c.l.b16 %v352
      %v929 = vunpack.c.l.b16 %v353
      %v930 = vunpack.c.l.b16 %v354
      %v931 = vunpack.c.l.b16 %v355
      %v932 = vunpack.c.l.b16 %v356
      %v933 = vunpack.c.l.b16 %v357
      %v934 = vunpack.c.l.b16 %v358
      %v935 = vpack.c.b16 %v808, %v807
      %v936 = vpack.c.b16 %v810, %v809
      %v937 = vpack.c.b16 %v812, %v811
      %v938 = vpack.c.b16 %v814, %v813
      %v939 = vpack.c.b16 %v816, %v815
      %v940 = vpack.c.b16 %v818, %v817
      %v941 = vpack.c.b16 %v820, %v819
      %v942 = vpack.c.b16 %v822, %v821
      %v943 = vpack.c.b16 %v824, %v823
      %v944 = vpack.c.b16 %v826, %v825
      %v945 = vpack.c.b16 %v828, %v827
      %v946 = vpack.c.b16 %v830, %v829
      %v947 = vpack.c.b16 %v832, %v831
      %v948 = vpack.c.b16 %v834, %v833
      %v949 = vpack.c.b16 %v836, %v835
      %v950 = vpack.c.b16 %v838, %v837
      %v951 = vpack.c.b16 %v840, %v839
      %v952 = vpack.c.b16 %v842, %v841
      %v953 = vpack.c.b16 %v844, %v843
      %v954 = vpack.c.b16 %v846, %v845
      %v955 = vpack.c.b16 %v848, %v847
      %v956 = vpack.c.b16 %v850, %v849
      %v957 = vpack.c.b16 %v852, %v851
      %v958 = vpack.c.b16 %v854, %v853
      %v959 = vpack.c.b16 %v856, %v855
      %v960 = vpack.c.b16 %v858, %v857
      %v961 = vpack.c.b16 %v860, %v859
      %v962 = vpack.c.b16 %v862, %v861
      %v963 = vpack.c.b16 %v864, %v863
      %v964 = vpack.c.b16 %v866, %v865
      %v965 = vpack.c.b16 %v868, %v867
      %v966 = vpack.c.b16 %v870, %v869
      %v967 = vpack.c.b16 %v872, %v871
      %v968 = vpack.c.b16 %v874, %v873
      %v969 = vpack.c.b16 %v876, %v875
      %v970 = vpack.c.b16 %v878, %v877
      %v971 = vpack.c.b16 %v880, %v879
      %v972 = vpack.c.b16 %v882, %v881
      %v973 = vpack.c.b16 %v884, %v883
      %v974 = vpack.c.b16 %v886, %v885
      %v975 = vpack.c.b16 %v888, %v887
      %v976 = vpack.c.b16 %v890, %v889
      %v977 = vpack.c.b16 %v892, %v891
      %v978 = vpack.c.b16 %v894, %v893
      %v979 = vpack.c.b16 %v896, %v895
      %v980 = vpack.c.b16 %v898, %v897
      %v981 = vpack.c.b16 %v900, %v899
      %v982 = vpack.c.b16 %v902, %v901
      %v983 = vpack.c.b16 %v904, %v903
      %v984 = vpack.c.b16 %v906, %v905
      %v985 = vpack.c.b16 %v908, %v907
      %v986 = vpack.c.b16 %v910, %v909
      %v987 = vpack.c.b16 %v912, %v911
      %v988 = vpack.c.b16 %v914, %v913
      %v989 = vpack.c.b16 %v916, %v915
      %v990 = vpack.c.b16 %v918, %v917
      %v991 = vpack.c.b16 %v920, %v919
      %v992 = vpack.c.b16 %v922, %v921
      %v993 = vpack.c.b16 %v924, %v923
      %v994 = vpack.c.b16 %v926, %v925
      %v995 = vpack.c.b16 %v928, %v927
      %v996 = vpack.c.b16 %v930, %v929
      %v997 = vpack.c.b16 %v932, %v931
      %v998 = vpack.c.b16 %v934, %v933
      %1063 = vmatpush.bf16.msra.mxu0 %v942
      %1064 = vmatpush.bf16.msra.mxu0 %v941
      %1065 = vmatpush.bf16.msra.mxu0 %v940
      %1066 = vmatpush.bf16.msra.mxu0 %v939
      %1067 = vmatpush.bf16.msra.mxu0 %v938
      %1068 = vmatpush.bf16.msra.mxu0 %v937
      %1069 = vmatpush.bf16.msra.mxu0 %v936
      %1070 = vmatpush.bf16.msra.mxu0 %v935
      %1071 = vmatmul.bf16.gmra.mxu0 %v551
      %v1072 = vpop.f32.mrf.mxu0
      %v1073 = vadd.f32 0.0, %v1072
      %v1074 = vpop.f32.mrf.mxu0
      %v1075 = vadd.f32 0.0, %v1074
      %1076 = vmatmul.bf16.gmra.mxu0 %v559
      %v1077 = vpop.f32.mrf.mxu0
      %v1078 = vadd.f32 0.0, %v1077
      %v1079 = vpop.f32.mrf.mxu0
      %v1080 = vadd.f32 0.0, %v1079
      %1081 = vmatmul.bf16.gmra.mxu0 %v567
      %v1082 = vpop.f32.mrf.mxu0
      %v1083 = vadd.f32 0.0, %v1082
      %v1084 = vpop.f32.mrf.mxu0
      %v1085 = vadd.f32 0.0, %v1084
      %1086 = vmatmul.bf16.gmra.mxu0 %v575
      %v1087 = vpop.f32.mrf.mxu0
      %v1088 = vadd.f32 0.0, %v1087
      %v1089 = vpop.f32.mrf.mxu0
      %v1090 = vadd.f32 0.0, %v1089
      %1091 = vmatmul.bf16.gmra.mxu0 %v583
      %v1092 = vpop.f32.mrf.mxu0
      %v1093 = vadd.f32 0.0, %v1092
      %v1094 = vpop.f32.mrf.mxu0
      %v1095 = vadd.f32 0.0, %v1094
      %1096 = vmatmul.bf16.gmra.mxu0 %v591
      %v1097 = vpop.f32.mrf.mxu0
      %v1098 = vadd.f32 0.0, %v1097
      %v1099 = vpop.f32.mrf.mxu0
      %v1100 = vadd.f32 0.0, %v1099
      %1101 = vmatmul.bf16.gmra.mxu0 %v599
      %v1102 = vpop.f32.mrf.mxu0
      %v1103 = vadd.f32 0.0, %v1102
      %v1104 = vpop.f32.mrf.mxu0
      %v1105 = vadd.f32 0.0, %v1104
      %1106 = vmatmul.bf16.gmra.mxu0 %v607
      %v1107 = vpop.f32.mrf.mxu0
      %v1108 = vadd.f32 0.0, %v1107
      %v1109 = vpop.f32.mrf.mxu0
      %v1110 = vadd.f32 0.0, %v1109
      %1111 = vdwg.mxu0
      %1112 = vmatpush.bf16.msra.mxu0 %v950
      %1113 = vmatpush.bf16.msra.mxu0 %v949
      %1114 = vmatpush.bf16.msra.mxu0 %v948
      %1115 = vmatpush.bf16.msra.mxu0 %v947
      %1116 = vmatpush.bf16.msra.mxu0 %v946
      %1117 = vmatpush.bf16.msra.mxu0 %v945
      %1118 = vmatpush.bf16.msra.mxu0 %v944
      %1119 = vmatpush.bf16.msra.mxu0 %v943
      %1120 = vmatmul.bf16.gmra.mxu0 %v552
      %v1121 = vpop.f32.mrf.mxu0
      %v1122 = vadd.f32 %v1073, %v1121
      %v1123 = vpop.f32.mrf.mxu0
      %v1124 = vadd.f32 %v1075, %v1123
      %1125 = vmatmul.bf16.gmra.mxu0 %v560
      %v1126 = vpop.f32.mrf.mxu0
      %v1127 = vadd.f32 %v1078, %v1126
      %v1128 = vpop.f32.mrf.mxu0
      %v1129 = vadd.f32 %v1080, %v1128
      %1130 = vmatmul.bf16.gmra.mxu0 %v568
      %v1131 = vpop.f32.mrf.mxu0
      %v1132 = vadd.f32 %v1083, %v1131
      %v1133 = vpop.f32.mrf.mxu0
      %v1134 = vadd.f32 %v1085, %v1133
      %1135 = vmatmul.bf16.gmra.mxu0 %v576
      %v1136 = vpop.f32.mrf.mxu0
      %v1137 = vadd.f32 %v1088, %v1136
      %v1138 = vpop.f32.mrf.mxu0
      %v1139 = vadd.f32 %v1090, %v1138
      %1140 = vmatmul.bf16.gmra.mxu0 %v584
      %v1141 = vpop.f32.mrf.mxu0
      %v1142 = vadd.f32 %v1093, %v1141
      %v1143 = vpop.f32.mrf.mxu0
      %v1144 = vadd.f32 %v1095, %v1143
      %1145 = vmatmul.bf16.gmra.mxu0 %v592
      %v1146 = vpop.f32.mrf.mxu0
      %v1147 = vadd.f32 %v1098, %v1146
      %v1148 = vpop.f32.mrf.mxu0
      %v1149 = vadd.f32 %v1100, %v1148
      %1150 = vmatmul.bf16.gmra.mxu0 %v600
      %v1151 = vpop.f32.mrf.mxu0
      %v1152 = vadd.f32 %v1103, %v1151
      %v1153 = vpop.f32.mrf.mxu0
      %v1154 = vadd.f32 %v1105, %v1153
      %1155 = vmatmul.bf16.gmra.mxu0 %v608
      %v1156 = vpop.f32.mrf.mxu0
      %v1157 = vadd.f32 %v1108, %v1156
      %v1158 = vpop.f32.mrf.mxu0
      %v1159 = vadd.f32 %v1110, %v1158
      %1160 = vdwg.mxu0
      %1161 = vmatpush.bf16.msra.mxu0 %v958
      %1162 = vmatpush.bf16.msra.mxu0 %v957
      %1163 = vmatpush.bf16.msra.mxu0 %v956
      %1164 = vmatpush.bf16.msra.mxu0 %v955
      %1165 = vmatpush.bf16.msra.mxu0 %v954
      %1166 = vmatpush.bf16.msra.mxu0 %v953
      %1167 = vmatpush.bf16.msra.mxu0 %v952
      %1168 = vmatpush.bf16.msra.mxu0 %v951
      %1169 = vmatmul.bf16.gmra.mxu0 %v553
      %v1170 = vpop.f32.mrf.mxu0
      %v1171 = vadd.f32 %v1122, %v1170
      %v1172 = vpop.f32.mrf.mxu0
      %v1173 = vadd.f32 %v1124, %v1172
      %1174 = vmatmul.bf16.gmra.mxu0 %v561
      %v1175 = vpop.f32.mrf.mxu0
      %v1176 = vadd.f32 %v1127, %v1175
      %v1177 = vpop.f32.mrf.mxu0
      %v1178 = vadd.f32 %v1129, %v1177
      %1179 = vmatmul.bf16.gmra.mxu0 %v569
      %v1180 = vpop.f32.mrf.mxu0
      %v1181 = vadd.f32 %v1132, %v1180
      %v1182 = vpop.f32.mrf.mxu0
      %v1183 = vadd.f32 %v1134, %v1182
      %1184 = vmatmul.bf16.gmra.mxu0 %v577
      %v1185 = vpop.f32.mrf.mxu0
      %v1186 = vadd.f32 %v1137, %v1185
      %v1187 = vpop.f32.mrf.mxu0
      %v1188 = vadd.f32 %v1139, %v1187
      %1189 = vmatmul.bf16.gmra.mxu0 %v585
      %v1190 = vpop.f32.mrf.mxu0
      %v1191 = vadd.f32 %v1142, %v1190
      %v1192 = vpop.f32.mrf.mxu0
      %v1193 = vadd.f32 %v1144, %v1192
      %1194 = vmatmul.bf16.gmra.mxu0 %v593
      %v1195 = vpop.f32.mrf.mxu0
      %v1196 = vadd.f32 %v1147, %v1195
      %v1197 = vpop.f32.mrf.mxu0
      %v1198 = vadd.f32 %v1149, %v1197
      %1199 = vmatmul.bf16.gmra.mxu0 %v601
      %v1200 = vpop.f32.mrf.mxu0
      %v1201 = vadd.f32 %v1152, %v1200
      %v1202 = vpop.f32.mrf.mxu0
      %v1203 = vadd.f32 %v1154, %v1202
      %1204 = vmatmul.bf16.gmra.mxu0 %v609
      %v1205 = vpop.f32.mrf.mxu0
      %v1206 = vadd.f32 %v1157, %v1205
      %v1207 = vpop.f32.mrf.mxu0
      %v1208 = vadd.f32 %v1159, %v1207
      %1209 = vdwg.mxu0
      %1210 = vmatpush.bf16.msra.mxu0 %v966
      %1211 = vmatpush.bf16.msra.mxu0 %v965
      %1212 = vmatpush.bf16.msra.mxu0 %v964
      %1213 = vmatpush.bf16.msra.mxu0 %v963
      %1214 = vmatpush.bf16.msra.mxu0 %v962
      %1215 = vmatpush.bf16.msra.mxu0 %v961
      %1216 = vmatpush.bf16.msra.mxu0 %v960
      %1217 = vmatpush.bf16.msra.mxu0 %v959
      %1218 = vmatmul.bf16.gmra.mxu0 %v554
      %v1219 = vpop.f32.mrf.mxu0
      %v1220 = vadd.f32 %v1171, %v1219
      %v1221 = vpop.f32.mrf.mxu0
      %v1222 = vadd.f32 %v1173, %v1221
      %1223 = vmatmul.bf16.gmra.mxu0 %v562
      %v1224 = vpop.f32.mrf.mxu0
      %v1225 = vadd.f32 %v1176, %v1224
      %v1226 = vpop.f32.mrf.mxu0
      %v1227 = vadd.f32 %v1178, %v1226
      %1228 = vmatmul.bf16.gmra.mxu0 %v570
      %v1229 = vpop.f32.mrf.mxu0
      %v1230 = vadd.f32 %v1181, %v1229
      %v1231 = vpop.f32.mrf.mxu0
      %v1232 = vadd.f32 %v1183, %v1231
      %1233 = vmatmul.bf16.gmra.mxu0 %v578
      %v1234 = vpop.f32.mrf.mxu0
      %v1235 = vadd.f32 %v1186, %v1234
      %v1236 = vpop.f32.mrf.mxu0
      %v1237 = vadd.f32 %v1188, %v1236
      %1238 = vmatmul.bf16.gmra.mxu0 %v586
      %v1239 = vpop.f32.mrf.mxu0
      %v1240 = vadd.f32 %v1191, %v1239
      %v1241 = vpop.f32.mrf.mxu0
      %v1242 = vadd.f32 %v1193, %v1241
      %1243 = vmatmul.bf16.gmra.mxu0 %v594
      %v1244 = vpop.f32.mrf.mxu0
      %v1245 = vadd.f32 %v1196, %v1244
      %v1246 = vpop.f32.mrf.mxu0
      %v1247 = vadd.f32 %v1198, %v1246
      %1248 = vmatmul.bf16.gmra.mxu0 %v602
      %v1249 = vpop.f32.mrf.mxu0
      %v1250 = vadd.f32 %v1201, %v1249
      %v1251 = vpop.f32.mrf.mxu0
      %v1252 = vadd.f32 %v1203, %v1251
      %1253 = vmatmul.bf16.gmra.mxu0 %v610
      %v1254 = vpop.f32.mrf.mxu0
      %v1255 = vadd.f32 %v1206, %v1254
      %v1256 = vpop.f32.mrf.mxu0
      %v1257 = vadd.f32 %v1208, %v1256
      %1258 = vdwg.mxu0
      %1259 = vmatpush.bf16.msra.mxu0 %v974
      %1260 = vmatpush.bf16.msra.mxu0 %v973
      %1261 = vmatpush.bf16.msra.mxu0 %v972
      %1262 = vmatpush.bf16.msra.mxu0 %v971
      %1263 = vmatpush.bf16.msra.mxu0 %v970
      %1264 = vmatpush.bf16.msra.mxu0 %v969
      %1265 = vmatpush.bf16.msra.mxu0 %v968
      %1266 = vmatpush.bf16.msra.mxu0 %v967
      %1267 = vmatmul.bf16.gmra.mxu0 %v555
      %v1268 = vpop.f32.mrf.mxu0
      %v1269 = vadd.f32 %v1220, %v1268
      %v1270 = vpop.f32.mrf.mxu0
      %v1271 = vadd.f32 %v1222, %v1270
      %1272 = vmatmul.bf16.gmra.mxu0 %v563
      %v1273 = vpop.f32.mrf.mxu0
      %v1274 = vadd.f32 %v1225, %v1273
      %v1275 = vpop.f32.mrf.mxu0
      %v1276 = vadd.f32 %v1227, %v1275
      %1277 = vmatmul.bf16.gmra.mxu0 %v571
      %v1278 = vpop.f32.mrf.mxu0
      %v1279 = vadd.f32 %v1230, %v1278
      %v1280 = vpop.f32.mrf.mxu0
      %v1281 = vadd.f32 %v1232, %v1280
      %1282 = vmatmul.bf16.gmra.mxu0 %v579
      %v1283 = vpop.f32.mrf.mxu0
      %v1284 = vadd.f32 %v1235, %v1283
      %v1285 = vpop.f32.mrf.mxu0
      %v1286 = vadd.f32 %v1237, %v1285
      %1287 = vmatmul.bf16.gmra.mxu0 %v587
      %v1288 = vpop.f32.mrf.mxu0
      %v1289 = vadd.f32 %v1240, %v1288
      %v1290 = vpop.f32.mrf.mxu0
      %v1291 = vadd.f32 %v1242, %v1290
      %1292 = vmatmul.bf16.gmra.mxu0 %v595
      %v1293 = vpop.f32.mrf.mxu0
      %v1294 = vadd.f32 %v1245, %v1293
      %v1295 = vpop.f32.mrf.mxu0
      %v1296 = vadd.f32 %v1247, %v1295
      %1297 = vmatmul.bf16.gmra.mxu0 %v603
      %v1298 = vpop.f32.mrf.mxu0
      %v1299 = vadd.f32 %v1250, %v1298
      %v1300 = vpop.f32.mrf.mxu0
      %v1301 = vadd.f32 %v1252, %v1300
      %1302 = vmatmul.bf16.gmra.mxu0 %v611
      %v1303 = vpop.f32.mrf.mxu0
      %v1304 = vadd.f32 %v1255, %v1303
      %v1305 = vpop.f32.mrf.mxu0
      %v1306 = vadd.f32 %v1257, %v1305
      %1307 = vdwg.mxu0
      %1308 = vmatpush.bf16.msra.mxu0 %v982
      %1309 = vmatpush.bf16.msra.mxu0 %v981
      %1310 = vmatpush.bf16.msra.mxu0 %v980
      %1311 = vmatpush.bf16.msra.mxu0 %v979
      %1312 = vmatpush.bf16.msra.mxu0 %v978
      %1313 = vmatpush.bf16.msra.mxu0 %v977
      %1314 = vmatpush.bf16.msra.mxu0 %v976
      %1315 = vmatpush.bf16.msra.mxu0 %v975
      %1316 = vmatmul.bf16.gmra.mxu0 %v556
      %v1317 = vpop.f32.mrf.mxu0
      %v1318 = vadd.f32 %v1269, %v1317
      %v1319 = vpop.f32.mrf.mxu0
      %v1320 = vadd.f32 %v1271, %v1319
      %1321 = vmatmul.bf16.gmra.mxu0 %v564
      %v1322 = vpop.f32.mrf.mxu0
      %v1323 = vadd.f32 %v1274, %v1322
      %v1324 = vpop.f32.mrf.mxu0
      %v1325 = vadd.f32 %v1276, %v1324
      %1326 = vmatmul.bf16.gmra.mxu0 %v572
      %v1327 = vpop.f32.mrf.mxu0
      %v1328 = vadd.f32 %v1279, %v1327
      %v1329 = vpop.f32.mrf.mxu0
      %v1330 = vadd.f32 %v1281, %v1329
      %1331 = vmatmul.bf16.gmra.mxu0 %v580
      %v1332 = vpop.f32.mrf.mxu0
      %v1333 = vadd.f32 %v1284, %v1332
      %v1334 = vpop.f32.mrf.mxu0
      %v1335 = vadd.f32 %v1286, %v1334
      %1336 = vmatmul.bf16.gmra.mxu0 %v588
      %v1337 = vpop.f32.mrf.mxu0
      %v1338 = vadd.f32 %v1289, %v1337
      %v1339 = vpop.f32.mrf.mxu0
      %v1340 = vadd.f32 %v1291, %v1339
      %1341 = vmatmul.bf16.gmra.mxu0 %v596
      %v1342 = vpop.f32.mrf.mxu0
      %v1343 = vadd.f32 %v1294, %v1342
      %v1344 = vpop.f32.mrf.mxu0
      %v1345 = vadd.f32 %v1296, %v1344
      %1346 = vmatmul.bf16.gmra.mxu0 %v604
      %v1347 = vpop.f32.mrf.mxu0
      %v1348 = vadd.f32 %v1299, %v1347
      %v1349 = vpop.f32.mrf.mxu0
      %v1350 = vadd.f32 %v1301, %v1349
      %1351 = vmatmul.bf16.gmra.mxu0 %v612
      %v1352 = vpop.f32.mrf.mxu0
      %v1353 = vadd.f32 %v1304, %v1352
      %v1354 = vpop.f32.mrf.mxu0
      %v1355 = vadd.f32 %v1306, %v1354
      %1356 = vdwg.mxu0
      %1357 = vmatpush.bf16.msra.mxu0 %v990
      %1358 = vmatpush.bf16.msra.mxu0 %v989
      %1359 = vmatpush.bf16.msra.mxu0 %v988
      %1360 = vmatpush.bf16.msra.mxu0 %v987
      %1361 = vmatpush.bf16.msra.mxu0 %v986
      %1362 = vmatpush.bf16.msra.mxu0 %v985
      %1363 = vmatpush.bf16.msra.mxu0 %v984
      %1364 = vmatpush.bf16.msra.mxu0 %v983
      %1365 = vmatmul.bf16.gmra.mxu0 %v557
      %v1366 = vpop.f32.mrf.mxu0
      %v1367 = vadd.f32 %v1318, %v1366
      %v1368 = vpop.f32.mrf.mxu0
      %v1369 = vadd.f32 %v1320, %v1368
      %1370 = vmatmul.bf16.gmra.mxu0 %v565
      %v1371 = vpop.f32.mrf.mxu0
      %v1372 = vadd.f32 %v1323, %v1371
      %v1373 = vpop.f32.mrf.mxu0
      %v1374 = vadd.f32 %v1325, %v1373
      %1375 = vmatmul.bf16.gmra.mxu0 %v573
      %v1376 = vpop.f32.mrf.mxu0
      %v1377 = vadd.f32 %v1328, %v1376
      %v1378 = vpop.f32.mrf.mxu0
      %v1379 = vadd.f32 %v1330, %v1378
      %1380 = vmatmul.bf16.gmra.mxu0 %v581
      %v1381 = vpop.f32.mrf.mxu0
      %v1382 = vadd.f32 %v1333, %v1381
      %v1383 = vpop.f32.mrf.mxu0
      %v1384 = vadd.f32 %v1335, %v1383
      %1385 = vmatmul.bf16.gmra.mxu0 %v589
      %v1386 = vpop.f32.mrf.mxu0
      %v1387 = vadd.f32 %v1338, %v1386
      %v1388 = vpop.f32.mrf.mxu0
      %v1389 = vadd.f32 %v1340, %v1388
      %1390 = vmatmul.bf16.gmra.mxu0 %v597
      %v1391 = vpop.f32.mrf.mxu0
      %v1392 = vadd.f32 %v1343, %v1391
      %v1393 = vpop.f32.mrf.mxu0
      %v1394 = vadd.f32 %v1345, %v1393
      %1395 = vmatmul.bf16.gmra.mxu0 %v605
      %v1396 = vpop.f32.mrf.mxu0
      %v1397 = vadd.f32 %v1348, %v1396
      %v1398 = vpop.f32.mrf.mxu0
      %v1399 = vadd.f32 %v1350, %v1398
      %1400 = vmatmul.bf16.gmra.mxu0 %v613
      %v1401 = vpop.f32.mrf.mxu0
      %v1402 = vadd.f32 %v1353, %v1401
      %v1403 = vpop.f32.mrf.mxu0
      %v1404 = vadd.f32 %v1355, %v1403
      %1405 = vdwg.mxu0
      %1406 = vmatpush.bf16.msra.mxu0 %v998
      %1407 = vmatpush.bf16.msra.mxu0 %v997
      %1408 = vmatpush.bf16.msra.mxu0 %v996
      %1409 = vmatpush.bf16.msra.mxu0 %v995
      %1410 = vmatpush.bf16.msra.mxu0 %v994
      %1411 = vmatpush.bf16.msra.mxu0 %v993
      %1412 = vmatpush.bf16.msra.mxu0 %v992
      %1413 = vmatpush.bf16.msra.mxu0 %v991
      %1414 = vmatmul.bf16.gmra.mxu0 %v558
      %v1415 = vpop.f32.mrf.mxu0
      %v1416 = vadd.f32 %v1367, %v1415
      %v1417 = vpop.f32.mrf.mxu0
      %v1418 = vadd.f32 %v1369, %v1417
      %1419 = vmatmul.bf16.gmra.mxu0 %v566
      %v1420 = vpop.f32.mrf.mxu0
      %v1421 = vadd.f32 %v1372, %v1420
      %v1422 = vpop.f32.mrf.mxu0
      %v1423 = vadd.f32 %v1374, %v1422
      %1424 = vmatmul.bf16.gmra.mxu0 %v574
      %v1425 = vpop.f32.mrf.mxu0
      %v1426 = vadd.f32 %v1377, %v1425
      %v1427 = vpop.f32.mrf.mxu0
      %v1428 = vadd.f32 %v1379, %v1427
      %1429 = vmatmul.bf16.gmra.mxu0 %v582
      %v1430 = vpop.f32.mrf.mxu0
      %v1431 = vadd.f32 %v1382, %v1430
      %v1432 = vpop.f32.mrf.mxu0
      %v1433 = vadd.f32 %v1384, %v1432
      %1434 = vmatmul.bf16.gmra.mxu0 %v590
      %v1435 = vpop.f32.mrf.mxu0
      %v1436 = vadd.f32 %v1387, %v1435
      %v1437 = vpop.f32.mrf.mxu0
      %v1438 = vadd.f32 %v1389, %v1437
      %1439 = vmatmul.bf16.gmra.mxu0 %v598
      %v1440 = vpop.f32.mrf.mxu0
      %v1441 = vadd.f32 %v1392, %v1440
      %v1442 = vpop.f32.mrf.mxu0
      %v1443 = vadd.f32 %v1394, %v1442
      %1444 = vmatmul.bf16.gmra.mxu0 %v606
      %v1445 = vpop.f32.mrf.mxu0
      %v1446 = vadd.f32 %v1397, %v1445
      %v1447 = vpop.f32.mrf.mxu0
      %v1448 = vadd.f32 %v1399, %v1447
      %1449 = vmatmul.bf16.gmra.mxu0 %v614
      %v1450 = vpop.f32.mrf.mxu0
      %v1451 = vadd.f32 %v1402, %v1450
      %v1452 = vpop.f32.mrf.mxu0
      %v1453 = vadd.f32 %v1404, %v1452
      %1454 = vdwg.mxu0
      %vm1455 = vcmask 130048
      %v1456 = vsel %vm1455, %v1416, 0.0
      %1457 = vadd.xlane.f32.xlu0 %v1456
      %v1458 = vpop.xlane.xlu0 %1457
      %v1459 = vsel %vm1455, %v1418, 0.0
      %1460 = vadd.xlane.f32.xlu0 %v1459
      %v1461 = vpop.xlane.xlu0 %1460
      %v1462 = vsel %vm1455, %v1421, 0.0
      %1463 = vadd.xlane.f32.xlu0 %v1462
      %v1464 = vpop.xlane.xlu0 %1463
      %v1465 = vsel %vm1455, %v1423, 0.0
      %1466 = vadd.xlane.f32.xlu0 %v1465
      %v1467 = vpop.xlane.xlu0 %1466
      %v1468 = vsel %vm1455, %v1426, 0.0
      %1469 = vadd.xlane.f32.xlu0 %v1468
      %v1470 = vpop.xlane.xlu0 %1469
      %v1471 = vsel %vm1455, %v1428, 0.0
      %1472 = vadd.xlane.f32.xlu0 %v1471
      %v1473 = vpop.xlane.xlu0 %1472
      %v1474 = vsel %vm1455, %v1431, 0.0
      %1475 = vadd.xlane.f32.xlu0 %v1474
      %v1476 = vpop.xlane.xlu0 %1475
      %v1477 = vsel %vm1455, %v1433, 0.0
      %1478 = vadd.xlane.f32.xlu0 %v1477
      %v1479 = vpop.xlane.xlu0 %1478
      %v1480 = vsel %vm1455, %v1436, 0.0
      %1481 = vadd.xlane.f32.xlu0 %v1480
      %v1482 = vpop.xlane.xlu0 %1481
      %v1483 = vsel %vm1455, %v1438, 0.0
      %1484 = vadd.xlane.f32.xlu0 %v1483
      %v1485 = vpop.xlane.xlu0 %1484
      %v1486 = vsel %vm1455, %v1441, 0.0
      %1487 = vadd.xlane.f32.xlu0 %v1486
      %v1488 = vpop.xlane.xlu0 %1487
      %v1489 = vsel %vm1455, %v1443, 0.0
      %1490 = vadd.xlane.f32.xlu0 %v1489
      %v1491 = vpop.xlane.xlu0 %1490
      %v1492 = vsel %vm1455, %v1446, 0.0
      %1493 = vadd.xlane.f32.xlu0 %v1492
      %v1494 = vpop.xlane.xlu0 %1493
      %v1495 = vsel %vm1455, %v1448, 0.0
      %1496 = vadd.xlane.f32.xlu0 %v1495
      %v1497 = vpop.xlane.xlu0 %1496
      %v1498 = vsel %vm1455, %v1451, 0.0
      %1499 = vadd.xlane.f32.xlu0 %v1498
      %v1500 = vpop.xlane.xlu0 %1499
      %v1501 = vsel %vm1455, %v1453, 0.0
      %1502 = vadd.xlane.f32.xlu0 %v1501
      %v1503 = vpop.xlane.xlu0 %1502
      %v1504 = vmul.f32 %v1458, 0.0625
      %v1505 = vmul.f32 %v1461, 0.0625
      %v1506 = vmul.f32 %v1464, 0.0625
      %v1507 = vmul.f32 %v1467, 0.0625
      %v1508 = vmul.f32 %v1470, 0.0625
      %v1509 = vmul.f32 %v1473, 0.0625
      %v1510 = vmul.f32 %v1476, 0.0625
      %v1511 = vmul.f32 %v1479, 0.0625
      %v1512 = vmul.f32 %v1482, 0.0625
      %v1513 = vmul.f32 %v1485, 0.0625
      %v1514 = vmul.f32 %v1488, 0.0625
      %v1515 = vmul.f32 %v1491, 0.0625
      %v1516 = vmul.f32 %v1494, 0.0625
      %v1517 = vmul.f32 %v1497, 0.0625
      %v1518 = vmul.f32 %v1500, 0.0625
      %v1519 = vmul.f32 %v1503, 0.0625
      %v1520 = vsub.f32 %v1416, %v1504
      %v1521 = vsub.f32 %v1418, %v1505
      %v1522 = vsub.f32 %v1421, %v1506
      %v1523 = vsub.f32 %v1423, %v1507
      %v1524 = vsub.f32 %v1426, %v1508
      %v1525 = vsub.f32 %v1428, %v1509
      %v1526 = vsub.f32 %v1431, %v1510
      %v1527 = vsub.f32 %v1433, %v1511
      %v1528 = vsub.f32 %v1436, %v1512
      %v1529 = vsub.f32 %v1438, %v1513
      %v1530 = vsub.f32 %v1441, %v1514
      %v1531 = vsub.f32 %v1443, %v1515
      %v1532 = vsub.f32 %v1446, %v1516
      %v1533 = vsub.f32 %v1448, %v1517
      %v1534 = vsub.f32 %v1451, %v1518
      %v1535 = vsub.f32 %v1453, %v1519
      %v1536 = vmul.f32 %v1520, %v1520
      %v1537 = vmul.f32 %v1521, %v1521
      %v1538 = vmul.f32 %v1522, %v1522
      %v1539 = vmul.f32 %v1523, %v1523
      %v1540 = vmul.f32 %v1524, %v1524
      %v1541 = vmul.f32 %v1525, %v1525
      %v1542 = vmul.f32 %v1526, %v1526
      %v1543 = vmul.f32 %v1527, %v1527
      %v1544 = vmul.f32 %v1528, %v1528
      %v1545 = vmul.f32 %v1529, %v1529
      %v1546 = vmul.f32 %v1530, %v1530
      %v1547 = vmul.f32 %v1531, %v1531
      %v1548 = vmul.f32 %v1532, %v1532
      %v1549 = vmul.f32 %v1533, %v1533
      %v1550 = vmul.f32 %v1534, %v1534
      %v1551 = vmul.f32 %v1535, %v1535
      %v1552 = vsel %vm1455, %v1536, 0.0
      %1553 = vadd.xlane.f32.xlu0 %v1552
      %v1554 = vpop.xlane.xlu0 %1553
      %v1555 = vsel %vm1455, %v1537, 0.0
      %1556 = vadd.xlane.f32.xlu0 %v1555
      %v1557 = vpop.xlane.xlu0 %1556
      %v1558 = vsel %vm1455, %v1538, 0.0
      %1559 = vadd.xlane.f32.xlu0 %v1558
      %v1560 = vpop.xlane.xlu0 %1559
      %v1561 = vsel %vm1455, %v1539, 0.0
      %1562 = vadd.xlane.f32.xlu0 %v1561
      %v1563 = vpop.xlane.xlu0 %1562
      %v1564 = vsel %vm1455, %v1540, 0.0
      %1565 = vadd.xlane.f32.xlu0 %v1564
      %v1566 = vpop.xlane.xlu0 %1565
      %v1567 = vsel %vm1455, %v1541, 0.0
      %1568 = vadd.xlane.f32.xlu0 %v1567
      %v1569 = vpop.xlane.xlu0 %1568
      %v1570 = vsel %vm1455, %v1542, 0.0
      %1571 = vadd.xlane.f32.xlu0 %v1570
      %v1572 = vpop.xlane.xlu0 %1571
      %v1573 = vsel %vm1455, %v1543, 0.0
      %1574 = vadd.xlane.f32.xlu0 %v1573
      %v1575 = vpop.xlane.xlu0 %1574
      %v1576 = vsel %vm1455, %v1544, 0.0
      %1577 = vadd.xlane.f32.xlu0 %v1576
      %v1578 = vpop.xlane.xlu0 %1577
      %v1579 = vsel %vm1455, %v1545, 0.0
      %1580 = vadd.xlane.f32.xlu0 %v1579
      %v1581 = vpop.xlane.xlu0 %1580
      %v1582 = vsel %vm1455, %v1546, 0.0
      %1583 = vadd.xlane.f32.xlu0 %v1582
      %v1584 = vpop.xlane.xlu0 %1583
      %v1585 = vsel %vm1455, %v1547, 0.0
      %1586 = vadd.xlane.f32.xlu0 %v1585
      %v1587 = vpop.xlane.xlu0 %1586
      %v1588 = vsel %vm1455, %v1548, 0.0
      %1589 = vadd.xlane.f32.xlu0 %v1588
      %v1590 = vpop.xlane.xlu0 %1589
      %v1591 = vsel %vm1455, %v1549, 0.0
      %1592 = vadd.xlane.f32.xlu0 %v1591
      %v1593 = vpop.xlane.xlu0 %1592
      %v1594 = vsel %vm1455, %v1550, 0.0
      %1595 = vadd.xlane.f32.xlu0 %v1594
      %v1596 = vpop.xlane.xlu0 %1595
      %v1597 = vsel %vm1455, %v1551, 0.0
      %1598 = vadd.xlane.f32.xlu0 %v1597
      %v1599 = vpop.xlane.xlu0 %1598
      %v1600 = vmul.f32 %v1554, 0.0625
      %v1601 = vmul.f32 %v1557, 0.0625
      %v1602 = vmul.f32 %v1560, 0.0625
      %v1603 = vmul.f32 %v1563, 0.0625
      %v1604 = vmul.f32 %v1566, 0.0625
      %v1605 = vmul.f32 %v1569, 0.0625
      %v1606 = vmul.f32 %v1572, 0.0625
      %v1607 = vmul.f32 %v1575, 0.0625
      %v1608 = vmul.f32 %v1578, 0.0625
      %v1609 = vmul.f32 %v1581, 0.0625
      %v1610 = vmul.f32 %v1584, 0.0625
      %v1611 = vmul.f32 %v1587, 0.0625
      %v1612 = vmul.f32 %v1590, 0.0625
      %v1613 = vmul.f32 %v1593, 0.0625
      %v1614 = vmul.f32 %v1596, 0.0625
      %v1615 = vmul.f32 %v1599, 0.0625
      %v1616 = vadd.f32 %v1600, 1e-05
      %v1617 = vadd.f32 %v1601, 1e-05
      %v1618 = vadd.f32 %v1602, 1e-05
      %v1619 = vadd.f32 %v1603, 1e-05
      %v1620 = vadd.f32 %v1604, 1e-05
      %v1621 = vadd.f32 %v1605, 1e-05
      %v1622 = vadd.f32 %v1606, 1e-05
      %v1623 = vadd.f32 %v1607, 1e-05
      %v1624 = vadd.f32 %v1608, 1e-05
      %v1625 = vadd.f32 %v1609, 1e-05
      %v1626 = vadd.f32 %v1610, 1e-05
      %v1627 = vadd.f32 %v1611, 1e-05
      %v1628 = vadd.f32 %v1612, 1e-05
      %v1629 = vadd.f32 %v1613, 1e-05
      %v1630 = vadd.f32 %v1614, 1e-05
      %v1631 = vadd.f32 %v1615, 1e-05
      %v1632 = vrsqrt.pop %v1616
      %v1633 = vmul.f32 %v1632, %v1616
      %v1634 = vmul.f32 %v1633, %v1632
      %v1635 = vmul.f32 0.5, %v1634
      %v1636 = vsub.f32 1.5, %v1635
      %v1637 = vmul.f32 %v1632, %v1636
      %vm1638 = vweird.f32 %v1616
      %vm1639 = vweird.f32 %v1632
      %vm1640 = vmor %vm1638, %vm1639
      %v1641 = vsel %vm1640, %v1632, %v1637
      %v1642 = vrsqrt.pop %v1617
      %v1643 = vmul.f32 %v1642, %v1617
      %v1644 = vmul.f32 %v1643, %v1642
      %v1645 = vmul.f32 0.5, %v1644
      %v1646 = vsub.f32 1.5, %v1645
      %v1647 = vmul.f32 %v1642, %v1646
      %vm1648 = vweird.f32 %v1617
      %vm1649 = vweird.f32 %v1642
      %vm1650 = vmor %vm1648, %vm1649
      %v1651 = vsel %vm1650, %v1642, %v1647
      %v1652 = vrsqrt.pop %v1618
      %v1653 = vmul.f32 %v1652, %v1618
      %v1654 = vmul.f32 %v1653, %v1652
      %v1655 = vmul.f32 0.5, %v1654
      %v1656 = vsub.f32 1.5, %v1655
      %v1657 = vmul.f32 %v1652, %v1656
      %vm1658 = vweird.f32 %v1618
      %vm1659 = vweird.f32 %v1652
      %vm1660 = vmor %vm1658, %vm1659
      %v1661 = vsel %vm1660, %v1652, %v1657
      %v1662 = vrsqrt.pop %v1619
      %v1663 = vmul.f32 %v1662, %v1619
      %v1664 = vmul.f32 %v1663, %v1662
      %v1665 = vmul.f32 0.5, %v1664
      %v1666 = vsub.f32 1.5, %v1665
      %v1667 = vmul.f32 %v1662, %v1666
      %vm1668 = vweird.f32 %v1619
      %vm1669 = vweird.f32 %v1662
      %vm1670 = vmor %vm1668, %vm1669
      %v1671 = vsel %vm1670, %v1662, %v1667
      %v1672 = vrsqrt.pop %v1620
      %v1673 = vmul.f32 %v1672, %v1620
      %v1674 = vmul.f32 %v1673, %v1672
      %v1675 = vmul.f32 0.5, %v1674
      %v1676 = vsub.f32 1.5, %v1675
      %v1677 = vmul.f32 %v1672, %v1676
      %vm1678 = vweird.f32 %v1620
      %vm1679 = vweird.f32 %v1672
      %vm1680 = vmor %vm1678, %vm1679
      %v1681 = vsel %vm1680, %v1672, %v1677
      %v1682 = vrsqrt.pop %v1621
      %v1683 = vmul.f32 %v1682, %v1621
      %v1684 = vmul.f32 %v1683, %v1682
      %v1685 = vmul.f32 0.5, %v1684
      %v1686 = vsub.f32 1.5, %v1685
      %v1687 = vmul.f32 %v1682, %v1686
      %vm1688 = vweird.f32 %v1621
      %vm1689 = vweird.f32 %v1682
      %vm1690 = vmor %vm1688, %vm1689
      %v1691 = vsel %vm1690, %v1682, %v1687
      %v1692 = vrsqrt.pop %v1622
      %v1693 = vmul.f32 %v1692, %v1622
      %v1694 = vmul.f32 %v1693, %v1692
      %v1695 = vmul.f32 0.5, %v1694
      %v1696 = vsub.f32 1.5, %v1695
      %v1697 = vmul.f32 %v1692, %v1696
      %vm1698 = vweird.f32 %v1622
      %vm1699 = vweird.f32 %v1692
      %vm1700 = vmor %vm1698, %vm1699
      %v1701 = vsel %vm1700, %v1692, %v1697
      %v1702 = vrsqrt.pop %v1623
      %v1703 = vmul.f32 %v1702, %v1623
      %v1704 = vmul.f32 %v1703, %v1702
      %v1705 = vmul.f32 0.5, %v1704
      %v1706 = vsub.f32 1.5, %v1705
      %v1707 = vmul.f32 %v1702, %v1706
      %vm1708 = vweird.f32 %v1623
      %vm1709 = vweird.f32 %v1702
      %vm1710 = vmor %vm1708, %vm1709
      %v1711 = vsel %vm1710, %v1702, %v1707
      %v1712 = vrsqrt.pop %v1624
      %v1713 = vmul.f32 %v1712, %v1624
      %v1714 = vmul.f32 %v1713, %v1712
      %v1715 = vmul.f32 0.5, %v1714
      %v1716 = vsub.f32 1.5, %v1715
      %v1717 = vmul.f32 %v1712, %v1716
      %vm1718 = vweird.f32 %v1624
      %vm1719 = vweird.f32 %v1712
      %vm1720 = vmor %vm1718, %vm1719
      %v1721 = vsel %vm1720, %v1712, %v1717
      %v1722 = vrsqrt.pop %v1625
      %v1723 = vmul.f32 %v1722, %v1625
      %v1724 = vmul.f32 %v1723, %v1722
      %v1725 = vmul.f32 0.5, %v1724
      %v1726 = vsub.f32 1.5, %v1725
      %v1727 = vmul.f32 %v1722, %v1726
      %vm1728 = vweird.f32 %v1625
      %vm1729 = vweird.f32 %v1722
      %vm1730 = vmor %vm1728, %vm1729
      %v1731 = vsel %vm1730, %v1722, %v1727
      %v1732 = vrsqrt.pop %v1626
      %v1733 = vmul.f32 %v1732, %v1626
      %v1734 = vmul.f32 %v1733, %v1732
      %v1735 = vmul.f32 0.5, %v1734
      %v1736 = vsub.f32 1.5, %v1735
      %v1737 = vmul.f32 %v1732, %v1736
      %vm1738 = vweird.f32 %v1626
      %vm1739 = vweird.f32 %v1732
      %vm1740 = vmor %vm1738, %vm1739
      %v1741 = vsel %vm1740, %v1732, %v1737
      %v1742 = vrsqrt.pop %v1627
      %v1743 = vmul.f32 %v1742, %v1627
      %v1744 = vmul.f32 %v1743, %v1742
      %v1745 = vmul.f32 0.5, %v1744
      %v1746 = vsub.f32 1.5, %v1745
      %v1747 = vmul.f32 %v1742, %v1746
      %vm1748 = vweird.f32 %v1627
      %vm1749 = vweird.f32 %v1742
      %vm1750 = vmor %vm1748, %vm1749
      %v1751 = vsel %vm1750, %v1742, %v1747
      %v1752 = vrsqrt.pop %v1628
      %v1753 = vmul.f32 %v1752, %v1628
      %v1754 = vmul.f32 %v1753, %v1752
      %v1755 = vmul.f32 0.5, %v1754
      %v1756 = vsub.f32 1.5, %v1755
      %v1757 = vmul.f32 %v1752, %v1756
      %vm1758 = vweird.f32 %v1628
      %vm1759 = vweird.f32 %v1752
      %vm1760 = vmor %vm1758, %vm1759
      %v1761 = vsel %vm1760, %v1752, %v1757
      %v1762 = vrsqrt.pop %v1629
      %v1763 = vmul.f32 %v1762, %v1629
      %v1764 = vmul.f32 %v1763, %v1762
      %v1765 = vmul.f32 0.5, %v1764
      %v1766 = vsub.f32 1.5, %v1765
      %v1767 = vmul.f32 %v1762, %v1766
      %vm1768 = vweird.f32 %v1629
      %vm1769 = vweird.f32 %v1762
      %vm1770 = vmor %vm1768, %vm1769
      %v1771 = vsel %vm1770, %v1762, %v1767
      %v1772 = vrsqrt.pop %v1630
      %v1773 = vmul.f32 %v1772, %v1630
      %v1774 = vmul.f32 %v1773, %v1772
      %v1775 = vmul.f32 0.5, %v1774
      %v1776 = vsub.f32 1.5, %v1775
      %v1777 = vmul.f32 %v1772, %v1776
      %vm1778 = vweird.f32 %v1630
      %vm1779 = vweird.f32 %v1772
      %vm1780 = vmor %vm1778, %vm1779
      %v1781 = vsel %vm1780, %v1772, %v1777
      %v1782 = vrsqrt.pop %v1631
      %v1783 = vmul.f32 %v1782, %v1631
      %v1784 = vmul.f32 %v1783, %v1782
      %v1785 = vmul.f32 0.5, %v1784
      %v1786 = vsub.f32 1.5, %v1785
      %v1787 = vmul.f32 %v1782, %v1786
      %vm1788 = vweird.f32 %v1631
      %vm1789 = vweird.f32 %v1782
      %vm1790 = vmor %vm1788, %vm1789
      %v1791 = vsel %vm1790, %v1782, %v1787
      %v1792 = vmul.f32 %v1520, %v1641
      %v1793 = vmul.f32 %v1521, %v1651
      %v1794 = vmul.f32 %v1522, %v1661
      %v1795 = vmul.f32 %v1523, %v1671
      %v1796 = vmul.f32 %v1524, %v1681
      %v1797 = vmul.f32 %v1525, %v1691
      %v1798 = vmul.f32 %v1526, %v1701
      %v1799 = vmul.f32 %v1527, %v1711
      %v1800 = vmul.f32 %v1528, %v1721
      %v1801 = vmul.f32 %v1529, %v1731
      %v1802 = vmul.f32 %v1530, %v1741
      %v1803 = vmul.f32 %v1531, %v1751
      %v1804 = vmul.f32 %v1532, %v1761
      %v1805 = vmul.f32 %v1533, %v1771
      %v1806 = vmul.f32 %v1534, %v1781
      %v1807 = vmul.f32 %v1535, %v1791
      %vm1808 = vcmp.ge.f32.partialorder %v1792, 0.0
      %vm1809 = vcmp.ge.f32.partialorder %v1793, 0.0
      %vm1810 = vcmp.ge.f32.partialorder %v1794, 0.0
      %vm1811 = vcmp.ge.f32.partialorder %v1795, 0.0
      %vm1812 = vcmp.ge.f32.partialorder %v1796, 0.0
      %vm1813 = vcmp.ge.f32.partialorder %v1797, 0.0
      %vm1814 = vcmp.ge.f32.partialorder %v1798, 0.0
      %vm1815 = vcmp.ge.f32.partialorder %v1799, 0.0
      %vm1816 = vcmp.ge.f32.partialorder %v1800, 0.0
      %vm1817 = vcmp.ge.f32.partialorder %v1801, 0.0
      %vm1818 = vcmp.ge.f32.partialorder %v1802, 0.0
      %vm1819 = vcmp.ge.f32.partialorder %v1803, 0.0
      %vm1820 = vcmp.ge.f32.partialorder %v1804, 0.0
      %vm1821 = vcmp.ge.f32.partialorder %v1805, 0.0
      %vm1822 = vcmp.ge.f32.partialorder %v1806, 0.0
      %vm1823 = vcmp.ge.f32.partialorder %v1807, 0.0
      %v1824 = vmul.f32 %v1792, 0.2
      %v1825 = vmul.f32 %v1793, 0.2
      %v1826 = vmul.f32 %v1794, 0.2
      %v1827 = vmul.f32 %v1795, 0.2
      %v1828 = vmul.f32 %v1796, 0.2
      %v1829 = vmul.f32 %v1797, 0.2
      %v1830 = vmul.f32 %v1798, 0.2
      %v1831 = vmul.f32 %v1799, 0.2
      %v1832 = vmul.f32 %v1800, 0.2
      %v1833 = vmul.f32 %v1801, 0.2
      %v1834 = vmul.f32 %v1802, 0.2
      %v1835 = vmul.f32 %v1803, 0.2
      %v1836 = vmul.f32 %v1804, 0.2
      %v1837 = vmul.f32 %v1805, 0.2
      %v1838 = vmul.f32 %v1806, 0.2
      %v1839 = vmul.f32 %v1807, 0.2
      %v1840 = vsel %vm1808, %v1792, %v1824
      %v1841 = vsel %vm1809, %v1793, %v1825
      %v1842 = vsel %vm1810, %v1794, %v1826
      %v1843 = vsel %vm1811, %v1795, %v1827
      %v1844 = vsel %vm1812, %v1796, %v1828
      %v1845 = vsel %vm1813, %v1797, %v1829
      %v1846 = vsel %vm1814, %v1798, %v1830
      %v1847 = vsel %vm1815, %v1799, %v1831
      %v1848 = vsel %vm1816, %v1800, %v1832
      %v1849 = vsel %vm1817, %v1801, %v1833
      %v1850 = vsel %vm1818, %v1802, %v1834
      %v1851 = vsel %vm1819, %v1803, %v1835
      %v1852 = vsel %vm1820, %v1804, %v1836
      %v1853 = vsel %vm1821, %v1805, %v1837
      %v1854 = vsel %vm1822, %v1806, %v1838
      %v1855 = vsel %vm1823, %v1807, %v1839
      %v1856 = vld [vmem:[%s1] sm:$0xff]
      %v1857 = vld [vmem:[%s1 + $0x8] sm:$0xff]
      %v1858 = vld [vmem:[%s1 + $0x10] sm:$0xff]
      %v1859 = vld [vmem:[%s1 + $0x18] sm:$0xff]
      %v1860 = vld [vmem:[%s1 + $0x20] sm:$0xff]
      %v1861 = vld [vmem:[%s1 + $0x28] sm:$0xff]
      %v1862 = vld [vmem:[%s1 + $0x30] sm:$0xff]
      %v1863 = vld [vmem:[%s1 + $0x38] sm:$0xff]
      %v1864 = vld [vmem:[%s1 + $0x40] sm:$0xff]
      %v1865 = vld [vmem:[%s1 + $0x48] sm:$0xff]
      %v1866 = vld [vmem:[%s1 + $0x50] sm:$0xff]
      %v1867 = vld [vmem:[%s1 + $0x58] sm:$0xff]
      %v1868 = vld [vmem:[%s1 + $0x60] sm:$0xff]
      %v1869 = vld [vmem:[%s1 + $0x68] sm:$0xff]
      %v1870 = vld [vmem:[%s1 + $0x70] sm:$0xff]
      %v1871 = vld [vmem:[%s1 + $0x78] sm:$0xff]
      %v1872 = vmul.f32 %v1840, %v1856
      %v1873 = vmul.f32 %v1841, %v1857
      %v1874 = vmul.f32 %v1842, %v1858
      %v1875 = vmul.f32 %v1843, %v1859
      %v1876 = vmul.f32 %v1844, %v1860
      %v1877 = vmul.f32 %v1845, %v1861
      %v1878 = vmul.f32 %v1846, %v1862
      %v1879 = vmul.f32 %v1847, %v1863
      %v1880 = vmul.f32 %v1848, %v1864
      %v1881 = vmul.f32 %v1849, %v1865
      %v1882 = vmul.f32 %v1850, %v1866
      %v1883 = vmul.f32 %v1851, %v1867
      %v1884 = vmul.f32 %v1852, %v1868
      %v1885 = vmul.f32 %v1853, %v1869
      %v1886 = vmul.f32 %v1854, %v1870
      %v1887 = vmul.f32 %v1855, %v1871
      %v1888 = vsel %vm1455, %v1872, 0.0
      %1889 = vadd.xlane.f32.xlu0 %v1888
      %v1890 = vpop.xlane.xlu0 %1889
      %v1891 = vsel %vm1455, %v1873, 0.0
      %1892 = vadd.xlane.f32.xlu0 %v1891
      %v1893 = vpop.xlane.xlu0 %1892
      %v1894 = vsel %vm1455, %v1874, 0.0
      %1895 = vadd.xlane.f32.xlu0 %v1894
      %v1896 = vpop.xlane.xlu0 %1895
      %v1897 = vsel %vm1455, %v1875, 0.0
      %1898 = vadd.xlane.f32.xlu0 %v1897
      %v1899 = vpop.xlane.xlu0 %1898
      %v1900 = vsel %vm1455, %v1876, 0.0
      %1901 = vadd.xlane.f32.xlu0 %v1900
      %v1902 = vpop.xlane.xlu0 %1901
      %v1903 = vsel %vm1455, %v1877, 0.0
      %1904 = vadd.xlane.f32.xlu0 %v1903
      %v1905 = vpop.xlane.xlu0 %1904
      %v1906 = vsel %vm1455, %v1878, 0.0
      %1907 = vadd.xlane.f32.xlu0 %v1906
      %v1908 = vpop.xlane.xlu0 %1907
      %v1909 = vsel %vm1455, %v1879, 0.0
      %1910 = vadd.xlane.f32.xlu0 %v1909
      %v1911 = vpop.xlane.xlu0 %1910
      %v1912 = vsel %vm1455, %v1880, 0.0
      %1913 = vadd.xlane.f32.xlu0 %v1912
      %v1914 = vpop.xlane.xlu0 %1913
      %v1915 = vsel %vm1455, %v1881, 0.0
      %1916 = vadd.xlane.f32.xlu0 %v1915
      %v1917 = vpop.xlane.xlu0 %1916
      %v1918 = vsel %vm1455, %v1882, 0.0
      %1919 = vadd.xlane.f32.xlu0 %v1918
      %v1920 = vpop.xlane.xlu0 %1919
      %v1921 = vsel %vm1455, %v1883, 0.0
      %1922 = vadd.xlane.f32.xlu0 %v1921
      %v1923 = vpop.xlane.xlu0 %1922
      %v1924 = vsel %vm1455, %v1884, 0.0
      %1925 = vadd.xlane.f32.xlu0 %v1924
      %v1926 = vpop.xlane.xlu0 %1925
      %v1927 = vsel %vm1455, %v1885, 0.0
      %1928 = vadd.xlane.f32.xlu0 %v1927
      %v1929 = vpop.xlane.xlu0 %1928
      %v1930 = vsel %vm1455, %v1886, 0.0
      %1931 = vadd.xlane.f32.xlu0 %v1930
      %v1932 = vpop.xlane.xlu0 %1931
      %v1933 = vsel %vm1455, %v1887, 0.0
      %1934 = vadd.xlane.f32.xlu0 %v1933
      %v1935 = vpop.xlane.xlu0 %1934
      %v1936 = vadd.f32 %v1890, %v1893
      %v1937 = vadd.f32 %v1936, %v1896
      %v1938 = vadd.f32 %v1937, %v1899
      %v1939 = vadd.f32 %v1938, %v1902
      %v1940 = vadd.f32 %v1939, %v1905
      %v1941 = vadd.f32 %v1940, %v1908
      %v1942 = vadd.f32 %v1941, %v1911
      %v1943 = vadd.f32 %v1942, %v1914
      %v1944 = vadd.f32 %v1943, %v1917
      %v1945 = vadd.f32 %v1944, %v1920
      %v1946 = vadd.f32 %v1945, %v1923
      %v1947 = vadd.f32 %v1946, %v1926
      %v1948 = vadd.f32 %v1947, %v1929
      %v1949 = vadd.f32 %v1948, %v1932
      %v1950 = vadd.f32 %v1949, %v1935
      %v1951 = vrot.slane %v1950, 4
      %v1952 = vadd.f32 %v1950, %v1951
      %v1953 = vrot.slane %v1952, 2
      %v1954 = vadd.f32 %v1952, %v1953
      %v1955 = vrot.slane %v1954, 1
      %v1956 = vadd.f32 %v1954, %v1955
      %vm1957 = vcmask 0
      %1958 = vst.msk [vmem:[%s166] sm:$0x1] %vm1957, %v1956
      %p1959 = scmp.lt.s32.totalorder %s14, 1
      %s1960 = scalar_select %p1959, %s14, 1
      %s1961 = scalar_lea.vmem %s3, %s1960
      // Predicated region
      $region33: #{discriminator_forward.11} parent=31 // pred_check
        %p1962 = pneg %p100
      $region34: #{discriminator_forward.11} parent=31 // pred_check_branch
        %1964 = sbr.rel (%p1962) target = $region36
      $region35: #{discriminator_forward.11} parent=31 // pred_region
        _
      $region36: #{discriminator_forward.11} parent=31 // pred_fallthru
        _
    $region32: #{discriminator_forward.11} parent=5 // pred_fallthru
      _
    %p1965 = scmp.le.s32.totalorder 2, %s9
    // Predicated region
    $region37: #{discriminator_forward.11} parent=5 // pred_check
      %p1966 = pneg %p1965
    $region38: #{discriminator_forward.11} parent=5 // pred_check_branch
      %1968 = sbr.rel (%p1966) target = $region40
    $region39: #{discriminator_forward.11} parent=5 // pred_region
      %s1969 = ssub.s32 %s9, 2
      // Predicated region
      $region41: #{discriminator_forward.11} parent=39 // pred_check
        %p1970 = pneg %p106
      $region42: #{discriminator_forward.11} parent=39 // pred_check_branch
        %1972 = sbr.rel (%p1970) target = $region44
      $region43: #{discriminator_forward.11} parent=39 // pred_region
        %p1973 = scmp.lt.s32.totalorder %s15, 1
        %s1974 = scalar_select %p1973, %s15, 1
        %s1975 = scalar_lea.vmem %s3, %s1974
      $region44: #{discriminator_forward.11} parent=39 // pred_fallthru
        _
    $region40: #{discriminator_forward.11} parent=5 // pred_fallthru
      _
  $region6: #{discriminator_forward.11} parent=0 // loop_footer
    %s13 = sadd.s32 1, %s9
  $region7: #{discriminator_forward.11} parent=0 // loop_footer_branch
    %8 = sbr.rel target = $region3
  $region8: #{discriminator_forward.11} parent=0 // loop_exit
    _

</llo_original>
